<compile_context>
chip_gen: v5e
topology: v5e:2x2
jax: 0.10.0
libtpu: 0.0.40
codegen_flags: <defaults>
</compile_context>

<pallas_src>
import jax
import jax.numpy as jnp
from jax import lax
from jax.experimental import pallas as pl
from jax.experimental.pallas import tpu as pltpu

LATENT_DIM = 100
LATENT_PAD = 128           # 100 -> 128 (lane-aligned K for the first matmul)
OUT_DIM = 784
OUT_PAD = 896              # 784 -> 7*128 (lane-dense w5 columns)
NEG_SLOPE = 0.2
BN_EPS = 1e-5

DIMS = [LATENT_DIM, 128, 256, 512, 1024, OUT_DIM]
PAD_DIMS = [LATENT_PAD, 128, 256, 512, 1024, OUT_PAD]

KCHUNK = 256               # K-chunk size for the big weight DMAs
W4_CHUNKS = PAD_DIMS[3] // KCHUNK   # 512  -> 2 chunks of (256, 1024)
W5_CHUNKS = PAD_DIMS[4] // KCHUNK   # 1024 -> 4 chunks of (256, 896)
NUM_SEMS = 2 + W4_CHUNKS + W5_CHUNKS


def _leaky_relu(x):
    return jnp.where(x > 0, x, NEG_SLOPE * x)


def generator_kernel(
    z_ref, w1_ref, vec_ref,            # VMEM inputs
    w2_hbm, w3_hbm, w4_hbm, w5_hbm,    # HBM inputs (manual DMA)
    out_ref,                           # VMEM output
    w2_vmem, w3_vmem, w4_vmem, w5_vmem, sems,   # scratch
):
    # ---- Kick off ALL manual weight DMAs up front (overlap with compute). ----
    cp2 = pltpu.make_async_copy(w2_hbm, w2_vmem, sems.at[0])
    cp3 = pltpu.make_async_copy(w3_hbm, w3_vmem, sems.at[1])
    cp2.start()
    cp3.start()
    cp4 = [pltpu.make_async_copy(w4_hbm.at[c], w4_vmem.at[c], sems.at[2 + c])
           for c in range(W4_CHUNKS)]
    cp5 = [pltpu.make_async_copy(w5_hbm.at[c], w5_vmem.at[c],
                                 sems.at[2 + W4_CHUNKS + c])
           for c in range(W5_CHUNKS)]
    for cp in cp4 + cp5:
        cp.start()

    # ---- Small parameter vectors, packed into one (8, 1024) f32 table. ----
    b1 = vec_ref[0:1, 0:128]
    g2, be2 = vec_ref[1:2, 0:256], vec_ref[2:3, 0:256]
    g3, be3 = vec_ref[3:4, 0:512], vec_ref[4:5, 0:512]
    g4, be4 = vec_ref[5:6, 0:1024], vec_ref[6:7, 0:1024]
    b5 = vec_ref[7:8, 0:OUT_PAD]

    def matmul(x_bf16, w):
        return jnp.dot(x_bf16, w, preferred_element_type=jnp.float32)

    def bn_leaky(x, gamma, beta):
        # Train-mode BatchNorm1d (biased variance) + LeakyReLU, all f32.
        mean = jnp.mean(x, axis=0, keepdims=True)
        mean_sq = jnp.mean(x * x, axis=0, keepdims=True)
        var = jnp.maximum(mean_sq - mean * mean, 0.0)
        scale = gamma * lax.rsqrt(var + BN_EPS)
        shift = beta - mean * scale
        return _leaky_relu(x * scale + shift)

    # Block 1: Linear(100->128) + bias -> LeakyReLU (z arrives bf16-padded).
    x = _leaky_relu(matmul(z_ref[...], w1_ref[...]) + b1)

    # Block 2: Linear(128->256) -> BN -> LeakyReLU (pre-BN bias cancels).
    cp2.wait()
    x = bn_leaky(matmul(x.astype(jnp.bfloat16), w2_vmem[...]), g2, be2)

    # Block 3: Linear(256->512) -> BN -> LeakyReLU.
    cp3.wait()
    x = bn_leaky(matmul(x.astype(jnp.bfloat16), w3_vmem[...]), g3, be3)

    # Block 4: Linear(512->1024) -> BN -> LeakyReLU, K-chunked so each
    # chunk's matmul overlaps the next chunk's DMA.
    x_bf = x.astype(jnp.bfloat16)
    h = None
    for c in range(W4_CHUNKS):
        cp4[c].wait()
        part = matmul(x_bf[:, c * KCHUNK:(c + 1) * KCHUNK], w4_vmem[c])
        h = part if h is None else h + part
    x = bn_leaky(h, g4, be4)

    # Output block: Linear(1024->784) + bias -> Tanh, K-chunked as above.
    x_bf = x.astype(jnp.bfloat16)
    y = None
    for c in range(W5_CHUNKS):
        cp5[c].wait()
        part = matmul(x_bf[:, c * KCHUNK:(c + 1) * KCHUNK], w5_vmem[c])
        y = part if y is None else y + part
    y = jnp.tanh(y + b5)
    out_ref[...] = y[:, :OUT_DIM].astype(out_ref.dtype)


def init_params(key):
    """PyTorch-style init (U(+-1/sqrt(fan_in))); weights stored bf16,
    zero-padded to lane-aligned shapes."""
    params = []
    ks = jax.random.split(key, len(DIMS) - 1)
    for i, (fan_in, fan_out) in enumerate(zip(DIMS[:-1], DIMS[1:])):
        kw, kb = jax.random.split(ks[i])
        bound = 1.0 / float(fan_in) ** 0.5
        w = jax.random.uniform(kw, (fan_in, fan_out), jnp.float32, -bound, bound)
        b = jax.random.uniform(kb, (1, fan_out), jnp.float32, -bound, bound)
        pad_in, pad_out = PAD_DIMS[i], PAD_DIMS[i + 1]
        w = jnp.pad(w, ((0, pad_in - fan_in), (0, pad_out - fan_out)))
        b = jnp.pad(b, ((0, 0), (0, pad_out - fan_out)))
        entry = {"w": w.astype(jnp.bfloat16), "b": b}
        # BatchNorm1d follows layers 2, 3, 4 (output dims 256, 512, 1024).
        if i in (1, 2, 3):
            entry["gamma"] = jnp.ones((1, pad_out), jnp.float32)
            entry["beta"] = jnp.zeros((1, pad_out), jnp.float32)
        params.append(entry)
    return params


def pack_params(params):
    """Kernel-ready operands: big weights kept for HBM residency (w4/w5
    reshaped into K-chunks), small vectors packed into one (8,1024) table.
    Pre-BN biases b2/b3/b4 are intentionally dropped (exact BN cancellation)."""
    vec = jnp.zeros((8, 1024), jnp.float32)
    vec = vec.at[0, :128].set(params[0]["b"][0])
    vec = vec.at[1, :256].set(params[1]["gamma"][0])
    vec = vec.at[2, :256].set(params[1]["beta"][0])
    vec = vec.at[3, :512].set(params[2]["gamma"][0])
    vec = vec.at[4, :512].set(params[2]["beta"][0])
    vec = vec.at[5, :1024].set(params[3]["gamma"][0])
    vec = vec.at[6, :1024].set(params[3]["beta"][0])
    vec = vec.at[7, :OUT_PAD].set(params[4]["b"][0])
    return {
        "w1": params[0]["w"],
        "vec": vec,
        "w2": params[1]["w"],
        "w3": params[2]["w"],
        "w4": params[3]["w"].reshape(W4_CHUNKS, KCHUNK, PAD_DIMS[4]),
        "w5": params[4]["w"].reshape(W5_CHUNKS, KCHUNK, PAD_DIMS[5]),
    }


@jax.jit
def generator_forward(z, kp):
    batch = z.shape[0]
    # Pre-pad and pre-cast z to bf16: halves the z DMA and removes one cast.
    z_pad = jnp.pad(
        z.astype(jnp.float32), ((0, 0), (0, LATENT_PAD - LATENT_DIM))
    ).astype(jnp.bfloat16)

    vmem = pl.BlockSpec(memory_space=pltpu.MemorySpace.VMEM)
    hbm = pl.BlockSpec(memory_space=pl.ANY)

    return pl.pallas_call(
        generator_kernel,
        out_shape=jax.ShapeDtypeStruct((batch, OUT_DIM), jnp.float32),
        in_specs=[vmem, vmem, vmem, hbm, hbm, hbm, hbm],
        out_specs=vmem,
        scratch_shapes=[
            pltpu.VMEM((PAD_DIMS[1], PAD_DIMS[2]), jnp.bfloat16),        # w2
            pltpu.VMEM((PAD_DIMS[2], PAD_DIMS[3]), jnp.bfloat16),        # w3
            pltpu.VMEM((W4_CHUNKS, KCHUNK, PAD_DIMS[4]), jnp.bfloat16),  # w4
            pltpu.VMEM((W5_CHUNKS, KCHUNK, PAD_DIMS[5]), jnp.bfloat16),  # w5
            pltpu.SemaphoreType.DMA((NUM_SEMS,)),
        ],
        compiler_params=pltpu.CompilerParams(vmem_limit_bytes=32 << 20),
    )(z_pad, kp["w1"], kp["vec"], kp["w2"], kp["w3"], kp["w4"], kp["w5"])


def reference_forward(z, params):
    """Pure-JAX reference with PyTorch semantics (biases everywhere,
    centered train-mode BN variance); same bf16 matmul precision."""
    def linear(x, w, b):
        return jnp.dot(x.astype(jnp.bfloat16), w,
                       preferred_element_type=jnp.float32) + b

    x = jnp.pad(z.astype(jnp.float32), ((0, 0), (0, LATENT_PAD - LATENT_DIM)))
    x = _leaky_relu(linear(x, params[0]["w"], params[0]["b"]))
    for i in (1, 2, 3):
        h = linear(x, params[i]["w"], params[i]["b"])
        mean = jnp.mean(h, axis=0, keepdims=True)
        var = jnp.mean((h - mean) ** 2, axis=0, keepdims=True)
        h = params[i]["gamma"] * (h - mean) * lax.rsqrt(var + BN_EPS) + params[i]["beta"]
        x = _leaky_relu(h)
    y = jnp.tanh(linear(x, params[4]["w"], params[4]["b"]))
    return y[:, :OUT_DIM]


if __name__ == "__main__":
    key = jax.random.PRNGKey(0)
    k_params, k_z = jax.random.split(key)
    params = init_params(k_params)
    kernel_params = pack_params(params)

    batch = 8  # multiple of 8 keeps the sublane axis aligned
    z = jax.random.normal(k_z, (batch, LATENT_DIM), jnp.float32)

    out = jax.block_until_ready(generator_forward(z, kernel_params))
    ref = reference_forward(z, params)

    assert out.shape == (batch, OUT_DIM)
    assert jnp.allclose(out, ref, atol=2e-3, rtol=2e-3), float(
        jnp.max(jnp.abs(out - ref))
    )
    print("KERNEL_OK")
</pallas_src>

<mosaic_0001>
module attributes {stable_mosaic.version = 11 : i64} {
  func.func @generator_kernel(%arg0: memref<8x128xbf16, #tpu.memory_space<vmem>>, %arg1: memref<128x128xbf16, #tpu.memory_space<vmem>>, %arg2: memref<8x1024xf32, #tpu.memory_space<vmem>>, %arg3: memref<128x256xbf16, #tpu.memory_space<any>>, %arg4: memref<256x512xbf16, #tpu.memory_space<any>>, %arg5: memref<2x256x1024xbf16, #tpu.memory_space<any>>, %arg6: memref<4x256x896xbf16, #tpu.memory_space<any>>, %arg7: memref<8x784xf32, #tpu.memory_space<vmem>>, %arg8: memref<128x256xbf16, #tpu.memory_space<vmem>>, %arg9: memref<256x512xbf16, #tpu.memory_space<vmem>>, %arg10: memref<2x256x1024xbf16, #tpu.memory_space<vmem>>, %arg11: memref<4x256x896xbf16, #tpu.memory_space<vmem>>, %arg12: memref<8x!tpu.dma_semaphore, #tpu.memory_space<semaphore_mem>>) attributes {dimension_semantics = [], scalar_prefetch = 0 : i64, scratch_operands = 5 : i64, tpu.core_type = #tpu.core_type<tc>} {
    %c0_i32 = arith.constant 0 : i32
    %0 = tpu.memref_slice %arg12[%c0_i32] : memref<8x!tpu.dma_semaphore, #tpu.memory_space<semaphore_mem>> -> memref<1x!tpu.dma_semaphore, #tpu.memory_space<semaphore_mem>>
    %1 = tpu.memref_squeeze %0 : memref<1x!tpu.dma_semaphore, #tpu.memory_space<semaphore_mem>> -> memref<!tpu.dma_semaphore, #tpu.memory_space<semaphore_mem>>
    tpu.enqueue_dma source(%arg3 : memref<128x256xbf16, #tpu.memory_space<any>>) target(%arg8 : memref<128x256xbf16, #tpu.memory_space<vmem>>) target_semaphore(%1 : memref<!tpu.dma_semaphore, #tpu.memory_space<semaphore_mem>>)
    %c1_i32 = arith.constant 1 : i32
    %2 = tpu.memref_slice %arg12[%c1_i32] : memref<8x!tpu.dma_semaphore, #tpu.memory_space<semaphore_mem>> -> memref<1x!tpu.dma_semaphore, #tpu.memory_space<semaphore_mem>>
    %3 = tpu.memref_squeeze %2 : memref<1x!tpu.dma_semaphore, #tpu.memory_space<semaphore_mem>> -> memref<!tpu.dma_semaphore, #tpu.memory_space<semaphore_mem>>
    tpu.enqueue_dma source(%arg4 : memref<256x512xbf16, #tpu.memory_space<any>>) target(%arg9 : memref<256x512xbf16, #tpu.memory_space<vmem>>) target_semaphore(%3 : memref<!tpu.dma_semaphore, #tpu.memory_space<semaphore_mem>>)
    %c0_i32_0 = arith.constant 0 : i32
    %c0_i32_1 = arith.constant 0 : i32
    %c2_i32 = arith.constant 2 : i32
    %c0_i32_2 = arith.constant 0 : i32
    %c0_i32_3 = arith.constant 0 : i32
    %4 = tpu.memref_slice %arg5[%c0_i32_0, %c0_i32_2, %c0_i32_3] : memref<2x256x1024xbf16, #tpu.memory_space<any>> -> memref<1x256x1024xbf16, #tpu.memory_space<any>>
    %5 = tpu.memref_squeeze %4 : memref<1x256x1024xbf16, #tpu.memory_space<any>> -> memref<256x1024xbf16, #tpu.memory_space<any>>
    %c0_i32_4 = arith.constant 0 : i32
    %c0_i32_5 = arith.constant 0 : i32
    %6 = tpu.memref_slice %arg10[%c0_i32_1, %c0_i32_4, %c0_i32_5] : memref<2x256x1024xbf16, #tpu.memory_space<vmem>> -> memref<1x256x1024xbf16, #tpu.memory_space<vmem>>
    %7 = tpu.memref_squeeze %6 : memref<1x256x1024xbf16, #tpu.memory_space<vmem>> -> memref<256x1024xbf16, #tpu.memory_space<vmem>>
    %8 = tpu.memref_slice %arg12[%c2_i32] : memref<8x!tpu.dma_semaphore, #tpu.memory_space<semaphore_mem>> -> memref<1x!tpu.dma_semaphore, #tpu.memory_space<semaphore_mem>>
    %9 = tpu.memref_squeeze %8 : memref<1x!tpu.dma_semaphore, #tpu.memory_space<semaphore_mem>> -> memref<!tpu.dma_semaphore, #tpu.memory_space<semaphore_mem>>
    tpu.enqueue_dma source(%5 : memref<256x1024xbf16, #tpu.memory_space<any>>) target(%7 : memref<256x1024xbf16, #tpu.memory_space<vmem>>) target_semaphore(%9 : memref<!tpu.dma_semaphore, #tpu.memory_space<semaphore_mem>>)
    %c1_i32_6 = arith.constant 1 : i32
    %c1_i32_7 = arith.constant 1 : i32
    %c3_i32 = arith.constant 3 : i32
    %c0_i32_8 = arith.constant 0 : i32
    %c0_i32_9 = arith.constant 0 : i32
    %10 = tpu.memref_slice %arg5[%c1_i32_6, %c0_i32_8, %c0_i32_9] : memref<2x256x1024xbf16, #tpu.memory_space<any>> -> memref<1x256x1024xbf16, #tpu.memory_space<any>>
    %11 = tpu.memref_squeeze %10 : memref<1x256x1024xbf16, #tpu.memory_space<any>> -> memref<256x1024xbf16, #tpu.memory_space<any>>
    %c0_i32_10 = arith.constant 0 : i32
    %c0_i32_11 = arith.constant 0 : i32
    %12 = tpu.memref_slice %arg10[%c1_i32_7, %c0_i32_10, %c0_i32_11] : memref<2x256x1024xbf16, #tpu.memory_space<vmem>> -> memref<1x256x1024xbf16, #tpu.memory_space<vmem>>
    %13 = tpu.memref_squeeze %12 : memref<1x256x1024xbf16, #tpu.memory_space<vmem>> -> memref<256x1024xbf16, #tpu.memory_space<vmem>>
    %14 = tpu.memref_slice %arg12[%c3_i32] : memref<8x!tpu.dma_semaphore, #tpu.memory_space<semaphore_mem>> -> memref<1x!tpu.dma_semaphore, #tpu.memory_space<semaphore_mem>>
    %15 = tpu.memref_squeeze %14 : memref<1x!tpu.dma_semaphore, #tpu.memory_space<semaphore_mem>> -> memref<!tpu.dma_semaphore, #tpu.memory_space<semaphore_mem>>
    tpu.enqueue_dma source(%11 : memref<256x1024xbf16, #tpu.memory_space<any>>) target(%13 : memref<256x1024xbf16, #tpu.memory_space<vmem>>) target_semaphore(%15 : memref<!tpu.dma_semaphore, #tpu.memory_space<semaphore_mem>>)
    %c0_i32_12 = arith.constant 0 : i32
    %c0_i32_13 = arith.constant 0 : i32
    %c4_i32 = arith.constant 4 : i32
    %c0_i32_14 = arith.constant 0 : i32
    %c0_i32_15 = arith.constant 0 : i32
    %16 = tpu.memref_slice %arg6[%c0_i32_12, %c0_i32_14, %c0_i32_15] : memref<4x256x896xbf16, #tpu.memory_space<any>> -> memref<1x256x896xbf16, #tpu.memory_space<any>>
    %17 = tpu.memref_squeeze %16 : memref<1x256x896xbf16, #tpu.memory_space<any>> -> memref<256x896xbf16, #tpu.memory_space<any>>
    %c0_i32_16 = arith.constant 0 : i32
    %c0_i32_17 = arith.constant 0 : i32
    %18 = tpu.memref_slice %arg11[%c0_i32_13, %c0_i32_16, %c0_i32_17] : memref<4x256x896xbf16, #tpu.memory_space<vmem>> -> memref<1x256x896xbf16, #tpu.memory_space<vmem>>
    %19 = tpu.memref_squeeze %18 : memref<1x256x896xbf16, #tpu.memory_space<vmem>> -> memref<256x896xbf16, #tpu.memory_space<vmem>>
    %20 = tpu.memref_slice %arg12[%c4_i32] : memref<8x!tpu.dma_semaphore, #tpu.memory_space<semaphore_mem>> -> memref<1x!tpu.dma_semaphore, #tpu.memory_space<semaphore_mem>>
    %21 = tpu.memref_squeeze %20 : memref<1x!tpu.dma_semaphore, #tpu.memory_space<semaphore_mem>> -> memref<!tpu.dma_semaphore, #tpu.memory_space<semaphore_mem>>
    tpu.enqueue_dma source(%17 : memref<256x896xbf16, #tpu.memory_space<any>>) target(%19 : memref<256x896xbf16, #tpu.memory_space<vmem>>) target_semaphore(%21 : memref<!tpu.dma_semaphore, #tpu.memory_space<semaphore_mem>>)
    %c1_i32_18 = arith.constant 1 : i32
    %c1_i32_19 = arith.constant 1 : i32
    %c5_i32 = arith.constant 5 : i32
    %c0_i32_20 = arith.constant 0 : i32
    %c0_i32_21 = arith.constant 0 : i32
    %22 = tpu.memref_slice %arg6[%c1_i32_18, %c0_i32_20, %c0_i32_21] : memref<4x256x896xbf16, #tpu.memory_space<any>> -> memref<1x256x896xbf16, #tpu.memory_space<any>>
    %23 = tpu.memref_squeeze %22 : memref<1x256x896xbf16, #tpu.memory_space<any>> -> memref<256x896xbf16, #tpu.memory_space<any>>
    %c0_i32_22 = arith.constant 0 : i32
    %c0_i32_23 = arith.constant 0 : i32
    %24 = tpu.memref_slice %arg11[%c1_i32_19, %c0_i32_22, %c0_i32_23] : memref<4x256x896xbf16, #tpu.memory_space<vmem>> -> memref<1x256x896xbf16, #tpu.memory_space<vmem>>
    %25 = tpu.memref_squeeze %24 : memref<1x256x896xbf16, #tpu.memory_space<vmem>> -> memref<256x896xbf16, #tpu.memory_space<vmem>>
    %26 = tpu.memref_slice %arg12[%c5_i32] : memref<8x!tpu.dma_semaphore, #tpu.memory_space<semaphore_mem>> -> memref<1x!tpu.dma_semaphore, #tpu.memory_space<semaphore_mem>>
    %27 = tpu.memref_squeeze %26 : memref<1x!tpu.dma_semaphore, #tpu.memory_space<semaphore_mem>> -> memref<!tpu.dma_semaphore, #tpu.memory_space<semaphore_mem>>
    tpu.enqueue_dma source(%23 : memref<256x896xbf16, #tpu.memory_space<any>>) target(%25 : memref<256x896xbf16, #tpu.memory_space<vmem>>) target_semaphore(%27 : memref<!tpu.dma_semaphore, #tpu.memory_space<semaphore_mem>>)
    %c2_i32_24 = arith.constant 2 : i32
    %c2_i32_25 = arith.constant 2 : i32
    %c6_i32 = arith.constant 6 : i32
    %c0_i32_26 = arith.constant 0 : i32
    %c0_i32_27 = arith.constant 0 : i32
    %28 = tpu.memref_slice %arg6[%c2_i32_24, %c0_i32_26, %c0_i32_27] : memref<4x256x896xbf16, #tpu.memory_space<any>> -> memref<1x256x896xbf16, #tpu.memory_space<any>>
    %29 = tpu.memref_squeeze %28 : memref<1x256x896xbf16, #tpu.memory_space<any>> -> memref<256x896xbf16, #tpu.memory_space<any>>
    %c0_i32_28 = arith.constant 0 : i32
    %c0_i32_29 = arith.constant 0 : i32
    %30 = tpu.memref_slice %arg11[%c2_i32_25, %c0_i32_28, %c0_i32_29] : memref<4x256x896xbf16, #tpu.memory_space<vmem>> -> memref<1x256x896xbf16, #tpu.memory_space<vmem>>
    %31 = tpu.memref_squeeze %30 : memref<1x256x896xbf16, #tpu.memory_space<vmem>> -> memref<256x896xbf16, #tpu.memory_space<vmem>>
    %32 = tpu.memref_slice %arg12[%c6_i32] : memref<8x!tpu.dma_semaphore, #tpu.memory_space<semaphore_mem>> -> memref<1x!tpu.dma_semaphore, #tpu.memory_space<semaphore_mem>>
    %33 = tpu.memref_squeeze %32 : memref<1x!tpu.dma_semaphore, #tpu.memory_space<semaphore_mem>> -> memref<!tpu.dma_semaphore, #tpu.memory_space<semaphore_mem>>
    tpu.enqueue_dma source(%29 : memref<256x896xbf16, #tpu.memory_space<any>>) target(%31 : memref<256x896xbf16, #tpu.memory_space<vmem>>) target_semaphore(%33 : memref<!tpu.dma_semaphore, #tpu.memory_space<semaphore_mem>>)
    %c3_i32_30 = arith.constant 3 : i32
    %c3_i32_31 = arith.constant 3 : i32
    %c7_i32 = arith.constant 7 : i32
    %c0_i32_32 = arith.constant 0 : i32
    %c0_i32_33 = arith.constant 0 : i32
    %34 = tpu.memref_slice %arg6[%c3_i32_30, %c0_i32_32, %c0_i32_33] : memref<4x256x896xbf16, #tpu.memory_space<any>> -> memref<1x256x896xbf16, #tpu.memory_space<any>>
    %35 = tpu.memref_squeeze %34 : memref<1x256x896xbf16, #tpu.memory_space<any>> -> memref<256x896xbf16, #tpu.memory_space<any>>
    %c0_i32_34 = arith.constant 0 : i32
    %c0_i32_35 = arith.constant 0 : i32
    %36 = tpu.memref_slice %arg11[%c3_i32_31, %c0_i32_34, %c0_i32_35] : memref<4x256x896xbf16, #tpu.memory_space<vmem>> -> memref<1x256x896xbf16, #tpu.memory_space<vmem>>
    %37 = tpu.memref_squeeze %36 : memref<1x256x896xbf16, #tpu.memory_space<vmem>> -> memref<256x896xbf16, #tpu.memory_space<vmem>>
    %38 = tpu.memref_slice %arg12[%c7_i32] : memref<8x!tpu.dma_semaphore, #tpu.memory_space<semaphore_mem>> -> memref<1x!tpu.dma_semaphore, #tpu.memory_space<semaphore_mem>>
    %39 = tpu.memref_squeeze %38 : memref<1x!tpu.dma_semaphore, #tpu.memory_space<semaphore_mem>> -> memref<!tpu.dma_semaphore, #tpu.memory_space<semaphore_mem>>
    tpu.enqueue_dma source(%35 : memref<256x896xbf16, #tpu.memory_space<any>>) target(%37 : memref<256x896xbf16, #tpu.memory_space<vmem>>) target_semaphore(%39 : memref<!tpu.dma_semaphore, #tpu.memory_space<semaphore_mem>>)
    %c0 = arith.constant 0 : index
    %c0_36 = arith.constant 0 : index
    %40 = vector.load %arg2[%c0, %c0_36] : memref<8x1024xf32, #tpu.memory_space<vmem>>, vector<1x128xf32>
    %c1 = arith.constant 1 : index
    %c0_37 = arith.constant 0 : index
    %41 = vector.load %arg2[%c1, %c0_37] : memref<8x1024xf32, #tpu.memory_space<vmem>>, vector<1x256xf32>
    %c2 = arith.constant 2 : index
    %c0_38 = arith.constant 0 : index
    %42 = vector.load %arg2[%c2, %c0_38] : memref<8x1024xf32, #tpu.memory_space<vmem>>, vector<1x256xf32>
    %c3 = arith.constant 3 : index
    %c0_39 = arith.constant 0 : index
    %43 = vector.load %arg2[%c3, %c0_39] : memref<8x1024xf32, #tpu.memory_space<vmem>>, vector<1x512xf32>
    %c4 = arith.constant 4 : index
    %c0_40 = arith.constant 0 : index
    %44 = vector.load %arg2[%c4, %c0_40] : memref<8x1024xf32, #tpu.memory_space<vmem>>, vector<1x512xf32>
    %c5 = arith.constant 5 : index
    %c0_41 = arith.constant 0 : index
    %45 = vector.load %arg2[%c5, %c0_41] : memref<8x1024xf32, #tpu.memory_space<vmem>>, vector<1x1024xf32>
    %c6 = arith.constant 6 : index
    %c0_42 = arith.constant 0 : index
    %46 = vector.load %arg2[%c6, %c0_42] : memref<8x1024xf32, #tpu.memory_space<vmem>>, vector<1x1024xf32>
    %c7 = arith.constant 7 : index
    %c0_43 = arith.constant 0 : index
    %47 = vector.load %arg2[%c7, %c0_43] : memref<8x1024xf32, #tpu.memory_space<vmem>>, vector<1x896xf32>
    %c0_44 = arith.constant 0 : index
    %c0_45 = arith.constant 0 : index
    %48 = vector.load %arg0[%c0_44, %c0_45] : memref<8x128xbf16, #tpu.memory_space<vmem>>, vector<8x128xbf16>
    %c0_46 = arith.constant 0 : index
    %c0_47 = arith.constant 0 : index
    %49 = vector.load %arg1[%c0_46, %c0_47] : memref<128x128xbf16, #tpu.memory_space<vmem>>, vector<128x128xbf16>
    %cst = arith.constant dense<0.000000e+00> : vector<8x128xf32>
    %50 = tpu.matmul %48, %49, %cst {dimension_numbers = #tpu.dot_dimension_numbers<[1], [0], [0], [1], [0, 0, 1, 1], [], []>} : vector<8x128xbf16>, vector<128x128xbf16>, vector<8x128xf32> -> vector<8x128xf32>
    %51 = vector.broadcast %40 : vector<1x128xf32> to vector<8x128xf32>
    %52 = arith.addf %50, %51 : vector<8x128xf32>
    %cst_48 = arith.constant 0.000000e+00 : f32
    %53 = vector.broadcast %cst_48 : f32 to vector<8x128xf32>
    %54 = arith.cmpf ogt, %52, %53 : vector<8x128xf32>
    %cst_49 = arith.constant 2.000000e-01 : f32
    %55 = vector.broadcast %cst_49 : f32 to vector<8x128xf32>
    %56 = arith.mulf %55, %52 : vector<8x128xf32>
    %57 = arith.select %54, %52, %56 : vector<8x128xi1>, vector<8x128xf32>
    %c0_i32_50 = arith.constant 0 : i32
    %58 = tpu.memref_slice %arg12[%c0_i32_50] : memref<8x!tpu.dma_semaphore, #tpu.memory_space<semaphore_mem>> -> memref<1x!tpu.dma_semaphore, #tpu.memory_space<semaphore_mem>>
    %59 = tpu.memref_squeeze %58 : memref<1x!tpu.dma_semaphore, #tpu.memory_space<semaphore_mem>> -> memref<!tpu.dma_semaphore, #tpu.memory_space<semaphore_mem>>
    tpu.wait_dma2 semaphore(%59 : memref<!tpu.dma_semaphore, #tpu.memory_space<semaphore_mem>>) src(%arg3 : memref<128x256xbf16, #tpu.memory_space<any>>) dst(%arg8 : memref<128x256xbf16, #tpu.memory_space<vmem>>)
    %60 = arith.truncf %57 : vector<8x128xf32> to vector<8x128xbf16>
    %c0_51 = arith.constant 0 : index
    %c0_52 = arith.constant 0 : index
    %61 = vector.load %arg8[%c0_51, %c0_52] : memref<128x256xbf16, #tpu.memory_space<vmem>>, vector<128x256xbf16>
    %cst_53 = arith.constant dense<0.000000e+00> : vector<8x256xf32>
    %62 = tpu.matmul %60, %61, %cst_53 {dimension_numbers = #tpu.dot_dimension_numbers<[1], [0], [0], [1], [0, 0, 1, 1], [], []>} : vector<8x128xbf16>, vector<128x256xbf16>, vector<8x256xf32> -> vector<8x256xf32>
    %cst_54 = arith.constant dense<0.000000e+00> : vector<256xf32>
    %63 = vector.multi_reduction <add>, %62, %cst_54 [0] : vector<8x256xf32> to vector<256xf32>
    %64 = vector.shape_cast %63 : vector<256xf32> to vector<1x256xf32>
    %cst_55 = arith.constant 8.000000e+00 : f32
    %65 = vector.broadcast %cst_55 : f32 to vector<1x256xf32>
    %66 = arith.divf %64, %65 : vector<1x256xf32>
    %67 = arith.mulf %62, %62 : vector<8x256xf32>
    %cst_56 = arith.constant dense<0.000000e+00> : vector<256xf32>
    %68 = vector.multi_reduction <add>, %67, %cst_56 [0] : vector<8x256xf32> to vector<256xf32>
    %69 = vector.shape_cast %68 : vector<256xf32> to vector<1x256xf32>
    %cst_57 = arith.constant 8.000000e+00 : f32
    %70 = vector.broadcast %cst_57 : f32 to vector<1x256xf32>
    %71 = arith.divf %69, %70 : vector<1x256xf32>
    %72 = arith.mulf %66, %66 : vector<1x256xf32>
    %73 = arith.subf %71, %72 : vector<1x256xf32>
    %cst_58 = arith.constant 0.000000e+00 : f32
    %74 = vector.broadcast %cst_58 : f32 to vector<1x256xf32>
    %75 = arith.maximumf %73, %74 : vector<1x256xf32>
    %cst_59 = arith.constant 9.99999974E-6 : f32
    %76 = vector.broadcast %cst_59 : f32 to vector<1x256xf32>
    %77 = arith.addf %75, %76 : vector<1x256xf32>
    %78 = math.rsqrt %77 : vector<1x256xf32>
    %79 = arith.mulf %41, %78 : vector<1x256xf32>
    %80 = arith.mulf %66, %79 : vector<1x256xf32>
    %81 = arith.subf %42, %80 : vector<1x256xf32>
    %82 = vector.broadcast %79 : vector<1x256xf32> to vector<8x256xf32>
    %83 = arith.mulf %62, %82 : vector<8x256xf32>
    %84 = vector.broadcast %81 : vector<1x256xf32> to vector<8x256xf32>
    %85 = arith.addf %83, %84 : vector<8x256xf32>
    %cst_60 = arith.constant 0.000000e+00 : f32
    %86 = vector.broadcast %cst_60 : f32 to vector<8x256xf32>
    %87 = arith.cmpf ogt, %85, %86 : vector<8x256xf32>
    %cst_61 = arith.constant 2.000000e-01 : f32
    %88 = vector.broadcast %cst_61 : f32 to vector<8x256xf32>
    %89 = arith.mulf %88, %85 : vector<8x256xf32>
    %90 = arith.select %87, %85, %89 : vector<8x256xi1>, vector<8x256xf32>
    %c1_i32_62 = arith.constant 1 : i32
    %91 = tpu.memref_slice %arg12[%c1_i32_62] : memref<8x!tpu.dma_semaphore, #tpu.memory_space<semaphore_mem>> -> memref<1x!tpu.dma_semaphore, #tpu.memory_space<semaphore_mem>>
    %92 = tpu.memref_squeeze %91 : memref<1x!tpu.dma_semaphore, #tpu.memory_space<semaphore_mem>> -> memref<!tpu.dma_semaphore, #tpu.memory_space<semaphore_mem>>
    tpu.wait_dma2 semaphore(%92 : memref<!tpu.dma_semaphore, #tpu.memory_space<semaphore_mem>>) src(%arg4 : memref<256x512xbf16, #tpu.memory_space<any>>) dst(%arg9 : memref<256x512xbf16, #tpu.memory_space<vmem>>)
    %93 = arith.truncf %90 : vector<8x256xf32> to vector<8x256xbf16>
    %c0_63 = arith.constant 0 : index
    %c0_64 = arith.constant 0 : index
    %94 = vector.load %arg9[%c0_63, %c0_64] : memref<256x512xbf16, #tpu.memory_space<vmem>>, vector<256x512xbf16>
    %cst_65 = arith.constant dense<0.000000e+00> : vector<8x512xf32>
    %95 = tpu.matmul %93, %94, %cst_65 {dimension_numbers = #tpu.dot_dimension_numbers<[1], [0], [0], [1], [0, 0, 1, 1], [], []>} : vector<8x256xbf16>, vector<256x512xbf16>, vector<8x512xf32> -> vector<8x512xf32>
    %cst_66 = arith.constant dense<0.000000e+00> : vector<512xf32>
    %96 = vector.multi_reduction <add>, %95, %cst_66 [0] : vector<8x512xf32> to vector<512xf32>
    %97 = vector.shape_cast %96 : vector<512xf32> to vector<1x512xf32>
    %cst_67 = arith.constant 8.000000e+00 : f32
    %98 = vector.broadcast %cst_67 : f32 to vector<1x512xf32>
    %99 = arith.divf %97, %98 : vector<1x512xf32>
    %100 = arith.mulf %95, %95 : vector<8x512xf32>
    %cst_68 = arith.constant dense<0.000000e+00> : vector<512xf32>
    %101 = vector.multi_reduction <add>, %100, %cst_68 [0] : vector<8x512xf32> to vector<512xf32>
    %102 = vector.shape_cast %101 : vector<512xf32> to vector<1x512xf32>
    %cst_69 = arith.constant 8.000000e+00 : f32
    %103 = vector.broadcast %cst_69 : f32 to vector<1x512xf32>
    %104 = arith.divf %102, %103 : vector<1x512xf32>
    %105 = arith.mulf %99, %99 : vector<1x512xf32>
    %106 = arith.subf %104, %105 : vector<1x512xf32>
    %cst_70 = arith.constant 0.000000e+00 : f32
    %107 = vector.broadcast %cst_70 : f32 to vector<1x512xf32>
    %108 = arith.maximumf %106, %107 : vector<1x512xf32>
    %cst_71 = arith.constant 9.99999974E-6 : f32
    %109 = vector.broadcast %cst_71 : f32 to vector<1x512xf32>
    %110 = arith.addf %108, %109 : vector<1x512xf32>
    %111 = math.rsqrt %110 : vector<1x512xf32>
    %112 = arith.mulf %43, %111 : vector<1x512xf32>
    %113 = arith.mulf %99, %112 : vector<1x512xf32>
    %114 = arith.subf %44, %113 : vector<1x512xf32>
    %115 = vector.broadcast %112 : vector<1x512xf32> to vector<8x512xf32>
    %116 = arith.mulf %95, %115 : vector<8x512xf32>
    %117 = vector.broadcast %114 : vector<1x512xf32> to vector<8x512xf32>
    %118 = arith.addf %116, %117 : vector<8x512xf32>
    %cst_72 = arith.constant 0.000000e+00 : f32
    %119 = vector.broadcast %cst_72 : f32 to vector<8x512xf32>
    %120 = arith.cmpf ogt, %118, %119 : vector<8x512xf32>
    %cst_73 = arith.constant 2.000000e-01 : f32
    %121 = vector.broadcast %cst_73 : f32 to vector<8x512xf32>
    %122 = arith.mulf %121, %118 : vector<8x512xf32>
    %123 = arith.select %120, %118, %122 : vector<8x512xi1>, vector<8x512xf32>
    %124 = arith.truncf %123 : vector<8x512xf32> to vector<8x512xbf16>
    %c0_i32_74 = arith.constant 0 : i32
    %c0_i32_75 = arith.constant 0 : i32
    %c2_i32_76 = arith.constant 2 : i32
    %c0_i32_77 = arith.constant 0 : i32
    %c0_i32_78 = arith.constant 0 : i32
    %125 = tpu.memref_slice %arg5[%c0_i32_74, %c0_i32_77, %c0_i32_78] : memref<2x256x1024xbf16, #tpu.memory_space<any>> -> memref<1x256x1024xbf16, #tpu.memory_space<any>>
    %126 = tpu.memref_squeeze %125 : memref<1x256x1024xbf16, #tpu.memory_space<any>> -> memref<256x1024xbf16, #tpu.memory_space<any>>
    %c0_i32_79 = arith.constant 0 : i32
    %c0_i32_80 = arith.constant 0 : i32
    %127 = tpu.memref_slice %arg10[%c0_i32_75, %c0_i32_79, %c0_i32_80] : memref<2x256x1024xbf16, #tpu.memory_space<vmem>> -> memref<1x256x1024xbf16, #tpu.memory_space<vmem>>
    %128 = tpu.memref_squeeze %127 : memref<1x256x1024xbf16, #tpu.memory_space<vmem>> -> memref<256x1024xbf16, #tpu.memory_space<vmem>>
    %129 = tpu.memref_slice %arg12[%c2_i32_76] : memref<8x!tpu.dma_semaphore, #tpu.memory_space<semaphore_mem>> -> memref<1x!tpu.dma_semaphore, #tpu.memory_space<semaphore_mem>>
    %130 = tpu.memref_squeeze %129 : memref<1x!tpu.dma_semaphore, #tpu.memory_space<semaphore_mem>> -> memref<!tpu.dma_semaphore, #tpu.memory_space<semaphore_mem>>
    tpu.wait_dma2 semaphore(%130 : memref<!tpu.dma_semaphore, #tpu.memory_space<semaphore_mem>>) src(%126 : memref<256x1024xbf16, #tpu.memory_space<any>>) dst(%128 : memref<256x1024xbf16, #tpu.memory_space<vmem>>)
    %131 = vector.extract_strided_slice %124 {offsets = [0, 0], sizes = [8, 256], strides = [1, 1]} : vector<8x512xbf16> to vector<8x256xbf16>
    %c0_81 = arith.constant 0 : index
    %c0_82 = arith.constant 0 : index
    %c0_83 = arith.constant 0 : index
    %132 = vector.load %arg10[%c0_81, %c0_82, %c0_83] : memref<2x256x1024xbf16, #tpu.memory_space<vmem>>, vector<1x256x1024xbf16>
    %133 = vector.shape_cast %132 : vector<1x256x1024xbf16> to vector<256x1024xbf16>
    %cst_84 = arith.constant dense<0.000000e+00> : vector<8x1024xf32>
    %134 = tpu.matmul %131, %133, %cst_84 {dimension_numbers = #tpu.dot_dimension_numbers<[1], [0], [0], [1], [0, 0, 1, 1], [], []>} : vector<8x256xbf16>, vector<256x1024xbf16>, vector<8x1024xf32> -> vector<8x1024xf32>
    %c1_i32_85 = arith.constant 1 : i32
    %c1_i32_86 = arith.constant 1 : i32
    %c3_i32_87 = arith.constant 3 : i32
    %c0_i32_88 = arith.constant 0 : i32
    %c0_i32_89 = arith.constant 0 : i32
    %135 = tpu.memref_slice %arg5[%c1_i32_85, %c0_i32_88, %c0_i32_89] : memref<2x256x1024xbf16, #tpu.memory_space<any>> -> memref<1x256x1024xbf16, #tpu.memory_space<any>>
    %136 = tpu.memref_squeeze %135 : memref<1x256x1024xbf16, #tpu.memory_space<any>> -> memref<256x1024xbf16, #tpu.memory_space<any>>
    %c0_i32_90 = arith.constant 0 : i32
    %c0_i32_91 = arith.constant 0 : i32
    %137 = tpu.memref_slice %arg10[%c1_i32_86, %c0_i32_90, %c0_i32_91] : memref<2x256x1024xbf16, #tpu.memory_space<vmem>> -> memref<1x256x1024xbf16, #tpu.memory_space<vmem>>
    %138 = tpu.memref_squeeze %137 : memref<1x256x1024xbf16, #tpu.memory_space<vmem>> -> memref<256x1024xbf16, #tpu.memory_space<vmem>>
    %139 = tpu.memref_slice %arg12[%c3_i32_87] : memref<8x!tpu.dma_semaphore, #tpu.memory_space<semaphore_mem>> -> memref<1x!tpu.dma_semaphore, #tpu.memory_space<semaphore_mem>>
    %140 = tpu.memref_squeeze %139 : memref<1x!tpu.dma_semaphore, #tpu.memory_space<semaphore_mem>> -> memref<!tpu.dma_semaphore, #tpu.memory_space<semaphore_mem>>
    tpu.wait_dma2 semaphore(%140 : memref<!tpu.dma_semaphore, #tpu.memory_space<semaphore_mem>>) src(%136 : memref<256x1024xbf16, #tpu.memory_space<any>>) dst(%138 : memref<256x1024xbf16, #tpu.memory_space<vmem>>)
    %141 = vector.extract_strided_slice %124 {offsets = [0, 256], sizes = [8, 256], strides = [1, 1]} : vector<8x512xbf16> to vector<8x256xbf16>
    %c1_92 = arith.constant 1 : index
    %c0_93 = arith.constant 0 : index
    %c0_94 = arith.constant 0 : index
    %142 = vector.load %arg10[%c1_92, %c0_93, %c0_94] : memref<2x256x1024xbf16, #tpu.memory_space<vmem>>, vector<1x256x1024xbf16>
    %143 = vector.shape_cast %142 : vector<1x256x1024xbf16> to vector<256x1024xbf16>
    %cst_95 = arith.constant dense<0.000000e+00> : vector<8x1024xf32>
    %144 = tpu.matmul %141, %143, %cst_95 {dimension_numbers = #tpu.dot_dimension_numbers<[1], [0], [0], [1], [0, 0, 1, 1], [], []>} : vector<8x256xbf16>, vector<256x1024xbf16>, vector<8x1024xf32> -> vector<8x1024xf32>
    %145 = arith.addf %134, %144 : vector<8x1024xf32>
    %cst_96 = arith.constant dense<0.000000e+00> : vector<1024xf32>
    %146 = vector.multi_reduction <add>, %145, %cst_96 [0] : vector<8x1024xf32> to vector<1024xf32>
    %147 = vector.shape_cast %146 : vector<1024xf32> to vector<1x1024xf32>
    %cst_97 = arith.constant 8.000000e+00 : f32
    %148 = vector.broadcast %cst_97 : f32 to vector<1x1024xf32>
    %149 = arith.divf %147, %148 : vector<1x1024xf32>
    %150 = arith.mulf %145, %145 : vector<8x1024xf32>
    %cst_98 = arith.constant dense<0.000000e+00> : vector<1024xf32>
    %151 = vector.multi_reduction <add>, %150, %cst_98 [0] : vector<8x1024xf32> to vector<1024xf32>
    %152 = vector.shape_cast %151 : vector<1024xf32> to vector<1x1024xf32>
    %cst_99 = arith.constant 8.000000e+00 : f32
    %153 = vector.broadcast %cst_99 : f32 to vector<1x1024xf32>
    %154 = arith.divf %152, %153 : vector<1x1024xf32>
    %155 = arith.mulf %149, %149 : vector<1x1024xf32>
    %156 = arith.subf %154, %155 : vector<1x1024xf32>
    %cst_100 = arith.constant 0.000000e+00 : f32
    %157 = vector.broadcast %cst_100 : f32 to vector<1x1024xf32>
    %158 = arith.maximumf %156, %157 : vector<1x1024xf32>
    %cst_101 = arith.constant 9.99999974E-6 : f32
    %159 = vector.broadcast %cst_101 : f32 to vector<1x1024xf32>
    %160 = arith.addf %158, %159 : vector<1x1024xf32>
    %161 = math.rsqrt %160 : vector<1x1024xf32>
    %162 = arith.mulf %45, %161 : vector<1x1024xf32>
    %163 = arith.mulf %149, %162 : vector<1x1024xf32>
    %164 = arith.subf %46, %163 : vector<1x1024xf32>
    %165 = vector.broadcast %162 : vector<1x1024xf32> to vector<8x1024xf32>
    %166 = arith.mulf %145, %165 : vector<8x1024xf32>
    %167 = vector.broadcast %164 : vector<1x1024xf32> to vector<8x1024xf32>
    %168 = arith.addf %166, %167 : vector<8x1024xf32>
    %cst_102 = arith.constant 0.000000e+00 : f32
    %169 = vector.broadcast %cst_102 : f32 to vector<8x1024xf32>
    %170 = arith.cmpf ogt, %168, %169 : vector<8x1024xf32>
    %cst_103 = arith.constant 2.000000e-01 : f32
    %171 = vector.broadcast %cst_103 : f32 to vector<8x1024xf32>
    %172 = arith.mulf %171, %168 : vector<8x1024xf32>
    %173 = arith.select %170, %168, %172 : vector<8x1024xi1>, vector<8x1024xf32>
    %174 = arith.truncf %173 : vector<8x1024xf32> to vector<8x1024xbf16>
    %c0_i32_104 = arith.constant 0 : i32
    %c0_i32_105 = arith.constant 0 : i32
    %c4_i32_106 = arith.constant 4 : i32
    %c0_i32_107 = arith.constant 0 : i32
    %c0_i32_108 = arith.constant 0 : i32
    %175 = tpu.memref_slice %arg6[%c0_i32_104, %c0_i32_107, %c0_i32_108] : memref<4x256x896xbf16, #tpu.memory_space<any>> -> memref<1x256x896xbf16, #tpu.memory_space<any>>
    %176 = tpu.memref_squeeze %175 : memref<1x256x896xbf16, #tpu.memory_space<any>> -> memref<256x896xbf16, #tpu.memory_space<any>>
    %c0_i32_109 = arith.constant 0 : i32
    %c0_i32_110 = arith.constant 0 : i32
    %177 = tpu.memref_slice %arg11[%c0_i32_105, %c0_i32_109, %c0_i32_110] : memref<4x256x896xbf16, #tpu.memory_space<vmem>> -> memref<1x256x896xbf16, #tpu.memory_space<vmem>>
    %178 = tpu.memref_squeeze %177 : memref<1x256x896xbf16, #tpu.memory_space<vmem>> -> memref<256x896xbf16, #tpu.memory_space<vmem>>
    %179 = tpu.memref_slice %arg12[%c4_i32_106] : memref<8x!tpu.dma_semaphore, #tpu.memory_space<semaphore_mem>> -> memref<1x!tpu.dma_semaphore, #tpu.memory_space<semaphore_mem>>
    %180 = tpu.memref_squeeze %179 : memref<1x!tpu.dma_semaphore, #tpu.memory_space<semaphore_mem>> -> memref<!tpu.dma_semaphore, #tpu.memory_space<semaphore_mem>>
    tpu.wait_dma2 semaphore(%180 : memref<!tpu.dma_semaphore, #tpu.memory_space<semaphore_mem>>) src(%176 : memref<256x896xbf16, #tpu.memory_space<any>>) dst(%178 : memref<256x896xbf16, #tpu.memory_space<vmem>>)
    %181 = vector.extract_strided_slice %174 {offsets = [0, 0], sizes = [8, 256], strides = [1, 1]} : vector<8x1024xbf16> to vector<8x256xbf16>
    %c0_111 = arith.constant 0 : index
    %c0_112 = arith.constant 0 : index
    %c0_113 = arith.constant 0 : index
    %182 = vector.load %arg11[%c0_111, %c0_112, %c0_113] : memref<4x256x896xbf16, #tpu.memory_space<vmem>>, vector<1x256x896xbf16>
    %183 = vector.shape_cast %182 : vector<1x256x896xbf16> to vector<256x896xbf16>
    %cst_114 = arith.constant dense<0.000000e+00> : vector<8x896xf32>
    %184 = tpu.matmul %181, %183, %cst_114 {dimension_numbers = #tpu.dot_dimension_numbers<[1], [0], [0], [1], [0, 0, 1, 1], [], []>} : vector<8x256xbf16>, vector<256x896xbf16>, vector<8x896xf32> -> vector<8x896xf32>
    %c1_i32_115 = arith.constant 1 : i32
    %c1_i32_116 = arith.constant 1 : i32
    %c5_i32_117 = arith.constant 5 : i32
    %c0_i32_118 = arith.constant 0 : i32
    %c0_i32_119 = arith.constant 0 : i32
    %185 = tpu.memref_slice %arg6[%c1_i32_115, %c0_i32_118, %c0_i32_119] : memref<4x256x896xbf16, #tpu.memory_space<any>> -> memref<1x256x896xbf16, #tpu.memory_space<any>>
    %186 = tpu.memref_squeeze %185 : memref<1x256x896xbf16, #tpu.memory_space<any>> -> memref<256x896xbf16, #tpu.memory_space<any>>
    %c0_i32_120 = arith.constant 0 : i32
    %c0_i32_121 = arith.constant 0 : i32
    %187 = tpu.memref_slice %arg11[%c1_i32_116, %c0_i32_120, %c0_i32_121] : memref<4x256x896xbf16, #tpu.memory_space<vmem>> -> memref<1x256x896xbf16, #tpu.memory_space<vmem>>
    %188 = tpu.memref_squeeze %187 : memref<1x256x896xbf16, #tpu.memory_space<vmem>> -> memref<256x896xbf16, #tpu.memory_space<vmem>>
    %189 = tpu.memref_slice %arg12[%c5_i32_117] : memref<8x!tpu.dma_semaphore, #tpu.memory_space<semaphore_mem>> -> memref<1x!tpu.dma_semaphore, #tpu.memory_space<semaphore_mem>>
    %190 = tpu.memref_squeeze %189 : memref<1x!tpu.dma_semaphore, #tpu.memory_space<semaphore_mem>> -> memref<!tpu.dma_semaphore, #tpu.memory_space<semaphore_mem>>
    tpu.wait_dma2 semaphore(%190 : memref<!tpu.dma_semaphore, #tpu.memory_space<semaphore_mem>>) src(%186 : memref<256x896xbf16, #tpu.memory_space<any>>) dst(%188 : memref<256x896xbf16, #tpu.memory_space<vmem>>)
    %191 = vector.extract_strided_slice %174 {offsets = [0, 256], sizes = [8, 256], strides = [1, 1]} : vector<8x1024xbf16> to vector<8x256xbf16>
    %c1_122 = arith.constant 1 : index
    %c0_123 = arith.constant 0 : index
    %c0_124 = arith.constant 0 : index
    %192 = vector.load %arg11[%c1_122, %c0_123, %c0_124] : memref<4x256x896xbf16, #tpu.memory_space<vmem>>, vector<1x256x896xbf16>
    %193 = vector.shape_cast %192 : vector<1x256x896xbf16> to vector<256x896xbf16>
    %cst_125 = arith.constant dense<0.000000e+00> : vector<8x896xf32>
    %194 = tpu.matmul %191, %193, %cst_125 {dimension_numbers = #tpu.dot_dimension_numbers<[1], [0], [0], [1], [0, 0, 1, 1], [], []>} : vector<8x256xbf16>, vector<256x896xbf16>, vector<8x896xf32> -> vector<8x896xf32>
    %195 = arith.addf %184, %194 : vector<8x896xf32>
    %c2_i32_126 = arith.constant 2 : i32
    %c2_i32_127 = arith.constant 2 : i32
    %c6_i32_128 = arith.constant 6 : i32
    %c0_i32_129 = arith.constant 0 : i32
    %c0_i32_130 = arith.constant 0 : i32
    %196 = tpu.memref_slice %arg6[%c2_i32_126, %c0_i32_129, %c0_i32_130] : memref<4x256x896xbf16, #tpu.memory_space<any>> -> memref<1x256x896xbf16, #tpu.memory_space<any>>
    %197 = tpu.memref_squeeze %196 : memref<1x256x896xbf16, #tpu.memory_space<any>> -> memref<256x896xbf16, #tpu.memory_space<any>>
    %c0_i32_131 = arith.constant 0 : i32
    %c0_i32_132 = arith.constant 0 : i32
    %198 = tpu.memref_slice %arg11[%c2_i32_127, %c0_i32_131, %c0_i32_132] : memref<4x256x896xbf16, #tpu.memory_space<vmem>> -> memref<1x256x896xbf16, #tpu.memory_space<vmem>>
    %199 = tpu.memref_squeeze %198 : memref<1x256x896xbf16, #tpu.memory_space<vmem>> -> memref<256x896xbf16, #tpu.memory_space<vmem>>
    %200 = tpu.memref_slice %arg12[%c6_i32_128] : memref<8x!tpu.dma_semaphore, #tpu.memory_space<semaphore_mem>> -> memref<1x!tpu.dma_semaphore, #tpu.memory_space<semaphore_mem>>
    %201 = tpu.memref_squeeze %200 : memref<1x!tpu.dma_semaphore, #tpu.memory_space<semaphore_mem>> -> memref<!tpu.dma_semaphore, #tpu.memory_space<semaphore_mem>>
    tpu.wait_dma2 semaphore(%201 : memref<!tpu.dma_semaphore, #tpu.memory_space<semaphore_mem>>) src(%197 : memref<256x896xbf16, #tpu.memory_space<any>>) dst(%199 : memref<256x896xbf16, #tpu.memory_space<vmem>>)
    %202 = vector.extract_strided_slice %174 {offsets = [0, 512], sizes = [8, 256], strides = [1, 1]} : vector<8x1024xbf16> to vector<8x256xbf16>
    %c2_133 = arith.constant 2 : index
    %c0_134 = arith.constant 0 : index
    %c0_135 = arith.constant 0 : index
    %203 = vector.load %arg11[%c2_133, %c0_134, %c0_135] : memref<4x256x896xbf16, #tpu.memory_space<vmem>>, vector<1x256x896xbf16>
    %204 = vector.shape_cast %203 : vector<1x256x896xbf16> to vector<256x896xbf16>
    %cst_136 = arith.constant dense<0.000000e+00> : vector<8x896xf32>
    %205 = tpu.matmul %202, %204, %cst_136 {dimension_numbers = #tpu.dot_dimension_numbers<[1], [0], [0], [1], [0, 0, 1, 1], [], []>} : vector<8x256xbf16>, vector<256x896xbf16>, vector<8x896xf32> -> vector<8x896xf32>
    %206 = arith.addf %195, %205 : vector<8x896xf32>
    %c3_i32_137 = arith.constant 3 : i32
    %c3_i32_138 = arith.constant 3 : i32
    %c7_i32_139 = arith.constant 7 : i32
    %c0_i32_140 = arith.constant 0 : i32
    %c0_i32_141 = arith.constant 0 : i32
    %207 = tpu.memref_slice %arg6[%c3_i32_137, %c0_i32_140, %c0_i32_141] : memref<4x256x896xbf16, #tpu.memory_space<any>> -> memref<1x256x896xbf16, #tpu.memory_space<any>>
    %208 = tpu.memref_squeeze %207 : memref<1x256x896xbf16, #tpu.memory_space<any>> -> memref<256x896xbf16, #tpu.memory_space<any>>
    %c0_i32_142 = arith.constant 0 : i32
    %c0_i32_143 = arith.constant 0 : i32
    %209 = tpu.memref_slice %arg11[%c3_i32_138, %c0_i32_142, %c0_i32_143] : memref<4x256x896xbf16, #tpu.memory_space<vmem>> -> memref<1x256x896xbf16, #tpu.memory_space<vmem>>
    %210 = tpu.memref_squeeze %209 : memref<1x256x896xbf16, #tpu.memory_space<vmem>> -> memref<256x896xbf16, #tpu.memory_space<vmem>>
    %211 = tpu.memref_slice %arg12[%c7_i32_139] : memref<8x!tpu.dma_semaphore, #tpu.memory_space<semaphore_mem>> -> memref<1x!tpu.dma_semaphore, #tpu.memory_space<semaphore_mem>>
    %212 = tpu.memref_squeeze %211 : memref<1x!tpu.dma_semaphore, #tpu.memory_space<semaphore_mem>> -> memref<!tpu.dma_semaphore, #tpu.memory_space<semaphore_mem>>
    tpu.wait_dma2 semaphore(%212 : memref<!tpu.dma_semaphore, #tpu.memory_space<semaphore_mem>>) src(%208 : memref<256x896xbf16, #tpu.memory_space<any>>) dst(%210 : memref<256x896xbf16, #tpu.memory_space<vmem>>)
    %213 = vector.extract_strided_slice %174 {offsets = [0, 768], sizes = [8, 256], strides = [1, 1]} : vector<8x1024xbf16> to vector<8x256xbf16>
    %c3_144 = arith.constant 3 : index
    %c0_145 = arith.constant 0 : index
    %c0_146 = arith.constant 0 : index
    %214 = vector.load %arg11[%c3_144, %c0_145, %c0_146] : memref<4x256x896xbf16, #tpu.memory_space<vmem>>, vector<1x256x896xbf16>
    %215 = vector.shape_cast %214 : vector<1x256x896xbf16> to vector<256x896xbf16>
    %cst_147 = arith.constant dense<0.000000e+00> : vector<8x896xf32>
    %216 = tpu.matmul %213, %215, %cst_147 {dimension_numbers = #tpu.dot_dimension_numbers<[1], [0], [0], [1], [0, 0, 1, 1], [], []>} : vector<8x256xbf16>, vector<256x896xbf16>, vector<8x896xf32> -> vector<8x896xf32>
    %217 = arith.addf %206, %216 : vector<8x896xf32>
    %218 = vector.broadcast %47 : vector<1x896xf32> to vector<8x896xf32>
    %219 = arith.addf %217, %218 : vector<8x896xf32>
    %220 = math.tanh %219 : vector<8x896xf32>
    %221 = vector.extract_strided_slice %220 {offsets = [0, 0], sizes = [8, 784], strides = [1, 1]} : vector<8x896xf32> to vector<8x784xf32>
    %c0_148 = arith.constant 0 : index
    %c0_149 = arith.constant 0 : index
    %222 = vector.load %arg7[%c0_148, %c0_149] : memref<8x784xf32, #tpu.memory_space<vmem>>, vector<8x784xf32>
    tpu.vector_store %arg7[%c0_148, %c0_149], %221 {strides = array<i32>} : memref<8x784xf32, #tpu.memory_space<vmem>>, vector<8x784xf32>,
    return
  }
}

</mosaic_0001>

<llo_original>
// kernel: generator_forward.1
$region0: #{generator_forward.1}
  #allocation0 [shape = 'u32[]', space=smem, size = 0x4, offset = 0x4, fixed_abs, tag = 'smem constant byte address 0x4 - core index']
  #allocation1 [shape = 'u32[72,128]{1,0:T(1,128)}', space=vmem, size = 0x9000, scoped, tag = 'internal scratch']
  #allocation2 [shape = 'bf16[128,256]{1,0:T(8,128)(2,1)}', space=vmem, size = 0x10000, scoped, tag = 'scratch operand']
  #allocation3 [shape = 'bf16[256,512]{1,0:T(8,128)(2,1)}', space=vmem, size = 0x40000, scoped, tag = 'scratch operand']
  #allocation4 [shape = 'bf16[2,256,1024]{2,1,0:T(8,128)(2,1)}', space=vmem, size = 0x100000, scoped, tag = 'scratch operand']
  #allocation5 [shape = 'bf16[4,256,896]{2,1,0:T(8,128)(2,1)}', space=vmem, size = 0x1c0000, scoped, tag = 'scratch operand']
  #allocation6 [shape = 's32[8]{0}', space=sflag, size = 0x20, scoped, tag = 'scratch operand']
  #allocation13 [shape = 's32[]', space=sflag, size = 0x4, offset = 0, fixed_abs, tag = 'sflag constant byte address 0x0 - dummy sync flag']
  #allocation14 [shape = 's32[]', space=sflag, size = 0x4, offset = 0, fixed_abs, tag = 'sflag constant byte address 0x0 - dummy sync flag']
  #allocation15 [shape = 'u32[]', space=smem, size = 0x4, offset = 0x44, fixed_abs, tag = 'smem constant byte address 0x44 - assertion arg 0']
  #allocation16 [shape = 'u32[]', space=smem, size = 0x4, offset = 0x48, fixed_abs, tag = 'smem constant byte address 0x48 - assertion arg 1']
  #allocation17 [shape = 's32[]', space=sflag, size = 0x4, offset = 0, fixed_abs, tag = 'sflag constant byte address 0x0 - dummy sync flag']
  #allocation18 [shape = 's32[]', space=sflag, size = 0x4, offset = 0, fixed_abs, tag = 'sflag constant byte address 0x0 - dummy sync flag']
  #allocation19 [shape = 's32[]', space=sflag, size = 0x4, offset = 0, fixed_abs, tag = 'sflag constant byte address 0x0 - dummy sync flag']
  #allocation20 [shape = 's32[]', space=sflag, size = 0x4, offset = 0, fixed_abs, tag = 'sflag constant byte address 0x0 - dummy sync flag']
  #allocation21 [shape = 's32[]', space=sflag, size = 0x4, offset = 0, fixed_abs, tag = 'sflag constant byte address 0x0 - dummy sync flag']
  #allocation22 [shape = 's32[]', space=sflag, size = 0x4, offset = 0, fixed_abs, tag = 'sflag constant byte address 0x0 - dummy sync flag']
  #allocation23 [shape = 's32[]', space=sflag, size = 0x4, offset = 0, fixed_abs, tag = 'sflag constant byte address 0x0 - dummy sync flag']
  #allocation24 [shape = 's32[]', space=sflag, size = 0x4, offset = 0, fixed_abs, tag = 'sflag constant byte address 0x0 - dummy sync flag']
  #allocation25 [shape = 's32[]', space=sflag, size = 0x4, offset = 0, fixed_abs, tag = 'sflag constant byte address 0x0 - dummy sync flag']
  #allocation26 [shape = 's32[]', space=sflag, size = 0x4, offset = 0, fixed_abs, tag = 'sflag constant byte address 0x0 - dummy sync flag']
  #allocation27 [shape = 's32[]', space=sflag, size = 0x4, offset = 0, fixed_abs, tag = 'sflag constant byte address 0x0 - dummy sync flag']
  #allocation28 [shape = 's32[]', space=sflag, size = 0x4, offset = 0, fixed_abs, tag = 'sflag constant byte address 0x0 - dummy sync flag']
  #allocation29 [shape = 's32[]', space=sflag, size = 0x4, offset = 0, fixed_abs, tag = 'sflag constant byte address 0x0 - dummy sync flag']
  #allocation30 [shape = 's32[]', space=sflag, size = 0x4, offset = 0, fixed_abs, tag = 'sflag constant byte address 0x0 - dummy sync flag']
  %s0 = inlined_call_operand.vmem [shape: bf16[8,128], index: 0, kind: input, shape index: {}]
  %s1 = inlined_call_operand.hbm [shape: bf16[128,128], index: 1, kind: input, shape index: {}]
  %s2 = inlined_call_operand.hbm [shape: f32[8,1024], index: 2, kind: input, shape index: {}]
  %s3 = inlined_call_operand.hbm [shape: bf16[128,256], index: 3, kind: input, shape index: {}]
  %s4 = inlined_call_operand.hbm [shape: bf16[256,512], index: 4, kind: input, shape index: {}]
  %s5 = inlined_call_operand.hbm [shape: bf16[2,256,1024], index: 5, kind: input, shape index: {}]
  %s6 = inlined_call_operand.hbm [shape: bf16[4,256,896], index: 6, kind: input, shape index: {}]
  %s7 = inlined_call_operand.hbm [shape: f32[8,784], index: 7, kind: output, shape index: {}]
  %s8 = sld [smem:[#allocation0]]
  $region62: #{generator_forward.1} parent=0
    _
  %s10 = ssub.s32 1, %s8
  %s11 = scalar_select 0, %s10, %s8
  $region1: #{generator_forward.1} parent=0
    #allocation7 [shape = 'u8[32768]{0}', space=vmem, size = 0x8000, scoped, tag = 'input window, operand 1, single buffered']
    #allocation8 [shape = 's32[1]{0}', space=sflag, size = 0x4, scoped, tag = 'scoped memory for generator_forward.1']
    #allocation9 [shape = 's32[1]{0}', space=sflag, size = 0x4, scoped, tag = 'scoped memory for generator_forward.1']
    #allocation10 [shape = 'u8[32768]{0}', space=vmem, size = 0x8000, scoped, tag = 'input window, operand 2, single buffered']
    #allocation11 [shape = 's32[1]{0}', space=sflag, size = 0x4, scoped, tag = 'scoped memory for generator_forward.1']
    #allocation12 [shape = 'u8[28672]{0}', space=vmem, size = 0x7000, scoped, tag = 'output window, operand 0, single buffered']
    %12 = vsyncpa [#allocation8], 0
    %13 = vsyncpa [#allocation11], 0
    %14 = vsyncpa [#allocation9], 0
    // Predicated region
    $region2: #{generator_forward.1} parent=1 // pred_check
      _
    $region3: #{generator_forward.1} parent=1 // pred_check_branch
      %16 = sbr.rel (0) target = $region5
    $region4: #{generator_forward.1} parent=1 // pred_region
      _
    $region5: #{generator_forward.1} parent=1 // pred_fallthru
      _
    // Predicated region
    $region6: #{generator_forward.1} parent=1 // pred_check
      _
    $region7: #{generator_forward.1} parent=1 // pred_check_branch
      %18 = sbr.rel (0) target = $region9
    $region8: #{generator_forward.1} parent=1 // pred_region
      %20 = vsyncadd [#allocation8], 0
      %s21 = sshll.u32 %s1, 4
      %s22 = int_to_ptr.hbm [resolvable:$true] %s21
      %s23 = sshll.u32 [#allocation7], 4
      %s24 = int_to_ptr.vmem [resolvable:$true] %s23
      %29 = dma.hbm_to_vmem [thread:$0]  %s22, 1024, %s24, [#allocation8], 64, 64, 4
    $region9: #{generator_forward.1} parent=1 // pred_fallthru
      _
    // Predicated region
    $region10: #{generator_forward.1} parent=1 // pred_check
      _
    $region11: #{generator_forward.1} parent=1 // pred_check_branch
      %31 = sbr.rel (0) target = $region13
    $region12: #{generator_forward.1} parent=1 // pred_region
      %33 = vsyncadd [#allocation11], 0
      %s35 = sshll.u32 %s2, 4
      %s36 = int_to_ptr.hbm [resolvable:$true] %s35
      %s37 = sshll.u32 [#allocation10], 4
      %s38 = int_to_ptr.vmem [resolvable:$true] %s37
      %40 = dma.hbm_to_vmem [thread:$0]  %s36, 1024, %s38, [#allocation11]
    $region13: #{generator_forward.1} parent=1 // pred_fallthru
      _
    // Predicated region
    $region14: #{generator_forward.1} parent=1 // pred_check
      _
    $region15: #{generator_forward.1} parent=1 // pred_check_branch
      %42 = sbr.rel (0) target = $region17
    $region16: #{generator_forward.1} parent=1 // pred_region
      %44 = dma.done [#allocation8], 1024
    $region17: #{generator_forward.1} parent=1 // pred_fallthru
      _
    // Predicated region
    $region18: #{generator_forward.1} parent=1 // pred_check
      _
    $region19: #{generator_forward.1} parent=1 // pred_check_branch
      %46 = sbr.rel (0) target = $region21
    $region20: #{generator_forward.1} parent=1 // pred_region
      %48 = dma.done [#allocation11], 1024
    $region21: #{generator_forward.1} parent=1 // pred_fallthru
      _
    // Predicated region
    $region22: #{generator_forward.1} parent=1 // pred_check
      _
    $region23: #{generator_forward.1} parent=1 // pred_check_branch
      %50 = sbr.rel target = $region25
    $region24: #{generator_forward.1} parent=1 // pred_region
      %51 = sst [smem:[#allocation15]] [#allocation14]
      %52 = sst [smem:[#allocation16]] [#allocation13]
    $region25: #{generator_forward.1} parent=1 // pred_fallthru
      _
    %54 = shalt.err (0)
    %s56 = sshll.u32 %s3, 4
    %s57 = int_to_ptr.hbm [resolvable:$true] %s56
    %s58 = sshll.u32 [#allocation2], 4
    %s59 = int_to_ptr.vmem [resolvable:$true] %s58
    %61 = dma.hbm_to_vmem [thread:$0]  %s57, 2048, %s59, [#allocation6]
    %s62 = scalar_lea.sflag [#allocation6], 1
    // Predicated region
    $region26: #{generator_forward.1} parent=1 // pred_check
      _
    $region27: #{generator_forward.1} parent=1 // pred_check_branch
      %64 = sbr.rel target = $region29
    $region28: #{generator_forward.1} parent=1 // pred_region
      %65 = sst [smem:[#allocation15]] [#allocation18]
      %66 = sst [smem:[#allocation16]] [#allocation17]
    $region29: #{generator_forward.1} parent=1 // pred_fallthru
      _
    %68 = shalt.err (0)
    %s70 = sshll.u32 %s4, 4
    %s71 = int_to_ptr.hbm [resolvable:$true] %s70
    %s72 = sshll.u32 [#allocation3], 4
    %s73 = int_to_ptr.vmem [resolvable:$true] %s72
    %75 = dma.hbm_to_vmem [thread:$0]  %s71, 8192, %s73, %s62
    %s76 = scalar_lea.sflag [#allocation6], 2
    // Predicated region
    $region30: #{generator_forward.1} parent=1 // pred_check
      _
    $region31: #{generator_forward.1} parent=1 // pred_check_branch
      %78 = sbr.rel target = $region33
    $region32: #{generator_forward.1} parent=1 // pred_region
      %79 = sst [smem:[#allocation15]] [#allocation20]
      %80 = sst [smem:[#allocation16]] [#allocation19]
    $region33: #{generator_forward.1} parent=1 // pred_fallthru
      _
    %82 = shalt.err (0)
    %s84 = sshll.u32 %s5, 4
    %s85 = int_to_ptr.hbm [resolvable:$true] %s84
    %s86 = sshll.u32 [#allocation4], 4
    %s87 = int_to_ptr.vmem [resolvable:$true] %s86
    %89 = dma.hbm_to_vmem [thread:$0]  %s85, 16384, %s87, %s76
    %s90 = scalar_lea.hbm %s5, 1024
    %s91 = scalar_lea.vmem [#allocation4], 1024
    %s92 = scalar_lea.sflag [#allocation6], 3
    // Predicated region
    $region34: #{generator_forward.1} parent=1 // pred_check
      _
    $region35: #{generator_forward.1} parent=1 // pred_check_branch
      %94 = sbr.rel target = $region37
    $region36: #{generator_forward.1} parent=1 // pred_region
      %95 = sst [smem:[#allocation15]] [#allocation22]
      %96 = sst [smem:[#allocation16]] [#allocation21]
    $region37: #{generator_forward.1} parent=1 // pred_fallthru
      _
    %98 = shalt.err (0)
    %s100 = sshll.u32 %s90, 4
    %s101 = int_to_ptr.hbm [resolvable:$true] %s100
    %s102 = sshll.u32 %s91, 4
    %s103 = int_to_ptr.vmem [resolvable:$true] %s102
    %105 = dma.hbm_to_vmem [thread:$0]  %s101, 16384, %s103, %s92
    %s106 = scalar_lea.sflag [#allocation6], 4
    // Predicated region
    $region38: #{generator_forward.1} parent=1 // pred_check
      _
    $region39: #{generator_forward.1} parent=1 // pred_check_branch
      %108 = sbr.rel target = $region41
    $region40: #{generator_forward.1} parent=1 // pred_region
      %109 = sst [smem:[#allocation15]] [#allocation24]
      %110 = sst [smem:[#allocation16]] [#allocation23]
    $region41: #{generator_forward.1} parent=1 // pred_fallthru
      _
    %112 = shalt.err (0)
    %s114 = sshll.u32 %s6, 4
    %s115 = int_to_ptr.hbm [resolvable:$true] %s114
    %s116 = sshll.u32 [#allocation5], 4
    %s117 = int_to_ptr.vmem [resolvable:$true] %s116
    %119 = dma.hbm_to_vmem [thread:$0]  %s115, 14336, %s117, %s106
    %s120 = scalar_lea.hbm %s6, 896
    %s121 = scalar_lea.vmem [#allocation5], 896
    %s122 = scalar_lea.sflag [#allocation6], 5
    // Predicated region
    $region42: #{generator_forward.1} parent=1 // pred_check
      _
    $region43: #{generator_forward.1} parent=1 // pred_check_branch
      %124 = sbr.rel target = $region45
    $region44: #{generator_forward.1} parent=1 // pred_region
      %125 = sst [smem:[#allocation15]] [#allocation26]
      %126 = sst [smem:[#allocation16]] [#allocation25]
    $region45: #{generator_forward.1} parent=1 // pred_fallthru
      _
    %128 = shalt.err (0)
    %s130 = sshll.u32 %s120, 4
    %s131 = int_to_ptr.hbm [resolvable:$true] %s130
    %s132 = sshll.u32 %s121, 4
    %s133 = int_to_ptr.vmem [resolvable:$true] %s132
    %135 = dma.hbm_to_vmem [thread:$0]  %s131, 14336, %s133, %s122
    %s136 = scalar_lea.hbm %s6, 1792
    %s137 = scalar_lea.vmem [#allocation5], 1792
    %s138 = scalar_lea.sflag [#allocation6], 6
    // Predicated region
    $region46: #{generator_forward.1} parent=1 // pred_check
      _
    $region47: #{generator_forward.1} parent=1 // pred_check_branch
      %140 = sbr.rel target = $region49
    $region48: #{generator_forward.1} parent=1 // pred_region
      %141 = sst [smem:[#allocation15]] [#allocation28]
      %142 = sst [smem:[#allocation16]] [#allocation27]
    $region49: #{generator_forward.1} parent=1 // pred_fallthru
      _
    %144 = shalt.err (0)
    %s146 = sshll.u32 %s136, 4
    %s147 = int_to_ptr.hbm [resolvable:$true] %s146
    %s148 = sshll.u32 %s137, 4
    %s149 = int_to_ptr.vmem [resolvable:$true] %s148
    %151 = dma.hbm_to_vmem [thread:$0]  %s147, 14336, %s149, %s138
    %s152 = scalar_lea.hbm %s6, 2688
    %s153 = scalar_lea.vmem [#allocation5], 2688
    %s154 = scalar_lea.sflag [#allocation6], 7
    // Predicated region
    $region50: #{generator_forward.1} parent=1 // pred_check
      _
    $region51: #{generator_forward.1} parent=1 // pred_check_branch
      %156 = sbr.rel target = $region53
    $region52: #{generator_forward.1} parent=1 // pred_region
      %157 = sst [smem:[#allocation15]] [#allocation30]
      %158 = sst [smem:[#allocation16]] [#allocation29]
    $region53: #{generator_forward.1} parent=1 // pred_fallthru
      _
    %160 = shalt.err (0)
    %s162 = sshll.u32 %s152, 4
    %s163 = int_to_ptr.hbm [resolvable:$true] %s162
    %s164 = sshll.u32 %s153, 4
    %s165 = int_to_ptr.vmem [resolvable:$true] %s164
    %167 = dma.hbm_to_vmem [thread:$0]  %s163, 14336, %s165, %s154
    %v168 = vld [vmem:[#allocation10] ss:$0 sm:$0xff]
    %s169 = scalar_lea.vmem [#allocation10], 1
    %v170 = vld [vmem:[%s169] ss:$8 sm:$0x3]
    %s171 = scalar_lea.vmem [#allocation10], 2
    %v172 = vld [vmem:[%s171] ss:$8 sm:$0x3]
    %s173 = scalar_lea.vmem [#allocation10], 3
    %v174 = vld [vmem:[%s173] ss:$8 sm:$0xf]
    %s175 = scalar_lea.vmem [#allocation10], 4
    %v176 = vld [vmem:[%s175] ss:$8 sm:$0xf]
    %s177 = scalar_lea.vmem [#allocation10], 5
    %v178 = vld [vmem:[%s177] ss:$8 sm:$0xf]
    %v179 = vld [vmem:[%s177] ss:$8 sm:$0xf0]
    %v180 = vor.u32 %v178, %v179
    %s181 = scalar_lea.vmem [#allocation10], 6
    %v182 = vld [vmem:[%s181] ss:$8 sm:$0xf]
    %v183 = vld [vmem:[%s181] ss:$8 sm:$0xf0]
    %v184 = vor.u32 %v182, %v183
    %s185 = scalar_lea.vmem [#allocation10], 7
    %v186 = vld [vmem:[%s185] ss:$8 sm:$0xf]
    %v187 = vld [vmem:[%s185] ss:$8 sm:$0xf0]
    %v188 = vor.u32 %v186, %v187
    %v189 = vld [vmem:[%s0] sm:$0xf]
    %v190 = vld [vmem:[#allocation7] sm:$0xf]
    %v191 = vld [vmem:[#allocation7 + $0x4] sm:$0xf]
    %v192 = vld [vmem:[#allocation7 + $0x8] sm:$0xf]
    %v193 = vld [vmem:[#allocation7 + $0xc] sm:$0xf]
    %v194 = vld [vmem:[#allocation7 + $0x10] sm:$0xf]
    %v195 = vld [vmem:[#allocation7 + $0x14] sm:$0xf]
    %v196 = vld [vmem:[#allocation7 + $0x18] sm:$0xf]
    %v197 = vld [vmem:[#allocation7 + $0x1c] sm:$0xf]
    %v198 = vld [vmem:[#allocation7 + $0x20] sm:$0xf]
    %v199 = vld [vmem:[#allocation7 + $0x24] sm:$0xf]
    %v200 = vld [vmem:[#allocation7 + $0x28] sm:$0xf]
    %v201 = vld [vmem:[#allocation7 + $0x2c] sm:$0xf]
    %v202 = vld [vmem:[#allocation7 + $0x30] sm:$0xf]
    %v203 = vld [vmem:[#allocation7 + $0x34] sm:$0xf]
    %v204 = vld [vmem:[#allocation7 + $0x38] sm:$0xf]
    %v205 = vld [vmem:[#allocation7 + $0x3c] sm:$0xf]
    %v222 = vunpack.c.l.b16 %v190
    %v223 = vunpack.c.l.b16 %v191
    %v224 = vunpack.c.l.b16 %v192
    %v225 = vunpack.c.l.b16 %v193
    %v226 = vunpack.c.l.b16 %v194
    %v227 = vunpack.c.l.b16 %v195
    %v228 = vunpack.c.l.b16 %v196
    %v229 = vunpack.c.l.b16 %v197
    %v230 = vunpack.c.l.b16 %v198
    %v231 = vunpack.c.l.b16 %v199
    %v232 = vunpack.c.l.b16 %v200
    %v233 = vunpack.c.l.b16 %v201
    %v234 = vunpack.c.l.b16 %v202
    %v235 = vunpack.c.l.b16 %v203
    %v236 = vunpack.c.l.b16 %v204
    %v237 = vunpack.c.l.b16 %v205
    %v238 = vpack.c.b16 %v223, %v222
    %v239 = vpack.c.b16 %v225, %v224
    %v240 = vpack.c.b16 %v227, %v226
    %v241 = vpack.c.b16 %v229, %v228
    %v242 = vpack.c.b16 %v231, %v230
    %v243 = vpack.c.b16 %v233, %v232
    %v244 = vpack.c.b16 %v235, %v234
    %v245 = vpack.c.b16 %v237, %v236
    %254 = vmatpush.bf16.msra.mxu0 %v245
    %255 = vmatpush.bf16.msra.mxu0 %v244
    %256 = vmatpush.bf16.msra.mxu0 %v243
    %257 = vmatpush.bf16.msra.mxu0 %v242
    %258 = vmatpush.bf16.msra.mxu0 %v241
    %259 = vmatpush.bf16.msra.mxu0 %v240
    %260 = vmatpush.bf16.msra.mxu0 %v239
    %261 = vmatpush.bf16.msra.mxu0 %v238
    %262 = vmatmul.bf16.gmra.mxu0 %v189
    %v263 = vpop.f32.mrf.mxu0
    %v264 = vadd.f32 %v168, %v263
    %v265 = vpop.f32.mrf.mxu0
    %266 = vdwg.mxu0
    %vm267 = vcmp.gt.f32.partialorder %v264, 0.0
    %v268 = vmul.f32 %v264, 0.2
    %v269 = vsel %vm267, %v264, %v268
    %s270 = smul.u32 4, 16
    %s271 = smul.u32 %s270, 2
    %s272 = sshll.u32 %s271, 4
    %273 = dma.done [#allocation6], %s272
    %v274 = vpack.c.bf16 %v269, %v269
    %v275 = vld [vmem:[#allocation2] sm:$0xff]
    %v276 = vld [vmem:[#allocation2 + $0x8] sm:$0xff]
    %v277 = vld [vmem:[#allocation2 + $0x10] sm:$0xff]
    %v278 = vld [vmem:[#allocation2 + $0x18] sm:$0xff]
    %v279 = vld [vmem:[#allocation2 + $0x20] sm:$0xff]
    %v280 = vld [vmem:[#allocation2 + $0x28] sm:$0xff]
    %v281 = vld [vmem:[#allocation2 + $0x30] sm:$0xff]
    %v282 = vld [vmem:[#allocation2 + $0x38] sm:$0xff]
    %v283 = vld [vmem:[#allocation2 + $0x40] sm:$0xff]
    %v284 = vld [vmem:[#allocation2 + $0x48] sm:$0xff]
    %v285 = vld [vmem:[#allocation2 + $0x50] sm:$0xff]
    %v286 = vld [vmem:[#allocation2 + $0x58] sm:$0xff]
    %v287 = vld [vmem:[#allocation2 + $0x60] sm:$0xff]
    %v288 = vld [vmem:[#allocation2 + $0x68] sm:$0xff]
    %v289 = vld [vmem:[#allocation2 + $0x70] sm:$0xff]
    %v290 = vld [vmem:[#allocation2 + $0x78] sm:$0xff]
    %v307 = vunpack.c.l.b16 %v275
    %v308 = vunpack.c.h.b16 %v275
    %v309 = vunpack.c.l.b16 %v276
    %v310 = vunpack.c.h.b16 %v276
    %v311 = vunpack.c.l.b16 %v277
    %v312 = vunpack.c.h.b16 %v277
    %v313 = vunpack.c.l.b16 %v278
    %v314 = vunpack.c.h.b16 %v278
    %v315 = vunpack.c.l.b16 %v279
    %v316 = vunpack.c.h.b16 %v279
    %v317 = vunpack.c.l.b16 %v280
    %v318 = vunpack.c.h.b16 %v280
    %v319 = vunpack.c.l.b16 %v281
    %v320 = vunpack.c.h.b16 %v281
    %v321 = vunpack.c.l.b16 %v282
    %v322 = vunpack.c.h.b16 %v282
    %v323 = vunpack.c.l.b16 %v283
    %v324 = vunpack.c.h.b16 %v283
    %v325 = vunpack.c.l.b16 %v284
    %v326 = vunpack.c.h.b16 %v284
    %v327 = vunpack.c.l.b16 %v285
    %v328 = vunpack.c.h.b16 %v285
    %v329 = vunpack.c.l.b16 %v286
    %v330 = vunpack.c.h.b16 %v286
    %v331 = vunpack.c.l.b16 %v287
    %v332 = vunpack.c.h.b16 %v287
    %v333 = vunpack.c.l.b16 %v288
    %v334 = vunpack.c.h.b16 %v288
    %v335 = vunpack.c.l.b16 %v289
    %v336 = vunpack.c.h.b16 %v289
    %v337 = vunpack.c.l.b16 %v290
    %v338 = vunpack.c.h.b16 %v290
    %v339 = vpack.c.b16 %v309, %v307
    %v340 = vpack.c.b16 %v310, %v308
    %v341 = vpack.c.b16 %v313, %v311
    %v342 = vpack.c.b16 %v314, %v312
    %v343 = vpack.c.b16 %v317, %v315
    %v344 = vpack.c.b16 %v318, %v316
    %v345 = vpack.c.b16 %v321, %v319
    %v346 = vpack.c.b16 %v322, %v320
    %v347 = vpack.c.b16 %v325, %v323
    %v348 = vpack.c.b16 %v326, %v324
    %v349 = vpack.c.b16 %v329, %v327
    %v350 = vpack.c.b16 %v330, %v328
    %v351 = vpack.c.b16 %v333, %v331
    %v352 = vpack.c.b16 %v334, %v332
    %v353 = vpack.c.b16 %v337, %v335
    %v354 = vpack.c.b16 %v338, %v336
    %371 = vmatpush.bf16.msra.mxu0 %v353
    %372 = vmatpush.bf16.msra.mxu0 %v351
    %373 = vmatpush.bf16.msra.mxu0 %v349
    %374 = vmatpush.bf16.msra.mxu0 %v347
    %375 = vmatpush.bf16.msra.mxu0 %v345
    %376 = vmatpush.bf16.msra.mxu0 %v343
    %377 = vmatpush.bf16.msra.mxu0 %v341
    %378 = vmatpush.bf16.msra.mxu0 %v339
    %379 = vmatmul.bf16.gmra.mxu0 %v274
    %v380 = vpop.f32.mrf.mxu0
    %v381 = vadd.f32 0.0, %v380
    %v382 = vpop.f32.mrf.mxu0
    %383 = vdwg.mxu0
    %384 = vmatpush.bf16.msra.mxu0 %v354
    %385 = vmatpush.bf16.msra.mxu0 %v352
    %386 = vmatpush.bf16.msra.mxu0 %v350
    %387 = vmatpush.bf16.msra.mxu0 %v348
    %388 = vmatpush.bf16.msra.mxu0 %v346
    %389 = vmatpush.bf16.msra.mxu0 %v344
    %390 = vmatpush.bf16.msra.mxu0 %v342
    %391 = vmatpush.bf16.msra.mxu0 %v340
    %392 = vmatmul.bf16.gmra.mxu0 %v274
    %v393 = vpop.f32.mrf.mxu0
    %v394 = vadd.f32 0.0, %v393
    %v395 = vpop.f32.mrf.mxu0
    %396 = vdwg.mxu0
    %v397 = vrot.slane %v381, 4
    %v398 = vadd.f32 %v381, %v397
    %v399 = vrot.slane %v398, 2
    %v400 = vadd.f32 %v398, %v399
    %v401 = vrot.slane %v400, 1
    %v402 = vadd.f32 %v400, %v401
    %v403 = vrot.slane %v394, 4
    %v404 = vadd.f32 %v394, %v403
    %v405 = vrot.slane %v404, 2
    %v406 = vadd.f32 %v404, %v405
    %v407 = vrot.slane %v406, 1
    %v408 = vadd.f32 %v406, %v407
    %v409 = vrcp.pop 8.0
    %v410 = vmul.f32 8.0, %v409
    %v411 = vsub.f32 1.0, %v410
    %v412 = vmul.f32 %v409, %v411
    %v413 = vadd.f32 %v409, %v412
    %vm414 = vweird.f32 %v409
    %v415 = vsel %vm414, %v409, %v413
    %v416 = vmul.f32 %v402, %v415
    %v417 = vmul.f32 %v408, %v415
    %v418 = vmul.f32 %v381, %v381
    %v419 = vmul.f32 %v394, %v394
    %v420 = vrot.slane %v418, 4
    %v421 = vadd.f32 %v418, %v420
    %v422 = vrot.slane %v421, 2
    %v423 = vadd.f32 %v421, %v422
    %v424 = vrot.slane %v423, 1
    %v425 = vadd.f32 %v423, %v424
    %v426 = vrot.slane %v419, 4
    %v427 = vadd.f32 %v419, %v426
    %v428 = vrot.slane %v427, 2
    %v429 = vadd.f32 %v427, %v428
    %v430 = vrot.slane %v429, 1
    %v431 = vadd.f32 %v429, %v430
    %v432 = vmul.f32 %v425, %v415
    %v433 = vmul.f32 %v431, %v415
    %v434 = vmul.f32 %v416, %v416
    %v435 = vmul.f32 %v417, %v417
    %v436 = vsub.f32 %v432, %v434
    %v437 = vsub.f32 %v433, %v435
    %v438 = vmax.f32 %v436, 0.0
    %v439 = vmax.f32 %v437, 0.0
    %v440 = vadd.f32 %v438, 1e-05
    %v441 = vadd.f32 %v439, 1e-05
    %v442 = vrsqrt.pop %v440
    %v443 = vmul.f32 %v442, %v440
    %v444 = vmul.f32 %v443, %v442
    %v445 = vmul.f32 0.5, %v444
    %v446 = vsub.f32 1.5, %v445
    %v447 = vmul.f32 %v442, %v446
    %vm448 = vweird.f32 %v440
    %vm449 = vweird.f32 %v442
    %vm450 = vmor %vm448, %vm449
    %v451 = vsel %vm450, %v442, %v447
    %v452 = vrsqrt.pop %v441
    %v453 = vmul.f32 %v452, %v441
    %v454 = vmul.f32 %v453, %v452
    %v455 = vmul.f32 0.5, %v454
    %v456 = vsub.f32 1.5, %v455
    %v457 = vmul.f32 %v452, %v456
    %vm458 = vweird.f32 %v441
    %vm459 = vweird.f32 %v452
    %vm460 = vmor %vm458, %vm459
    %v461 = vsel %vm460, %v452, %v457
    %v464 = vrot.slane %v461, 7
    %vm465 = vcmask 1040384
    %v466 = vsel %vm465, %v451, %v464
    %v468 = vmul.f32 %v170, %v466
    %v470 = vperm.slane %v468, 0
    %v471 = vperm.slane %v468, 1
    %v474 = vmul.f32 %v416, %v470
    %v475 = vmul.f32 %v417, %v471
    %v478 = vrot.slane %v475, 7
    %v479 = vsel %vm465, %v474, %v478
    %v481 = vsub.f32 %v172, %v479
    %v482 = vmul.f32 %v381, %v470
    %v483 = vmul.f32 %v394, %v471
    %v485 = vperm.slane %v481, 0
    %v486 = vperm.slane %v481, 1
    %v489 = vadd.f32 %v482, %v485
    %v490 = vadd.f32 %v483, %v486
    %vm491 = vcmp.gt.f32.partialorder %v489, 0.0
    %vm492 = vcmp.gt.f32.partialorder %v490, 0.0
    %v493 = vmul.f32 %v489, 0.2
    %v494 = vmul.f32 %v490, 0.2
    %v495 = vsel %vm491, %v489, %v493
    %v496 = vsel %vm492, %v490, %v494
    %s497 = smul.u32 4, 32
    %s498 = smul.u32 %s497, 4
    %s499 = sshll.u32 %s498, 4
    %500 = dma.done %s62, %s499
    %v501 = vpack.c.bf16 %v495, %v495
    %v502 = vpack.c.bf16 %v496, %v496
    %v503 = vld [vmem:[#allocation3] sm:$0xff]
    %v504 = vld [vmem:[#allocation3 + $0x8] sm:$0xff]
    %v505 = vld [vmem:[#allocation3 + $0x10] sm:$0xff]
    %v506 = vld [vmem:[#allocation3 + $0x18] sm:$0xff]
    %v507 = vld [vmem:[#allocation3 + $0x20] sm:$0xff]
    %v508 = vld [vmem:[#allocation3 + $0x28] sm:$0xff]
    %v509 = vld [vmem:[#allocation3 + $0x30] sm:$0xff]
    %v510 = vld [vmem:[#allocation3 + $0x38] sm:$0xff]
    %v511 = vld [vmem:[#allocation3 + $0x40] sm:$0xff]
    %v512 = vld [vmem:[#allocation3 + $0x48] sm:$0xff]
    %v513 = vld [vmem:[#allocation3 + $0x50] sm:$0xff]
    %v514 = vld [vmem:[#allocation3 + $0x58] sm:$0xff]
    %v515 = vld [vmem:[#allocation3 + $0x60] sm:$0xff]
    %v516 = vld [vmem:[#allocation3 + $0x68] sm:$0xff]
    %v517 = vld [vmem:[#allocation3 + $0x70] sm:$0xff]
    %v518 = vld [vmem:[#allocation3 + $0x78] sm:$0xff]
    %v519 = vld [vmem:[#allocation3 + $0x80] sm:$0xff]
    %v520 = vld [vmem:[#allocation3 + $0x88] sm:$0xff]
    %v521 = vld [vmem:[#allocation3 + $0x90] sm:$0xff]
    %v522 = vld [vmem:[#allocation3 + $0x98] sm:$0xff]
    %v523 = vld [vmem:[#allocation3 + $0xa0] sm:$0xff]
    %v524 = vld [vmem:[#allocation3 + $0xa8] sm:$0xff]
    %v525 = vld [vmem:[#allocation3 + $0xb0] sm:$0xff]
    %v526 = vld [vmem:[#allocation3 + $0xb8] sm:$0xff]
    %v527 = vld [vmem:[#allocation3 + $0xc0] sm:$0xff]
    %v528 = vld [vmem:[#allocation3 + $0xc8] sm:$0xff]
    %v529 = vld [vmem:[#allocation3 + $0xd0] sm:$0xff]
    %v530 = vld [vmem:[#allocation3 + $0xd8] sm:$0xff]
    %v531 = vld [vmem:[#allocation3 + $0xe0] sm:$0xff]
    %v532 = vld [vmem:[#allocation3 + $0xe8] sm:$0xff]
    %v533 = vld [vmem:[#allocation3 + $0xf0] sm:$0xff]
    %v534 = vld [vmem:[#allocation3 + $0xf8] sm:$0xff]
    %v535 = vld [vmem:[#allocation3 + $0x100] sm:$0xff]
    %v536 = vld [vmem:[#allocation3 + $0x108] sm:$0xff]
    %v537 = vld [vmem:[#allocation3 + $0x110] sm:$0xff]
    %v538 = vld [vmem:[#allocation3 + $0x118] sm:$0xff]
    %v539 = vld [vmem:[#allocation3 + $0x120] sm:$0xff]
    %v540 = vld [vmem:[#allocation3 + $0x128] sm:$0xff]
    %v541 = vld [vmem:[#allocation3 + $0x130] sm:$0xff]
    %v542 = vld [vmem:[#allocation3 + $0x138] sm:$0xff]
    %v543 = vld [vmem:[#allocation3 + $0x140] sm:$0xff]
    %v544 = vld [vmem:[#allocation3 + $0x148] sm:$0xff]
    %v545 = vld [vmem:[#allocation3 + $0x150] sm:$0xff]
    %v546 = vld [vmem:[#allocation3 + $0x158] sm:$0xff]
    %v547 = vld [vmem:[#allocation3 + $0x160] sm:$0xff]
    %v548 = vld [vmem:[#allocation3 + $0x168] sm:$0xff]
    %v549 = vld [vmem:[#allocation3 + $0x170] sm:$0xff]
    %v550 = vld [vmem:[#allocation3 + $0x178] sm:$0xff]
    %v551 = vld [vmem:[#allocation3 + $0x180] sm:$0xff]
    %v552 = vld [vmem:[#allocation3 + $0x188] sm:$0xff]
    %v553 = vld [vmem:[#allocation3 + $0x190] sm:$0xff]
    %v554 = vld [vmem:[#allocation3 + $0x198] sm:$0xff]
    %v555 = vld [vmem:[#allocation3 + $0x1a0] sm:$0xff]
    %v556 = vld [vmem:[#allocation3 + $0x1a8] sm:$0xff]
    %v557 = vld [vmem:[#allocation3 + $0x1b0] sm:$0xff]
    %v558 = vld [vmem:[#allocation3 + $0x1b8] sm:$0xff]
    %v559 = vld [vmem:[#allocation3 + $0x1c0] sm:$0xff]
    %v560 = vld [vmem:[#allocation3 + $0x1c8] sm:$0xff]
    %v561 = vld [vmem:[#allocation3 + $0x1d0] sm:$0xff]
    %v562 = vld [vmem:[#allocation3 + $0x1d8] sm:$0xff]
    %v563 = vld [vmem:[#allocation3 + $0x1e0] sm:$0xff]
    %v564 = vld [vmem:[#allocation3 + $0x1e8] sm:$0xff]
    %v565 = vld [vmem:[#allocation3 + $0x1f0] sm:$0xff]
    %v566 = vld [vmem:[#allocation3 + $0x1f8] sm:$0xff]
    %v631 = vunpack.c.l.b16 %v503
    %v632 = vunpack.c.h.b16 %v503
    %v633 = vunpack.c.l.b16 %v504
    %v634 = vunpack.c.h.b16 %v504
    %v635 = vunpack.c.l.b16 %v505
    %v636 = vunpack.c.h.b16 %v505
    %v637 = vunpack.c.l.b16 %v506
    %v638 = vunpack.c.h.b16 %v506
    %v639 = vunpack.c.l.b16 %v507
    %v640 = vunpack.c.h.b16 %v507
    %v641 = vunpack.c.l.b16 %v508
    %v642 = vunpack.c.h.b16 %v508
    %v643 = vunpack.c.l.b16 %v509
    %v644 = vunpack.c.h.b16 %v509
    %v645 = vunpack.c.l.b16 %v510
    %v646 = vunpack.c.h.b16 %v510
    %v647 = vunpack.c.l.b16 %v511
    %v648 = vunpack.c.h.b16 %v511
    %v649 = vunpack.c.l.b16 %v512
    %v650 = vunpack.c.h.b16 %v512
    %v651 = vunpack.c.l.b16 %v513
    %v652 = vunpack.c.h.b16 %v513
    %v653 = vunpack.c.l.b16 %v514
    %v654 = vunpack.c.h.b16 %v514
    %v655 = vunpack.c.l.b16 %v515
    %v656 = vunpack.c.h.b16 %v515
    %v657 = vunpack.c.l.b16 %v516
    %v658 = vunpack.c.h.b16 %v516
    %v659 = vunpack.c.l.b16 %v517
    %v660 = vunpack.c.h.b16 %v517
    %v661 = vunpack.c.l.b16 %v518
    %v662 = vunpack.c.h.b16 %v518
    %v663 = vunpack.c.l.b16 %v519
    %v664 = vunpack.c.h.b16 %v519
    %v665 = vunpack.c.l.b16 %v520
    %v666 = vunpack.c.h.b16 %v520
    %v667 = vunpack.c.l.b16 %v521
    %v668 = vunpack.c.h.b16 %v521
    %v669 = vunpack.c.l.b16 %v522
    %v670 = vunpack.c.h.b16 %v522
    %v671 = vunpack.c.l.b16 %v523
    %v672 = vunpack.c.h.b16 %v523
    %v673 = vunpack.c.l.b16 %v524
    %v674 = vunpack.c.h.b16 %v524
    %v675 = vunpack.c.l.b16 %v525
    %v676 = vunpack.c.h.b16 %v525
    %v677 = vunpack.c.l.b16 %v526
    %v678 = vunpack.c.h.b16 %v526
    %v679 = vunpack.c.l.b16 %v527
    %v680 = vunpack.c.h.b16 %v527
    %v681 = vunpack.c.l.b16 %v528
    %v682 = vunpack.c.h.b16 %v528
    %v683 = vunpack.c.l.b16 %v529
    %v684 = vunpack.c.h.b16 %v529
    %v685 = vunpack.c.l.b16 %v530
    %v686 = vunpack.c.h.b16 %v530
    %v687 = vunpack.c.l.b16 %v531
    %v688 = vunpack.c.h.b16 %v531
    %v689 = vunpack.c.l.b16 %v532
    %v690 = vunpack.c.h.b16 %v532
    %v691 = vunpack.c.l.b16 %v533
    %v692 = vunpack.c.h.b16 %v533
    %v693 = vunpack.c.l.b16 %v534
    %v694 = vunpack.c.h.b16 %v534
    %v695 = vunpack.c.l.b16 %v535
    %v696 = vunpack.c.h.b16 %v535
    %v697 = vunpack.c.l.b16 %v536
    %v698 = vunpack.c.h.b16 %v536
    %v699 = vunpack.c.l.b16 %v537
    %v700 = vunpack.c.h.b16 %v537
    %v701 = vunpack.c.l.b16 %v538
    %v702 = vunpack.c.h.b16 %v538
    %v703 = vunpack.c.l.b16 %v539
    %v704 = vunpack.c.h.b16 %v539
    %v705 = vunpack.c.l.b16 %v540
    %v706 = vunpack.c.h.b16 %v540
    %v707 = vunpack.c.l.b16 %v541
    %v708 = vunpack.c.h.b16 %v541
    %v709 = vunpack.c.l.b16 %v542
    %v710 = vunpack.c.h.b16 %v542
    %v711 = vunpack.c.l.b16 %v543
    %v712 = vunpack.c.h.b16 %v543
    %v713 = vunpack.c.l.b16 %v544
    %v714 = vunpack.c.h.b16 %v544
    %v715 = vunpack.c.l.b16 %v545
    %v716 = vunpack.c.h.b16 %v545
    %v717 = vunpack.c.l.b16 %v546
    %v718 = vunpack.c.h.b16 %v546
    %v719 = vunpack.c.l.b16 %v547
    %v720 = vunpack.c.h.b16 %v547
    %v721 = vunpack.c.l.b16 %v548
    %v722 = vunpack.c.h.b16 %v548
    %v723 = vunpack.c.l.b16 %v549
    %v724 = vunpack.c.h.b16 %v549
    %v725 = vunpack.c.l.b16 %v550
    %v726 = vunpack.c.h.b16 %v550
    %v727 = vunpack.c.l.b16 %v551
    %v728 = vunpack.c.h.b16 %v551
    %v729 = vunpack.c.l.b16 %v552
    %v730 = vunpack.c.h.b16 %v552
    %v731 = vunpack.c.l.b16 %v553
    %v732 = vunpack.c.h.b16 %v553
    %v733 = vunpack.c.l.b16 %v554
    %v734 = vunpack.c.h.b16 %v554
    %v735 = vunpack.c.l.b16 %v555
    %v736 = vunpack.c.h.b16 %v555
    %v737 = vunpack.c.l.b16 %v556
    %v738 = vunpack.c.h.b16 %v556
    %v739 = vunpack.c.l.b16 %v557
    %v740 = vunpack.c.h.b16 %v557
    %v741 = vunpack.c.l.b16 %v558
    %v742 = vunpack.c.h.b16 %v558
    %v743 = vunpack.c.l.b16 %v559
    %v744 = vunpack.c.h.b16 %v559
    %v745 = vunpack.c.l.b16 %v560
    %v746 = vunpack.c.h.b16 %v560
    %v747 = vunpack.c.l.b16 %v561
    %v748 = vunpack.c.h.b16 %v561
    %v749 = vunpack.c.l.b16 %v562
    %v750 = vunpack.c.h.b16 %v562
    %v751 = vunpack.c.l.b16 %v563
    %v752 = vunpack.c.h.b16 %v563
    %v753 = vunpack.c.l.b16 %v564
    %v754 = vunpack.c.h.b16 %v564
    %v755 = vunpack.c.l.b16 %v565
    %v756 = vunpack.c.h.b16 %v565
    %v757 = vunpack.c.l.b16 %v566
    %v758 = vunpack.c.h.b16 %v566
    %v759 = vpack.c.b16 %v635, %v631
    %v760 = vpack.c.b16 %v636, %v632
    %v761 = vpack.c.b16 %v637, %v633
    %v762 = vpack.c.b16 %v638, %v634
    %v763 = vpack.c.b16 %v643, %v639
    %v764 = vpack.c.b16 %v644, %v640
    %v765 = vpack.c.b16 %v645, %v641
    %v766 = vpack.c.b16 %v646, %v642
    %v767 = vpack.c.b16 %v651, %v647
    %v768 = vpack.c.b16 %v652, %v648
    %v769 = vpack.c.b16 %v653, %v649
    %v770 = vpack.c.b16 %v654, %v650
    %v771 = vpack.c.b16 %v659, %v655
    %v772 = vpack.c.b16 %v660, %v656
    %v773 = vpack.c.b16 %v661, %v657
    %v774 = vpack.c.b16 %v662, %v658
    %v775 = vpack.c.b16 %v667, %v663
    %v776 = vpack.c.b16 %v668, %v664
    %v777 = vpack.c.b16 %v669, %v665
    %v778 = vpack.c.b16 %v670, %v666
    %v779 = vpack.c.b16 %v675, %v671
    %v780 = vpack.c.b16 %v676, %v672
    %v781 = vpack.c.b16 %v677, %v673
    %v782 = vpack.c.b16 %v678, %v674
    %v783 = vpack.c.b16 %v683, %v679
    %v784 = vpack.c.b16 %v684, %v680
    %v785 = vpack.c.b16 %v685, %v681
    %v786 = vpack.c.b16 %v686, %v682
    %v787 = vpack.c.b16 %v691, %v687
    %v788 = vpack.c.b16 %v692, %v688
    %v789 = vpack.c.b16 %v693, %v689
    %v790 = vpack.c.b16 %v694, %v690
    %v791 = vpack.c.b16 %v699, %v695
    %v792 = vpack.c.b16 %v700, %v696
    %v793 = vpack.c.b16 %v701, %v697
    %v794 = vpack.c.b16 %v702, %v698
    %v795 = vpack.c.b16 %v707, %v703
    %v796 = vpack.c.b16 %v708, %v704
    %v797 = vpack.c.b16 %v709, %v705
    %v798 = vpack.c.b16 %v710, %v706
    %v799 = vpack.c.b16 %v715, %v711
    %v800 = vpack.c.b16 %v716, %v712
    %v801 = vpack.c.b16 %v717, %v713
    %v802 = vpack.c.b16 %v718, %v714
    %v803 = vpack.c.b16 %v723, %v719
    %v804 = vpack.c.b16 %v724, %v720
    %v805 = vpack.c.b16 %v725, %v721
    %v806 = vpack.c.b16 %v726, %v722
    %v807 = vpack.c.b16 %v731, %v727
    %v808 = vpack.c.b16 %v732, %v728
    %v809 = vpack.c.b16 %v733, %v729
    %v810 = vpack.c.b16 %v734, %v730
    %v811 = vpack.c.b16 %v739, %v735
    %v812 = vpack.c.b16 %v740, %v736
    %v813 = vpack.c.b16 %v741, %v737
    %v814 = vpack.c.b16 %v742, %v738
    %v815 = vpack.c.b16 %v747, %v743
    %v816 = vpack.c.b16 %v748, %v744
    %v817 = vpack.c.b16 %v749, %v745
    %v818 = vpack.c.b16 %v750, %v746
    %v819 = vpack.c.b16 %v755, %v751
    %v820 = vpack.c.b16 %v756, %v752
    %v821 = vpack.c.b16 %v757, %v753
    %v822 = vpack.c.b16 %v758, %v754
    %887 = vmatpush.bf16.msra.mxu0 %v787
    %888 = vmatpush.bf16.msra.mxu0 %v783
    %889 = vmatpush.bf16.msra.mxu0 %v779
    %890 = vmatpush.bf16.msra.mxu0 %v775
    %891 = vmatpush.bf16.msra.mxu0 %v771
    %892 = vmatpush.bf16.msra.mxu0 %v767
    %893 = vmatpush.bf16.msra.mxu0 %v763
    %894 = vmatpush.bf16.msra.mxu0 %v759
    %895 = vmatmul.bf16.gmra.mxu0 %v501
    %v896 = vpop.f32.mrf.mxu0
    %v897 = vadd.f32 0.0, %v896
    %v898 = vpop.f32.mrf.mxu0
    %899 = vdwg.mxu0
    %900 = vmatpush.bf16.msra.mxu0 %v819
    %901 = vmatpush.bf16.msra.mxu0 %v815
    %902 = vmatpush.bf16.msra.mxu0 %v811
    %903 = vmatpush.bf16.msra.mxu0 %v807
    %904 = vmatpush.bf16.msra.mxu0 %v803
    %905 = vmatpush.bf16.msra.mxu0 %v799
    %906 = vmatpush.bf16.msra.mxu0 %v795
    %907 = vmatpush.bf16.msra.mxu0 %v791
    %908 = vmatmul.bf16.gmra.mxu0 %v502
    %v909 = vpop.f32.mrf.mxu0
    %v910 = vadd.f32 %v897, %v909
    %v911 = vpop.f32.mrf.mxu0
    %912 = vdwg.mxu0
    %913 = vmatpush.bf16.msra.mxu0 %v788
    %914 = vmatpush.bf16.msra.mxu0 %v784
    %915 = vmatpush.bf16.msra.mxu0 %v780
    %916 = vmatpush.bf16.msra.mxu0 %v776
    %917 = vmatpush.bf16.msra.mxu0 %v772
    %918 = vmatpush.bf16.msra.mxu0 %v768
    %919 = vmatpush.bf16.msra.mxu0 %v764
    %920 = vmatpush.bf16.msra.mxu0 %v760
    %921 = vmatmul.bf16.gmra.mxu0 %v501
    %v922 = vpop.f32.mrf.mxu0
    %v923 = vadd.f32 0.0, %v922
    %v924 = vpop.f32.mrf.mxu0
    %925 = vdwg.mxu0
    %926 = vmatpush.bf16.msra.mxu0 %v820
    %927 = vmatpush.bf16.msra.mxu0 %v816
    %928 = vmatpush.bf16.msra.mxu0 %v812
    %929 = vmatpush.bf16.msra.mxu0 %v808
    %930 = vmatpush.bf16.msra.mxu0 %v804
    %931 = vmatpush.bf16.msra.mxu0 %v800
    %932 = vmatpush.bf16.msra.mxu0 %v796
    %933 = vmatpush.bf16.msra.mxu0 %v792
    %934 = vmatmul.bf16.gmra.mxu0 %v502
    %v935 = vpop.f32.mrf.mxu0
    %v936 = vadd.f32 %v923, %v935
    %v937 = vpop.f32.mrf.mxu0
    %938 = vdwg.mxu0
    %939 = vmatpush.bf16.msra.mxu0 %v789
    %940 = vmatpush.bf16.msra.mxu0 %v785
    %941 = vmatpush.bf16.msra.mxu0 %v781
    %942 = vmatpush.bf16.msra.mxu0 %v777
    %943 = vmatpush.bf16.msra.mxu0 %v773
    %944 = vmatpush.bf16.msra.mxu0 %v769
    %945 = vmatpush.bf16.msra.mxu0 %v765
    %946 = vmatpush.bf16.msra.mxu0 %v761
    %947 = vmatmul.bf16.gmra.mxu0 %v501
    %v948 = vpop.f32.mrf.mxu0
    %v949 = vadd.f32 0.0, %v948
    %v950 = vpop.f32.mrf.mxu0
    %951 = vdwg.mxu0
    %952 = vmatpush.bf16.msra.mxu0 %v821
    %953 = vmatpush.bf16.msra.mxu0 %v817
    %954 = vmatpush.bf16.msra.mxu0 %v813
    %955 = vmatpush.bf16.msra.mxu0 %v809
    %956 = vmatpush.bf16.msra.mxu0 %v805
    %957 = vmatpush.bf16.msra.mxu0 %v801
    %958 = vmatpush.bf16.msra.mxu0 %v797
    %959 = vmatpush.bf16.msra.mxu0 %v793
    %960 = vmatmul.bf16.gmra.mxu0 %v502
    %v961 = vpop.f32.mrf.mxu0
    %v962 = vadd.f32 %v949, %v961
    %v963 = vpop.f32.mrf.mxu0
    %964 = vdwg.mxu0
    %965 = vmatpush.bf16.msra.mxu0 %v790
    %966 = vmatpush.bf16.msra.mxu0 %v786
    %967 = vmatpush.bf16.msra.mxu0 %v782
    %968 = vmatpush.bf16.msra.mxu0 %v778
    %969 = vmatpush.bf16.msra.mxu0 %v774
    %970 = vmatpush.bf16.msra.mxu0 %v770
    %971 = vmatpush.bf16.msra.mxu0 %v766
    %972 = vmatpush.bf16.msra.mxu0 %v762
    %973 = vmatmul.bf16.gmra.mxu0 %v501
    %v974 = vpop.f32.mrf.mxu0
    %v975 = vadd.f32 0.0, %v974
    %v976 = vpop.f32.mrf.mxu0
    %977 = vdwg.mxu0
    %978 = vmatpush.bf16.msra.mxu0 %v822
    %979 = vmatpush.bf16.msra.mxu0 %v818
    %980 = vmatpush.bf16.msra.mxu0 %v814
    %981 = vmatpush.bf16.msra.mxu0 %v810
    %982 = vmatpush.bf16.msra.mxu0 %v806
    %983 = vmatpush.bf16.msra.mxu0 %v802
    %984 = vmatpush.bf16.msra.mxu0 %v798
    %985 = vmatpush.bf16.msra.mxu0 %v794
    %986 = vmatmul.bf16.gmra.mxu0 %v502
    %v987 = vpop.f32.mrf.mxu0
    %v988 = vadd.f32 %v975, %v987
    %v989 = vpop.f32.mrf.mxu0
    %990 = vdwg.mxu0
    %v991 = vrot.slane %v910, 4
    %v992 = vadd.f32 %v910, %v991
    %v993 = vrot.slane %v992, 2
    %v994 = vadd.f32 %v992, %v993
    %v995 = vrot.slane %v994, 1
    %v996 = vadd.f32 %v994, %v995
    %v997 = vrot.slane %v936, 4
    %v998 = vadd.f32 %v936, %v997
    %v999 = vrot.slane %v998, 2
    %v1000 = vadd.f32 %v998, %v999
    %v1001 = vrot.slane %v1000, 1
    %v1002 = vadd.f32 %v1000, %v1001
    %v1003 = vrot.slane %v962, 4
    %v1004 = vadd.f32 %v962, %v1003
    %v1005 = vrot.slane %v1004, 2
    %v1006 = vadd.f32 %v1004, %v1005
    %v1007 = vrot.slane %v1006, 1
    %v1008 = vadd.f32 %v1006, %v1007
    %v1009 = vrot.slane %v988, 4
    %v1010 = vadd.f32 %v988, %v1009
    %v1011 = vrot.slane %v1010, 2
    %v1012 = vadd.f32 %v1010, %v1011
    %v1013 = vrot.slane %v1012, 1
    %v1014 = vadd.f32 %v1012, %v1013
    %v1015 = vmul.f32 %v996, %v415
    %v1016 = vmul.f32 %v1002, %v415
    %v1017 = vmul.f32 %v1008, %v415
    %v1018 = vmul.f32 %v1014, %v415
    %v1019 = vmul.f32 %v910, %v910
    %v1020 = vmul.f32 %v936, %v936
    %v1021 = vmul.f32 %v962, %v962
    %v1022 = vmul.f32 %v988, %v988
    %v1023 = vrot.slane %v1019, 4
    %v1024 = vadd.f32 %v1019, %v1023
    %v1025 = vrot.slane %v1024, 2
    %v1026 = vadd.f32 %v1024, %v1025
    %v1027 = vrot.slane %v1026, 1
    %v1028 = vadd.f32 %v1026, %v1027
    %v1029 = vrot.slane %v1020, 4
    %v1030 = vadd.f32 %v1020, %v1029
    %v1031 = vrot.slane %v1030, 2
    %v1032 = vadd.f32 %v1030, %v1031
    %v1033 = vrot.slane %v1032, 1
    %v1034 = vadd.f32 %v1032, %v1033
    %v1035 = vrot.slane %v1021, 4
    %v1036 = vadd.f32 %v1021, %v1035
    %v1037 = vrot.slane %v1036, 2
    %v1038 = vadd.f32 %v1036, %v1037
    %v1039 = vrot.slane %v1038, 1
    %v1040 = vadd.f32 %v1038, %v1039
    %v1041 = vrot.slane %v1022, 4
    %v1042 = vadd.f32 %v1022, %v1041
    %v1043 = vrot.slane %v1042, 2
    %v1044 = vadd.f32 %v1042, %v1043
    %v1045 = vrot.slane %v1044, 1
    %v1046 = vadd.f32 %v1044, %v1045
    %v1047 = vmul.f32 %v1028, %v415
    %v1048 = vmul.f32 %v1034, %v415
    %v1049 = vmul.f32 %v1040, %v415
    %v1050 = vmul.f32 %v1046, %v415
    %v1051 = vmul.f32 %v1015, %v1015
    %v1052 = vmul.f32 %v1016, %v1016
    %v1053 = vmul.f32 %v1017, %v1017
    %v1054 = vmul.f32 %v1018, %v1018
    %v1055 = vsub.f32 %v1047, %v1051
    %v1056 = vsub.f32 %v1048, %v1052
    %v1057 = vsub.f32 %v1049, %v1053
    %v1058 = vsub.f32 %v1050, %v1054
    %v1059 = vmax.f32 %v1055, 0.0
    %v1060 = vmax.f32 %v1056, 0.0
    %v1061 = vmax.f32 %v1057, 0.0
    %v1062 = vmax.f32 %v1058, 0.0
    %v1063 = vadd.f32 %v1059, 1e-05
    %v1064 = vadd.f32 %v1060, 1e-05
    %v1065 = vadd.f32 %v1061, 1e-05
    %v1066 = vadd.f32 %v1062, 1e-05
    %v1067 = vrsqrt.pop %v1063
    %v1068 = vmul.f32 %v1067, %v1063
    %v1069 = vmul.f32 %v1068, %v1067
    %v1070 = vmul.f32 0.5, %v1069
    %v1071 = vsub.f32 1.5, %v1070
    %v1072 = vmul.f32 %v1067, %v1071
    %vm1073 = vweird.f32 %v1063
    %vm1074 = vweird.f32 %v1067
    %vm1075 = vmor %vm1073, %vm1074
    %v1076 = vsel %vm1075, %v1067, %v1072
    %v1077 = vrsqrt.pop %v1064
    %v1078 = vmul.f32 %v1077, %v1064
    %v1079 = vmul.f32 %v1078, %v1077
    %v1080 = vmul.f32 0.5, %v1079
    %v1081 = vsub.f32 1.5, %v1080
    %v1082 = vmul.f32 %v1077, %v1081
    %vm1083 = vweird.f32 %v1064
    %vm1084 = vweird.f32 %v1077
    %vm1085 = vmor %vm1083, %vm1084
    %v1086 = vsel %vm1085, %v1077, %v1082
    %v1087 = vrsqrt.pop %v1065
    %v1088 = vmul.f32 %v1087, %v1065
    %v1089 = vmul.f32 %v1088, %v1087
    %v1090 = vmul.f32 0.5, %v1089
    %v1091 = vsub.f32 1.5, %v1090
    %v1092 = vmul.f32 %v1087, %v1091
    %vm1093 = vweird.f32 %v1065
    %vm1094 = vweird.f32 %v1087
    %vm1095 = vmor %vm1093, %vm1094
    %v1096 = vsel %vm1095, %v1087, %v1092
    %v1097 = vrsqrt.pop %v1066
    %v1098 = vmul.f32 %v1097, %v1066
    %v1099 = vmul.f32 %v1098, %v1097
    %v1100 = vmul.f32 0.5, %v1099
    %v1101 = vsub.f32 1.5, %v1100
    %v1102 = vmul.f32 %v1097, %v1101
    %vm1103 = vweird.f32 %v1066
    %vm1104 = vweird.f32 %v1097
    %vm1105 = vmor %vm1103, %vm1104
    %v1106 = vsel %vm1105, %v1097, %v1102
    %v1111 = vrot.slane %v1086, 7
    %v1112 = vrot.slane %v1096, 6
    %v1113 = vrot.slane %v1106, 5
    %v1114 = vsel %vm465, %v1076, %v1111
    %vm1115 = vcmask 1042434
    %v1116 = vsel %vm1115, %v1112, %v1113
    %vm1117 = vcmask 1041408
    %v1118 = vsel %vm1117, %v1114, %v1116
    %v1120 = vmul.f32 %v174, %v1118
    %v1122 = vperm.slane %v1120, 0
    %v1123 = vperm.slane %v1120, 1
    %v1124 = vperm.slane %v1120, 2
    %v1125 = vperm.slane %v1120, 3
    %v1130 = vmul.f32 %v1015, %v1122
    %v1131 = vmul.f32 %v1016, %v1123
    %v1132 = vmul.f32 %v1017, %v1124
    %v1133 = vmul.f32 %v1018, %v1125
    %v1138 = vrot.slane %v1131, 7
    %v1139 = vrot.slane %v1132, 6
    %v1140 = vrot.slane %v1133, 5
    %v1141 = vsel %vm465, %v1130, %v1138
    %v1142 = vsel %vm1115, %v1139, %v1140
    %v1143 = vsel %vm1117, %v1141, %v1142
    %v1145 = vsub.f32 %v176, %v1143
    %v1146 = vmul.f32 %v910, %v1122
    %v1147 = vmul.f32 %v936, %v1123
    %v1148 = vmul.f32 %v962, %v1124
    %v1149 = vmul.f32 %v988, %v1125
    %v1151 = vperm.slane %v1145, 0
    %v1152 = vperm.slane %v1145, 1
    %v1153 = vperm.slane %v1145, 2
    %v1154 = vperm.slane %v1145, 3
    %v1159 = vadd.f32 %v1146, %v1151
    %v1160 = vadd.f32 %v1147, %v1152
    %v1161 = vadd.f32 %v1148, %v1153
    %v1162 = vadd.f32 %v1149, %v1154
    %vm1163 = vcmp.gt.f32.partialorder %v1159, 0.0
    %vm1164 = vcmp.gt.f32.partialorder %v1160, 0.0
    %vm1165 = vcmp.gt.f32.partialorder %v1161, 0.0
    %vm1166 = vcmp.gt.f32.partialorder %v1162, 0.0
    %v1167 = vmul.f32 %v1159, 0.2
    %v1168 = vmul.f32 %v1160, 0.2
    %v1169 = vmul.f32 %v1161, 0.2
    %v1170 = vmul.f32 %v1162, 0.2
    %v1171 = vsel %vm1163, %v1159, %v1167
    %v1172 = vsel %vm1164, %v1160, %v1168
    %v1173 = vsel %vm1165, %v1161, %v1169
    %v1174 = vsel %vm1166, %v1162, %v1170
    %v1175 = vpack.c.bf16 %v1172, %v1171
    %v1176 = vpack.c.bf16 %v1174, %v1173
    %s1177 = smul.u32 %s497, 8
    %s1178 = sshll.u32 %s1177, 4
    %1179 = dma.done %s76, %s1178
    %v1180 = vld [vmem:[#allocation4] sm:$0xff]
    %v1181 = vld [vmem:[#allocation4 + $0x8] sm:$0xff]
    %v1182 = vld [vmem:[#allocation4 + $0x10] sm:$0xff]
    %v1183 = vld [vmem:[#allocation4 + $0x18] sm:$0xff]
    %v1184 = vld [vmem:[#allocation4 + $0x20] sm:$0xff]
    %v1185 = vld [vmem:[#allocation4 + $0x28] sm:$0xff]
    %v1186 = vld [vmem:[#allocation4 + $0x30] sm:$0xff]
    %v1187 = vld [vmem:[#allocation4 + $0x38] sm:$0xff]
    %v1188 = vld [vmem:[#allocation4 + $0x40] sm:$0xff]
    %v1189 = vld [vmem:[#allocation4 + $0x48] sm:$0xff]
    %v1190 = vld [vmem:[#allocation4 + $0x50] sm:$0xff]
    %v1191 = vld [vmem:[#allocation4 + $0x58] sm:$0xff]
    %v1192 = vld [vmem:[#allocation4 + $0x60] sm:$0xff]
    %v1193 = vld [vmem:[#allocation4 + $0x68] sm:$0xff]
    %v1194 = vld [vmem:[#allocation4 + $0x70] sm:$0xff]
    %v1195 = vld [vmem:[#allocation4 + $0x78] sm:$0xff]
    %v1196 = vld [vmem:[#allocation4 + $0x80] sm:$0xff]
    %v1197 = vld [vmem:[#allocation4 + $0x88] sm:$0xff]
    %v1198 = vld [vmem:[#allocation4 + $0x90] sm:$0xff]
    %v1199 = vld [vmem:[#allocation4 + $0x98] sm:$0xff]
    %v1200 = vld [vmem:[#allocation4 + $0xa0] sm:$0xff]
    %v1201 = vld [vmem:[#allocation4 + $0xa8] sm:$0xff]
    %v1202 = vld [vmem:[#allocation4 + $0xb0] sm:$0xff]
    %v1203 = vld [vmem:[#allocation4 + $0xb8] sm:$0xff]
    %v1204 = vld [vmem:[#allocation4 + $0xc0] sm:$0xff]
    %v1205 = vld [vmem:[#allocation4 + $0xc8] sm:$0xff]
    %v1206 = vld [vmem:[#allocation4 + $0xd0] sm:$0xff]
    %v1207 = vld [vmem:[#allocation4 + $0xd8] sm:$0xff]
    %v1208 = vld [vmem:[#allocation4 + $0xe0] sm:$0xff]
    %v1209 = vld [vmem:[#allocation4 + $0xe8] sm:$0xff]
    %v1210 = vld [vmem:[#allocation4 + $0xf0] sm:$0xff]
    %v1211 = vld [vmem:[#allocation4 + $0xf8] sm:$0xff]
    %v1212 = vld [vmem:[#allocation4 + $0x100] sm:$0xff]
    %v1213 = vld [vmem:[#allocation4 + $0x108] sm:$0xff]
    %v1214 = vld [vmem:[#allocation4 + $0x110] sm:$0xff]
    %v1215 = vld [vmem:[#allocation4 + $0x118] sm:$0xff]
    %v1216 = vld [vmem:[#allocation4 + $0x120] sm:$0xff]
    %v1217 = vld [vmem:[#allocation4 + $0x128] sm:$0xff]
    %v1218 = vld [vmem:[#allocation4 + $0x130] sm:$0xff]
    %v1219 = vld [vmem:[#allocation4 + $0x138] sm:$0xff]
    %v1220 = vld [vmem:[#allocation4 + $0x140] sm:$0xff]
    %v1221 = vld [vmem:[#allocation4 + $0x148] sm:$0xff]
    %v1222 = vld [vmem:[#allocation4 + $0x150] sm:$0xff]
    %v1223 = vld [vmem:[#allocation4 + $0x158] sm:$0xff]
    %v1224 = vld [vmem:[#allocation4 + $0x160] sm:$0xff]
    %v1225 = vld [vmem:[#allocation4 + $0x168] sm:$0xff]
    %v1226 = vld [vmem:[#allocation4 + $0x170] sm:$0xff]
    %v1227 = vld [vmem:[#allocation4 + $0x178] sm:$0xff]
    %v1228 = vld [vmem:[#allocation4 + $0x180] sm:$0xff]
    %v1229 = vld [vmem:[#allocation4 + $0x188] sm:$0xff]
    %v1230 = vld [vmem:[#allocation4 + $0x190] sm:$0xff]
    %v1231 = vld [vmem:[#allocation4 + $0x198] sm:$0xff]
    %v1232 = vld [vmem:[#allocation4 + $0x1a0] sm:$0xff]
    %v1233 = vld [vmem:[#allocation4 + $0x1a8] sm:$0xff]
    %v1234 = vld [vmem:[#allocation4 + $0x1b0] sm:$0xff]
    %v1235 = vld [vmem:[#allocation4 + $0x1b8] sm:$0xff]
    %v1236 = vld [vmem:[#allocation4 + $0x1c0] sm:$0xff]
    %v1237 = vld [vmem:[#allocation4 + $0x1c8] sm:$0xff]
    %v1238 = vld [vmem:[#allocation4 + $0x1d0] sm:$0xff]
    %v1239 = vld [vmem:[#allocation4 + $0x1d8] sm:$0xff]
    %v1240 = vld [vmem:[#allocation4 + $0x1e0] sm:$0xff]
    %v1241 = vld [vmem:[#allocation4 + $0x1e8] sm:$0xff]
    %v1242 = vld [vmem:[#allocation4 + $0x1f0] sm:$0xff]
    %v1243 = vld [vmem:[#allocation4 + $0x1f8] sm:$0xff]
    %v1244 = vld [vmem:[#allocation4 + $0x200] sm:$0xff]
    %v1245 = vld [vmem:[#allocation4 + $0x208] sm:$0xff]
    %v1246 = vld [vmem:[#allocation4 + $0x210] sm:$0xff]
    %v1247 = vld [vmem:[#allocation4 + $0x218] sm:$0xff]
    %v1248 = vld [vmem:[#allocation4 + $0x220] sm:$0xff]
    %v1249 = vld [vmem:[#allocation4 + $0x228] sm:$0xff]
    %v1250 = vld [vmem:[#allocation4 + $0x230] sm:$0xff]
    %v1251 = vld [vmem:[#allocation4 + $0x238] sm:$0xff]
    %v1252 = vld [vmem:[#allocation4 + $0x240] sm:$0xff]
    %v1253 = vld [vmem:[#allocation4 + $0x248] sm:$0xff]
    %v1254 = vld [vmem:[#allocation4 + $0x250] sm:$0xff]
    %v1255 = vld [vmem:[#allocation4 + $0x258] sm:$0xff]
    %v1256 = vld [vmem:[#allocation4 + $0x260] sm:$0xff]
    %v1257 = vld [vmem:[#allocation4 + $0x268] sm:$0xff]
    %v1258 = vld [vmem:[#allocation4 + $0x270] sm:$0xff]
    %v1259 = vld [vmem:[#allocation4 + $0x278] sm:$0xff]
    %v1260 = vld [vmem:[#allocation4 + $0x280] sm:$0xff]
    %v1261 = vld [vmem:[#allocation4 + $0x288] sm:$0xff]
    %v1262 = vld [vmem:[#allocation4 + $0x290] sm:$0xff]
    %v1263 = vld [vmem:[#allocation4 + $0x298] sm:$0xff]
    %v1264 = vld [vmem:[#allocation4 + $0x2a0] sm:$0xff]
    %v1265 = vld [vmem:[#allocation4 + $0x2a8] sm:$0xff]
    %v1266 = vld [vmem:[#allocation4 + $0x2b0] sm:$0xff]
    %v1267 = vld [vmem:[#allocation4 + $0x2b8] sm:$0xff]
    %v1268 = vld [vmem:[#allocation4 + $0x2c0] sm:$0xff]
    %v1269 = vld [vmem:[#allocation4 + $0x2c8] sm:$0xff]
    %v1270 = vld [vmem:[#allocation4 + $0x2d0] sm:$0xff]
    %v1271 = vld [vmem:[#allocation4 + $0x2d8] sm:$0xff]
    %v1272 = vld [vmem:[#allocation4 + $0x2e0] sm:$0xff]
    %v1273 = vld [vmem:[#allocation4 + $0x2e8] sm:$0xff]
    %v1274 = vld [vmem:[#allocation4 + $0x2f0] sm:$0xff]
    %v1275 = vld [vmem:[#allocation4 + $0x2f8] sm:$0xff]
    %v1276 = vld [vmem:[#allocation4 + $0x300] sm:$0xff]
    %v1277 = vld [vmem:[#allocation4 + $0x308] sm:$0xff]
    %v1278 = vld [vmem:[#allocation4 + $0x310] sm:$0xff]
    %v1279 = vld [vmem:[#allocation4 + $0x318] sm:$0xff]
    %v1280 = vld [vmem:[#allocation4 + $0x320] sm:$0xff]
    %v1281 = vld [vmem:[#allocation4 + $0x328] sm:$0xff]
    %v1282 = vld [vmem:[#allocation4 + $0x330] sm:$0xff]
    %v1283 = vld [vmem:[#allocation4 + $0x338] sm:$0xff]
    %v1284 = vld [vmem:[#allocation4 + $0x340] sm:$0xff]
    %v1285 = vld [vmem:[#allocation4 + $0x348] sm:$0xff]
    %v1286 = vld [vmem:[#allocation4 + $0x350] sm:$0xff]
    %v1287 = vld [vmem:[#allocation4 + $0x358] sm:$0xff]
    %v1288 = vld [vmem:[#allocation4 + $0x360] sm:$0xff]
    %v1289 = vld [vmem:[#allocation4 + $0x368] sm:$0xff]
    %v1290 = vld [vmem:[#allocation4 + $0x370] sm:$0xff]
    %v1291 = vld [vmem:[#allocation4 + $0x378] sm:$0xff]
    %v1292 = vld [vmem:[#allocation4 + $0x380] sm:$0xff]
    %v1293 = vld [vmem:[#allocation4 + $0x388] sm:$0xff]
    %v1294 = vld [vmem:[#allocation4 + $0x390] sm:$0xff]
    %v1295 = vld [vmem:[#allocation4 + $0x398] sm:$0xff]
    %v1296 = vld [vmem:[#allocation4 + $0x3a0] sm:$0xff]
    %v1297 = vld [vmem:[#allocation4 + $0x3a8] sm:$0xff]
    %v1298 = vld [vmem:[#allocation4 + $0x3b0] sm:$0xff]
    %v1299 = vld [vmem:[#allocation4 + $0x3b8] sm:$0xff]
    %v1300 = vld [vmem:[#allocation4 + $0x3c0] sm:$0xff]
    %v1301 = vld [vmem:[#allocation4 + $0x3c8] sm:$0xff]
    %v1302 = vld [vmem:[#allocation4 + $0x3d0] sm:$0xff]
    %v1303 = vld [vmem:[#allocation4 + $0x3d8] sm:$0xff]
    %v1304 = vld [vmem:[#allocation4 + $0x3e0] sm:$0xff]
    %v1305 = vld [vmem:[#allocation4 + $0x3e8] sm:$0xff]
    %v1306 = vld [vmem:[#allocation4 + $0x3f0] sm:$0xff]
    %v1307 = vld [vmem:[#allocation4 + $0x3f8] sm:$0xff]
    %s1308 = sshll.u32 %s1177, 4
    %1309 = dma.done %s92, %s1308
    %v1310 = vld [vmem:[%s91] sm:$0xff]
    %v1311 = vld [vmem:[%s91 + $0x8] sm:$0xff]
    %v1312 = vld [vmem:[%s91 + $0x10] sm:$0xff]
    %v1313 = vld [vmem:[%s91 + $0x18] sm:$0xff]
    %v1314 = vld [vmem:[%s91 + $0x20] sm:$0xff]
    %v1315 = vld [vmem:[%s91 + $0x28] sm:$0xff]
    %v1316 = vld [vmem:[%s91 + $0x30] sm:$0xff]
    %v1317 = vld [vmem:[%s91 + $0x38] sm:$0xff]
    %v1318 = vld [vmem:[%s91 + $0x40] sm:$0xff]
    %v1319 = vld [vmem:[%s91 + $0x48] sm:$0xff]
    %v1320 = vld [vmem:[%s91 + $0x50] sm:$0xff]
    %v1321 = vld [vmem:[%s91 + $0x58] sm:$0xff]
    %v1322 = vld [vmem:[%s91 + $0x60] sm:$0xff]
    %v1323 = vld [vmem:[%s91 + $0x68] sm:$0xff]
    %v1324 = vld [vmem:[%s91 + $0x70] sm:$0xff]
    %v1325 = vld [vmem:[%s91 + $0x78] sm:$0xff]
    %v1326 = vld [vmem:[%s91 + $0x80] sm:$0xff]
    %v1327 = vld [vmem:[%s91 + $0x88] sm:$0xff]
    %v1328 = vld [vmem:[%s91 + $0x90] sm:$0xff]
    %v1329 = vld [vmem:[%s91 + $0x98] sm:$0xff]
    %v1330 = vld [vmem:[%s91 + $0xa0] sm:$0xff]
    %v1331 = vld [vmem:[%s91 + $0xa8] sm:$0xff]
    %v1332 = vld [vmem:[%s91 + $0xb0] sm:$0xff]
    %v1333 = vld [vmem:[%s91 + $0xb8] sm:$0xff]
    %v1334 = vld [vmem:[%s91 + $0xc0] sm:$0xff]
    %v1335 = vld [vmem:[%s91 + $0xc8] sm:$0xff]
    %v1336 = vld [vmem:[%s91 + $0xd0] sm:$0xff]
    %v1337 = vld [vmem:[%s91 + $0xd8] sm:$0xff]
    %v1338 = vld [vmem:[%s91 + $0xe0] sm:$0xff]
    %v1339 = vld [vmem:[%s91 + $0xe8] sm:$0xff]
    %v1340 = vld [vmem:[%s91 + $0xf0] sm:$0xff]
    %v1341 = vld [vmem:[%s91 + $0xf8] sm:$0xff]
    %v1342 = vld [vmem:[%s91 + $0x100] sm:$0xff]
    %v1343 = vld [vmem:[%s91 + $0x108] sm:$0xff]
    %v1344 = vld [vmem:[%s91 + $0x110] sm:$0xff]
    %v1345 = vld [vmem:[%s91 + $0x118] sm:$0xff]
    %v1346 = vld [vmem:[%s91 + $0x120] sm:$0xff]
    %v1347 = vld [vmem:[%s91 + $0x128] sm:$0xff]
    %v1348 = vld [vmem:[%s91 + $0x130] sm:$0xff]
    %v1349 = vld [vmem:[%s91 + $0x138] sm:$0xff]
    %v1350 = vld [vmem:[%s91 + $0x140] sm:$0xff]
    %v1351 = vld [vmem:[%s91 + $0x148] sm:$0xff]
    %v1352 = vld [vmem:[%s91 + $0x150] sm:$0xff]
    %v1353 = vld [vmem:[%s91 + $0x158] sm:$0xff]
    %v1354 = vld [vmem:[%s91 + $0x160] sm:$0xff]
    %v1355 = vld [vmem:[%s91 + $0x168] sm:$0xff]
    %v1356 = vld [vmem:[%s91 + $0x170] sm:$0xff]
    %v1357 = vld [vmem:[%s91 + $0x178] sm:$0xff]
    %v1358 = vld [vmem:[%s91 + $0x180] sm:$0xff]
    %v1359 = vld [vmem:[%s91 + $0x188] sm:$0xff]
    %v1360 = vld [vmem:[%s91 + $0x190] sm:$0xff]
    %v1361 = vld [vmem:[%s91 + $0x198] sm:$0xff]
    %v1362 = vld [vmem:[%s91 + $0x1a0] sm:$0xff]
    %v1363 = vld [vmem:[%s91 + $0x1a8] sm:$0xff]
    %v1364 = vld [vmem:[%s91 + $0x1b0] sm:$0xff]
    %v1365 = vld [vmem:[%s91 + $0x1b8] sm:$0xff]
    %v1366 = vld [vmem:[%s91 + $0x1c0] sm:$0xff]
    %v1367 = vld [vmem:[%s91 + $0x1c8] sm:$0xff]
    %v1368 = vld [vmem:[%s91 + $0x1d0] sm:$0xff]
    %v1369 = vld [vmem:[%s91 + $0x1d8] sm:$0xff]
    %v1370 = vld [vmem:[%s91 + $0x1e0] sm:$0xff]
    %v1371 = vld [vmem:[%s91 + $0x1e8] sm:$0xff]
    %v1372 = vld [vmem:[%s91 + $0x1f0] sm:$0xff]
    %v1373 = vld [vmem:[%s91 + $0x1f8] sm:$0xff]
    %v1374 = vld [vmem:[%s91 + $0x200] sm:$0xff]
    %v1375 = vld [vmem:[%s91 + $0x208] sm:$0xff]
    %v1376 = vld [vmem:[%s91 + $0x210] sm:$0xff]
    %v1377 = vld [vmem:[%s91 + $0x218] sm:$0xff]
    %v1378 = vld [vmem:[%s91 + $0x220] sm:$0xff]
    %v1379 = vld [vmem:[%s91 + $0x228] sm:$0xff]
    %v1380 = vld [vmem:[%s91 + $0x230] sm:$0xff]
    %v1381 = vld [vmem:[%s91 + $0x238] sm:$0xff]
    %v1382 = vld [vmem:[%s91 + $0x240] sm:$0xff]
    %v1383 = vld [vmem:[%s91 + $0x248] sm:$0xff]
    %v1384 = vld [vmem:[%s91 + $0x250] sm:$0xff]
    %v1385 = vld [vmem:[%s91 + $0x258] sm:$0xff]
    %v1386 = vld [vmem:[%s91 + $0x260] sm:$0xff]
    %v1387 = vld [vmem:[%s91 + $0x268] sm:$0xff]
    %v1388 = vld [vmem:[%s91 + $0x270] sm:$0xff]
    %v1389 = vld [vmem:[%s91 + $0x278] sm:$0xff]
    %v1390 = vld [vmem:[%s91 + $0x280] sm:$0xff]
    %v1391 = vld [vmem:[%s91 + $0x288] sm:$0xff]
    %v1392 = vld [vmem:[%s91 + $0x290] sm:$0xff]
    %v1393 = vld [vmem:[%s91 + $0x298] sm:$0xff]
    %v1394 = vld [vmem:[%s91 + $0x2a0] sm:$0xff]
    %v1395 = vld [vmem:[%s91 + $0x2a8] sm:$0xff]
    %v1396 = vld [vmem:[%s91 + $0x2b0] sm:$0xff]
    %v1397 = vld [vmem:[%s91 + $0x2b8] sm:$0xff]
    %v1398 = vld [vmem:[%s91 + $0x2c0] sm:$0xff]
    %v1399 = vld [vmem:[%s91 + $0x2c8] sm:$0xff]
    %v1400 = vld [vmem:[%s91 + $0x2d0] sm:$0xff]
    %v1401 = vld [vmem:[%s91 + $0x2d8] sm:$0xff]
    %v1402 = vld [vmem:[%s91 + $0x2e0] sm:$0xff]
    %v1403 = vld [vmem:[%s91 + $0x2e8] sm:$0xff]
    %v1404 = vld [vmem:[%s91 + $0x2f0] sm:$0xff]
    %v1405 = vld [vmem:[%s91 + $0x2f8] sm:$0xff]
    %v1406 = vld [vmem:[%s91 + $0x300] sm:$0xff]
    %v1407 = vld [vmem:[%s91 + $0x308] sm:$0xff]
    %v1408 = vld [vmem:[%s91 + $0x310] sm:$0xff]
    %v1409 = vld [vmem:[%s91 + $0x318] sm:$0xff]
    %v1410 = vld [vmem:[%s91 + $0x320] sm:$0xff]
    %v1411 = vld [vmem:[%s91 + $0x328] sm:$0xff]
    %v1412 = vld [vmem:[%s91 + $0x330] sm:$0xff]
    %v1413 = vld [vmem:[%s91 + $0x338] sm:$0xff]
    %v1414 = vld [vmem:[%s91 + $0x340] sm:$0xff]
    %v1415 = vld [vmem:[%s91 + $0x348] sm:$0xff]
    %v1416 = vld [vmem:[%s91 + $0x350] sm:$0xff]
    %v1417 = vld [vmem:[%s91 + $0x358] sm:$0xff]
    %v1418 = vld [vmem:[%s91 + $0x360] sm:$0xff]
    %v1419 = vld [vmem:[%s91 + $0x368] sm:$0xff]
    %v1420 = vld [vmem:[%s91 + $0x370] sm:$0xff]
    %v1421 = vld [vmem:[%s91 + $0x378] sm:$0xff]
    %v1422 = vld [vmem:[%s91 + $0x380] sm:$0xff]
    %v1423 = vld [vmem:[%s91 + $0x388] sm:$0xff]
    %v1424 = vld [vmem:[%s91 + $0x390] sm:$0xff]
    %v1425 = vld [vmem:[%s91 + $0x398] sm:$0xff]
    %v1426 = vld [vmem:[%s91 + $0x3a0] sm:$0xff]
    %v1427 = vld [vmem:[%s91 + $0x3a8] sm:$0xff]
    %v1428 = vld [vmem:[%s91 + $0x3b0] sm:$0xff]
    %v1429 = vld [vmem:[%s91 + $0x3b8] sm:$0xff]
    %v1430 = vld [vmem:[%s91 + $0x3c0] sm:$0xff]
    %v1431 = vld [vmem:[%s91 + $0x3c8] sm:$0xff]
    %v1432 = vld [vmem:[%s91 + $0x3d0] sm:$0xff]
    %v1433 = vld [vmem:[%s91 + $0x3d8] sm:$0xff]
    %v1434 = vld [vmem:[%s91 + $0x3e0] sm:$0xff]
    %v1435 = vld [vmem:[%s91 + $0x3e8] sm:$0xff]
    %v1436 = vld [vmem:[%s91 + $0x3f0] sm:$0xff]
    %v1437 = vld [vmem:[%s91 + $0x3f8] sm:$0xff]
    %v1439 = vunpack.c.l.b16 %v1176
    %v1440 = vunpack.c.h.b16 %v1176
    %v1441 = vpack.c.b16 %v1439, %v1439
    %v1442 = vpack.c.b16 %v1440, %v1440
    %v1573 = vunpack.c.l.b16 %v1310
    %v1574 = vunpack.c.h.b16 %v1310
    %v1575 = vunpack.c.l.b16 %v1311
    %v1576 = vunpack.c.h.b16 %v1311
    %v1577 = vunpack.c.l.b16 %v1312
    %v1578 = vunpack.c.h.b16 %v1312
    %v1579 = vunpack.c.l.b16 %v1313
    %v1580 = vunpack.c.h.b16 %v1313
    %v1581 = vunpack.c.l.b16 %v1314
    %v1582 = vunpack.c.h.b16 %v1314
    %v1583 = vunpack.c.l.b16 %v1315
    %v1584 = vunpack.c.h.b16 %v1315
    %v1585 = vunpack.c.l.b16 %v1316
    %v1586 = vunpack.c.h.b16 %v1316
    %v1587 = vunpack.c.l.b16 %v1317
    %v1588 = vunpack.c.h.b16 %v1317
    %v1589 = vunpack.c.l.b16 %v1318
    %v1590 = vunpack.c.h.b16 %v1318
    %v1591 = vunpack.c.l.b16 %v1319
    %v1592 = vunpack.c.h.b16 %v1319
    %v1593 = vunpack.c.l.b16 %v1320
    %v1594 = vunpack.c.h.b16 %v1320
    %v1595 = vunpack.c.l.b16 %v1321
    %v1596 = vunpack.c.h.b16 %v1321
    %v1597 = vunpack.c.l.b16 %v1322
    %v1598 = vunpack.c.h.b16 %v1322
    %v1599 = vunpack.c.l.b16 %v1323
    %v1600 = vunpack.c.h.b16 %v1323
    %v1601 = vunpack.c.l.b16 %v1324
    %v1602 = vunpack.c.h.b16 %v1324
    %v1603 = vunpack.c.l.b16 %v1325
    %v1604 = vunpack.c.h.b16 %v1325
    %v1605 = vunpack.c.l.b16 %v1326
    %v1606 = vunpack.c.h.b16 %v1326
    %v1607 = vunpack.c.l.b16 %v1327
    %v1608 = vunpack.c.h.b16 %v1327
    %v1609 = vunpack.c.l.b16 %v1328
    %v1610 = vunpack.c.h.b16 %v1328
    %v1611 = vunpack.c.l.b16 %v1329
    %v1612 = vunpack.c.h.b16 %v1329
    %v1613 = vunpack.c.l.b16 %v1330
    %v1614 = vunpack.c.h.b16 %v1330
    %v1615 = vunpack.c.l.b16 %v1331
    %v1616 = vunpack.c.h.b16 %v1331
    %v1617 = vunpack.c.l.b16 %v1332
    %v1618 = vunpack.c.h.b16 %v1332
    %v1619 = vunpack.c.l.b16 %v1333
    %v1620 = vunpack.c.h.b16 %v1333
    %v1621 = vunpack.c.l.b16 %v1334
    %v1622 = vunpack.c.h.b16 %v1334
    %v1623 = vunpack.c.l.b16 %v1335
    %v1624 = vunpack.c.h.b16 %v1335
    %v1625 = vunpack.c.l.b16 %v1336
    %v1626 = vunpack.c.h.b16 %v1336
    %v1627 = vunpack.c.l.b16 %v1337
    %v1628 = vunpack.c.h.b16 %v1337
    %v1629 = vunpack.c.l.b16 %v1338
    %v1630 = vunpack.c.h.b16 %v1338
    %v1631 = vunpack.c.l.b16 %v1339
    %v1632 = vunpack.c.h.b16 %v1339
    %v1633 = vunpack.c.l.b16 %v1340
    %v1634 = vunpack.c.h.b16 %v1340
    %v1635 = vunpack.c.l.b16 %v1341
    %v1636 = vunpack.c.h.b16 %v1341
    %v1637 = vunpack.c.l.b16 %v1342
    %v1638 = vunpack.c.h.b16 %v1342
    %v1639 = vunpack.c.l.b16 %v1343
    %v1640 = vunpack.c.h.b16 %v1343
    %v1641 = vunpack.c.l.b16 %v1344
    %v1642 = vunpack.c.h.b16 %v1344
    %v1643 = vunpack.c.l.b16 %v1345
    %v1644 = vunpack.c.h.b16 %v1345
    %v1645 = vunpack.c.l.b16 %v1346
    %v1646 = vunpack.c.h.b16 %v1346
    %v1647 = vunpack.c.l.b16 %v1347
    %v1648 = vunpack.c.h.b16 %v1347
    %v1649 = vunpack.c.l.b16 %v1348
    %v1650 = vunpack.c.h.b16 %v1348
    %v1651 = vunpack.c.l.b16 %v1349
    %v1652 = vunpack.c.h.b16 %v1349
    %v1653 = vunpack.c.l.b16 %v1350
    %v1654 = vunpack.c.h.b16 %v1350
    %v1655 = vunpack.c.l.b16 %v1351
    %v1656 = vunpack.c.h.b16 %v1351
    %v1657 = vunpack.c.l.b16 %v1352
    %v1658 = vunpack.c.h.b16 %v1352
    %v1659 = vunpack.c.l.b16 %v1353
    %v1660 = vunpack.c.h.b16 %v1353
    %v1661 = vunpack.c.l.b16 %v1354
    %v1662 = vunpack.c.h.b16 %v1354
    %v1663 = vunpack.c.l.b16 %v1355
    %v1664 = vunpack.c.h.b16 %v1355
    %v1665 = vunpack.c.l.b16 %v1356
    %v1666 = vunpack.c.h.b16 %v1356
    %v1667 = vunpack.c.l.b16 %v1357
    %v1668 = vunpack.c.h.b16 %v1357
    %v1669 = vunpack.c.l.b16 %v1358
    %v1670 = vunpack.c.h.b16 %v1358
    %v1671 = vunpack.c.l.b16 %v1359
    %v1672 = vunpack.c.h.b16 %v1359
    %v1673 = vunpack.c.l.b16 %v1360
    %v1674 = vunpack.c.h.b16 %v1360
    %v1675 = vunpack.c.l.b16 %v1361
    %v1676 = vunpack.c.h.b16 %v1361
    %v1677 = vunpack.c.l.b16 %v1362
    %v1678 = vunpack.c.h.b16 %v1362
    %v1679 = vunpack.c.l.b16 %v1363
    %v1680 = vunpack.c.h.b16 %v1363
    %v1681 = vunpack.c.l.b16 %v1364
    %v1682 = vunpack.c.h.b16 %v1364
    %v1683 = vunpack.c.l.b16 %v1365
    %v1684 = vunpack.c.h.b16 %v1365
    %v1685 = vunpack.c.l.b16 %v1366
    %v1686 = vunpack.c.h.b16 %v1366
    %v1687 = vunpack.c.l.b16 %v1367
    %v1688 = vunpack.c.h.b16 %v1367
    %v1689 = vunpack.c.l.b16 %v1368
    %v1690 = vunpack.c.h.b16 %v1368
    %v1691 = vunpack.c.l.b16 %v1369
    %v1692 = vunpack.c.h.b16 %v1369
    %v1693 = vunpack.c.l.b16 %v1370
    %v1694 = vunpack.c.h.b16 %v1370
    %v1695 = vunpack.c.l.b16 %v1371
    %v1696 = vunpack.c.h.b16 %v1371
    %v1697 = vunpack.c.l.b16 %v1372
    %v1698 = vunpack.c.h.b16 %v1372
    %v1699 = vunpack.c.l.b16 %v1373
    %v1700 = vunpack.c.h.b16 %v1373
    %v1701 = vunpack.c.l.b16 %v1374
    %v1702 = vunpack.c.h.b16 %v1374
    %v1703 = vunpack.c.l.b16 %v1375
    %v1704 = vunpack.c.h.b16 %v1375
    %v1705 = vunpack.c.l.b16 %v1376
    %v1706 = vunpack.c.h.b16 %v1376
    %v1707 = vunpack.c.l.b16 %v1377
    %v1708 = vunpack.c.h.b16 %v1377
    %v1709 = vunpack.c.l.b16 %v1378
    %v1710 = vunpack.c.h.b16 %v1378
    %v1711 = vunpack.c.l.b16 %v1379
    %v1712 = vunpack.c.h.b16 %v1379
    %v1713 = vunpack.c.l.b16 %v1380
    %v1714 = vunpack.c.h.b16 %v1380
    %v1715 = vunpack.c.l.b16 %v1381
    %v1716 = vunpack.c.h.b16 %v1381
    %v1717 = vunpack.c.l.b16 %v1382
    %v1718 = vunpack.c.h.b16 %v1382
    %v1719 = vunpack.c.l.b16 %v1383
    %v1720 = vunpack.c.h.b16 %v1383
    %v1721 = vunpack.c.l.b16 %v1384
    %v1722 = vunpack.c.h.b16 %v1384
    %v1723 = vunpack.c.l.b16 %v1385
    %v1724 = vunpack.c.h.b16 %v1385
    %v1725 = vunpack.c.l.b16 %v1386
    %v1726 = vunpack.c.h.b16 %v1386
    %v1727 = vunpack.c.l.b16 %v1387
    %v1728 = vunpack.c.h.b16 %v1387
    %v1729 = vunpack.c.l.b16 %v1388
    %v1730 = vunpack.c.h.b16 %v1388
    %v1731 = vunpack.c.l.b16 %v1389
    %v1732 = vunpack.c.h.b16 %v1389
    %v1733 = vunpack.c.l.b16 %v1390
    %v1734 = vunpack.c.h.b16 %v1390
    %v1735 = vunpack.c.l.b16 %v1391
    %v1736 = vunpack.c.h.b16 %v1391
    %v1737 = vunpack.c.l.b16 %v1392
    %v1738 = vunpack.c.h.b16 %v1392
    %v1739 = vunpack.c.l.b16 %v1393
    %v1740 = vunpack.c.h.b16 %v1393
    %v1741 = vunpack.c.l.b16 %v1394
    %v1742 = vunpack.c.h.b16 %v1394
    %v1743 = vunpack.c.l.b16 %v1395
    %v1744 = vunpack.c.h.b16 %v1395
    %v1745 = vunpack.c.l.b16 %v1396
    %v1746 = vunpack.c.h.b16 %v1396
    %v1747 = vunpack.c.l.b16 %v1397
    %v1748 = vunpack.c.h.b16 %v1397
    %v1749 = vunpack.c.l.b16 %v1398
    %v1750 = vunpack.c.h.b16 %v1398
    %v1751 = vunpack.c.l.b16 %v1399
    %v1752 = vunpack.c.h.b16 %v1399
    %v1753 = vunpack.c.l.b16 %v1400
    %v1754 = vunpack.c.h.b16 %v1400
    %v1755 = vunpack.c.l.b16 %v1401
    %v1756 = vunpack.c.h.b16 %v1401
    %v1757 = vunpack.c.l.b16 %v1402
    %v1758 = vunpack.c.h.b16 %v1402
    %v1759 = vunpack.c.l.b16 %v1403
    %v1760 = vunpack.c.h.b16 %v1403
    %v1761 = vunpack.c.l.b16 %v1404
    %v1762 = vunpack.c.h.b16 %v1404
    %v1763 = vunpack.c.l.b16 %v1405
    %v1764 = vunpack.c.h.b16 %v1405
    %v1765 = vunpack.c.l.b16 %v1406
    %v1766 = vunpack.c.h.b16 %v1406
    %v1767 = vunpack.c.l.b16 %v1407
    %v1768 = vunpack.c.h.b16 %v1407
    %v1769 = vunpack.c.l.b16 %v1408
    %v1770 = vunpack.c.h.b16 %v1408
    %v1771 = vunpack.c.l.b16 %v1409
    %v1772 = vunpack.c.h.b16 %v1409
    %v1773 = vunpack.c.l.b16 %v1410
    %v1774 = vunpack.c.h.b16 %v1410
    %v1775 = vunpack.c.l.b16 %v1411
    %v1776 = vunpack.c.h.b16 %v1411
    %v1777 = vunpack.c.l.b16 %v1412
    %v1778 = vunpack.c.h.b16 %v1412
    %v1779 = vunpack.c.l.b16 %v1413
    %v1780 = vunpack.c.h.b16 %v1413
    %v1781 = vunpack.c.l.b16 %v1414
    %v1782 = vunpack.c.h.b16 %v1414
    %v1783 = vunpack.c.l.b16 %v1415
    %v1784 = vunpack.c.h.b16 %v1415
    %v1785 = vunpack.c.l.b16 %v1416
    %v1786 = vunpack.c.h.b16 %v1416
    %v1787 = vunpack.c.l.b16 %v1417
    %v1788 = vunpack.c.h.b16 %v1417
    %v1789 = vunpack.c.l.b16 %v1418
    %v1790 = vunpack.c.h.b16 %v1418
    %v1791 = vunpack.c.l.b16 %v1419
    %v1792 = vunpack.c.h.b16 %v1419
    %v1793 = vunpack.c.l.b16 %v1420
    %v1794 = vunpack.c.h.b16 %v1420
    %v1795 = vunpack.c.l.b16 %v1421
    %v1796 = vunpack.c.h.b16 %v1421
    %v1797 = vunpack.c.l.b16 %v1422
    %v1798 = vunpack.c.h.b16 %v1422
    %v1799 = vunpack.c.l.b16 %v1423
    %v1800 = vunpack.c.h.b16 %v1423
    %v1801 = vunpack.c.l.b16 %v1424
    %v1802 = vunpack.c.h.b16 %v1424
    %v1803 = vunpack.c.l.b16 %v1425
    %v1804 = vunpack.c.h.b16 %v1425
    %v1805 = vunpack.c.l.b16 %v1426
    %v1806 = vunpack.c.h.b16 %v1426
    %v1807 = vunpack.c.l.b16 %v1427
    %v1808 = vunpack.c.h.b16 %v1427
    %v1809 = vunpack.c.l.b16 %v1428
    %v1810 = vunpack.c.h.b16 %v1428
    %v1811 = vunpack.c.l.b16 %v1429
    %v1812 = vunpack.c.h.b16 %v1429
    %v1813 = vunpack.c.l.b16 %v1430
    %v1814 = vunpack.c.h.b16 %v1430
    %v1815 = vunpack.c.l.b16 %v1431
    %v1816 = vunpack.c.h.b16 %v1431
    %v1817 = vunpack.c.l.b16 %v1432
    %v1818 = vunpack.c.h.b16 %v1432
    %v1819 = vunpack.c.l.b16 %v1433
    %v1820 = vunpack.c.h.b16 %v1433
    %v1821 = vunpack.c.l.b16 %v1434
    %v1822 = vunpack.c.h.b16 %v1434
    %v1823 = vunpack.c.l.b16 %v1435
    %v1824 = vunpack.c.h.b16 %v1435
    %v1825 = vunpack.c.l.b16 %v1436
    %v1826 = vunpack.c.h.b16 %v1436
    %v1827 = vunpack.c.l.b16 %v1437
    %v1828 = vunpack.c.h.b16 %v1437
    %v1829 = vpack.c.b16 %v1581, %v1573
    %v1830 = vpack.c.b16 %v1582, %v1574
    %v1831 = vpack.c.b16 %v1583, %v1575
    %v1832 = vpack.c.b16 %v1584, %v1576
    %v1833 = vpack.c.b16 %v1585, %v1577
    %v1834 = vpack.c.b16 %v1586, %v1578
    %v1835 = vpack.c.b16 %v1587, %v1579
    %v1836 = vpack.c.b16 %v1588, %v1580
    %v1837 = vpack.c.b16 %v1597, %v1589
    %v1838 = vpack.c.b16 %v1598, %v1590
    %v1839 = vpack.c.b16 %v1599, %v1591
    %v1840 = vpack.c.b16 %v1600, %v1592
    %v1841 = vpack.c.b16 %v1601, %v1593
    %v1842 = vpack.c.b16 %v1602, %v1594
    %v1843 = vpack.c.b16 %v1603, %v1595
    %v1844 = vpack.c.b16 %v1604, %v1596
    %v1845 = vpack.c.b16 %v1613, %v1605
    %v1846 = vpack.c.b16 %v1614, %v1606
    %v1847 = vpack.c.b16 %v1615, %v1607
    %v1848 = vpack.c.b16 %v1616, %v1608
    %v1849 = vpack.c.b16 %v1617, %v1609
    %v1850 = vpack.c.b16 %v1618, %v1610
    %v1851 = vpack.c.b16 %v1619, %v1611
    %v1852 = vpack.c.b16 %v1620, %v1612
    %v1853 = vpack.c.b16 %v1629, %v1621
    %v1854 = vpack.c.b16 %v1630, %v1622
    %v1855 = vpack.c.b16 %v1631, %v1623
    %v1856 = vpack.c.b16 %v1632, %v1624
    %v1857 = vpack.c.b16 %v1633, %v1625
    %v1858 = vpack.c.b16 %v1634, %v1626
    %v1859 = vpack.c.b16 %v1635, %v1627
    %v1860 = vpack.c.b16 %v1636, %v1628
    %v1861 = vpack.c.b16 %v1645, %v1637
    %v1862 = vpack.c.b16 %v1646, %v1638
    %v1863 = vpack.c.b16 %v1647, %v1639
    %v1864 = vpack.c.b16 %v1648, %v1640
    %v1865 = vpack.c.b16 %v1649, %v1641
    %v1866 = vpack.c.b16 %v1650, %v1642
    %v1867 = vpack.c.b16 %v1651, %v1643
    %v1868 = vpack.c.b16 %v1652, %v1644
    %v1869 = vpack.c.b16 %v1661, %v1653
    %v1870 = vpack.c.b16 %v1662, %v1654
    %v1871 = vpack.c.b16 %v1663, %v1655
    %v1872 = vpack.c.b16 %v1664, %v1656
    %v1873 = vpack.c.b16 %v1665, %v1657
    %v1874 = vpack.c.b16 %v1666, %v1658
    %v1875 = vpack.c.b16 %v1667, %v1659
    %v1876 = vpack.c.b16 %v1668, %v1660
    %v1877 = vpack.c.b16 %v1677, %v1669
    %v1878 = vpack.c.b16 %v1678, %v1670
    %v1879 = vpack.c.b16 %v1679, %v1671
    %v1880 = vpack.c.b16 %v1680, %v1672
    %v1881 = vpack.c.b16 %v1681, %v1673
    %v1882 = vpack.c.b16 %v1682, %v1674
    %v1883 = vpack.c.b16 %v1683, %v1675
    %v1884 = vpack.c.b16 %v1684, %v1676
    %v1885 = vpack.c.b16 %v1693, %v1685
    %v1886 = vpack.c.b16 %v1694, %v1686
    %v1887 = vpack.c.b16 %v1695, %v1687
    %v1888 = vpack.c.b16 %v1696, %v1688
    %v1889 = vpack.c.b16 %v1697, %v1689
    %v1890 = vpack.c.b16 %v1698, %v1690
    %v1891 = vpack.c.b16 %v1699, %v1691
    %v1892 = vpack.c.b16 %v1700, %v1692
    %v1893 = vpack.c.b16 %v1709, %v1701
    %v1894 = vpack.c.b16 %v1710, %v1702
    %v1895 = vpack.c.b16 %v1711, %v1703
    %v1896 = vpack.c.b16 %v1712, %v1704
    %v1897 = vpack.c.b16 %v1713, %v1705
    %v1898 = vpack.c.b16 %v1714, %v1706
    %v1899 = vpack.c.b16 %v1715, %v1707
    %v1900 = vpack.c.b16 %v1716, %v1708
    %v1901 = vpack.c.b16 %v1725, %v1717
    %v1902 = vpack.c.b16 %v1726, %v1718
    %v1903 = vpack.c.b16 %v1727, %v1719
    %v1904 = vpack.c.b16 %v1728, %v1720
    %v1905 = vpack.c.b16 %v1729, %v1721
    %v1906 = vpack.c.b16 %v1730, %v1722
    %v1907 = vpack.c.b16 %v1731, %v1723
    %v1908 = vpack.c.b16 %v1732, %v1724
    %v1909 = vpack.c.b16 %v1741, %v1733
    %v1910 = vpack.c.b16 %v1742, %v1734
    %v1911 = vpack.c.b16 %v1743, %v1735
    %v1912 = vpack.c.b16 %v1744, %v1736
    %v1913 = vpack.c.b16 %v1745, %v1737
    %v1914 = vpack.c.b16 %v1746, %v1738
    %v1915 = vpack.c.b16 %v1747, %v1739
    %v1916 = vpack.c.b16 %v1748, %v1740
    %v1917 = vpack.c.b16 %v1757, %v1749
    %v1918 = vpack.c.b16 %v1758, %v1750
    %v1919 = vpack.c.b16 %v1759, %v1751
    %v1920 = vpack.c.b16 %v1760, %v1752
    %v1921 = vpack.c.b16 %v1761, %v1753
    %v1922 = vpack.c.b16 %v1762, %v1754
    %v1923 = vpack.c.b16 %v1763, %v1755
    %v1924 = vpack.c.b16 %v1764, %v1756
    %v1925 = vpack.c.b16 %v1773, %v1765
    %v1926 = vpack.c.b16 %v1774, %v1766
    %v1927 = vpack.c.b16 %v1775, %v1767
    %v1928 = vpack.c.b16 %v1776, %v1768
    %v1929 = vpack.c.b16 %v1777, %v1769
    %v1930 = vpack.c.b16 %v1778, %v1770
    %v1931 = vpack.c.b16 %v1779, %v1771
    %v1932 = vpack.c.b16 %v1780, %v1772
    %v1933 = vpack.c.b16 %v1789, %v1781
    %v1934 = vpack.c.b16 %v1790, %v1782
    %v1935 = vpack.c.b16 %v1791, %v1783
    %v1936 = vpack.c.b16 %v1792, %v1784
    %v1937 = vpack.c.b16 %v1793, %v1785
    %v1938 = vpack.c.b16 %v1794, %v1786
    %v1939 = vpack.c.b16 %v1795, %v1787
    %v1940 = vpack.c.b16 %v1796, %v1788
    %v1941 = vpack.c.b16 %v1805, %v1797
    %v1942 = vpack.c.b16 %v1806, %v1798
    %v1943 = vpack.c.b16 %v1807, %v1799
    %v1944 = vpack.c.b16 %v1808, %v1800
    %v1945 = vpack.c.b16 %v1809, %v1801
    %v1946 = vpack.c.b16 %v1810, %v1802
    %v1947 = vpack.c.b16 %v1811, %v1803
    %v1948 = vpack.c.b16 %v1812, %v1804
    %v1949 = vpack.c.b16 %v1821, %v1813
    %v1950 = vpack.c.b16 %v1822, %v1814
    %v1951 = vpack.c.b16 %v1823, %v1815
    %v1952 = vpack.c.b16 %v1824, %v1816
    %v1953 = vpack.c.b16 %v1825, %v1817
    %v1954 = vpack.c.b16 %v1826, %v1818
    %v1955 = vpack.c.b16 %v1827, %v1819
    %v1956 = vpack.c.b16 %v1828, %v1820
    %2085 = vmatpush.bf16.msra.mxu0 %v1885
    %2086 = vmatpush.bf16.msra.mxu0 %v1877
    %2087 = vmatpush.bf16.msra.mxu0 %v1869
    %2088 = vmatpush.bf16.msra.mxu0 %v1861
    %2089 = vmatpush.bf16.msra.mxu0 %v1853
    %2090 = vmatpush.bf16.msra.mxu0 %v1845
    %2091 = vmatpush.bf16.msra.mxu0 %v1837
    %2092 = vmatpush.bf16.msra.mxu0 %v1829
    %2093 = vmatmul.bf16.gmra.mxu0 %v1441
    %v2094 = vpop.f32.mrf.mxu0
    %v2095 = vadd.f32 0.0, %v2094
    %v2096 = vpop.f32.mrf.mxu0
    %2097 = vdwg.mxu0
    %2098 = vmatpush.bf16.msra.mxu0 %v1949
    %2099 = vmatpush.bf16.msra.mxu0 %v1941
    %2100 = vmatpush.bf16.msra.mxu0 %v1933
    %2101 = vmatpush.bf16.msra.mxu0 %v1925
    %2102 = vmatpush.bf16.msra.mxu0 %v1917
    %2103 = vmatpush.bf16.msra.mxu0 %v1909
    %2104 = vmatpush.bf16.msra.mxu0 %v1901
    %2105 = vmatpush.bf16.msra.mxu0 %v1893
    %2106 = vmatmul.bf16.gmra.mxu0 %v1442
    %v2107 = vpop.f32.mrf.mxu0
    %v2108 = vadd.f32 %v2095, %v2107
    %v2109 = vpop.f32.mrf.mxu0
    %2110 = vdwg.mxu0
    %2111 = vmatpush.bf16.msra.mxu0 %v1886
    %2112 = vmatpush.bf16.msra.mxu0 %v1878
    %2113 = vmatpush.bf16.msra.mxu0 %v1870
    %2114 = vmatpush.bf16.msra.mxu0 %v1862
    %2115 = vmatpush.bf16.msra.mxu0 %v1854
    %2116 = vmatpush.bf16.msra.mxu0 %v1846
    %2117 = vmatpush.bf16.msra.mxu0 %v1838
    %2118 = vmatpush.bf16.msra.mxu0 %v1830
    %2119 = vmatmul.bf16.gmra.mxu0 %v1441
    %v2120 = vpop.f32.mrf.mxu0
    %v2121 = vadd.f32 0.0, %v2120
    %v2122 = vpop.f32.mrf.mxu0
    %2123 = vdwg.mxu0
    %2124 = vmatpush.bf16.msra.mxu0 %v1950
    %2125 = vmatpush.bf16.msra.mxu0 %v1942
    %2126 = vmatpush.bf16.msra.mxu0 %v1934
    %2127 = vmatpush.bf16.msra.mxu0 %v1926
    %2128 = vmatpush.bf16.msra.mxu0 %v1918
    %2129 = vmatpush.bf16.msra.mxu0 %v1910
    %2130 = vmatpush.bf16.msra.mxu0 %v1902
    %2131 = vmatpush.bf16.msra.mxu0 %v1894
    %2132 = vmatmul.bf16.gmra.mxu0 %v1442
    %v2133 = vpop.f32.mrf.mxu0
    %v2134 = vadd.f32 %v2121, %v2133
    %v2135 = vpop.f32.mrf.mxu0
    %2136 = vdwg.mxu0
    %2137 = vmatpush.bf16.msra.mxu0 %v1887
    %2138 = vmatpush.bf16.msra.mxu0 %v1879
    %2139 = vmatpush.bf16.msra.mxu0 %v1871
    %2140 = vmatpush.bf16.msra.mxu0 %v1863
    %2141 = vmatpush.bf16.msra.mxu0 %v1855
    %2142 = vmatpush.bf16.msra.mxu0 %v1847
    %2143 = vmatpush.bf16.msra.mxu0 %v1839
    %2144 = vmatpush.bf16.msra.mxu0 %v1831
    %2145 = vmatmul.bf16.gmra.mxu0 %v1441
    %v2146 = vpop.f32.mrf.mxu0
    %v2147 = vadd.f32 0.0, %v2146
    %v2148 = vpop.f32.mrf.mxu0
    %2149 = vdwg.mxu0
    %2150 = vmatpush.bf16.msra.mxu0 %v1951
    %2151 = vmatpush.bf16.msra.mxu0 %v1943
    %2152 = vmatpush.bf16.msra.mxu0 %v1935
    %2153 = vmatpush.bf16.msra.mxu0 %v1927
    %2154 = vmatpush.bf16.msra.mxu0 %v1919
    %2155 = vmatpush.bf16.msra.mxu0 %v1911
    %2156 = vmatpush.bf16.msra.mxu0 %v1903
    %2157 = vmatpush.bf16.msra.mxu0 %v1895
    %2158 = vmatmul.bf16.gmra.mxu0 %v1442
    %v2159 = vpop.f32.mrf.mxu0
    %v2160 = vadd.f32 %v2147, %v2159
    %v2161 = vpop.f32.mrf.mxu0
    %2162 = vdwg.mxu0
    %2163 = vmatpush.bf16.msra.mxu0 %v1888
    %2164 = vmatpush.bf16.msra.mxu0 %v1880
    %2165 = vmatpush.bf16.msra.mxu0 %v1872
    %2166 = vmatpush.bf16.msra.mxu0 %v1864
    %2167 = vmatpush.bf16.msra.mxu0 %v1856
    %2168 = vmatpush.bf16.msra.mxu0 %v1848
    %2169 = vmatpush.bf16.msra.mxu0 %v1840
    %2170 = vmatpush.bf16.msra.mxu0 %v1832
    %2171 = vmatmul.bf16.gmra.mxu0 %v1441
    %v2172 = vpop.f32.mrf.mxu0
    %v2173 = vadd.f32 0.0, %v2172
    %v2174 = vpop.f32.mrf.mxu0
    %2175 = vdwg.mxu0
    %2176 = vmatpush.bf16.msra.mxu0 %v1952
    %2177 = vmatpush.bf16.msra.mxu0 %v1944
    %2178 = vmatpush.bf16.msra.mxu0 %v1936
    %2179 = vmatpush.bf16.msra.mxu0 %v1928
    %2180 = vmatpush.bf16.msra.mxu0 %v1920
    %2181 = vmatpush.bf16.msra.mxu0 %v1912
    %2182 = vmatpush.bf16.msra.mxu0 %v1904
    %2183 = vmatpush.bf16.msra.mxu0 %v1896
    %2184 = vmatmul.bf16.gmra.mxu0 %v1442
    %v2185 = vpop.f32.mrf.mxu0
    %v2186 = vadd.f32 %v2173, %v2185
    %v2187 = vpop.f32.mrf.mxu0
    %2188 = vdwg.mxu0
    %2189 = vmatpush.bf16.msra.mxu0 %v1889
    %2190 = vmatpush.bf16.msra.mxu0 %v1881
    %2191 = vmatpush.bf16.msra.mxu0 %v1873
    %2192 = vmatpush.bf16.msra.mxu0 %v1865
    %2193 = vmatpush.bf16.msra.mxu0 %v1857
    %2194 = vmatpush.bf16.msra.mxu0 %v1849
    %2195 = vmatpush.bf16.msra.mxu0 %v1841
    %2196 = vmatpush.bf16.msra.mxu0 %v1833
    %2197 = vmatmul.bf16.gmra.mxu0 %v1441
    %v2198 = vpop.f32.mrf.mxu0
    %v2199 = vadd.f32 0.0, %v2198
    %v2200 = vpop.f32.mrf.mxu0
    %2201 = vdwg.mxu0
    %2202 = vmatpush.bf16.msra.mxu0 %v1953
    %2203 = vmatpush.bf16.msra.mxu0 %v1945
    %2204 = vmatpush.bf16.msra.mxu0 %v1937
    %2205 = vmatpush.bf16.msra.mxu0 %v1929
    %2206 = vmatpush.bf16.msra.mxu0 %v1921
    %2207 = vmatpush.bf16.msra.mxu0 %v1913
    %2208 = vmatpush.bf16.msra.mxu0 %v1905
    %2209 = vmatpush.bf16.msra.mxu0 %v1897
    %2210 = vmatmul.bf16.gmra.mxu0 %v1442
    %v2211 = vpop.f32.mrf.mxu0
    %v2212 = vadd.f32 %v2199, %v2211
    %v2213 = vpop.f32.mrf.mxu0
    %2214 = vdwg.mxu0
    %2215 = vmatpush.bf16.msra.mxu0 %v1890
    %2216 = vmatpush.bf16.msra.mxu0 %v1882
    %2217 = vmatpush.bf16.msra.mxu0 %v1874
    %2218 = vmatpush.bf16.msra.mxu0 %v1866
    %2219 = vmatpush.bf16.msra.mxu0 %v1858
    %2220 = vmatpush.bf16.msra.mxu0 %v1850
    %2221 = vmatpush.bf16.msra.mxu0 %v1842
    %2222 = vmatpush.bf16.msra.mxu0 %v1834
    %2223 = vmatmul.bf16.gmra.mxu0 %v1441
    %v2224 = vpop.f32.mrf.mxu0
    %v2225 = vadd.f32 0.0, %v2224
    %v2226 = vpop.f32.mrf.mxu0
    %2227 = vdwg.mxu0
    %2228 = vmatpush.bf16.msra.mxu0 %v1954
    %2229 = vmatpush.bf16.msra.mxu0 %v1946
    %2230 = vmatpush.bf16.msra.mxu0 %v1938
    %2231 = vmatpush.bf16.msra.mxu0 %v1930
    %2232 = vmatpush.bf16.msra.mxu0 %v1922
    %2233 = vmatpush.bf16.msra.mxu0 %v1914
    %2234 = vmatpush.bf16.msra.mxu0 %v1906
    %2235 = vmatpush.bf16.msra.mxu0 %v1898
    %2236 = vmatmul.bf16.gmra.mxu0 %v1442
    %v2237 = vpop.f32.mrf.mxu0
    %v2238 = vadd.f32 %v2225, %v2237
    %v2239 = vpop.f32.mrf.mxu0
    %2240 = vdwg.mxu0
    %2241 = vmatpush.bf16.msra.mxu0 %v1891
    %2242 = vmatpush.bf16.msra.mxu0 %v1883
    %2243 = vmatpush.bf16.msra.mxu0 %v1875
    %2244 = vmatpush.bf16.msra.mxu0 %v1867
    %2245 = vmatpush.bf16.msra.mxu0 %v1859
    %2246 = vmatpush.bf16.msra.mxu0 %v1851
    %2247 = vmatpush.bf16.msra.mxu0 %v1843
    %2248 = vmatpush.bf16.msra.mxu0 %v1835
    %2249 = vmatmul.bf16.gmra.mxu0 %v1441
    %v2250 = vpop.f32.mrf.mxu0
    %v2251 = vadd.f32 0.0, %v2250
    %v2252 = vpop.f32.mrf.mxu0
    %2253 = vdwg.mxu0
    %2254 = vmatpush.bf16.msra.mxu0 %v1955
    %2255 = vmatpush.bf16.msra.mxu0 %v1947
    %2256 = vmatpush.bf16.msra.mxu0 %v1939
    %2257 = vmatpush.bf16.msra.mxu0 %v1931
    %2258 = vmatpush.bf16.msra.mxu0 %v1923
    %2259 = vmatpush.bf16.msra.mxu0 %v1915
    %2260 = vmatpush.bf16.msra.mxu0 %v1907
    %2261 = vmatpush.bf16.msra.mxu0 %v1899
    %2262 = vmatmul.bf16.gmra.mxu0 %v1442
    %v2263 = vpop.f32.mrf.mxu0
    %v2264 = vadd.f32 %v2251, %v2263
    %v2265 = vpop.f32.mrf.mxu0
    %2266 = vdwg.mxu0
    %2267 = vmatpush.bf16.msra.mxu0 %v1892
    %2268 = vmatpush.bf16.msra.mxu0 %v1884
    %2269 = vmatpush.bf16.msra.mxu0 %v1876
    %2270 = vmatpush.bf16.msra.mxu0 %v1868
    %2271 = vmatpush.bf16.msra.mxu0 %v1860
    %2272 = vmatpush.bf16.msra.mxu0 %v1852
    %2273 = vmatpush.bf16.msra.mxu0 %v1844
    %2274 = vmatpush.bf16.msra.mxu0 %v1836
    %2275 = vmatmul.bf16.gmra.mxu0 %v1441
    %v2276 = vpop.f32.mrf.mxu0
    %v2277 = vadd.f32 0.0, %v2276
    %v2278 = vpop.f32.mrf.mxu0
    %2279 = vdwg.mxu0
    %2280 = vmatpush.bf16.msra.mxu0 %v1956
    %2281 = vmatpush.bf16.msra.mxu0 %v1948
    %2282 = vmatpush.bf16.msra.mxu0 %v1940
    %2283 = vmatpush.bf16.msra.mxu0 %v1932
    %2284 = vmatpush.bf16.msra.mxu0 %v1924
    %2285 = vmatpush.bf16.msra.mxu0 %v1916
    %2286 = vmatpush.bf16.msra.mxu0 %v1908
    %2287 = vmatpush.bf16.msra.mxu0 %v1900
    %2288 = vmatmul.bf16.gmra.mxu0 %v1442
    %v2289 = vpop.f32.mrf.mxu0
    %v2290 = vadd.f32 %v2277, %v2289
    %v2291 = vpop.f32.mrf.mxu0
    %2292 = vdwg.mxu0
    %v2294 = vunpack.c.l.b16 %v1175
    %v2295 = vunpack.c.h.b16 %v1175
    %v2296 = vpack.c.b16 %v2294, %v2294
    %v2297 = vpack.c.b16 %v2295, %v2295
    %v2428 = vunpack.c.l.b16 %v1180
    %v2429 = vunpack.c.h.b16 %v1180
    %v2430 = vunpack.c.l.b16 %v1181
    %v2431 = vunpack.c.h.b16 %v1181
    %v2432 = vunpack.c.l.b16 %v1182
    %v2433 = vunpack.c.h.b16 %v1182
    %v2434 = vunpack.c.l.b16 %v1183
    %v2435 = vunpack.c.h.b16 %v1183
    %v2436 = vunpack.c.l.b16 %v1184
    %v2437 = vunpack.c.h.b16 %v1184
    %v2438 = vunpack.c.l.b16 %v1185
    %v2439 = vunpack.c.h.b16 %v1185
    %v2440 = vunpack.c.l.b16 %v1186
    %v2441 = vunpack.c.h.b16 %v1186
    %v2442 = vunpack.c.l.b16 %v1187
    %v2443 = vunpack.c.h.b16 %v1187
    %v2444 = vunpack.c.l.b16 %v1188
    %v2445 = vunpack.c.h.b16 %v1188
    %v2446 = vunpack.c.l.b16 %v1189
    %v2447 = vunpack.c.h.b16 %v1189
    %v2448 = vunpack.c.l.b16 %v1190
    %v2449 = vunpack.c.h.b16 %v1190
    %v2450 = vunpack.c.l.b16 %v1191
    %v2451 = vunpack.c.h.b16 %v1191
    %v2452 = vunpack.c.l.b16 %v1192
    %v2453 = vunpack.c.h.b16 %v1192
    %v2454 = vunpack.c.l.b16 %v1193
    %v2455 = vunpack.c.h.b16 %v1193
    %v2456 = vunpack.c.l.b16 %v1194
    %v2457 = vunpack.c.h.b16 %v1194
    %v2458 = vunpack.c.l.b16 %v1195
    %v2459 = vunpack.c.h.b16 %v1195
    %v2460 = vunpack.c.l.b16 %v1196
    %v2461 = vunpack.c.h.b16 %v1196
    %v2462 = vunpack.c.l.b16 %v1197
    %v2463 = vunpack.c.h.b16 %v1197
    %v2464 = vunpack.c.l.b16 %v1198
    %v2465 = vunpack.c.h.b16 %v1198
    %v2466 = vunpack.c.l.b16 %v1199
    %v2467 = vunpack.c.h.b16 %v1199
    %v2468 = vunpack.c.l.b16 %v1200
    %v2469 = vunpack.c.h.b16 %v1200
    %v2470 = vunpack.c.l.b16 %v1201
    %v2471 = vunpack.c.h.b16 %v1201
    %v2472 = vunpack.c.l.b16 %v1202
    %v2473 = vunpack.c.h.b16 %v1202
    %v2474 = vunpack.c.l.b16 %v1203
    %v2475 = vunpack.c.h.b16 %v1203
    %v2476 = vunpack.c.l.b16 %v1204
    %v2477 = vunpack.c.h.b16 %v1204
    %v2478 = vunpack.c.l.b16 %v1205
    %v2479 = vunpack.c.h.b16 %v1205
    %v2480 = vunpack.c.l.b16 %v1206
    %v2481 = vunpack.c.h.b16 %v1206
    %v2482 = vunpack.c.l.b16 %v1207
    %v2483 = vunpack.c.h.b16 %v1207
    %v2484 = vunpack.c.l.b16 %v1208
    %v2485 = vunpack.c.h.b16 %v1208
    %v2486 = vunpack.c.l.b16 %v1209
    %v2487 = vunpack.c.h.b16 %v1209
    %v2488 = vunpack.c.l.b16 %v1210
    %v2489 = vunpack.c.h.b16 %v1210
    %v2490 = vunpack.c.l.b16 %v1211
    %v2491 = vunpack.c.h.b16 %v1211
    %v2492 = vunpack.c.l.b16 %v1212
    %v2493 = vunpack.c.h.b16 %v1212
    %v2494 = vunpack.c.l.b16 %v1213
    %v2495 = vunpack.c.h.b16 %v1213
    %v2496 = vunpack.c.l.b16 %v1214
    %v2497 = vunpack.c.h.b16 %v1214
    %v2498 = vunpack.c.l.b16 %v1215
    %v2499 = vunpack.c.h.b16 %v1215
    %v2500 = vunpack.c.l.b16 %v1216
    %v2501 = vunpack.c.h.b16 %v1216
    %v2502 = vunpack.c.l.b16 %v1217
    %v2503 = vunpack.c.h.b16 %v1217
    %v2504 = vunpack.c.l.b16 %v1218
    %v2505 = vunpack.c.h.b16 %v1218
    %v2506 = vunpack.c.l.b16 %v1219
    %v2507 = vunpack.c.h.b16 %v1219
    %v2508 = vunpack.c.l.b16 %v1220
    %v2509 = vunpack.c.h.b16 %v1220
    %v2510 = vunpack.c.l.b16 %v1221
    %v2511 = vunpack.c.h.b16 %v1221
    %v2512 = vunpack.c.l.b16 %v1222
    %v2513 = vunpack.c.h.b16 %v1222
    %v2514 = vunpack.c.l.b16 %v1223
    %v2515 = vunpack.c.h.b16 %v1223
    %v2516 = vunpack.c.l.b16 %v1224
    %v2517 = vunpack.c.h.b16 %v1224
    %v2518 = vunpack.c.l.b16 %v1225
    %v2519 = vunpack.c.h.b16 %v1225
    %v2520 = vunpack.c.l.b16 %v1226
    %v2521 = vunpack.c.h.b16 %v1226
    %v2522 = vunpack.c.l.b16 %v1227
    %v2523 = vunpack.c.h.b16 %v1227
    %v2524 = vunpack.c.l.b16 %v1228
    %v2525 = vunpack.c.h.b16 %v1228
    %v2526 = vunpack.c.l.b16 %v1229
    %v2527 = vunpack.c.h.b16 %v1229
    %v2528 = vunpack.c.l.b16 %v1230
    %v2529 = vunpack.c.h.b16 %v1230
    %v2530 = vunpack.c.l.b16 %v1231
    %v2531 = vunpack.c.h.b16 %v1231
    %v2532 = vunpack.c.l.b16 %v1232
    %v2533 = vunpack.c.h.b16 %v1232
    %v2534 = vunpack.c.l.b16 %v1233
    %v2535 = vunpack.c.h.b16 %v1233
    %v2536 = vunpack.c.l.b16 %v1234
    %v2537 = vunpack.c.h.b16 %v1234
    %v2538 = vunpack.c.l.b16 %v1235
    %v2539 = vunpack.c.h.b16 %v1235
    %v2540 = vunpack.c.l.b16 %v1236
    %v2541 = vunpack.c.h.b16 %v1236
    %v2542 = vunpack.c.l.b16 %v1237
    %v2543 = vunpack.c.h.b16 %v1237
    %v2544 = vunpack.c.l.b16 %v1238
    %v2545 = vunpack.c.h.b16 %v1238
    %v2546 = vunpack.c.l.b16 %v1239
    %v2547 = vunpack.c.h.b16 %v1239
    %v2548 = vunpack.c.l.b16 %v1240
    %v2549 = vunpack.c.h.b16 %v1240
    %v2550 = vunpack.c.l.b16 %v1241
    %v2551 = vunpack.c.h.b16 %v1241
    %v2552 = vunpack.c.l.b16 %v1242
    %v2553 = vunpack.c.h.b16 %v1242
    %v2554 = vunpack.c.l.b16 %v1243
    %v2555 = vunpack.c.h.b16 %v1243
    %v2556 = vunpack.c.l.b16 %v1244
    %v2557 = vunpack.c.h.b16 %v1244
    %v2558 = vunpack.c.l.b16 %v1245
    %v2559 = vunpack.c.h.b16 %v1245
    %v2560 = vunpack.c.l.b16 %v1246
    %v2561 = vunpack.c.h.b16 %v1246
    %v2562 = vunpack.c.l.b16 %v1247
    %v2563 = vunpack.c.h.b16 %v1247
    %v2564 = vunpack.c.l.b16 %v1248
    %v2565 = vunpack.c.h.b16 %v1248
    %v2566 = vunpack.c.l.b16 %v1249
    %v2567 = vunpack.c.h.b16 %v1249
    %v2568 = vunpack.c.l.b16 %v1250
    %v2569 = vunpack.c.h.b16 %v1250
    %v2570 = vunpack.c.l.b16 %v1251
    %v2571 = vunpack.c.h.b16 %v1251
    %v2572 = vunpack.c.l.b16 %v1252
    %v2573 = vunpack.c.h.b16 %v1252
    %v2574 = vunpack.c.l.b16 %v1253
    %v2575 = vunpack.c.h.b16 %v1253
    %v2576 = vunpack.c.l.b16 %v1254
    %v2577 = vunpack.c.h.b16 %v1254
    %v2578 = vunpack.c.l.b16 %v1255
    %v2579 = vunpack.c.h.b16 %v1255
    %v2580 = vunpack.c.l.b16 %v1256
    %v2581 = vunpack.c.h.b16 %v1256
    %v2582 = vunpack.c.l.b16 %v1257
    %v2583 = vunpack.c.h.b16 %v1257
    %v2584 = vunpack.c.l.b16 %v1258
    %v2585 = vunpack.c.h.b16 %v1258
    %v2586 = vunpack.c.l.b16 %v1259
    %v2587 = vunpack.c.h.b16 %v1259
    %v2588 = vunpack.c.l.b16 %v1260
    %v2589 = vunpack.c.h.b16 %v1260
    %v2590 = vunpack.c.l.b16 %v1261
    %v2591 = vunpack.c.h.b16 %v1261
    %v2592 = vunpack.c.l.b16 %v1262
    %v2593 = vunpack.c.h.b16 %v1262
    %v2594 = vunpack.c.l.b16 %v1263
    %v2595 = vunpack.c.h.b16 %v1263
    %v2596 = vunpack.c.l.b16 %v1264
    %v2597 = vunpack.c.h.b16 %v1264
    %v2598 = vunpack.c.l.b16 %v1265
    %v2599 = vunpack.c.h.b16 %v1265
    %v2600 = vunpack.c.l.b16 %v1266
    %v2601 = vunpack.c.h.b16 %v1266
    %v2602 = vunpack.c.l.b16 %v1267
    %v2603 = vunpack.c.h.b16 %v1267
    %v2604 = vunpack.c.l.b16 %v1268
    %v2605 = vunpack.c.h.b16 %v1268
    %v2606 = vunpack.c.l.b16 %v1269
    %v2607 = vunpack.c.h.b16 %v1269
    %v2608 = vunpack.c.l.b16 %v1270
    %v2609 = vunpack.c.h.b16 %v1270
    %v2610 = vunpack.c.l.b16 %v1271
    %v2611 = vunpack.c.h.b16 %v1271
    %v2612 = vunpack.c.l.b16 %v1272
    %v2613 = vunpack.c.h.b16 %v1272
    %v2614 = vunpack.c.l.b16 %v1273
    %v2615 = vunpack.c.h.b16 %v1273
    %v2616 = vunpack.c.l.b16 %v1274
    %v2617 = vunpack.c.h.b16 %v1274
    %v2618 = vunpack.c.l.b16 %v1275
    %v2619 = vunpack.c.h.b16 %v1275
    %v2620 = vunpack.c.l.b16 %v1276
    %v2621 = vunpack.c.h.b16 %v1276
    %v2622 = vunpack.c.l.b16 %v1277
    %v2623 = vunpack.c.h.b16 %v1277
    %v2624 = vunpack.c.l.b16 %v1278
    %v2625 = vunpack.c.h.b16 %v1278
    %v2626 = vunpack.c.l.b16 %v1279
    %v2627 = vunpack.c.h.b16 %v1279
    %v2628 = vunpack.c.l.b16 %v1280
    %v2629 = vunpack.c.h.b16 %v1280
    %v2630 = vunpack.c.l.b16 %v1281
    %v2631 = vunpack.c.h.b16 %v1281
    %v2632 = vunpack.c.l.b16 %v1282
    %v2633 = vunpack.c.h.b16 %v1282
    %v2634 = vunpack.c.l.b16 %v1283
    %v2635 = vunpack.c.h.b16 %v1283
    %v2636 = vunpack.c.l.b16 %v1284
    %v2637 = vunpack.c.h.b16 %v1284
    %v2638 = vunpack.c.l.b16 %v1285
    %v2639 = vunpack.c.h.b16 %v1285
    %v2640 = vunpack.c.l.b16 %v1286
    %v2641 = vunpack.c.h.b16 %v1286
    %v2642 = vunpack.c.l.b16 %v1287
    %v2643 = vunpack.c.h.b16 %v1287
    %v2644 = vunpack.c.l.b16 %v1288
    %v2645 = vunpack.c.h.b16 %v1288
    %v2646 = vunpack.c.l.b16 %v1289
    %v2647 = vunpack.c.h.b16 %v1289
    %v2648 = vunpack.c.l.b16 %v1290
    %v2649 = vunpack.c.h.b16 %v1290
    %v2650 = vunpack.c.l.b16 %v1291
    %v2651 = vunpack.c.h.b16 %v1291
    %v2652 = vunpack.c.l.b16 %v1292
    %v2653 = vunpack.c.h.b16 %v1292
    %v2654 = vunpack.c.l.b16 %v1293
    %v2655 = vunpack.c.h.b16 %v1293
    %v2656 = vunpack.c.l.b16 %v1294
    %v2657 = vunpack.c.h.b16 %v1294
    %v2658 = vunpack.c.l.b16 %v1295
    %v2659 = vunpack.c.h.b16 %v1295
    %v2660 = vunpack.c.l.b16 %v1296
    %v2661 = vunpack.c.h.b16 %v1296
    %v2662 = vunpack.c.l.b16 %v1297
    %v2663 = vunpack.c.h.b16 %v1297
    %v2664 = vunpack.c.l.b16 %v1298
    %v2665 = vunpack.c.h.b16 %v1298
    %v2666 = vunpack.c.l.b16 %v1299
    %v2667 = vunpack.c.h.b16 %v1299
    %v2668 = vunpack.c.l.b16 %v1300
    %v2669 = vunpack.c.h.b16 %v1300
    %v2670 = vunpack.c.l.b16 %v1301
    %v2671 = vunpack.c.h.b16 %v1301
    %v2672 = vunpack.c.l.b16 %v1302
    %v2673 = vunpack.c.h.b16 %v1302
    %v2674 = vunpack.c.l.b16 %v1303
    %v2675 = vunpack.c.h.b16 %v1303
    %v2676 = vunpack.c.l.b16 %v1304
    %v2677 = vunpack.c.h.b16 %v1304
    %v2678 = vunpack.c.l.b16 %v1305
    %v2679 = vunpack.c.h.b16 %v1305
    %v2680 = vunpack.c.l.b16 %v1306
    %v2681 = vunpack.c.h.b16 %v1306
    %v2682 = vunpack.c.l.b16 %v1307
    %v2683 = vunpack.c.h.b16 %v1307
    %v2684 = vpack.c.b16 %v2436, %v2428
    %v2685 = vpack.c.b16 %v2437, %v2429
    %v2686 = vpack.c.b16 %v2438, %v2430
    %v2687 = vpack.c.b16 %v2439, %v2431
    %v2688 = vpack.c.b16 %v2440, %v2432
    %v2689 = vpack.c.b16 %v2441, %v2433
    %v2690 = vpack.c.b16 %v2442, %v2434
    %v2691 = vpack.c.b16 %v2443, %v2435
    %v2692 = vpack.c.b16 %v2452, %v2444
    %v2693 = vpack.c.b16 %v2453, %v2445
    %v2694 = vpack.c.b16 %v2454, %v2446
    %v2695 = vpack.c.b16 %v2455, %v2447
    %v2696 = vpack.c.b16 %v2456, %v2448
    %v2697 = vpack.c.b16 %v2457, %v2449
    %v2698 = vpack.c.b16 %v2458, %v2450
    %v2699 = vpack.c.b16 %v2459, %v2451
    %v2700 = vpack.c.b16 %v2468, %v2460
    %v2701 = vpack.c.b16 %v2469, %v2461
    %v2702 = vpack.c.b16 %v2470, %v2462
    %v2703 = vpack.c.b16 %v2471, %v2463
    %v2704 = vpack.c.b16 %v2472, %v2464
    %v2705 = vpack.c.b16 %v2473, %v2465
    %v2706 = vpack.c.b16 %v2474, %v2466
    %v2707 = vpack.c.b16 %v2475, %v2467
    %v2708 = vpack.c.b16 %v2484, %v2476
    %v2709 = vpack.c.b16 %v2485, %v2477
    %v2710 = vpack.c.b16 %v2486, %v2478
    %v2711 = vpack.c.b16 %v2487, %v2479
    %v2712 = vpack.c.b16 %v2488, %v2480
    %v2713 = vpack.c.b16 %v2489, %v2481
    %v2714 = vpack.c.b16 %v2490, %v2482
    %v2715 = vpack.c.b16 %v2491, %v2483
    %v2716 = vpack.c.b16 %v2500, %v2492
    %v2717 = vpack.c.b16 %v2501, %v2493
    %v2718 = vpack.c.b16 %v2502, %v2494
    %v2719 = vpack.c.b16 %v2503, %v2495
    %v2720 = vpack.c.b16 %v2504, %v2496
    %v2721 = vpack.c.b16 %v2505, %v2497
    %v2722 = vpack.c.b16 %v2506, %v2498
    %v2723 = vpack.c.b16 %v2507, %v2499
    %v2724 = vpack.c.b16 %v2516, %v2508
    %v2725 = vpack.c.b16 %v2517, %v2509
    %v2726 = vpack.c.b16 %v2518, %v2510
    %v2727 = vpack.c.b16 %v2519, %v2511
    %v2728 = vpack.c.b16 %v2520, %v2512
    %v2729 = vpack.c.b16 %v2521, %v2513
    %v2730 = vpack.c.b16 %v2522, %v2514
    %v2731 = vpack.c.b16 %v2523, %v2515
    %v2732 = vpack.c.b16 %v2532, %v2524
    %v2733 = vpack.c.b16 %v2533, %v2525
    %v2734 = vpack.c.b16 %v2534, %v2526
    %v2735 = vpack.c.b16 %v2535, %v2527
    %v2736 = vpack.c.b16 %v2536, %v2528
    %v2737 = vpack.c.b16 %v2537, %v2529
    %v2738 = vpack.c.b16 %v2538, %v2530
    %v2739 = vpack.c.b16 %v2539, %v2531
    %v2740 = vpack.c.b16 %v2548, %v2540
    %v2741 = vpack.c.b16 %v2549, %v2541
    %v2742 = vpack.c.b16 %v2550, %v2542
    %v2743 = vpack.c.b16 %v2551, %v2543
    %v2744 = vpack.c.b16 %v2552, %v2544
    %v2745 = vpack.c.b16 %v2553, %v2545
    %v2746 = vpack.c.b16 %v2554, %v2546
    %v2747 = vpack.c.b16 %v2555, %v2547
    %v2748 = vpack.c.b16 %v2564, %v2556
    %v2749 = vpack.c.b16 %v2565, %v2557
    %v2750 = vpack.c.b16 %v2566, %v2558
    %v2751 = vpack.c.b16 %v2567, %v2559
    %v2752 = vpack.c.b16 %v2568, %v2560
    %v2753 = vpack.c.b16 %v2569, %v2561
    %v2754 = vpack.c.b16 %v2570, %v2562
    %v2755 = vpack.c.b16 %v2571, %v2563
    %v2756 = vpack.c.b16 %v2580, %v2572
    %v2757 = vpack.c.b16 %v2581, %v2573
    %v2758 = vpack.c.b16 %v2582, %v2574
    %v2759 = vpack.c.b16 %v2583, %v2575
    %v2760 = vpack.c.b16 %v2584, %v2576
    %v2761 = vpack.c.b16 %v2585, %v2577
    %v2762 = vpack.c.b16 %v2586, %v2578
    %v2763 = vpack.c.b16 %v2587, %v2579
    %v2764 = vpack.c.b16 %v2596, %v2588
    %v2765 = vpack.c.b16 %v2597, %v2589
    %v2766 = vpack.c.b16 %v2598, %v2590
    %v2767 = vpack.c.b16 %v2599, %v2591
    %v2768 = vpack.c.b16 %v2600, %v2592
    %v2769 = vpack.c.b16 %v2601, %v2593
    %v2770 = vpack.c.b16 %v2602, %v2594
    %v2771 = vpack.c.b16 %v2603, %v2595
    %v2772 = vpack.c.b16 %v2612, %v2604
    %v2773 = vpack.c.b16 %v2613, %v2605
    %v2774 = vpack.c.b16 %v2614, %v2606
    %v2775 = vpack.c.b16 %v2615, %v2607
    %v2776 = vpack.c.b16 %v2616, %v2608
    %v2777 = vpack.c.b16 %v2617, %v2609
    %v2778 = vpack.c.b16 %v2618, %v2610
    %v2779 = vpack.c.b16 %v2619, %v2611
    %v2780 = vpack.c.b16 %v2628, %v2620
    %v2781 = vpack.c.b16 %v2629, %v2621
    %v2782 = vpack.c.b16 %v2630, %v2622
    %v2783 = vpack.c.b16 %v2631, %v2623
    %v2784 = vpack.c.b16 %v2632, %v2624
    %v2785 = vpack.c.b16 %v2633, %v2625
    %v2786 = vpack.c.b16 %v2634, %v2626
    %v2787 = vpack.c.b16 %v2635, %v2627
    %v2788 = vpack.c.b16 %v2644, %v2636
    %v2789 = vpack.c.b16 %v2645, %v2637
    %v2790 = vpack.c.b16 %v2646, %v2638
    %v2791 = vpack.c.b16 %v2647, %v2639
    %v2792 = vpack.c.b16 %v2648, %v2640
    %v2793 = vpack.c.b16 %v2649, %v2641
    %v2794 = vpack.c.b16 %v2650, %v2642
    %v2795 = vpack.c.b16 %v2651, %v2643
    %v2796 = vpack.c.b16 %v2660, %v2652
    %v2797 = vpack.c.b16 %v2661, %v2653
    %v2798 = vpack.c.b16 %v2662, %v2654
    %v2799 = vpack.c.b16 %v2663, %v2655
    %v2800 = vpack.c.b16 %v2664, %v2656
    %v2801 = vpack.c.b16 %v2665, %v2657
    %v2802 = vpack.c.b16 %v2666, %v2658
    %v2803 = vpack.c.b16 %v2667, %v2659
    %v2804 = vpack.c.b16 %v2676, %v2668
    %v2805 = vpack.c.b16 %v2677, %v2669
    %v2806 = vpack.c.b16 %v2678, %v2670
    %v2807 = vpack.c.b16 %v2679, %v2671
    %v2808 = vpack.c.b16 %v2680, %v2672
    %v2809 = vpack.c.b16 %v2681, %v2673
    %v2810 = vpack.c.b16 %v2682, %v2674
    %v2811 = vpack.c.b16 %v2683, %v2675
    %2940 = vmatpush.bf16.msra.mxu0 %v2740
    %2941 = vmatpush.bf16.msra.mxu0 %v2732
    %2942 = vmatpush.bf16.msra.mxu0 %v2724
    %2943 = vmatpush.bf16.msra.mxu0 %v2716
    %2944 = vmatpush.bf16.msra.mxu0 %v2708
    %2945 = vmatpush.bf16.msra.mxu0 %v2700
    %2946 = vmatpush.bf16.msra.mxu0 %v2692
    %2947 = vmatpush.bf16.msra.mxu0 %v2684
    %2948 = vmatmul.bf16.gmra.mxu0 %v2296
    %v2949 = vpop.f32.mrf.mxu0
    %v2950 = vadd.f32 %v2108, %v2949
    %v2951 = vpop.f32.mrf.mxu0
    %2952 = vdwg.mxu0
    %2953 = vmatpush.bf16.msra.mxu0 %v2804
    %2954 = vmatpush.bf16.msra.mxu0 %v2796
    %2955 = vmatpush.bf16.msra.mxu0 %v2788
    %2956 = vmatpush.bf16.msra.mxu0 %v2780
    %2957 = vmatpush.bf16.msra.mxu0 %v2772
    %2958 = vmatpush.bf16.msra.mxu0 %v2764
    %2959 = vmatpush.bf16.msra.mxu0 %v2756
    %2960 = vmatpush.bf16.msra.mxu0 %v2748
    %2961 = vmatmul.bf16.gmra.mxu0 %v2297
    %v2962 = vpop.f32.mrf.mxu0
    %v2963 = vadd.f32 %v2950, %v2962
    %v2964 = vpop.f32.mrf.mxu0
    %2965 = vdwg.mxu0
    %2966 = vmatpush.bf16.msra.mxu0 %v2741
    %2967 = vmatpush.bf16.msra.mxu0 %v2733
    %2968 = vmatpush.bf16.msra.mxu0 %v2725
    %2969 = vmatpush.bf16.msra.mxu0 %v2717
    %2970 = vmatpush.bf16.msra.mxu0 %v2709
    %2971 = vmatpush.bf16.msra.mxu0 %v2701
    %2972 = vmatpush.bf16.msra.mxu0 %v2693
    %2973 = vmatpush.bf16.msra.mxu0 %v2685
    %2974 = vmatmul.bf16.gmra.mxu0 %v2296
    %v2975 = vpop.f32.mrf.mxu0
    %v2976 = vadd.f32 %v2134, %v2975
    %v2977 = vpop.f32.mrf.mxu0
    %2978 = vdwg.mxu0
    %2979 = vmatpush.bf16.msra.mxu0 %v2805
    %2980 = vmatpush.bf16.msra.mxu0 %v2797
    %2981 = vmatpush.bf16.msra.mxu0 %v2789
    %2982 = vmatpush.bf16.msra.mxu0 %v2781
    %2983 = vmatpush.bf16.msra.mxu0 %v2773
    %2984 = vmatpush.bf16.msra.mxu0 %v2765
    %2985 = vmatpush.bf16.msra.mxu0 %v2757
    %2986 = vmatpush.bf16.msra.mxu0 %v2749
    %2987 = vmatmul.bf16.gmra.mxu0 %v2297
    %v2988 = vpop.f32.mrf.mxu0
    %v2989 = vadd.f32 %v2976, %v2988
    %v2990 = vpop.f32.mrf.mxu0
    %2991 = vdwg.mxu0
    %2992 = vmatpush.bf16.msra.mxu0 %v2742
    %2993 = vmatpush.bf16.msra.mxu0 %v2734
    %2994 = vmatpush.bf16.msra.mxu0 %v2726
    %2995 = vmatpush.bf16.msra.mxu0 %v2718
    %2996 = vmatpush.bf16.msra.mxu0 %v2710
    %2997 = vmatpush.bf16.msra.mxu0 %v2702
    %2998 = vmatpush.bf16.msra.mxu0 %v2694
    %2999 = vmatpush.bf16.msra.mxu0 %v2686
    %3000 = vmatmul.bf16.gmra.mxu0 %v2296
    %v3001 = vpop.f32.mrf.mxu0
    %v3002 = vadd.f32 %v2160, %v3001
    %v3003 = vpop.f32.mrf.mxu0
    %3004 = vdwg.mxu0
    %3005 = vmatpush.bf16.msra.mxu0 %v2806
    %3006 = vmatpush.bf16.msra.mxu0 %v2798
    %3007 = vmatpush.bf16.msra.mxu0 %v2790
    %3008 = vmatpush.bf16.msra.mxu0 %v2782
    %3009 = vmatpush.bf16.msra.mxu0 %v2774
    %3010 = vmatpush.bf16.msra.mxu0 %v2766
    %3011 = vmatpush.bf16.msra.mxu0 %v2758
    %3012 = vmatpush.bf16.msra.mxu0 %v2750
    %3013 = vmatmul.bf16.gmra.mxu0 %v2297
    %v3014 = vpop.f32.mrf.mxu0
    %v3015 = vadd.f32 %v3002, %v3014
    %v3016 = vpop.f32.mrf.mxu0
    %3017 = vdwg.mxu0
    %3018 = vmatpush.bf16.msra.mxu0 %v2743
    %3019 = vmatpush.bf16.msra.mxu0 %v2735
    %3020 = vmatpush.bf16.msra.mxu0 %v2727
    %3021 = vmatpush.bf16.msra.mxu0 %v2719
    %3022 = vmatpush.bf16.msra.mxu0 %v2711
    %3023 = vmatpush.bf16.msra.mxu0 %v2703
    %3024 = vmatpush.bf16.msra.mxu0 %v2695
    %3025 = vmatpush.bf16.msra.mxu0 %v2687
    %3026 = vmatmul.bf16.gmra.mxu0 %v2296
    %v3027 = vpop.f32.mrf.mxu0
    %v3028 = vadd.f32 %v2186, %v3027
    %v3029 = vpop.f32.mrf.mxu0
    %3030 = vdwg.mxu0
    %3031 = vmatpush.bf16.msra.mxu0 %v2807
    %3032 = vmatpush.bf16.msra.mxu0 %v2799
    %3033 = vmatpush.bf16.msra.mxu0 %v2791
    %3034 = vmatpush.bf16.msra.mxu0 %v2783
    %3035 = vmatpush.bf16.msra.mxu0 %v2775
    %3036 = vmatpush.bf16.msra.mxu0 %v2767
    %3037 = vmatpush.bf16.msra.mxu0 %v2759
    %3038 = vmatpush.bf16.msra.mxu0 %v2751
    %3039 = vmatmul.bf16.gmra.mxu0 %v2297
    %v3040 = vpop.f32.mrf.mxu0
    %v3041 = vadd.f32 %v3028, %v3040
    %v3042 = vpop.f32.mrf.mxu0
    %3043 = vdwg.mxu0
    %3044 = vmatpush.bf16.msra.mxu0 %v2744
    %3045 = vmatpush.bf16.msra.mxu0 %v2736
    %3046 = vmatpush.bf16.msra.mxu0 %v2728
    %3047 = vmatpush.bf16.msra.mxu0 %v2720
    %3048 = vmatpush.bf16.msra.mxu0 %v2712
    %3049 = vmatpush.bf16.msra.mxu0 %v2704
    %3050 = vmatpush.bf16.msra.mxu0 %v2696
    %3051 = vmatpush.bf16.msra.mxu0 %v2688
    %3052 = vmatmul.bf16.gmra.mxu0 %v2296
    %v3053 = vpop.f32.mrf.mxu0
    %v3054 = vadd.f32 %v2212, %v3053
    %v3055 = vpop.f32.mrf.mxu0
    %3056 = vdwg.mxu0
    %3057 = vmatpush.bf16.msra.mxu0 %v2808
    %3058 = vmatpush.bf16.msra.mxu0 %v2800
    %3059 = vmatpush.bf16.msra.mxu0 %v2792
    %3060 = vmatpush.bf16.msra.mxu0 %v2784
    %3061 = vmatpush.bf16.msra.mxu0 %v2776
    %3062 = vmatpush.bf16.msra.mxu0 %v2768
    %3063 = vmatpush.bf16.msra.mxu0 %v2760
    %3064 = vmatpush.bf16.msra.mxu0 %v2752
    %3065 = vmatmul.bf16.gmra.mxu0 %v2297
    %v3066 = vpop.f32.mrf.mxu0
    %v3067 = vadd.f32 %v3054, %v3066
    %v3068 = vpop.f32.mrf.mxu0
    %3069 = vdwg.mxu0
    %3070 = vmatpush.bf16.msra.mxu0 %v2745
    %3071 = vmatpush.bf16.msra.mxu0 %v2737
    %3072 = vmatpush.bf16.msra.mxu0 %v2729
    %3073 = vmatpush.bf16.msra.mxu0 %v2721
    %3074 = vmatpush.bf16.msra.mxu0 %v2713
    %3075 = vmatpush.bf16.msra.mxu0 %v2705
    %3076 = vmatpush.bf16.msra.mxu0 %v2697
    %3077 = vmatpush.bf16.msra.mxu0 %v2689
    %3078 = vmatmul.bf16.gmra.mxu0 %v2296
    %v3079 = vpop.f32.mrf.mxu0
    %v3080 = vadd.f32 %v2238, %v3079
    %v3081 = vpop.f32.mrf.mxu0
    %3082 = vdwg.mxu0
    %3083 = vmatpush.bf16.msra.mxu0 %v2809
    %3084 = vmatpush.bf16.msra.mxu0 %v2801
    %3085 = vmatpush.bf16.msra.mxu0 %v2793
    %3086 = vmatpush.bf16.msra.mxu0 %v2785
    %3087 = vmatpush.bf16.msra.mxu0 %v2777
    %3088 = vmatpush.bf16.msra.mxu0 %v2769
    %3089 = vmatpush.bf16.msra.mxu0 %v2761
    %3090 = vmatpush.bf16.msra.mxu0 %v2753
    %3091 = vmatmul.bf16.gmra.mxu0 %v2297
    %v3092 = vpop.f32.mrf.mxu0
    %v3093 = vadd.f32 %v3080, %v3092
    %v3094 = vpop.f32.mrf.mxu0
    %3095 = vdwg.mxu0
    %3096 = vmatpush.bf16.msra.mxu0 %v2746
    %3097 = vmatpush.bf16.msra.mxu0 %v2738
    %3098 = vmatpush.bf16.msra.mxu0 %v2730
    %3099 = vmatpush.bf16.msra.mxu0 %v2722
    %3100 = vmatpush.bf16.msra.mxu0 %v2714
    %3101 = vmatpush.bf16.msra.mxu0 %v2706
    %3102 = vmatpush.bf16.msra.mxu0 %v2698
    %3103 = vmatpush.bf16.msra.mxu0 %v2690
    %3104 = vmatmul.bf16.gmra.mxu0 %v2296
    %v3105 = vpop.f32.mrf.mxu0
    %v3106 = vadd.f32 %v2264, %v3105
    %v3107 = vpop.f32.mrf.mxu0
    %3108 = vdwg.mxu0
    %3109 = vmatpush.bf16.msra.mxu0 %v2810
    %3110 = vmatpush.bf16.msra.mxu0 %v2802
    %3111 = vmatpush.bf16.msra.mxu0 %v2794
    %3112 = vmatpush.bf16.msra.mxu0 %v2786
    %3113 = vmatpush.bf16.msra.mxu0 %v2778
    %3114 = vmatpush.bf16.msra.mxu0 %v2770
    %3115 = vmatpush.bf16.msra.mxu0 %v2762
    %3116 = vmatpush.bf16.msra.mxu0 %v2754
    %3117 = vmatmul.bf16.gmra.mxu0 %v2297
    %v3118 = vpop.f32.mrf.mxu0
    %v3119 = vadd.f32 %v3106, %v3118
    %v3120 = vpop.f32.mrf.mxu0
    %3121 = vdwg.mxu0
    %3122 = vmatpush.bf16.msra.mxu0 %v2747
    %3123 = vmatpush.bf16.msra.mxu0 %v2739
    %3124 = vmatpush.bf16.msra.mxu0 %v2731
    %3125 = vmatpush.bf16.msra.mxu0 %v2723
    %3126 = vmatpush.bf16.msra.mxu0 %v2715
    %3127 = vmatpush.bf16.msra.mxu0 %v2707
    %3128 = vmatpush.bf16.msra.mxu0 %v2699
    %3129 = vmatpush.bf16.msra.mxu0 %v2691
    %3130 = vmatmul.bf16.gmra.mxu0 %v2296
    %v3131 = vpop.f32.mrf.mxu0
    %v3132 = vadd.f32 %v2290, %v3131
    %v3133 = vpop.f32.mrf.mxu0
    %3134 = vdwg.mxu0
    %3135 = vmatpush.bf16.msra.mxu0 %v2811
    %3136 = vmatpush.bf16.msra.mxu0 %v2803
    %3137 = vmatpush.bf16.msra.mxu0 %v2795
    %3138 = vmatpush.bf16.msra.mxu0 %v2787
    %3139 = vmatpush.bf16.msra.mxu0 %v2779
    %3140 = vmatpush.bf16.msra.mxu0 %v2771
    %3141 = vmatpush.bf16.msra.mxu0 %v2763
    %3142 = vmatpush.bf16.msra.mxu0 %v2755
    %3143 = vmatmul.bf16.gmra.mxu0 %v2297
    %v3144 = vpop.f32.mrf.mxu0
    %v3145 = vadd.f32 %v3132, %v3144
    %v3146 = vpop.f32.mrf.mxu0
    %3147 = vdwg.mxu0
    %v3148 = vrot.slane %v2963, 4
    %v3149 = vadd.f32 %v2963, %v3148
    %v3150 = vrot.slane %v3149, 2
    %v3151 = vadd.f32 %v3149, %v3150
    %v3152 = vrot.slane %v3151, 1
    %v3153 = vadd.f32 %v3151, %v3152
    %v3154 = vrot.slane %v2989, 4
    %v3155 = vadd.f32 %v2989, %v3154
    %v3156 = vrot.slane %v3155, 2
    %v3157 = vadd.f32 %v3155, %v3156
    %v3158 = vrot.slane %v3157, 1
    %v3159 = vadd.f32 %v3157, %v3158
    %v3160 = vrot.slane %v3015, 4
    %v3161 = vadd.f32 %v3015, %v3160
    %v3162 = vrot.slane %v3161, 2
    %v3163 = vadd.f32 %v3161, %v3162
    %v3164 = vrot.slane %v3163, 1
    %v3165 = vadd.f32 %v3163, %v3164
    %v3166 = vrot.slane %v3041, 4
    %v3167 = vadd.f32 %v3041, %v3166
    %v3168 = vrot.slane %v3167, 2
    %v3169 = vadd.f32 %v3167, %v3168
    %v3170 = vrot.slane %v3169, 1
    %v3171 = vadd.f32 %v3169, %v3170
    %v3172 = vrot.slane %v3067, 4
    %v3173 = vadd.f32 %v3067, %v3172
    %v3174 = vrot.slane %v3173, 2
    %v3175 = vadd.f32 %v3173, %v3174
    %v3176 = vrot.slane %v3175, 1
    %v3177 = vadd.f32 %v3175, %v3176
    %v3178 = vrot.slane %v3093, 4
    %v3179 = vadd.f32 %v3093, %v3178
    %v3180 = vrot.slane %v3179, 2
    %v3181 = vadd.f32 %v3179, %v3180
    %v3182 = vrot.slane %v3181, 1
    %v3183 = vadd.f32 %v3181, %v3182
    %v3184 = vrot.slane %v3119, 4
    %v3185 = vadd.f32 %v3119, %v3184
    %v3186 = vrot.slane %v3185, 2
    %v3187 = vadd.f32 %v3185, %v3186
    %v3188 = vrot.slane %v3187, 1
    %v3189 = vadd.f32 %v3187, %v3188
    %v3190 = vrot.slane %v3145, 4
    %v3191 = vadd.f32 %v3145, %v3190
    %v3192 = vrot.slane %v3191, 2
    %v3193 = vadd.f32 %v3191, %v3192
    %v3194 = vrot.slane %v3193, 1
    %v3195 = vadd.f32 %v3193, %v3194
    %v3196 = vmul.f32 %v3153, %v415
    %v3197 = vmul.f32 %v3159, %v415
    %v3198 = vmul.f32 %v3165, %v415
    %v3199 = vmul.f32 %v3171, %v415
    %v3200 = vmul.f32 %v3177, %v415
    %v3201 = vmul.f32 %v3183, %v415
    %v3202 = vmul.f32 %v3189, %v415
    %v3203 = vmul.f32 %v3195, %v415
    %v3204 = vmul.f32 %v2963, %v2963
    %v3205 = vmul.f32 %v2989, %v2989
    %v3206 = vmul.f32 %v3015, %v3015
    %v3207 = vmul.f32 %v3041, %v3041
    %v3208 = vmul.f32 %v3067, %v3067
    %v3209 = vmul.f32 %v3093, %v3093
    %v3210 = vmul.f32 %v3119, %v3119
    %v3211 = vmul.f32 %v3145, %v3145
    %v3212 = vrot.slane %v3204, 4
    %v3213 = vadd.f32 %v3204, %v3212
    %v3214 = vrot.slane %v3213, 2
    %v3215 = vadd.f32 %v3213, %v3214
    %v3216 = vrot.slane %v3215, 1
    %v3217 = vadd.f32 %v3215, %v3216
    %v3218 = vrot.slane %v3205, 4
    %v3219 = vadd.f32 %v3205, %v3218
    %v3220 = vrot.slane %v3219, 2
    %v3221 = vadd.f32 %v3219, %v3220
    %v3222 = vrot.slane %v3221, 1
    %v3223 = vadd.f32 %v3221, %v3222
    %v3224 = vrot.slane %v3206, 4
    %v3225 = vadd.f32 %v3206, %v3224
    %v3226 = vrot.slane %v3225, 2
    %v3227 = vadd.f32 %v3225, %v3226
    %v3228 = vrot.slane %v3227, 1
    %v3229 = vadd.f32 %v3227, %v3228
    %v3230 = vrot.slane %v3207, 4
    %v3231 = vadd.f32 %v3207, %v3230
    %v3232 = vrot.slane %v3231, 2
    %v3233 = vadd.f32 %v3231, %v3232
    %v3234 = vrot.slane %v3233, 1
    %v3235 = vadd.f32 %v3233, %v3234
    %v3236 = vrot.slane %v3208, 4
    %v3237 = vadd.f32 %v3208, %v3236
    %v3238 = vrot.slane %v3237, 2
    %v3239 = vadd.f32 %v3237, %v3238
    %v3240 = vrot.slane %v3239, 1
    %v3241 = vadd.f32 %v3239, %v3240
    %v3242 = vrot.slane %v3209, 4
    %v3243 = vadd.f32 %v3209, %v3242
    %v3244 = vrot.slane %v3243, 2
    %v3245 = vadd.f32 %v3243, %v3244
    %v3246 = vrot.slane %v3245, 1
    %v3247 = vadd.f32 %v3245, %v3246
    %v3248 = vrot.slane %v3210, 4
    %v3249 = vadd.f32 %v3210, %v3248
    %v3250 = vrot.slane %v3249, 2
    %v3251 = vadd.f32 %v3249, %v3250
    %v3252 = vrot.slane %v3251, 1
    %v3253 = vadd.f32 %v3251, %v3252
    %v3254 = vrot.slane %v3211, 4
    %v3255 = vadd.f32 %v3211, %v3254
    %v3256 = vrot.slane %v3255, 2
    %v3257 = vadd.f32 %v3255, %v3256
    %v3258 = vrot.slane %v3257, 1
    %v3259 = vadd.f32 %v3257, %v3258
    %v3260 = vmul.f32 %v3217, %v415
    %v3261 = vmul.f32 %v3223, %v415
    %v3262 = vmul.f32 %v3229, %v415
    %v3263 = vmul.f32 %v3235, %v415
    %v3264 = vmul.f32 %v3241, %v415
    %v3265 = vmul.f32 %v3247, %v415
    %v3266 = vmul.f32 %v3253, %v415
    %v3267 = vmul.f32 %v3259, %v415
    %v3268 = vmul.f32 %v3196, %v3196
    %v3269 = vmul.f32 %v3197, %v3197
    %v3270 = vmul.f32 %v3198, %v3198
    %v3271 = vmul.f32 %v3199, %v3199
    %v3272 = vmul.f32 %v3200, %v3200
    %v3273 = vmul.f32 %v3201, %v3201
    %v3274 = vmul.f32 %v3202, %v3202
    %v3275 = vmul.f32 %v3203, %v3203
    %v3276 = vsub.f32 %v3260, %v3268
    %v3277 = vsub.f32 %v3261, %v3269
    %v3278 = vsub.f32 %v3262, %v3270
    %v3279 = vsub.f32 %v3263, %v3271
    %v3280 = vsub.f32 %v3264, %v3272
    %v3281 = vsub.f32 %v3265, %v3273
    %v3282 = vsub.f32 %v3266, %v3274
    %v3283 = vsub.f32 %v3267, %v3275
    %v3284 = vmax.f32 %v3276, 0.0
    %v3285 = vmax.f32 %v3277, 0.0
    %v3286 = vmax.f32 %v3278, 0.0
    %v3287 = vmax.f32 %v3279, 0.0
    %v3288 = vmax.f32 %v3280, 0.0
    %v3289 = vmax.f32 %v3281, 0.0
    %v3290 = vmax.f32 %v3282, 0.0
    %v3291 = vmax.f32 %v3283, 0.0
    %v3292 = vadd.f32 %v3284, 1e-05
    %v3293 = vadd.f32 %v3285, 1e-05
    %v3294 = vadd.f32 %v3286, 1e-05
    %v3295 = vadd.f32 %v3287, 1e-05
    %v3296 = vadd.f32 %v3288, 1e-05
    %v3297 = vadd.f32 %v3289, 1e-05
    %v3298 = vadd.f32 %v3290, 1e-05
    %v3299 = vadd.f32 %v3291, 1e-05
    %v3300 = vrsqrt.pop %v3292
    %v3301 = vmul.f32 %v3300, %v3292
    %v3302 = vmul.f32 %v3301, %v3300
    %v3303 = vmul.f32 0.5, %v3302
    %v3304 = vsub.f32 1.5, %v3303
    %v3305 = vmul.f32 %v3300, %v3304
    %vm3306 = vweird.f32 %v3292
    %vm3307 = vweird.f32 %v3300
    %vm3308 = vmor %vm3306, %vm3307
    %v3309 = vsel %vm3308, %v3300, %v3305
    %v3310 = vrsqrt.pop %v3293
    %v3311 = vmul.f32 %v3310, %v3293
    %v3312 = vmul.f32 %v3311, %v3310
    %v3313 = vmul.f32 0.5, %v3312
    %v3314 = vsub.f32 1.5, %v3313
    %v3315 = vmul.f32 %v3310, %v3314
    %vm3316 = vweird.f32 %v3293
    %vm3317 = vweird.f32 %v3310
    %vm3318 = vmor %vm3316, %vm3317
    %v3319 = vsel %vm3318, %v3310, %v3315
    %v3320 = vrsqrt.pop %v3294
    %v3321 = vmul.f32 %v3320, %v3294
    %v3322 = vmul.f32 %v3321, %v3320
    %v3323 = vmul.f32 0.5, %v3322
    %v3324 = vsub.f32 1.5, %v3323
    %v3325 = vmul.f32 %v3320, %v3324
    %vm3326 = vweird.f32 %v3294
    %vm3327 = vweird.f32 %v3320
    %vm3328 = vmor %vm3326, %vm3327
    %v3329 = vsel %vm3328, %v3320, %v3325
    %v3330 = vrsqrt.pop %v3295
    %v3331 = vmul.f32 %v3330, %v3295
    %v3332 = vmul.f32 %v3331, %v3330
    %v3333 = vmul.f32 0.5, %v3332
    %v3334 = vsub.f32 1.5, %v3333
    %v3335 = vmul.f32 %v3330, %v3334
    %vm3336 = vweird.f32 %v3295
    %vm3337 = vweird.f32 %v3330
    %vm3338 = vmor %vm3336, %vm3337
    %v3339 = vsel %vm3338, %v3330, %v3335
    %v3340 = vrsqrt.pop %v3296
    %v3341 = vmul.f32 %v3340, %v3296
    %v3342 = vmul.f32 %v3341, %v3340
    %v3343 = vmul.f32 0.5, %v3342
    %v3344 = vsub.f32 1.5, %v3343
    %v3345 = vmul.f32 %v3340, %v3344
    %vm3346 = vweird.f32 %v3296
    %vm3347 = vweird.f32 %v3340
    %vm3348 = vmor %vm3346, %vm3347
    %v3349 = vsel %vm3348, %v3340, %v3345
    %v3350 = vrsqrt.pop %v3297
    %v3351 = vmul.f32 %v3350, %v3297
    %v3352 = vmul.f32 %v3351, %v3350
    %v3353 = vmul.f32 0.5, %v3352
    %v3354 = vsub.f32 1.5, %v3353
    %v3355 = vmul.f32 %v3350, %v3354
    %vm3356 = vweird.f32 %v3297
    %vm3357 = vweird.f32 %v3350
    %vm3358 = vmor %vm3356, %vm3357
    %v3359 = vsel %vm3358, %v3350, %v3355
    %v3360 = vrsqrt.pop %v3298
    %v3361 = vmul.f32 %v3360, %v3298
    %v3362 = vmul.f32 %v3361, %v3360
    %v3363 = vmul.f32 0.5, %v3362
    %v3364 = vsub.f32 1.5, %v3363
    %v3365 = vmul.f32 %v3360, %v3364
    %vm3366 = vweird.f32 %v3298
    %vm3367 = vweird.f32 %v3360
    %vm3368 = vmor %vm3366, %vm3367
    %v3369 = vsel %vm3368, %v3360, %v3365
    %v3370 = vrsqrt.pop %v3299
    %v3371 = vmul.f32 %v3370, %v3299
    %v3372 = vmul.f32 %v3371, %v3370
    %v3373 = vmul.f32 0.5, %v3372
    %v3374 = vsub.f32 1.5, %v3373
    %v3375 = vmul.f32 %v3370, %v3374
    %vm3376 = vweird.f32 %v3299
    %vm3377 = vweird.f32 %v3370
    %vm3378 = vmor %vm3376, %vm3377
    %v3379 = vsel %vm3378, %v3370, %v3375
    %v3388 = vrot.slane %v3319, 7
    %v3389 = vrot.slane %v3329, 6
    %v3390 = vrot.slane %v3339, 5
    %v3391 = vrot.slane %v3349, 4
    %v3392 = vrot.slane %v3359, 3
    %v3393 = vrot.slane %v3369, 2
    %v3394 = vrot.slane %v3379, 1
    %v3395 = vsel %vm465, %v3309, %v3388
    %v3396 = vsel %vm1115, %v3389, %v3390
    %v3397 = vsel %vm1117, %v3395, %v3396
    %vm3398 = vcmask 1044484
    %v3399 = vsel %vm3398, %v3391, %v3392
    %vm3400 = vcmask 1046534
    %v3401 = vsel %vm3400, %v3393, %v3394
    %vm3402 = vcmask 1045508
    %v3403 = vsel %vm3402, %v3399, %v3401
    %vm3404 = vcmask 1043456
    %v3405 = vsel %vm3404, %v3397, %v3403
    %v3407 = vmul.f32 %v180, %v3405
    %v3409 = vperm.slane %v3407, 0
    %v3410 = vperm.slane %v3407, 1
    %v3411 = vperm.slane %v3407, 2
    %v3412 = vperm.slane %v3407, 3
    %v3413 = vperm.slane %v3407, 4
    %v3414 = vperm.slane %v3407, 5
    %v3415 = vperm.slane %v3407, 6
    %v3416 = vperm.slane %v3407, 7
    %v3425 = vmul.f32 %v3196, %v3409
    %v3426 = vmul.f32 %v3197, %v3410
    %v3427 = vmul.f32 %v3198, %v3411
    %v3428 = vmul.f32 %v3199, %v3412
    %v3429 = vmul.f32 %v3200, %v3413
    %v3430 = vmul.f32 %v3201, %v3414
    %v3431 = vmul.f32 %v3202, %v3415
    %v3432 = vmul.f32 %v3203, %v3416
    %v3441 = vrot.slane %v3426, 7
    %v3442 = vrot.slane %v3427, 6
    %v3443 = vrot.slane %v3428, 5
    %v3444 = vrot.slane %v3429, 4
    %v3445 = vrot.slane %v3430, 3
    %v3446 = vrot.slane %v3431, 2
    %v3447 = vrot.slane %v3432, 1
    %v3448 = vsel %vm465, %v3425, %v3441
    %v3449 = vsel %vm1115, %v3442, %v3443
    %v3450 = vsel %vm1117, %v3448, %v3449
    %v3451 = vsel %vm3398, %v3444, %v3445
    %v3452 = vsel %vm3400, %v3446, %v3447
    %v3453 = vsel %vm3402, %v3451, %v3452
    %v3454 = vsel %vm3404, %v3450, %v3453
    %v3456 = vsub.f32 %v184, %v3454
    %v3457 = vmul.f32 %v2963, %v3409
    %v3458 = vmul.f32 %v2989, %v3410
    %v3459 = vmul.f32 %v3015, %v3411
    %v3460 = vmul.f32 %v3041, %v3412
    %v3461 = vmul.f32 %v3067, %v3413
    %v3462 = vmul.f32 %v3093, %v3414
    %v3463 = vmul.f32 %v3119, %v3415
    %v3464 = vmul.f32 %v3145, %v3416
    %v3466 = vperm.slane %v3456, 0
    %v3467 = vperm.slane %v3456, 1
    %v3468 = vperm.slane %v3456, 2
    %v3469 = vperm.slane %v3456, 3
    %v3470 = vperm.slane %v3456, 4
    %v3471 = vperm.slane %v3456, 5
    %v3472 = vperm.slane %v3456, 6
    %v3473 = vperm.slane %v3456, 7
    %v3482 = vadd.f32 %v3457, %v3466
    %v3483 = vadd.f32 %v3458, %v3467
    %v3484 = vadd.f32 %v3459, %v3468
    %v3485 = vadd.f32 %v3460, %v3469
    %v3486 = vadd.f32 %v3461, %v3470
    %v3487 = vadd.f32 %v3462, %v3471
    %v3488 = vadd.f32 %v3463, %v3472
    %v3489 = vadd.f32 %v3464, %v3473
    %vm3490 = vcmp.gt.f32.partialorder %v3482, 0.0
    %vm3491 = vcmp.gt.f32.partialorder %v3483, 0.0
    %vm3492 = vcmp.gt.f32.partialorder %v3484, 0.0
    %vm3493 = vcmp.gt.f32.partialorder %v3485, 0.0
    %vm3494 = vcmp.gt.f32.partialorder %v3486, 0.0
    %vm3495 = vcmp.gt.f32.partialorder %v3487, 0.0
    %vm3496 = vcmp.gt.f32.partialorder %v3488, 0.0
    %vm3497 = vcmp.gt.f32.partialorder %v3489, 0.0
    %v3498 = vmul.f32 %v3482, 0.2
    %v3499 = vmul.f32 %v3483, 0.2
    %v3500 = vmul.f32 %v3484, 0.2
    %v3501 = vmul.f32 %v3485, 0.2
    %v3502 = vmul.f32 %v3486, 0.2
    %v3503 = vmul.f32 %v3487, 0.2
    %v3504 = vmul.f32 %v3488, 0.2
    %v3505 = vmul.f32 %v3489, 0.2
    %v3506 = vsel %vm3490, %v3482, %v3498
    %v3507 = vsel %vm3491, %v3483, %v3499
    %v3508 = vsel %vm3492, %v3484, %v3500
    %v3509 = vsel %vm3493, %v3485, %v3501
    %v3510 = vsel %vm3494, %v3486, %v3502
    %v3511 = vsel %vm3495, %v3487, %v3503
    %v3512 = vsel %vm3496, %v3488, %v3504
    %v3513 = vsel %vm3497, %v3489, %v3505
    %v3514 = vpack.c.bf16 %v3507, %v3506
    %v3515 = vpack.c.bf16 %v3509, %v3508
    %v3516 = vpack.c.bf16 %v3511, %v3510
    %v3517 = vpack.c.bf16 %v3513, %v3512
    %s3518 = smul.u32 %s497, 7
    %s3519 = sshll.u32 %s3518, 4
    %3520 = dma.done %s106, %s3519
    %v3521 = vld [vmem:[#allocation5] sm:$0xff]
    %v3522 = vld [vmem:[#allocation5 + $0x8] sm:$0xff]
    %v3523 = vld [vmem:[#allocation5 + $0x10] sm:$0xff]
    %v3524 = vld [vmem:[#allocation5 + $0x18] sm:$0xf]
    %v3525 = vld [vmem:[#allocation5 + $0x1c] sm:$0xff]
    %v3526 = vld [vmem:[#allocation5 + $0x24] sm:$0xff]
    %v3527 = vld [vmem:[#allocation5 + $0x2c] sm:$0xff]
    %v3528 = vld [vmem:[#allocation5 + $0x34] sm:$0xf]
    %v3529 = vld [vmem:[#allocation5 + $0x38] sm:$0xff]
    %v3530 = vld [vmem:[#allocation5 + $0x40] sm:$0xff]
    %v3531 = vld [vmem:[#allocation5 + $0x48] sm:$0xff]
    %v3532 = vld [vmem:[#allocation5 + $0x50] sm:$0xf]
    %v3533 = vld [vmem:[#allocation5 + $0x54] sm:$0xff]
    %v3534 = vld [vmem:[#allocation5 + $0x5c] sm:$0xff]
    %v3535 = vld [vmem:[#allocation5 + $0x64] sm:$0xff]
    %v3536 = vld [vmem:[#allocation5 + $0x6c] sm:$0xf]
    %v3537 = vld [vmem:[#allocation5 + $0x70] sm:$0xff]
    %v3538 = vld [vmem:[#allocation5 + $0x78] sm:$0xff]
    %v3539 = vld [vmem:[#allocation5 + $0x80] sm:$0xff]
    %v3540 = vld [vmem:[#allocation5 + $0x88] sm:$0xf]
    %v3541 = vld [vmem:[#allocation5 + $0x8c] sm:$0xff]
    %v3542 = vld [vmem:[#allocation5 + $0x94] sm:$0xff]
    %v3543 = vld [vmem:[#allocation5 + $0x9c] sm:$0xff]
    %v3544 = vld [vmem:[#allocation5 + $0xa4] sm:$0xf]
    %v3545 = vld [vmem:[#allocation5 + $0xa8] sm:$0xff]
    %v3546 = vld [vmem:[#allocation5 + $0xb0] sm:$0xff]
    %v3547 = vld [vmem:[#allocation5 + $0xb8] sm:$0xff]
    %v3548 = vld [vmem:[#allocation5 + $0xc0] sm:$0xf]
    %v3549 = vld [vmem:[#allocation5 + $0xc4] sm:$0xff]
    %v3550 = vld [vmem:[#allocation5 + $0xcc] sm:$0xff]
    %v3551 = vld [vmem:[#allocation5 + $0xd4] sm:$0xff]
    %v3552 = vld [vmem:[#allocation5 + $0xdc] sm:$0xf]
    %v3553 = vld [vmem:[#allocation5 + $0xe0] sm:$0xff]
    %v3554 = vld [vmem:[#allocation5 + $0xe8] sm:$0xff]
    %v3555 = vld [vmem:[#allocation5 + $0xf0] sm:$0xff]
    %v3556 = vld [vmem:[#allocation5 + $0xf8] sm:$0xf]
    %v3557 = vld [vmem:[#allocation5 + $0xfc] sm:$0xff]
    %v3558 = vld [vmem:[#allocation5 + $0x104] sm:$0xff]
    %v3559 = vld [vmem:[#allocation5 + $0x10c] sm:$0xff]
    %v3560 = vld [vmem:[#allocation5 + $0x114] sm:$0xf]
    %v3561 = vld [vmem:[#allocation5 + $0x118] sm:$0xff]
    %v3562 = vld [vmem:[#allocation5 + $0x120] sm:$0xff]
    %v3563 = vld [vmem:[#allocation5 + $0x128] sm:$0xff]
    %v3564 = vld [vmem:[#allocation5 + $0x130] sm:$0xf]
    %v3565 = vld [vmem:[#allocation5 + $0x134] sm:$0xff]
    %v3566 = vld [vmem:[#allocation5 + $0x13c] sm:$0xff]
    %v3567 = vld [vmem:[#allocation5 + $0x144] sm:$0xff]
    %v3568 = vld [vmem:[#allocation5 + $0x14c] sm:$0xf]
    %v3569 = vld [vmem:[#allocation5 + $0x150] sm:$0xff]
    %v3570 = vld [vmem:[#allocation5 + $0x158] sm:$0xff]
    %v3571 = vld [vmem:[#allocation5 + $0x160] sm:$0xff]
    %v3572 = vld [vmem:[#allocation5 + $0x168] sm:$0xf]
    %v3573 = vld [vmem:[#allocation5 + $0x16c] sm:$0xff]
    %v3574 = vld [vmem:[#allocation5 + $0x174] sm:$0xff]
    %v3575 = vld [vmem:[#allocation5 + $0x17c] sm:$0xff]
    %v3576 = vld [vmem:[#allocation5 + $0x184] sm:$0xf]
    %v3577 = vld [vmem:[#allocation5 + $0x188] sm:$0xff]
    %v3578 = vld [vmem:[#allocation5 + $0x190] sm:$0xff]
    %v3579 = vld [vmem:[#allocation5 + $0x198] sm:$0xff]
    %v3580 = vld [vmem:[#allocation5 + $0x1a0] sm:$0xf]
    %v3581 = vld [vmem:[#allocation5 + $0x1a4] sm:$0xff]
    %v3582 = vld [vmem:[#allocation5 + $0x1ac] sm:$0xff]
    %v3583 = vld [vmem:[#allocation5 + $0x1b4] sm:$0xff]
    %v3584 = vld [vmem:[#allocation5 + $0x1bc] sm:$0xf]
    %v3585 = vld [vmem:[#allocation5 + $0x1c0] sm:$0xff]
    %v3586 = vld [vmem:[#allocation5 + $0x1c8] sm:$0xff]
    %v3587 = vld [vmem:[#allocation5 + $0x1d0] sm:$0xff]
    %v3588 = vld [vmem:[#allocation5 + $0x1d8] sm:$0xf]
    %v3589 = vld [vmem:[#allocation5 + $0x1dc] sm:$0xff]
    %v3590 = vld [vmem:[#allocation5 + $0x1e4] sm:$0xff]
    %v3591 = vld [vmem:[#allocation5 + $0x1ec] sm:$0xff]
    %v3592 = vld [vmem:[#allocation5 + $0x1f4] sm:$0xf]
    %v3593 = vld [vmem:[#allocation5 + $0x1f8] sm:$0xff]
    %v3594 = vld [vmem:[#allocation5 + $0x200] sm:$0xff]
    %v3595 = vld [vmem:[#allocation5 + $0x208] sm:$0xff]
    %v3596 = vld [vmem:[#allocation5 + $0x210] sm:$0xf]
    %v3597 = vld [vmem:[#allocation5 + $0x214] sm:$0xff]
    %v3598 = vld [vmem:[#allocation5 + $0x21c] sm:$0xff]
    %v3599 = vld [vmem:[#allocation5 + $0x224] sm:$0xff]
    %v3600 = vld [vmem:[#allocation5 + $0x22c] sm:$0xf]
    %v3601 = vld [vmem:[#allocation5 + $0x230] sm:$0xff]
    %v3602 = vld [vmem:[#allocation5 + $0x238] sm:$0xff]
    %v3603 = vld [vmem:[#allocation5 + $0x240] sm:$0xff]
    %v3604 = vld [vmem:[#allocation5 + $0x248] sm:$0xf]
    %v3605 = vld [vmem:[#allocation5 + $0x24c] sm:$0xff]
    %v3606 = vld [vmem:[#allocation5 + $0x254] sm:$0xff]
    %v3607 = vld [vmem:[#allocation5 + $0x25c] sm:$0xff]
    %v3608 = vld [vmem:[#allocation5 + $0x264] sm:$0xf]
    %v3609 = vld [vmem:[#allocation5 + $0x268] sm:$0xff]
    %v3610 = vld [vmem:[#allocation5 + $0x270] sm:$0xff]
    %v3611 = vld [vmem:[#allocation5 + $0x278] sm:$0xff]
    %v3612 = vld [vmem:[#allocation5 + $0x280] sm:$0xf]
    %v3613 = vld [vmem:[#allocation5 + $0x284] sm:$0xff]
    %v3614 = vld [vmem:[#allocation5 + $0x28c] sm:$0xff]
    %v3615 = vld [vmem:[#allocation5 + $0x294] sm:$0xff]
    %v3616 = vld [vmem:[#allocation5 + $0x29c] sm:$0xf]
    %v3617 = vld [vmem:[#allocation5 + $0x2a0] sm:$0xff]
    %v3618 = vld [vmem:[#allocation5 + $0x2a8] sm:$0xff]
    %v3619 = vld [vmem:[#allocation5 + $0x2b0] sm:$0xff]
    %v3620 = vld [vmem:[#allocation5 + $0x2b8] sm:$0xf]
    %v3621 = vld [vmem:[#allocation5 + $0x2bc] sm:$0xff]
    %v3622 = vld [vmem:[#allocation5 + $0x2c4] sm:$0xff]
    %v3623 = vld [vmem:[#allocation5 + $0x2cc] sm:$0xff]
    %v3624 = vld [vmem:[#allocation5 + $0x2d4] sm:$0xf]
    %v3625 = vld [vmem:[#allocation5 + $0x2d8] sm:$0xff]
    %v3626 = vld [vmem:[#allocation5 + $0x2e0] sm:$0xff]
    %v3627 = vld [vmem:[#allocation5 + $0x2e8] sm:$0xff]
    %v3628 = vld [vmem:[#allocation5 + $0x2f0] sm:$0xf]
    %v3629 = vld [vmem:[#allocation5 + $0x2f4] sm:$0xff]
    %v3630 = vld [vmem:[#allocation5 + $0x2fc] sm:$0xff]
    %v3631 = vld [vmem:[#allocation5 + $0x304] sm:$0xff]
    %v3632 = vld [vmem:[#allocation5 + $0x30c] sm:$0xf]
    %v3633 = vld [vmem:[#allocation5 + $0x310] sm:$0xff]
    %v3634 = vld [vmem:[#allocation5 + $0x318] sm:$0xff]
    %v3635 = vld [vmem:[#allocation5 + $0x320] sm:$0xff]
    %v3636 = vld [vmem:[#allocation5 + $0x328] sm:$0xf]
    %v3637 = vld [vmem:[#allocation5 + $0x32c] sm:$0xff]
    %v3638 = vld [vmem:[#allocation5 + $0x334] sm:$0xff]
    %v3639 = vld [vmem:[#allocation5 + $0x33c] sm:$0xff]
    %v3640 = vld [vmem:[#allocation5 + $0x344] sm:$0xf]
    %v3641 = vld [vmem:[#allocation5 + $0x348] sm:$0xff]
    %v3642 = vld [vmem:[#allocation5 + $0x350] sm:$0xff]
    %v3643 = vld [vmem:[#allocation5 + $0x358] sm:$0xff]
    %v3644 = vld [vmem:[#allocation5 + $0x360] sm:$0xf]
    %v3645 = vld [vmem:[#allocation5 + $0x364] sm:$0xff]
    %v3646 = vld [vmem:[#allocation5 + $0x36c] sm:$0xff]
    %v3647 = vld [vmem:[#allocation5 + $0x374] sm:$0xff]
    %v3648 = vld [vmem:[#allocation5 + $0x37c] sm:$0xf]
    %s3649 = sshll.u32 %s3518, 4
    %3650 = dma.done %s122, %s3649
    %v3651 = vld [vmem:[%s121] sm:$0xff]
    %v3652 = vld [vmem:[%s121 + $0x8] sm:$0xff]
    %v3653 = vld [vmem:[%s121 + $0x10] sm:$0xff]
    %v3654 = vld [vmem:[%s121 + $0x18] sm:$0xf]
    %v3655 = vld [vmem:[%s121 + $0x1c] sm:$0xff]
    %v3656 = vld [vmem:[%s121 + $0x24] sm:$0xff]
    %v3657 = vld [vmem:[%s121 + $0x2c] sm:$0xff]
    %v3658 = vld [vmem:[%s121 + $0x34] sm:$0xf]
    %v3659 = vld [vmem:[%s121 + $0x38] sm:$0xff]
    %v3660 = vld [vmem:[%s121 + $0x40] sm:$0xff]
    %v3661 = vld [vmem:[%s121 + $0x48] sm:$0xff]
    %v3662 = vld [vmem:[%s121 + $0x50] sm:$0xf]
    %v3663 = vld [vmem:[%s121 + $0x54] sm:$0xff]
    %v3664 = vld [vmem:[%s121 + $0x5c] sm:$0xff]
    %v3665 = vld [vmem:[%s121 + $0x64] sm:$0xff]
    %v3666 = vld [vmem:[%s121 + $0x6c] sm:$0xf]
    %v3667 = vld [vmem:[%s121 + $0x70] sm:$0xff]
    %v3668 = vld [vmem:[%s121 + $0x78] sm:$0xff]
    %v3669 = vld [vmem:[%s121 + $0x80] sm:$0xff]
    %v3670 = vld [vmem:[%s121 + $0x88] sm:$0xf]
    %v3671 = vld [vmem:[%s121 + $0x8c] sm:$0xff]
    %v3672 = vld [vmem:[%s121 + $0x94] sm:$0xff]
    %v3673 = vld [vmem:[%s121 + $0x9c] sm:$0xff]
    %v3674 = vld [vmem:[%s121 + $0xa4] sm:$0xf]
    %v3675 = vld [vmem:[%s121 + $0xa8] sm:$0xff]
    %v3676 = vld [vmem:[%s121 + $0xb0] sm:$0xff]
    %v3677 = vld [vmem:[%s121 + $0xb8] sm:$0xff]
    %v3678 = vld [vmem:[%s121 + $0xc0] sm:$0xf]
    %v3679 = vld [vmem:[%s121 + $0xc4] sm:$0xff]
    %v3680 = vld [vmem:[%s121 + $0xcc] sm:$0xff]
    %v3681 = vld [vmem:[%s121 + $0xd4] sm:$0xff]
    %v3682 = vld [vmem:[%s121 + $0xdc] sm:$0xf]
    %v3683 = vld [vmem:[%s121 + $0xe0] sm:$0xff]
    %v3684 = vld [vmem:[%s121 + $0xe8] sm:$0xff]
    %v3685 = vld [vmem:[%s121 + $0xf0] sm:$0xff]
    %v3686 = vld [vmem:[%s121 + $0xf8] sm:$0xf]
    %v3687 = vld [vmem:[%s121 + $0xfc] sm:$0xff]
    %v3688 = vld [vmem:[%s121 + $0x104] sm:$0xff]
    %v3689 = vld [vmem:[%s121 + $0x10c] sm:$0xff]
    %v3690 = vld [vmem:[%s121 + $0x114] sm:$0xf]
    %v3691 = vld [vmem:[%s121 + $0x118] sm:$0xff]
    %v3692 = vld [vmem:[%s121 + $0x120] sm:$0xff]
    %v3693 = vld [vmem:[%s121 + $0x128] sm:$0xff]
    %v3694 = vld [vmem:[%s121 + $0x130] sm:$0xf]
    %v3695 = vld [vmem:[%s121 + $0x134] sm:$0xff]
    %v3696 = vld [vmem:[%s121 + $0x13c] sm:$0xff]
    %v3697 = vld [vmem:[%s121 + $0x144] sm:$0xff]
    %v3698 = vld [vmem:[%s121 + $0x14c] sm:$0xf]
    %v3699 = vld [vmem:[%s121 + $0x150] sm:$0xff]
    %v3700 = vld [vmem:[%s121 + $0x158] sm:$0xff]
    %v3701 = vld [vmem:[%s121 + $0x160] sm:$0xff]
    %v3702 = vld [vmem:[%s121 + $0x168] sm:$0xf]
    %v3703 = vld [vmem:[%s121 + $0x16c] sm:$0xff]
    %v3704 = vld [vmem:[%s121 + $0x174] sm:$0xff]
    %v3705 = vld [vmem:[%s121 + $0x17c] sm:$0xff]
    %v3706 = vld [vmem:[%s121 + $0x184] sm:$0xf]
    %v3707 = vld [vmem:[%s121 + $0x188] sm:$0xff]
    %v3708 = vld [vmem:[%s121 + $0x190] sm:$0xff]
    %v3709 = vld [vmem:[%s121 + $0x198] sm:$0xff]
    %v3710 = vld [vmem:[%s121 + $0x1a0] sm:$0xf]
    %v3711 = vld [vmem:[%s121 + $0x1a4] sm:$0xff]
    %v3712 = vld [vmem:[%s121 + $0x1ac] sm:$0xff]
    %v3713 = vld [vmem:[%s121 + $0x1b4] sm:$0xff]
    %v3714 = vld [vmem:[%s121 + $0x1bc] sm:$0xf]
    %v3715 = vld [vmem:[%s121 + $0x1c0] sm:$0xff]
    %v3716 = vld [vmem:[%s121 + $0x1c8] sm:$0xff]
    %v3717 = vld [vmem:[%s121 + $0x1d0] sm:$0xff]
    %v3718 = vld [vmem:[%s121 + $0x1d8] sm:$0xf]
    %v3719 = vld [vmem:[%s121 + $0x1dc] sm:$0xff]
    %v3720 = vld [vmem:[%s121 + $0x1e4] sm:$0xff]
    %v3721 = vld [vmem:[%s121 + $0x1ec] sm:$0xff]
    %v3722 = vld [vmem:[%s121 + $0x1f4] sm:$0xf]
    %v3723 = vld [vmem:[%s121 + $0x1f8] sm:$0xff]
    %v3724 = vld [vmem:[%s121 + $0x200] sm:$0xff]
    %v3725 = vld [vmem:[%s121 + $0x208] sm:$0xff]
    %v3726 = vld [vmem:[%s121 + $0x210] sm:$0xf]
    %v3727 = vld [vmem:[%s121 + $0x214] sm:$0xff]
    %v3728 = vld [vmem:[%s121 + $0x21c] sm:$0xff]
    %v3729 = vld [vmem:[%s121 + $0x224] sm:$0xff]
    %v3730 = vld [vmem:[%s121 + $0x22c] sm:$0xf]
    %v3731 = vld [vmem:[%s121 + $0x230] sm:$0xff]
    %v3732 = vld [vmem:[%s121 + $0x238] sm:$0xff]
    %v3733 = vld [vmem:[%s121 + $0x240] sm:$0xff]
    %v3734 = vld [vmem:[%s121 + $0x248] sm:$0xf]
    %v3735 = vld [vmem:[%s121 + $0x24c] sm:$0xff]
    %v3736 = vld [vmem:[%s121 + $0x254] sm:$0xff]
    %v3737 = vld [vmem:[%s121 + $0x25c] sm:$0xff]
    %v3738 = vld [vmem:[%s121 + $0x264] sm:$0xf]
    %v3739 = vld [vmem:[%s121 + $0x268] sm:$0xff]
    %v3740 = vld [vmem:[%s121 + $0x270] sm:$0xff]
    %v3741 = vld [vmem:[%s121 + $0x278] sm:$0xff]
    %v3742 = vld [vmem:[%s121 + $0x280] sm:$0xf]
    %v3743 = vld [vmem:[%s121 + $0x284] sm:$0xff]
    %v3744 = vld [vmem:[%s121 + $0x28c] sm:$0xff]
    %v3745 = vld [vmem:[%s121 + $0x294] sm:$0xff]
    %v3746 = vld [vmem:[%s121 + $0x29c] sm:$0xf]
    %v3747 = vld [vmem:[%s121 + $0x2a0] sm:$0xff]
    %v3748 = vld [vmem:[%s121 + $0x2a8] sm:$0xff]
    %v3749 = vld [vmem:[%s121 + $0x2b0] sm:$0xff]
    %v3750 = vld [vmem:[%s121 + $0x2b8] sm:$0xf]
    %v3751 = vld [vmem:[%s121 + $0x2bc] sm:$0xff]
    %v3752 = vld [vmem:[%s121 + $0x2c4] sm:$0xff]
    %v3753 = vld [vmem:[%s121 + $0x2cc] sm:$0xff]
    %v3754 = vld [vmem:[%s121 + $0x2d4] sm:$0xf]
    %v3755 = vld [vmem:[%s121 + $0x2d8] sm:$0xff]
    %v3756 = vld [vmem:[%s121 + $0x2e0] sm:$0xff]
    %v3757 = vld [vmem:[%s121 + $0x2e8] sm:$0xff]
    %v3758 = vld [vmem:[%s121 + $0x2f0] sm:$0xf]
    %v3759 = vld [vmem:[%s121 + $0x2f4] sm:$0xff]
    %v3760 = vld [vmem:[%s121 + $0x2fc] sm:$0xff]
    %v3761 = vld [vmem:[%s121 + $0x304] sm:$0xff]
    %v3762 = vld [vmem:[%s121 + $0x30c] sm:$0xf]
    %v3763 = vld [vmem:[%s121 + $0x310] sm:$0xff]
    %v3764 = vld [vmem:[%s121 + $0x318] sm:$0xff]
    %v3765 = vld [vmem:[%s121 + $0x320] sm:$0xff]
    %v3766 = vld [vmem:[%s121 + $0x328] sm:$0xf]
    %v3767 = vld [vmem:[%s121 + $0x32c] sm:$0xff]
    %v3768 = vld [vmem:[%s121 + $0x334] sm:$0xff]
    %v3769 = vld [vmem:[%s121 + $0x33c] sm:$0xff]
    %v3770 = vld [vmem:[%s121 + $0x344] sm:$0xf]
    %v3771 = vld [vmem:[%s121 + $0x348] sm:$0xff]
    %v3772 = vld [vmem:[%s121 + $0x350] sm:$0xff]
    %v3773 = vld [vmem:[%s121 + $0x358] sm:$0xff]
    %v3774 = vld [vmem:[%s121 + $0x360] sm:$0xf]
    %v3775 = vld [vmem:[%s121 + $0x364] sm:$0xff]
    %v3776 = vld [vmem:[%s121 + $0x36c] sm:$0xff]
    %v3777 = vld [vmem:[%s121 + $0x374] sm:$0xff]
    %v3778 = vld [vmem:[%s121 + $0x37c] sm:$0xf]
    %v3780 = vunpack.c.l.b16 %v3515
    %v3781 = vunpack.c.h.b16 %v3515
    %v3782 = vpack.c.b16 %v3780, %v3780
    %v3783 = vpack.c.b16 %v3781, %v3781
    %v3914 = vunpack.c.l.b16 %v3651
    %v3915 = vunpack.c.h.b16 %v3651
    %v3916 = vunpack.c.l.b16 %v3652
    %v3917 = vunpack.c.h.b16 %v3652
    %v3918 = vunpack.c.l.b16 %v3653
    %v3919 = vunpack.c.h.b16 %v3653
    %v3920 = vunpack.c.l.b16 %v3654
    %v3921 = vunpack.c.l.b16 %v3655
    %v3922 = vunpack.c.h.b16 %v3655
    %v3923 = vunpack.c.l.b16 %v3656
    %v3924 = vunpack.c.h.b16 %v3656
    %v3925 = vunpack.c.l.b16 %v3657
    %v3926 = vunpack.c.h.b16 %v3657
    %v3927 = vunpack.c.l.b16 %v3658
    %v3928 = vunpack.c.l.b16 %v3659
    %v3929 = vunpack.c.h.b16 %v3659
    %v3930 = vunpack.c.l.b16 %v3660
    %v3931 = vunpack.c.h.b16 %v3660
    %v3932 = vunpack.c.l.b16 %v3661
    %v3933 = vunpack.c.h.b16 %v3661
    %v3934 = vunpack.c.l.b16 %v3662
    %v3935 = vunpack.c.l.b16 %v3663
    %v3936 = vunpack.c.h.b16 %v3663
    %v3937 = vunpack.c.l.b16 %v3664
    %v3938 = vunpack.c.h.b16 %v3664
    %v3939 = vunpack.c.l.b16 %v3665
    %v3940 = vunpack.c.h.b16 %v3665
    %v3941 = vunpack.c.l.b16 %v3666
    %v3942 = vunpack.c.l.b16 %v3667
    %v3943 = vunpack.c.h.b16 %v3667
    %v3944 = vunpack.c.l.b16 %v3668
    %v3945 = vunpack.c.h.b16 %v3668
    %v3946 = vunpack.c.l.b16 %v3669
    %v3947 = vunpack.c.h.b16 %v3669
    %v3948 = vunpack.c.l.b16 %v3670
    %v3949 = vunpack.c.l.b16 %v3671
    %v3950 = vunpack.c.h.b16 %v3671
    %v3951 = vunpack.c.l.b16 %v3672
    %v3952 = vunpack.c.h.b16 %v3672
    %v3953 = vunpack.c.l.b16 %v3673
    %v3954 = vunpack.c.h.b16 %v3673
    %v3955 = vunpack.c.l.b16 %v3674
    %v3956 = vunpack.c.l.b16 %v3675
    %v3957 = vunpack.c.h.b16 %v3675
    %v3958 = vunpack.c.l.b16 %v3676
    %v3959 = vunpack.c.h.b16 %v3676
    %v3960 = vunpack.c.l.b16 %v3677
    %v3961 = vunpack.c.h.b16 %v3677
    %v3962 = vunpack.c.l.b16 %v3678
    %v3963 = vunpack.c.l.b16 %v3679
    %v3964 = vunpack.c.h.b16 %v3679
    %v3965 = vunpack.c.l.b16 %v3680
    %v3966 = vunpack.c.h.b16 %v3680
    %v3967 = vunpack.c.l.b16 %v3681
    %v3968 = vunpack.c.h.b16 %v3681
    %v3969 = vunpack.c.l.b16 %v3682
    %v3970 = vunpack.c.l.b16 %v3683
    %v3971 = vunpack.c.h.b16 %v3683
    %v3972 = vunpack.c.l.b16 %v3684
    %v3973 = vunpack.c.h.b16 %v3684
    %v3974 = vunpack.c.l.b16 %v3685
    %v3975 = vunpack.c.h.b16 %v3685
    %v3976 = vunpack.c.l.b16 %v3686
    %v3977 = vunpack.c.l.b16 %v3687
    %v3978 = vunpack.c.h.b16 %v3687
    %v3979 = vunpack.c.l.b16 %v3688
    %v3980 = vunpack.c.h.b16 %v3688
    %v3981 = vunpack.c.l.b16 %v3689
    %v3982 = vunpack.c.h.b16 %v3689
    %v3983 = vunpack.c.l.b16 %v3690
    %v3984 = vunpack.c.l.b16 %v3691
    %v3985 = vunpack.c.h.b16 %v3691
    %v3986 = vunpack.c.l.b16 %v3692
    %v3987 = vunpack.c.h.b16 %v3692
    %v3988 = vunpack.c.l.b16 %v3693
    %v3989 = vunpack.c.h.b16 %v3693
    %v3990 = vunpack.c.l.b16 %v3694
    %v3991 = vunpack.c.l.b16 %v3695
    %v3992 = vunpack.c.h.b16 %v3695
    %v3993 = vunpack.c.l.b16 %v3696
    %v3994 = vunpack.c.h.b16 %v3696
    %v3995 = vunpack.c.l.b16 %v3697
    %v3996 = vunpack.c.h.b16 %v3697
    %v3997 = vunpack.c.l.b16 %v3698
    %v3998 = vunpack.c.l.b16 %v3699
    %v3999 = vunpack.c.h.b16 %v3699
    %v4000 = vunpack.c.l.b16 %v3700
    %v4001 = vunpack.c.h.b16 %v3700
    %v4002 = vunpack.c.l.b16 %v3701
    %v4003 = vunpack.c.h.b16 %v3701
    %v4004 = vunpack.c.l.b16 %v3702
    %v4005 = vunpack.c.l.b16 %v3703
    %v4006 = vunpack.c.h.b16 %v3703
    %v4007 = vunpack.c.l.b16 %v3704
    %v4008 = vunpack.c.h.b16 %v3704
    %v4009 = vunpack.c.l.b16 %v3705
    %v4010 = vunpack.c.h.b16 %v3705
    %v4011 = vunpack.c.l.b16 %v3706
    %v4012 = vunpack.c.l.b16 %v3707
    %v4013 = vunpack.c.h.b16 %v3707
    %v4014 = vunpack.c.l.b16 %v3708
    %v4015 = vunpack.c.h.b16 %v3708
    %v4016 = vunpack.c.l.b16 %v3709
    %v4017 = vunpack.c.h.b16 %v3709
    %v4018 = vunpack.c.l.b16 %v3710
    %v4019 = vunpack.c.l.b16 %v3711
    %v4020 = vunpack.c.h.b16 %v3711
    %v4021 = vunpack.c.l.b16 %v3712
    %v4022 = vunpack.c.h.b16 %v3712
    %v4023 = vunpack.c.l.b16 %v3713
    %v4024 = vunpack.c.h.b16 %v3713
    %v4025 = vunpack.c.l.b16 %v3714
    %v4026 = vunpack.c.l.b16 %v3715
    %v4027 = vunpack.c.h.b16 %v3715
    %v4028 = vunpack.c.l.b16 %v3716
    %v4029 = vunpack.c.h.b16 %v3716
    %v4030 = vunpack.c.l.b16 %v3717
    %v4031 = vunpack.c.h.b16 %v3717
    %v4032 = vunpack.c.l.b16 %v3718
    %v4033 = vunpack.c.l.b16 %v3719
    %v4034 = vunpack.c.h.b16 %v3719
    %v4035 = vunpack.c.l.b16 %v3720
    %v4036 = vunpack.c.h.b16 %v3720
    %v4037 = vunpack.c.l.b16 %v3721
    %v4038 = vunpack.c.h.b16 %v3721
    %v4039 = vunpack.c.l.b16 %v3722
    %v4040 = vunpack.c.l.b16 %v3723
    %v4041 = vunpack.c.h.b16 %v3723
    %v4042 = vunpack.c.l.b16 %v3724
    %v4043 = vunpack.c.h.b16 %v3724
    %v4044 = vunpack.c.l.b16 %v3725
    %v4045 = vunpack.c.h.b16 %v3725
    %v4046 = vunpack.c.l.b16 %v3726
    %v4047 = vunpack.c.l.b16 %v3727
    %v4048 = vunpack.c.h.b16 %v3727
    %v4049 = vunpack.c.l.b16 %v3728
    %v4050 = vunpack.c.h.b16 %v3728
    %v4051 = vunpack.c.l.b16 %v3729
    %v4052 = vunpack.c.h.b16 %v3729
    %v4053 = vunpack.c.l.b16 %v3730
    %v4054 = vunpack.c.l.b16 %v3731
    %v4055 = vunpack.c.h.b16 %v3731
    %v4056 = vunpack.c.l.b16 %v3732
    %v4057 = vunpack.c.h.b16 %v3732
    %v4058 = vunpack.c.l.b16 %v3733
    %v4059 = vunpack.c.h.b16 %v3733
    %v4060 = vunpack.c.l.b16 %v3734
    %v4061 = vunpack.c.l.b16 %v3735
    %v4062 = vunpack.c.h.b16 %v3735
    %v4063 = vunpack.c.l.b16 %v3736
    %v4064 = vunpack.c.h.b16 %v3736
    %v4065 = vunpack.c.l.b16 %v3737
    %v4066 = vunpack.c.h.b16 %v3737
    %v4067 = vunpack.c.l.b16 %v3738
    %v4068 = vunpack.c.l.b16 %v3739
    %v4069 = vunpack.c.h.b16 %v3739
    %v4070 = vunpack.c.l.b16 %v3740
    %v4071 = vunpack.c.h.b16 %v3740
    %v4072 = vunpack.c.l.b16 %v3741
    %v4073 = vunpack.c.h.b16 %v3741
    %v4074 = vunpack.c.l.b16 %v3742
    %v4075 = vunpack.c.l.b16 %v3743
    %v4076 = vunpack.c.h.b16 %v3743
    %v4077 = vunpack.c.l.b16 %v3744
    %v4078 = vunpack.c.h.b16 %v3744
    %v4079 = vunpack.c.l.b16 %v3745
    %v4080 = vunpack.c.h.b16 %v3745
    %v4081 = vunpack.c.l.b16 %v3746
    %v4082 = vunpack.c.l.b16 %v3747
    %v4083 = vunpack.c.h.b16 %v3747
    %v4084 = vunpack.c.l.b16 %v3748
    %v4085 = vunpack.c.h.b16 %v3748
    %v4086 = vunpack.c.l.b16 %v3749
    %v4087 = vunpack.c.h.b16 %v3749
    %v4088 = vunpack.c.l.b16 %v3750
    %v4089 = vunpack.c.l.b16 %v3751
    %v4090 = vunpack.c.h.b16 %v3751
    %v4091 = vunpack.c.l.b16 %v3752
    %v4092 = vunpack.c.h.b16 %v3752
    %v4093 = vunpack.c.l.b16 %v3753
    %v4094 = vunpack.c.h.b16 %v3753
    %v4095 = vunpack.c.l.b16 %v3754
    %v4096 = vunpack.c.l.b16 %v3755
    %v4097 = vunpack.c.h.b16 %v3755
    %v4098 = vunpack.c.l.b16 %v3756
    %v4099 = vunpack.c.h.b16 %v3756
    %v4100 = vunpack.c.l.b16 %v3757
    %v4101 = vunpack.c.h.b16 %v3757
    %v4102 = vunpack.c.l.b16 %v3758
    %v4103 = vunpack.c.l.b16 %v3759
    %v4104 = vunpack.c.h.b16 %v3759
    %v4105 = vunpack.c.l.b16 %v3760
    %v4106 = vunpack.c.h.b16 %v3760
    %v4107 = vunpack.c.l.b16 %v3761
    %v4108 = vunpack.c.h.b16 %v3761
    %v4109 = vunpack.c.l.b16 %v3762
    %v4110 = vunpack.c.l.b16 %v3763
    %v4111 = vunpack.c.h.b16 %v3763
    %v4112 = vunpack.c.l.b16 %v3764
    %v4113 = vunpack.c.h.b16 %v3764
    %v4114 = vunpack.c.l.b16 %v3765
    %v4115 = vunpack.c.h.b16 %v3765
    %v4116 = vunpack.c.l.b16 %v3766
    %v4117 = vunpack.c.l.b16 %v3767
    %v4118 = vunpack.c.h.b16 %v3767
    %v4119 = vunpack.c.l.b16 %v3768
    %v4120 = vunpack.c.h.b16 %v3768
    %v4121 = vunpack.c.l.b16 %v3769
    %v4122 = vunpack.c.h.b16 %v3769
    %v4123 = vunpack.c.l.b16 %v3770
    %v4124 = vunpack.c.l.b16 %v3771
    %v4125 = vunpack.c.h.b16 %v3771
    %v4126 = vunpack.c.l.b16 %v3772
    %v4127 = vunpack.c.h.b16 %v3772
    %v4128 = vunpack.c.l.b16 %v3773
    %v4129 = vunpack.c.h.b16 %v3773
    %v4130 = vunpack.c.l.b16 %v3774
    %v4131 = vunpack.c.l.b16 %v3775
    %v4132 = vunpack.c.h.b16 %v3775
    %v4133 = vunpack.c.l.b16 %v3776
    %v4134 = vunpack.c.h.b16 %v3776
    %v4135 = vunpack.c.l.b16 %v3777
    %v4136 = vunpack.c.h.b16 %v3777
    %v4137 = vunpack.c.l.b16 %v3778
    %v4138 = vpack.c.b16 %v3921, %v3914
    %v4139 = vpack.c.b16 %v3922, %v3915
    %v4140 = vpack.c.b16 %v3923, %v3916
    %v4141 = vpack.c.b16 %v3924, %v3917
    %v4142 = vpack.c.b16 %v3925, %v3918
    %v4143 = vpack.c.b16 %v3926, %v3919
    %v4144 = vpack.c.b16 %v3927, %v3920
    %v4145 = vpack.c.b16 %v3935, %v3928
    %v4146 = vpack.c.b16 %v3936, %v3929
    %v4147 = vpack.c.b16 %v3937, %v3930
    %v4148 = vpack.c.b16 %v3938, %v3931
    %v4149 = vpack.c.b16 %v3939, %v3932
    %v4150 = vpack.c.b16 %v3940, %v3933
    %v4151 = vpack.c.b16 %v3941, %v3934
    %v4152 = vpack.c.b16 %v3949, %v3942
    %v4153 = vpack.c.b16 %v3950, %v3943
    %v4154 = vpack.c.b16 %v3951, %v3944
    %v4155 = vpack.c.b16 %v3952, %v3945
    %v4156 = vpack.c.b16 %v3953, %v3946
    %v4157 = vpack.c.b16 %v3954, %v3947
    %v4158 = vpack.c.b16 %v3955, %v3948
    %v4159 = vpack.c.b16 %v3963, %v3956
    %v4160 = vpack.c.b16 %v3964, %v3957
    %v4161 = vpack.c.b16 %v3965, %v3958
    %v4162 = vpack.c.b16 %v3966, %v3959
    %v4163 = vpack.c.b16 %v3967, %v3960
    %v4164 = vpack.c.b16 %v3968, %v3961
    %v4165 = vpack.c.b16 %v3969, %v3962
    %v4166 = vpack.c.b16 %v3977, %v3970
    %v4167 = vpack.c.b16 %v3978, %v3971
    %v4168 = vpack.c.b16 %v3979, %v3972
    %v4169 = vpack.c.b16 %v3980, %v3973
    %v4170 = vpack.c.b16 %v3981, %v3974
    %v4171 = vpack.c.b16 %v3982, %v3975
    %v4172 = vpack.c.b16 %v3983, %v3976
    %v4173 = vpack.c.b16 %v3991, %v3984
    %v4174 = vpack.c.b16 %v3992, %v3985
    %v4175 = vpack.c.b16 %v3993, %v3986
    %v4176 = vpack.c.b16 %v3994, %v3987
    %v4177 = vpack.c.b16 %v3995, %v3988
    %v4178 = vpack.c.b16 %v3996, %v3989
    %v4179 = vpack.c.b16 %v3997, %v3990
    %v4180 = vpack.c.b16 %v4005, %v3998
    %v4181 = vpack.c.b16 %v4006, %v3999
    %v4182 = vpack.c.b16 %v4007, %v4000
    %v4183 = vpack.c.b16 %v4008, %v4001
    %v4184 = vpack.c.b16 %v4009, %v4002
    %v4185 = vpack.c.b16 %v4010, %v4003
    %v4186 = vpack.c.b16 %v4011, %v4004
    %v4187 = vpack.c.b16 %v4019, %v4012
    %v4188 = vpack.c.b16 %v4020, %v4013
    %v4189 = vpack.c.b16 %v4021, %v4014
    %v4190 = vpack.c.b16 %v4022, %v4015
    %v4191 = vpack.c.b16 %v4023, %v4016
    %v4192 = vpack.c.b16 %v4024, %v4017
    %v4193 = vpack.c.b16 %v4025, %v4018
    %v4194 = vpack.c.b16 %v4033, %v4026
    %v4195 = vpack.c.b16 %v4034, %v4027
    %v4196 = vpack.c.b16 %v4035, %v4028
    %v4197 = vpack.c.b16 %v4036, %v4029
    %v4198 = vpack.c.b16 %v4037, %v4030
    %v4199 = vpack.c.b16 %v4038, %v4031
    %v4200 = vpack.c.b16 %v4039, %v4032
    %v4201 = vpack.c.b16 %v4047, %v4040
    %v4202 = vpack.c.b16 %v4048, %v4041
    %v4203 = vpack.c.b16 %v4049, %v4042
    %v4204 = vpack.c.b16 %v4050, %v4043
    %v4205 = vpack.c.b16 %v4051, %v4044
    %v4206 = vpack.c.b16 %v4052, %v4045
    %v4207 = vpack.c.b16 %v4053, %v4046
    %v4208 = vpack.c.b16 %v4061, %v4054
    %v4209 = vpack.c.b16 %v4062, %v4055
    %v4210 = vpack.c.b16 %v4063, %v4056
    %v4211 = vpack.c.b16 %v4064, %v4057
    %v4212 = vpack.c.b16 %v4065, %v4058
    %v4213 = vpack.c.b16 %v4066, %v4059
    %v4214 = vpack.c.b16 %v4067, %v4060
    %v4215 = vpack.c.b16 %v4075, %v4068
    %v4216 = vpack.c.b16 %v4076, %v4069
    %v4217 = vpack.c.b16 %v4077, %v4070
    %v4218 = vpack.c.b16 %v4078, %v4071
    %v4219 = vpack.c.b16 %v4079, %v4072
    %v4220 = vpack.c.b16 %v4080, %v4073
    %v4221 = vpack.c.b16 %v4081, %v4074
    %v4222 = vpack.c.b16 %v4089, %v4082
    %v4223 = vpack.c.b16 %v4090, %v4083
    %v4224 = vpack.c.b16 %v4091, %v4084
    %v4225 = vpack.c.b16 %v4092, %v4085
    %v4226 = vpack.c.b16 %v4093, %v4086
    %v4227 = vpack.c.b16 %v4094, %v4087
    %v4228 = vpack.c.b16 %v4095, %v4088
    %v4229 = vpack.c.b16 %v4103, %v4096
    %v4230 = vpack.c.b16 %v4104, %v4097
    %v4231 = vpack.c.b16 %v4105, %v4098
    %v4232 = vpack.c.b16 %v4106, %v4099
    %v4233 = vpack.c.b16 %v4107, %v4100
    %v4234 = vpack.c.b16 %v4108, %v4101
    %v4235 = vpack.c.b16 %v4109, %v4102
    %v4236 = vpack.c.b16 %v4117, %v4110
    %v4237 = vpack.c.b16 %v4118, %v4111
    %v4238 = vpack.c.b16 %v4119, %v4112
    %v4239 = vpack.c.b16 %v4120, %v4113
    %v4240 = vpack.c.b16 %v4121, %v4114
    %v4241 = vpack.c.b16 %v4122, %v4115
    %v4242 = vpack.c.b16 %v4123, %v4116
    %v4243 = vpack.c.b16 %v4131, %v4124
    %v4244 = vpack.c.b16 %v4132, %v4125
    %v4245 = vpack.c.b16 %v4133, %v4126
    %v4246 = vpack.c.b16 %v4134, %v4127
    %v4247 = vpack.c.b16 %v4135, %v4128
    %v4248 = vpack.c.b16 %v4136, %v4129
    %v4249 = vpack.c.b16 %v4137, %v4130
    %4362 = vmatpush.bf16.msra.mxu0 %v4187
    %4363 = vmatpush.bf16.msra.mxu0 %v4180
    %4364 = vmatpush.bf16.msra.mxu0 %v4173
    %4365 = vmatpush.bf16.msra.mxu0 %v4166
    %4366 = vmatpush.bf16.msra.mxu0 %v4159
    %4367 = vmatpush.bf16.msra.mxu0 %v4152
    %4368 = vmatpush.bf16.msra.mxu0 %v4145
    %4369 = vmatpush.bf16.msra.mxu0 %v4138
    %4370 = vmatmul.bf16.gmra.mxu0 %v3782
    %v4371 = vpop.f32.mrf.mxu0
    %v4372 = vadd.f32 0.0, %v4371
    %v4373 = vpop.f32.mrf.mxu0
    %4374 = vdwg.mxu0
    %4375 = vmatpush.bf16.msra.mxu0 %v4243
    %4376 = vmatpush.bf16.msra.mxu0 %v4236
    %4377 = vmatpush.bf16.msra.mxu0 %v4229
    %4378 = vmatpush.bf16.msra.mxu0 %v4222
    %4379 = vmatpush.bf16.msra.mxu0 %v4215
    %4380 = vmatpush.bf16.msra.mxu0 %v4208
    %4381 = vmatpush.bf16.msra.mxu0 %v4201
    %4382 = vmatpush.bf16.msra.mxu0 %v4194
    %4383 = vmatmul.bf16.gmra.mxu0 %v3783
    %v4384 = vpop.f32.mrf.mxu0
    %v4385 = vadd.f32 %v4372, %v4384
    %v4386 = vpop.f32.mrf.mxu0
    %4387 = vdwg.mxu0
    %4388 = vmatpush.bf16.msra.mxu0 %v4188
    %4389 = vmatpush.bf16.msra.mxu0 %v4181
    %4390 = vmatpush.bf16.msra.mxu0 %v4174
    %4391 = vmatpush.bf16.msra.mxu0 %v4167
    %4392 = vmatpush.bf16.msra.mxu0 %v4160
    %4393 = vmatpush.bf16.msra.mxu0 %v4153
    %4394 = vmatpush.bf16.msra.mxu0 %v4146
    %4395 = vmatpush.bf16.msra.mxu0 %v4139
    %4396 = vmatmul.bf16.gmra.mxu0 %v3782
    %v4397 = vpop.f32.mrf.mxu0
    %v4398 = vadd.f32 0.0, %v4397
    %v4399 = vpop.f32.mrf.mxu0
    %4400 = vdwg.mxu0
    %4401 = vmatpush.bf16.msra.mxu0 %v4244
    %4402 = vmatpush.bf16.msra.mxu0 %v4237
    %4403 = vmatpush.bf16.msra.mxu0 %v4230
    %4404 = vmatpush.bf16.msra.mxu0 %v4223
    %4405 = vmatpush.bf16.msra.mxu0 %v4216
    %4406 = vmatpush.bf16.msra.mxu0 %v4209
    %4407 = vmatpush.bf16.msra.mxu0 %v4202
    %4408 = vmatpush.bf16.msra.mxu0 %v4195
    %4409 = vmatmul.bf16.gmra.mxu0 %v3783
    %v4410 = vpop.f32.mrf.mxu0
    %v4411 = vadd.f32 %v4398, %v4410
    %v4412 = vpop.f32.mrf.mxu0
    %4413 = vdwg.mxu0
    %4414 = vmatpush.bf16.msra.mxu0 %v4189
    %4415 = vmatpush.bf16.msra.mxu0 %v4182
    %4416 = vmatpush.bf16.msra.mxu0 %v4175
    %4417 = vmatpush.bf16.msra.mxu0 %v4168
    %4418 = vmatpush.bf16.msra.mxu0 %v4161
    %4419 = vmatpush.bf16.msra.mxu0 %v4154
    %4420 = vmatpush.bf16.msra.mxu0 %v4147
    %4421 = vmatpush.bf16.msra.mxu0 %v4140
    %4422 = vmatmul.bf16.gmra.mxu0 %v3782
    %v4423 = vpop.f32.mrf.mxu0
    %v4424 = vadd.f32 0.0, %v4423
    %v4425 = vpop.f32.mrf.mxu0
    %4426 = vdwg.mxu0
    %4427 = vmatpush.bf16.msra.mxu0 %v4245
    %4428 = vmatpush.bf16.msra.mxu0 %v4238
    %4429 = vmatpush.bf16.msra.mxu0 %v4231
    %4430 = vmatpush.bf16.msra.mxu0 %v4224
    %4431 = vmatpush.bf16.msra.mxu0 %v4217
    %4432 = vmatpush.bf16.msra.mxu0 %v4210
    %4433 = vmatpush.bf16.msra.mxu0 %v4203
    %4434 = vmatpush.bf16.msra.mxu0 %v4196
    %4435 = vmatmul.bf16.gmra.mxu0 %v3783
    %v4436 = vpop.f32.mrf.mxu0
    %v4437 = vadd.f32 %v4424, %v4436
    %v4438 = vpop.f32.mrf.mxu0
    %4439 = vdwg.mxu0
    %4440 = vmatpush.bf16.msra.mxu0 %v4190
    %4441 = vmatpush.bf16.msra.mxu0 %v4183
    %4442 = vmatpush.bf16.msra.mxu0 %v4176
    %4443 = vmatpush.bf16.msra.mxu0 %v4169
    %4444 = vmatpush.bf16.msra.mxu0 %v4162
    %4445 = vmatpush.bf16.msra.mxu0 %v4155
    %4446 = vmatpush.bf16.msra.mxu0 %v4148
    %4447 = vmatpush.bf16.msra.mxu0 %v4141
    %4448 = vmatmul.bf16.gmra.mxu0 %v3782
    %v4449 = vpop.f32.mrf.mxu0
    %v4450 = vadd.f32 0.0, %v4449
    %v4451 = vpop.f32.mrf.mxu0
    %4452 = vdwg.mxu0
    %4453 = vmatpush.bf16.msra.mxu0 %v4246
    %4454 = vmatpush.bf16.msra.mxu0 %v4239
    %4455 = vmatpush.bf16.msra.mxu0 %v4232
    %4456 = vmatpush.bf16.msra.mxu0 %v4225
    %4457 = vmatpush.bf16.msra.mxu0 %v4218
    %4458 = vmatpush.bf16.msra.mxu0 %v4211
    %4459 = vmatpush.bf16.msra.mxu0 %v4204
    %4460 = vmatpush.bf16.msra.mxu0 %v4197
    %4461 = vmatmul.bf16.gmra.mxu0 %v3783
    %v4462 = vpop.f32.mrf.mxu0
    %v4463 = vadd.f32 %v4450, %v4462
    %v4464 = vpop.f32.mrf.mxu0
    %4465 = vdwg.mxu0
    %4466 = vmatpush.bf16.msra.mxu0 %v4191
    %4467 = vmatpush.bf16.msra.mxu0 %v4184
    %4468 = vmatpush.bf16.msra.mxu0 %v4177
    %4469 = vmatpush.bf16.msra.mxu0 %v4170
    %4470 = vmatpush.bf16.msra.mxu0 %v4163
    %4471 = vmatpush.bf16.msra.mxu0 %v4156
    %4472 = vmatpush.bf16.msra.mxu0 %v4149
    %4473 = vmatpush.bf16.msra.mxu0 %v4142
    %4474 = vmatmul.bf16.gmra.mxu0 %v3782
    %v4475 = vpop.f32.mrf.mxu0
    %v4476 = vadd.f32 0.0, %v4475
    %v4477 = vpop.f32.mrf.mxu0
    %4478 = vdwg.mxu0
    %4479 = vmatpush.bf16.msra.mxu0 %v4247
    %4480 = vmatpush.bf16.msra.mxu0 %v4240
    %4481 = vmatpush.bf16.msra.mxu0 %v4233
    %4482 = vmatpush.bf16.msra.mxu0 %v4226
    %4483 = vmatpush.bf16.msra.mxu0 %v4219
    %4484 = vmatpush.bf16.msra.mxu0 %v4212
    %4485 = vmatpush.bf16.msra.mxu0 %v4205
    %4486 = vmatpush.bf16.msra.mxu0 %v4198
    %4487 = vmatmul.bf16.gmra.mxu0 %v3783
    %v4488 = vpop.f32.mrf.mxu0
    %v4489 = vadd.f32 %v4476, %v4488
    %v4490 = vpop.f32.mrf.mxu0
    %4491 = vdwg.mxu0
    %4492 = vmatpush.bf16.msra.mxu0 %v4192
    %4493 = vmatpush.bf16.msra.mxu0 %v4185
    %4494 = vmatpush.bf16.msra.mxu0 %v4178
    %4495 = vmatpush.bf16.msra.mxu0 %v4171
    %4496 = vmatpush.bf16.msra.mxu0 %v4164
    %4497 = vmatpush.bf16.msra.mxu0 %v4157
    %4498 = vmatpush.bf16.msra.mxu0 %v4150
    %4499 = vmatpush.bf16.msra.mxu0 %v4143
    %4500 = vmatmul.bf16.gmra.mxu0 %v3782
    %v4501 = vpop.f32.mrf.mxu0
    %v4502 = vadd.f32 0.0, %v4501
    %v4503 = vpop.f32.mrf.mxu0
    %4504 = vdwg.mxu0
    %4505 = vmatpush.bf16.msra.mxu0 %v4248
    %4506 = vmatpush.bf16.msra.mxu0 %v4241
    %4507 = vmatpush.bf16.msra.mxu0 %v4234
    %4508 = vmatpush.bf16.msra.mxu0 %v4227
    %4509 = vmatpush.bf16.msra.mxu0 %v4220
    %4510 = vmatpush.bf16.msra.mxu0 %v4213
    %4511 = vmatpush.bf16.msra.mxu0 %v4206
    %4512 = vmatpush.bf16.msra.mxu0 %v4199
    %4513 = vmatmul.bf16.gmra.mxu0 %v3783
    %v4514 = vpop.f32.mrf.mxu0
    %v4515 = vadd.f32 %v4502, %v4514
    %v4516 = vpop.f32.mrf.mxu0
    %4517 = vdwg.mxu0
    %4518 = vmatpush.bf16.msra.mxu0 %v4193
    %4519 = vmatpush.bf16.msra.mxu0 %v4186
    %4520 = vmatpush.bf16.msra.mxu0 %v4179
    %4521 = vmatpush.bf16.msra.mxu0 %v4172
    %4522 = vmatpush.bf16.msra.mxu0 %v4165
    %4523 = vmatpush.bf16.msra.mxu0 %v4158
    %4524 = vmatpush.bf16.msra.mxu0 %v4151
    %4525 = vmatpush.bf16.msra.mxu0 %v4144
    %4526 = vmatmul.bf16.gmra.mxu0 %v3782
    %v4527 = vpop.f32.mrf.mxu0
    %v4528 = vadd.f32 0.0, %v4527
    %v4529 = vpop.f32.mrf.mxu0
    %4530 = vdwg.mxu0
    %4531 = vmatpush.bf16.msra.mxu0 %v4249
    %4532 = vmatpush.bf16.msra.mxu0 %v4242
    %4533 = vmatpush.bf16.msra.mxu0 %v4235
    %4534 = vmatpush.bf16.msra.mxu0 %v4228
    %4535 = vmatpush.bf16.msra.mxu0 %v4221
    %4536 = vmatpush.bf16.msra.mxu0 %v4214
    %4537 = vmatpush.bf16.msra.mxu0 %v4207
    %4538 = vmatpush.bf16.msra.mxu0 %v4200
    %4539 = vmatmul.bf16.gmra.mxu0 %v3783
    %v4540 = vpop.f32.mrf.mxu0
    %v4541 = vadd.f32 %v4528, %v4540
    %v4542 = vpop.f32.mrf.mxu0
    %4543 = vdwg.mxu0
    %v4545 = vunpack.c.l.b16 %v3514
    %v4546 = vunpack.c.h.b16 %v3514
    %v4547 = vpack.c.b16 %v4545, %v4545
    %v4548 = vpack.c.b16 %v4546, %v4546
    %v4679 = vunpack.c.l.b16 %v3521
    %v4680 = vunpack.c.h.b16 %v3521
    %v4681 = vunpack.c.l.b16 %v3522
    %v4682 = vunpack.c.h.b16 %v3522
    %v4683 = vunpack.c.l.b16 %v3523
    %v4684 = vunpack.c.h.b16 %v3523
    %v4685 = vunpack.c.l.b16 %v3524
    %v4686 = vunpack.c.l.b16 %v3525
    %v4687 = vunpack.c.h.b16 %v3525
    %v4688 = vunpack.c.l.b16 %v3526
    %v4689 = vunpack.c.h.b16 %v3526
    %v4690 = vunpack.c.l.b16 %v3527
    %v4691 = vunpack.c.h.b16 %v3527
    %v4692 = vunpack.c.l.b16 %v3528
    %v4693 = vunpack.c.l.b16 %v3529
    %v4694 = vunpack.c.h.b16 %v3529
    %v4695 = vunpack.c.l.b16 %v3530
    %v4696 = vunpack.c.h.b16 %v3530
    %v4697 = vunpack.c.l.b16 %v3531
    %v4698 = vunpack.c.h.b16 %v3531
    %v4699 = vunpack.c.l.b16 %v3532
    %v4700 = vunpack.c.l.b16 %v3533
    %v4701 = vunpack.c.h.b16 %v3533
    %v4702 = vunpack.c.l.b16 %v3534
    %v4703 = vunpack.c.h.b16 %v3534
    %v4704 = vunpack.c.l.b16 %v3535
    %v4705 = vunpack.c.h.b16 %v3535
    %v4706 = vunpack.c.l.b16 %v3536
    %v4707 = vunpack.c.l.b16 %v3537
    %v4708 = vunpack.c.h.b16 %v3537
    %v4709 = vunpack.c.l.b16 %v3538
    %v4710 = vunpack.c.h.b16 %v3538
    %v4711 = vunpack.c.l.b16 %v3539
    %v4712 = vunpack.c.h.b16 %v3539
    %v4713 = vunpack.c.l.b16 %v3540
    %v4714 = vunpack.c.l.b16 %v3541
    %v4715 = vunpack.c.h.b16 %v3541
    %v4716 = vunpack.c.l.b16 %v3542
    %v4717 = vunpack.c.h.b16 %v3542
    %v4718 = vunpack.c.l.b16 %v3543
    %v4719 = vunpack.c.h.b16 %v3543
    %v4720 = vunpack.c.l.b16 %v3544
    %v4721 = vunpack.c.l.b16 %v3545
    %v4722 = vunpack.c.h.b16 %v3545
    %v4723 = vunpack.c.l.b16 %v3546
    %v4724 = vunpack.c.h.b16 %v3546
    %v4725 = vunpack.c.l.b16 %v3547
    %v4726 = vunpack.c.h.b16 %v3547
    %v4727 = vunpack.c.l.b16 %v3548
    %v4728 = vunpack.c.l.b16 %v3549
    %v4729 = vunpack.c.h.b16 %v3549
    %v4730 = vunpack.c.l.b16 %v3550
    %v4731 = vunpack.c.h.b16 %v3550
    %v4732 = vunpack.c.l.b16 %v3551
    %v4733 = vunpack.c.h.b16 %v3551
    %v4734 = vunpack.c.l.b16 %v3552
    %v4735 = vunpack.c.l.b16 %v3553
    %v4736 = vunpack.c.h.b16 %v3553
    %v4737 = vunpack.c.l.b16 %v3554
    %v4738 = vunpack.c.h.b16 %v3554
    %v4739 = vunpack.c.l.b16 %v3555
    %v4740 = vunpack.c.h.b16 %v3555
    %v4741 = vunpack.c.l.b16 %v3556
    %v4742 = vunpack.c.l.b16 %v3557
    %v4743 = vunpack.c.h.b16 %v3557
    %v4744 = vunpack.c.l.b16 %v3558
    %v4745 = vunpack.c.h.b16 %v3558
    %v4746 = vunpack.c.l.b16 %v3559
    %v4747 = vunpack.c.h.b16 %v3559
    %v4748 = vunpack.c.l.b16 %v3560
    %v4749 = vunpack.c.l.b16 %v3561
    %v4750 = vunpack.c.h.b16 %v3561
    %v4751 = vunpack.c.l.b16 %v3562
    %v4752 = vunpack.c.h.b16 %v3562
    %v4753 = vunpack.c.l.b16 %v3563
    %v4754 = vunpack.c.h.b16 %v3563
    %v4755 = vunpack.c.l.b16 %v3564
    %v4756 = vunpack.c.l.b16 %v3565
    %v4757 = vunpack.c.h.b16 %v3565
    %v4758 = vunpack.c.l.b16 %v3566
    %v4759 = vunpack.c.h.b16 %v3566
    %v4760 = vunpack.c.l.b16 %v3567
    %v4761 = vunpack.c.h.b16 %v3567
    %v4762 = vunpack.c.l.b16 %v3568
    %v4763 = vunpack.c.l.b16 %v3569
    %v4764 = vunpack.c.h.b16 %v3569
    %v4765 = vunpack.c.l.b16 %v3570
    %v4766 = vunpack.c.h.b16 %v3570
    %v4767 = vunpack.c.l.b16 %v3571
    %v4768 = vunpack.c.h.b16 %v3571
    %v4769 = vunpack.c.l.b16 %v3572
    %v4770 = vunpack.c.l.b16 %v3573
    %v4771 = vunpack.c.h.b16 %v3573
    %v4772 = vunpack.c.l.b16 %v3574
    %v4773 = vunpack.c.h.b16 %v3574
    %v4774 = vunpack.c.l.b16 %v3575
    %v4775 = vunpack.c.h.b16 %v3575
    %v4776 = vunpack.c.l.b16 %v3576
    %v4777 = vunpack.c.l.b16 %v3577
    %v4778 = vunpack.c.h.b16 %v3577
    %v4779 = vunpack.c.l.b16 %v3578
    %v4780 = vunpack.c.h.b16 %v3578
    %v4781 = vunpack.c.l.b16 %v3579
    %v4782 = vunpack.c.h.b16 %v3579
    %v4783 = vunpack.c.l.b16 %v3580
    %v4784 = vunpack.c.l.b16 %v3581
    %v4785 = vunpack.c.h.b16 %v3581
    %v4786 = vunpack.c.l.b16 %v3582
    %v4787 = vunpack.c.h.b16 %v3582
    %v4788 = vunpack.c.l.b16 %v3583
    %v4789 = vunpack.c.h.b16 %v3583
    %v4790 = vunpack.c.l.b16 %v3584
    %v4791 = vunpack.c.l.b16 %v3585
    %v4792 = vunpack.c.h.b16 %v3585
    %v4793 = vunpack.c.l.b16 %v3586
    %v4794 = vunpack.c.h.b16 %v3586
    %v4795 = vunpack.c.l.b16 %v3587
    %v4796 = vunpack.c.h.b16 %v3587
    %v4797 = vunpack.c.l.b16 %v3588
    %v4798 = vunpack.c.l.b16 %v3589
    %v4799 = vunpack.c.h.b16 %v3589
    %v4800 = vunpack.c.l.b16 %v3590
    %v4801 = vunpack.c.h.b16 %v3590
    %v4802 = vunpack.c.l.b16 %v3591
    %v4803 = vunpack.c.h.b16 %v3591
    %v4804 = vunpack.c.l.b16 %v3592
    %v4805 = vunpack.c.l.b16 %v3593
    %v4806 = vunpack.c.h.b16 %v3593
    %v4807 = vunpack.c.l.b16 %v3594
    %v4808 = vunpack.c.h.b16 %v3594
    %v4809 = vunpack.c.l.b16 %v3595
    %v4810 = vunpack.c.h.b16 %v3595
    %v4811 = vunpack.c.l.b16 %v3596
    %v4812 = vunpack.c.l.b16 %v3597
    %v4813 = vunpack.c.h.b16 %v3597
    %v4814 = vunpack.c.l.b16 %v3598
    %v4815 = vunpack.c.h.b16 %v3598
    %v4816 = vunpack.c.l.b16 %v3599
    %v4817 = vunpack.c.h.b16 %v3599
    %v4818 = vunpack.c.l.b16 %v3600
    %v4819 = vunpack.c.l.b16 %v3601
    %v4820 = vunpack.c.h.b16 %v3601
    %v4821 = vunpack.c.l.b16 %v3602
    %v4822 = vunpack.c.h.b16 %v3602
    %v4823 = vunpack.c.l.b16 %v3603
    %v4824 = vunpack.c.h.b16 %v3603
    %v4825 = vunpack.c.l.b16 %v3604
    %v4826 = vunpack.c.l.b16 %v3605
    %v4827 = vunpack.c.h.b16 %v3605
    %v4828 = vunpack.c.l.b16 %v3606
    %v4829 = vunpack.c.h.b16 %v3606
    %v4830 = vunpack.c.l.b16 %v3607
    %v4831 = vunpack.c.h.b16 %v3607
    %v4832 = vunpack.c.l.b16 %v3608
    %v4833 = vunpack.c.l.b16 %v3609
    %v4834 = vunpack.c.h.b16 %v3609
    %v4835 = vunpack.c.l.b16 %v3610
    %v4836 = vunpack.c.h.b16 %v3610
    %v4837 = vunpack.c.l.b16 %v3611
    %v4838 = vunpack.c.h.b16 %v3611
    %v4839 = vunpack.c.l.b16 %v3612
    %v4840 = vunpack.c.l.b16 %v3613
    %v4841 = vunpack.c.h.b16 %v3613
    %v4842 = vunpack.c.l.b16 %v3614
    %v4843 = vunpack.c.h.b16 %v3614
    %v4844 = vunpack.c.l.b16 %v3615
    %v4845 = vunpack.c.h.b16 %v3615
    %v4846 = vunpack.c.l.b16 %v3616
    %v4847 = vunpack.c.l.b16 %v3617
    %v4848 = vunpack.c.h.b16 %v3617
    %v4849 = vunpack.c.l.b16 %v3618
    %v4850 = vunpack.c.h.b16 %v3618
    %v4851 = vunpack.c.l.b16 %v3619
    %v4852 = vunpack.c.h.b16 %v3619
    %v4853 = vunpack.c.l.b16 %v3620
    %v4854 = vunpack.c.l.b16 %v3621
    %v4855 = vunpack.c.h.b16 %v3621
    %v4856 = vunpack.c.l.b16 %v3622
    %v4857 = vunpack.c.h.b16 %v3622
    %v4858 = vunpack.c.l.b16 %v3623
    %v4859 = vunpack.c.h.b16 %v3623
    %v4860 = vunpack.c.l.b16 %v3624
    %v4861 = vunpack.c.l.b16 %v3625
    %v4862 = vunpack.c.h.b16 %v3625
    %v4863 = vunpack.c.l.b16 %v3626
    %v4864 = vunpack.c.h.b16 %v3626
    %v4865 = vunpack.c.l.b16 %v3627
    %v4866 = vunpack.c.h.b16 %v3627
    %v4867 = vunpack.c.l.b16 %v3628
    %v4868 = vunpack.c.l.b16 %v3629
    %v4869 = vunpack.c.h.b16 %v3629
    %v4870 = vunpack.c.l.b16 %v3630
    %v4871 = vunpack.c.h.b16 %v3630
    %v4872 = vunpack.c.l.b16 %v3631
    %v4873 = vunpack.c.h.b16 %v3631
    %v4874 = vunpack.c.l.b16 %v3632
    %v4875 = vunpack.c.l.b16 %v3633
    %v4876 = vunpack.c.h.b16 %v3633
    %v4877 = vunpack.c.l.b16 %v3634
    %v4878 = vunpack.c.h.b16 %v3634
    %v4879 = vunpack.c.l.b16 %v3635
    %v4880 = vunpack.c.h.b16 %v3635
    %v4881 = vunpack.c.l.b16 %v3636
    %v4882 = vunpack.c.l.b16 %v3637
    %v4883 = vunpack.c.h.b16 %v3637
    %v4884 = vunpack.c.l.b16 %v3638
    %v4885 = vunpack.c.h.b16 %v3638
    %v4886 = vunpack.c.l.b16 %v3639
    %v4887 = vunpack.c.h.b16 %v3639
    %v4888 = vunpack.c.l.b16 %v3640
    %v4889 = vunpack.c.l.b16 %v3641
    %v4890 = vunpack.c.h.b16 %v3641
    %v4891 = vunpack.c.l.b16 %v3642
    %v4892 = vunpack.c.h.b16 %v3642
    %v4893 = vunpack.c.l.b16 %v3643
    %v4894 = vunpack.c.h.b16 %v3643
    %v4895 = vunpack.c.l.b16 %v3644
    %v4896 = vunpack.c.l.b16 %v3645
    %v4897 = vunpack.c.h.b16 %v3645
    %v4898 = vunpack.c.l.b16 %v3646
    %v4899 = vunpack.c.h.b16 %v3646
    %v4900 = vunpack.c.l.b16 %v3647
    %v4901 = vunpack.c.h.b16 %v3647
    %v4902 = vunpack.c.l.b16 %v3648
    %v4903 = vpack.c.b16 %v4686, %v4679
    %v4904 = vpack.c.b16 %v4687, %v4680
    %v4905 = vpack.c.b16 %v4688, %v4681
    %v4906 = vpack.c.b16 %v4689, %v4682
    %v4907 = vpack.c.b16 %v4690, %v4683
    %v4908 = vpack.c.b16 %v4691, %v4684
    %v4909 = vpack.c.b16 %v4692, %v4685
    %v4910 = vpack.c.b16 %v4700, %v4693
    %v4911 = vpack.c.b16 %v4701, %v4694
    %v4912 = vpack.c.b16 %v4702, %v4695
    %v4913 = vpack.c.b16 %v4703, %v4696
    %v4914 = vpack.c.b16 %v4704, %v4697
    %v4915 = vpack.c.b16 %v4705, %v4698
    %v4916 = vpack.c.b16 %v4706, %v4699
    %v4917 = vpack.c.b16 %v4714, %v4707
    %v4918 = vpack.c.b16 %v4715, %v4708
    %v4919 = vpack.c.b16 %v4716, %v4709
    %v4920 = vpack.c.b16 %v4717, %v4710
    %v4921 = vpack.c.b16 %v4718, %v4711
    %v4922 = vpack.c.b16 %v4719, %v4712
    %v4923 = vpack.c.b16 %v4720, %v4713
    %v4924 = vpack.c.b16 %v4728, %v4721
    %v4925 = vpack.c.b16 %v4729, %v4722
    %v4926 = vpack.c.b16 %v4730, %v4723
    %v4927 = vpack.c.b16 %v4731, %v4724
    %v4928 = vpack.c.b16 %v4732, %v4725
    %v4929 = vpack.c.b16 %v4733, %v4726
    %v4930 = vpack.c.b16 %v4734, %v4727
    %v4931 = vpack.c.b16 %v4742, %v4735
    %v4932 = vpack.c.b16 %v4743, %v4736
    %v4933 = vpack.c.b16 %v4744, %v4737
    %v4934 = vpack.c.b16 %v4745, %v4738
    %v4935 = vpack.c.b16 %v4746, %v4739
    %v4936 = vpack.c.b16 %v4747, %v4740
    %v4937 = vpack.c.b16 %v4748, %v4741
    %v4938 = vpack.c.b16 %v4756, %v4749
    %v4939 = vpack.c.b16 %v4757, %v4750
    %v4940 = vpack.c.b16 %v4758, %v4751
    %v4941 = vpack.c.b16 %v4759, %v4752
    %v4942 = vpack.c.b16 %v4760, %v4753
    %v4943 = vpack.c.b16 %v4761, %v4754
    %v4944 = vpack.c.b16 %v4762, %v4755
    %v4945 = vpack.c.b16 %v4770, %v4763
    %v4946 = vpack.c.b16 %v4771, %v4764
    %v4947 = vpack.c.b16 %v4772, %v4765
    %v4948 = vpack.c.b16 %v4773, %v4766
    %v4949 = vpack.c.b16 %v4774, %v4767
    %v4950 = vpack.c.b16 %v4775, %v4768
    %v4951 = vpack.c.b16 %v4776, %v4769
    %v4952 = vpack.c.b16 %v4784, %v4777
    %v4953 = vpack.c.b16 %v4785, %v4778
    %v4954 = vpack.c.b16 %v4786, %v4779
    %v4955 = vpack.c.b16 %v4787, %v4780
    %v4956 = vpack.c.b16 %v4788, %v4781
    %v4957 = vpack.c.b16 %v4789, %v4782
    %v4958 = vpack.c.b16 %v4790, %v4783
    %v4959 = vpack.c.b16 %v4798, %v4791
    %v4960 = vpack.c.b16 %v4799, %v4792
    %v4961 = vpack.c.b16 %v4800, %v4793
    %v4962 = vpack.c.b16 %v4801, %v4794
    %v4963 = vpack.c.b16 %v4802, %v4795
    %v4964 = vpack.c.b16 %v4803, %v4796
    %v4965 = vpack.c.b16 %v4804, %v4797
    %v4966 = vpack.c.b16 %v4812, %v4805
    %v4967 = vpack.c.b16 %v4813, %v4806
    %v4968 = vpack.c.b16 %v4814, %v4807
    %v4969 = vpack.c.b16 %v4815, %v4808
    %v4970 = vpack.c.b16 %v4816, %v4809
    %v4971 = vpack.c.b16 %v4817, %v4810
    %v4972 = vpack.c.b16 %v4818, %v4811
    %v4973 = vpack.c.b16 %v4826, %v4819
    %v4974 = vpack.c.b16 %v4827, %v4820
    %v4975 = vpack.c.b16 %v4828, %v4821
    %v4976 = vpack.c.b16 %v4829, %v4822
    %v4977 = vpack.c.b16 %v4830, %v4823
    %v4978 = vpack.c.b16 %v4831, %v4824
    %v4979 = vpack.c.b16 %v4832, %v4825
    %v4980 = vpack.c.b16 %v4840, %v4833
    %v4981 = vpack.c.b16 %v4841, %v4834
    %v4982 = vpack.c.b16 %v4842, %v4835
    %v4983 = vpack.c.b16 %v4843, %v4836
    %v4984 = vpack.c.b16 %v4844, %v4837
    %v4985 = vpack.c.b16 %v4845, %v4838
    %v4986 = vpack.c.b16 %v4846, %v4839
    %v4987 = vpack.c.b16 %v4854, %v4847
    %v4988 = vpack.c.b16 %v4855, %v4848
    %v4989 = vpack.c.b16 %v4856, %v4849
    %v4990 = vpack.c.b16 %v4857, %v4850
    %v4991 = vpack.c.b16 %v4858, %v4851
    %v4992 = vpack.c.b16 %v4859, %v4852
    %v4993 = vpack.c.b16 %v4860, %v4853
    %v4994 = vpack.c.b16 %v4868, %v4861
    %v4995 = vpack.c.b16 %v4869, %v4862
    %v4996 = vpack.c.b16 %v4870, %v4863
    %v4997 = vpack.c.b16 %v4871, %v4864
    %v4998 = vpack.c.b16 %v4872, %v4865
    %v4999 = vpack.c.b16 %v4873, %v4866
    %v5000 = vpack.c.b16 %v4874, %v4867
    %v5001 = vpack.c.b16 %v4882, %v4875
    %v5002 = vpack.c.b16 %v4883, %v4876
    %v5003 = vpack.c.b16 %v4884, %v4877
    %v5004 = vpack.c.b16 %v4885, %v4878
    %v5005 = vpack.c.b16 %v4886, %v4879
    %v5006 = vpack.c.b16 %v4887, %v4880
    %v5007 = vpack.c.b16 %v4888, %v4881
    %v5008 = vpack.c.b16 %v4896, %v4889
    %v5009 = vpack.c.b16 %v4897, %v4890
    %v5010 = vpack.c.b16 %v4898, %v4891
    %v5011 = vpack.c.b16 %v4899, %v4892
    %v5012 = vpack.c.b16 %v4900, %v4893
    %v5013 = vpack.c.b16 %v4901, %v4894
    %v5014 = vpack.c.b16 %v4902, %v4895
    %5127 = vmatpush.bf16.msra.mxu0 %v4952
    %5128 = vmatpush.bf16.msra.mxu0 %v4945
    %5129 = vmatpush.bf16.msra.mxu0 %v4938
    %5130 = vmatpush.bf16.msra.mxu0 %v4931
    %5131 = vmatpush.bf16.msra.mxu0 %v4924
    %5132 = vmatpush.bf16.msra.mxu0 %v4917
    %5133 = vmatpush.bf16.msra.mxu0 %v4910
    %5134 = vmatpush.bf16.msra.mxu0 %v4903
    %5135 = vmatmul.bf16.gmra.mxu0 %v4547
    %v5136 = vpop.f32.mrf.mxu0
    %v5137 = vadd.f32 %v4385, %v5136
    %v5138 = vpop.f32.mrf.mxu0
    %5139 = vdwg.mxu0
    %5140 = vmatpush.bf16.msra.mxu0 %v5008
    %5141 = vmatpush.bf16.msra.mxu0 %v5001
    %5142 = vmatpush.bf16.msra.mxu0 %v4994
    %5143 = vmatpush.bf16.msra.mxu0 %v4987
    %5144 = vmatpush.bf16.msra.mxu0 %v4980
    %5145 = vmatpush.bf16.msra.mxu0 %v4973
    %5146 = vmatpush.bf16.msra.mxu0 %v4966
    %5147 = vmatpush.bf16.msra.mxu0 %v4959
    %5148 = vmatmul.bf16.gmra.mxu0 %v4548
    %v5149 = vpop.f32.mrf.mxu0
    %v5150 = vadd.f32 %v5137, %v5149
    %v5151 = vpop.f32.mrf.mxu0
    %5152 = vdwg.mxu0
    %5153 = vmatpush.bf16.msra.mxu0 %v4953
    %5154 = vmatpush.bf16.msra.mxu0 %v4946
    %5155 = vmatpush.bf16.msra.mxu0 %v4939
    %5156 = vmatpush.bf16.msra.mxu0 %v4932
    %5157 = vmatpush.bf16.msra.mxu0 %v4925
    %5158 = vmatpush.bf16.msra.mxu0 %v4918
    %5159 = vmatpush.bf16.msra.mxu0 %v4911
    %5160 = vmatpush.bf16.msra.mxu0 %v4904
    %5161 = vmatmul.bf16.gmra.mxu0 %v4547
    %v5162 = vpop.f32.mrf.mxu0
    %v5163 = vadd.f32 %v4411, %v5162
    %v5164 = vpop.f32.mrf.mxu0
    %5165 = vdwg.mxu0
    %5166 = vmatpush.bf16.msra.mxu0 %v5009
    %5167 = vmatpush.bf16.msra.mxu0 %v5002
    %5168 = vmatpush.bf16.msra.mxu0 %v4995
    %5169 = vmatpush.bf16.msra.mxu0 %v4988
    %5170 = vmatpush.bf16.msra.mxu0 %v4981
    %5171 = vmatpush.bf16.msra.mxu0 %v4974
    %5172 = vmatpush.bf16.msra.mxu0 %v4967
    %5173 = vmatpush.bf16.msra.mxu0 %v4960
    %5174 = vmatmul.bf16.gmra.mxu0 %v4548
    %v5175 = vpop.f32.mrf.mxu0
    %v5176 = vadd.f32 %v5163, %v5175
    %v5177 = vpop.f32.mrf.mxu0
    %5178 = vdwg.mxu0
    %5179 = vmatpush.bf16.msra.mxu0 %v4954
    %5180 = vmatpush.bf16.msra.mxu0 %v4947
    %5181 = vmatpush.bf16.msra.mxu0 %v4940
    %5182 = vmatpush.bf16.msra.mxu0 %v4933
    %5183 = vmatpush.bf16.msra.mxu0 %v4926
    %5184 = vmatpush.bf16.msra.mxu0 %v4919
    %5185 = vmatpush.bf16.msra.mxu0 %v4912
    %5186 = vmatpush.bf16.msra.mxu0 %v4905
    %5187 = vmatmul.bf16.gmra.mxu0 %v4547
    %v5188 = vpop.f32.mrf.mxu0
    %v5189 = vadd.f32 %v4437, %v5188
    %v5190 = vpop.f32.mrf.mxu0
    %5191 = vdwg.mxu0
    %5192 = vmatpush.bf16.msra.mxu0 %v5010
    %5193 = vmatpush.bf16.msra.mxu0 %v5003
    %5194 = vmatpush.bf16.msra.mxu0 %v4996
    %5195 = vmatpush.bf16.msra.mxu0 %v4989
    %5196 = vmatpush.bf16.msra.mxu0 %v4982
    %5197 = vmatpush.bf16.msra.mxu0 %v4975
    %5198 = vmatpush.bf16.msra.mxu0 %v4968
    %5199 = vmatpush.bf16.msra.mxu0 %v4961
    %5200 = vmatmul.bf16.gmra.mxu0 %v4548
    %v5201 = vpop.f32.mrf.mxu0
    %v5202 = vadd.f32 %v5189, %v5201
    %v5203 = vpop.f32.mrf.mxu0
    %5204 = vdwg.mxu0
    %5205 = vmatpush.bf16.msra.mxu0 %v4955
    %5206 = vmatpush.bf16.msra.mxu0 %v4948
    %5207 = vmatpush.bf16.msra.mxu0 %v4941
    %5208 = vmatpush.bf16.msra.mxu0 %v4934
    %5209 = vmatpush.bf16.msra.mxu0 %v4927
    %5210 = vmatpush.bf16.msra.mxu0 %v4920
    %5211 = vmatpush.bf16.msra.mxu0 %v4913
    %5212 = vmatpush.bf16.msra.mxu0 %v4906
    %5213 = vmatmul.bf16.gmra.mxu0 %v4547
    %v5214 = vpop.f32.mrf.mxu0
    %v5215 = vadd.f32 %v4463, %v5214
    %v5216 = vpop.f32.mrf.mxu0
    %5217 = vdwg.mxu0
    %5218 = vmatpush.bf16.msra.mxu0 %v5011
    %5219 = vmatpush.bf16.msra.mxu0 %v5004
    %5220 = vmatpush.bf16.msra.mxu0 %v4997
    %5221 = vmatpush.bf16.msra.mxu0 %v4990
    %5222 = vmatpush.bf16.msra.mxu0 %v4983
    %5223 = vmatpush.bf16.msra.mxu0 %v4976
    %5224 = vmatpush.bf16.msra.mxu0 %v4969
    %5225 = vmatpush.bf16.msra.mxu0 %v4962
    %5226 = vmatmul.bf16.gmra.mxu0 %v4548
    %v5227 = vpop.f32.mrf.mxu0
    %v5228 = vadd.f32 %v5215, %v5227
    %v5229 = vpop.f32.mrf.mxu0
    %5230 = vdwg.mxu0
    %5231 = vmatpush.bf16.msra.mxu0 %v4956
    %5232 = vmatpush.bf16.msra.mxu0 %v4949
    %5233 = vmatpush.bf16.msra.mxu0 %v4942
    %5234 = vmatpush.bf16.msra.mxu0 %v4935
    %5235 = vmatpush.bf16.msra.mxu0 %v4928
    %5236 = vmatpush.bf16.msra.mxu0 %v4921
    %5237 = vmatpush.bf16.msra.mxu0 %v4914
    %5238 = vmatpush.bf16.msra.mxu0 %v4907
    %5239 = vmatmul.bf16.gmra.mxu0 %v4547
    %v5240 = vpop.f32.mrf.mxu0
    %v5241 = vadd.f32 %v4489, %v5240
    %v5242 = vpop.f32.mrf.mxu0
    %5243 = vdwg.mxu0
    %5244 = vmatpush.bf16.msra.mxu0 %v5012
    %5245 = vmatpush.bf16.msra.mxu0 %v5005
    %5246 = vmatpush.bf16.msra.mxu0 %v4998
    %5247 = vmatpush.bf16.msra.mxu0 %v4991
    %5248 = vmatpush.bf16.msra.mxu0 %v4984
    %5249 = vmatpush.bf16.msra.mxu0 %v4977
    %5250 = vmatpush.bf16.msra.mxu0 %v4970
    %5251 = vmatpush.bf16.msra.mxu0 %v4963
    %5252 = vmatmul.bf16.gmra.mxu0 %v4548
    %v5253 = vpop.f32.mrf.mxu0
    %v5254 = vadd.f32 %v5241, %v5253
    %v5255 = vpop.f32.mrf.mxu0
    %5256 = vdwg.mxu0
    %5257 = vmatpush.bf16.msra.mxu0 %v4957
    %5258 = vmatpush.bf16.msra.mxu0 %v4950
    %5259 = vmatpush.bf16.msra.mxu0 %v4943
    %5260 = vmatpush.bf16.msra.mxu0 %v4936
    %5261 = vmatpush.bf16.msra.mxu0 %v4929
    %5262 = vmatpush.bf16.msra.mxu0 %v4922
    %5263 = vmatpush.bf16.msra.mxu0 %v4915
    %5264 = vmatpush.bf16.msra.mxu0 %v4908
    %5265 = vmatmul.bf16.gmra.mxu0 %v4547
    %v5266 = vpop.f32.mrf.mxu0
    %v5267 = vadd.f32 %v4515, %v5266
    %v5268 = vpop.f32.mrf.mxu0
    %5269 = vdwg.mxu0
    %5270 = vmatpush.bf16.msra.mxu0 %v5013
    %5271 = vmatpush.bf16.msra.mxu0 %v5006
    %5272 = vmatpush.bf16.msra.mxu0 %v4999
    %5273 = vmatpush.bf16.msra.mxu0 %v4992
    %5274 = vmatpush.bf16.msra.mxu0 %v4985
    %5275 = vmatpush.bf16.msra.mxu0 %v4978
    %5276 = vmatpush.bf16.msra.mxu0 %v4971
    %5277 = vmatpush.bf16.msra.mxu0 %v4964
    %5278 = vmatmul.bf16.gmra.mxu0 %v4548
    %v5279 = vpop.f32.mrf.mxu0
    %v5280 = vadd.f32 %v5267, %v5279
    %v5281 = vpop.f32.mrf.mxu0
    %5282 = vdwg.mxu0
    %5283 = vmatpush.bf16.msra.mxu0 %v4958
    %5284 = vmatpush.bf16.msra.mxu0 %v4951
    %5285 = vmatpush.bf16.msra.mxu0 %v4944
    %5286 = vmatpush.bf16.msra.mxu0 %v4937
    %5287 = vmatpush.bf16.msra.mxu0 %v4930
    %5288 = vmatpush.bf16.msra.mxu0 %v4923
    %5289 = vmatpush.bf16.msra.mxu0 %v4916
    %5290 = vmatpush.bf16.msra.mxu0 %v4909
    %5291 = vmatmul.bf16.gmra.mxu0 %v4547
    %v5292 = vpop.f32.mrf.mxu0
    %v5293 = vadd.f32 %v4541, %v5292
    %v5294 = vpop.f32.mrf.mxu0
    %5295 = vdwg.mxu0
    %5296 = vmatpush.bf16.msra.mxu0 %v5014
    %5297 = vmatpush.bf16.msra.mxu0 %v5007
    %5298 = vmatpush.bf16.msra.mxu0 %v5000
    %5299 = vmatpush.bf16.msra.mxu0 %v4993
    %5300 = vmatpush.bf16.msra.mxu0 %v4986
    %5301 = vmatpush.bf16.msra.mxu0 %v4979
    %5302 = vmatpush.bf16.msra.mxu0 %v4972
    %5303 = vmatpush.bf16.msra.mxu0 %v4965
    %5304 = vmatmul.bf16.gmra.mxu0 %v4548
    %v5305 = vpop.f32.mrf.mxu0
    %v5306 = vadd.f32 %v5293, %v5305
    %v5307 = vpop.f32.mrf.mxu0
    %5308 = vdwg.mxu0
    %s5309 = sshll.u32 %s3518, 4
    %5310 = dma.done %s138, %s5309
    %v5311 = vld [vmem:[%s137] sm:$0xff]
    %v5312 = vld [vmem:[%s137 + $0x8] sm:$0xff]
    %v5313 = vld [vmem:[%s137 + $0x10] sm:$0xff]
    %v5314 = vld [vmem:[%s137 + $0x18] sm:$0xf]
    %v5315 = vld [vmem:[%s137 + $0x1c] sm:$0xff]
    %v5316 = vld [vmem:[%s137 + $0x24] sm:$0xff]
    %v5317 = vld [vmem:[%s137 + $0x2c] sm:$0xff]
    %v5318 = vld [vmem:[%s137 + $0x34] sm:$0xf]
    %v5319 = vld [vmem:[%s137 + $0x38] sm:$0xff]
    %v5320 = vld [vmem:[%s137 + $0x40] sm:$0xff]
    %v5321 = vld [vmem:[%s137 + $0x48] sm:$0xff]
    %v5322 = vld [vmem:[%s137 + $0x50] sm:$0xf]
    %v5323 = vld [vmem:[%s137 + $0x54] sm:$0xff]
    %v5324 = vld [vmem:[%s137 + $0x5c] sm:$0xff]
    %v5325 = vld [vmem:[%s137 + $0x64] sm:$0xff]
    %v5326 = vld [vmem:[%s137 + $0x6c] sm:$0xf]
    %v5327 = vld [vmem:[%s137 + $0x70] sm:$0xff]
    %v5328 = vld [vmem:[%s137 + $0x78] sm:$0xff]
    %v5329 = vld [vmem:[%s137 + $0x80] sm:$0xff]
    %v5330 = vld [vmem:[%s137 + $0x88] sm:$0xf]
    %v5331 = vld [vmem:[%s137 + $0x8c] sm:$0xff]
    %v5332 = vld [vmem:[%s137 + $0x94] sm:$0xff]
    %v5333 = vld [vmem:[%s137 + $0x9c] sm:$0xff]
    %v5334 = vld [vmem:[%s137 + $0xa4] sm:$0xf]
    %v5335 = vld [vmem:[%s137 + $0xa8] sm:$0xff]
    %v5336 = vld [vmem:[%s137 + $0xb0] sm:$0xff]
    %v5337 = vld [vmem:[%s137 + $0xb8] sm:$0xff]
    %v5338 = vld [vmem:[%s137 + $0xc0] sm:$0xf]
    %v5339 = vld [vmem:[%s137 + $0xc4] sm:$0xff]
    %v5340 = vld [vmem:[%s137 + $0xcc] sm:$0xff]
    %v5341 = vld [vmem:[%s137 + $0xd4] sm:$0xff]
    %v5342 = vld [vmem:[%s137 + $0xdc] sm:$0xf]
    %v5343 = vld [vmem:[%s137 + $0xe0] sm:$0xff]
    %v5344 = vld [vmem:[%s137 + $0xe8] sm:$0xff]
    %v5345 = vld [vmem:[%s137 + $0xf0] sm:$0xff]
    %v5346 = vld [vmem:[%s137 + $0xf8] sm:$0xf]
    %v5347 = vld [vmem:[%s137 + $0xfc] sm:$0xff]
    %v5348 = vld [vmem:[%s137 + $0x104] sm:$0xff]
    %v5349 = vld [vmem:[%s137 + $0x10c] sm:$0xff]
    %v5350 = vld [vmem:[%s137 + $0x114] sm:$0xf]
    %v5351 = vld [vmem:[%s137 + $0x118] sm:$0xff]
    %v5352 = vld [vmem:[%s137 + $0x120] sm:$0xff]
    %v5353 = vld [vmem:[%s137 + $0x128] sm:$0xff]
    %v5354 = vld [vmem:[%s137 + $0x130] sm:$0xf]
    %v5355 = vld [vmem:[%s137 + $0x134] sm:$0xff]
    %v5356 = vld [vmem:[%s137 + $0x13c] sm:$0xff]
    %v5357 = vld [vmem:[%s137 + $0x144] sm:$0xff]
    %v5358 = vld [vmem:[%s137 + $0x14c] sm:$0xf]
    %v5359 = vld [vmem:[%s137 + $0x150] sm:$0xff]
    %v5360 = vld [vmem:[%s137 + $0x158] sm:$0xff]
    %v5361 = vld [vmem:[%s137 + $0x160] sm:$0xff]
    %v5362 = vld [vmem:[%s137 + $0x168] sm:$0xf]
    %v5363 = vld [vmem:[%s137 + $0x16c] sm:$0xff]
    %v5364 = vld [vmem:[%s137 + $0x174] sm:$0xff]
    %v5365 = vld [vmem:[%s137 + $0x17c] sm:$0xff]
    %v5366 = vld [vmem:[%s137 + $0x184] sm:$0xf]
    %v5367 = vld [vmem:[%s137 + $0x188] sm:$0xff]
    %v5368 = vld [vmem:[%s137 + $0x190] sm:$0xff]
    %v5369 = vld [vmem:[%s137 + $0x198] sm:$0xff]
    %v5370 = vld [vmem:[%s137 + $0x1a0] sm:$0xf]
    %v5371 = vld [vmem:[%s137 + $0x1a4] sm:$0xff]
    %v5372 = vld [vmem:[%s137 + $0x1ac] sm:$0xff]
    %v5373 = vld [vmem:[%s137 + $0x1b4] sm:$0xff]
    %v5374 = vld [vmem:[%s137 + $0x1bc] sm:$0xf]
    %v5375 = vld [vmem:[%s137 + $0x1c0] sm:$0xff]
    %v5376 = vld [vmem:[%s137 + $0x1c8] sm:$0xff]
    %v5377 = vld [vmem:[%s137 + $0x1d0] sm:$0xff]
    %v5378 = vld [vmem:[%s137 + $0x1d8] sm:$0xf]
    %v5379 = vld [vmem:[%s137 + $0x1dc] sm:$0xff]
    %v5380 = vld [vmem:[%s137 + $0x1e4] sm:$0xff]
    %v5381 = vld [vmem:[%s137 + $0x1ec] sm:$0xff]
    %v5382 = vld [vmem:[%s137 + $0x1f4] sm:$0xf]
    %v5383 = vld [vmem:[%s137 + $0x1f8] sm:$0xff]
    %v5384 = vld [vmem:[%s137 + $0x200] sm:$0xff]
    %v5385 = vld [vmem:[%s137 + $0x208] sm:$0xff]
    %v5386 = vld [vmem:[%s137 + $0x210] sm:$0xf]
    %v5387 = vld [vmem:[%s137 + $0x214] sm:$0xff]
    %v5388 = vld [vmem:[%s137 + $0x21c] sm:$0xff]
    %v5389 = vld [vmem:[%s137 + $0x224] sm:$0xff]
    %v5390 = vld [vmem:[%s137 + $0x22c] sm:$0xf]
    %v5391 = vld [vmem:[%s137 + $0x230] sm:$0xff]
    %v5392 = vld [vmem:[%s137 + $0x238] sm:$0xff]
    %v5393 = vld [vmem:[%s137 + $0x240] sm:$0xff]
    %v5394 = vld [vmem:[%s137 + $0x248] sm:$0xf]
    %v5395 = vld [vmem:[%s137 + $0x24c] sm:$0xff]
    %v5396 = vld [vmem:[%s137 + $0x254] sm:$0xff]
    %v5397 = vld [vmem:[%s137 + $0x25c] sm:$0xff]
    %v5398 = vld [vmem:[%s137 + $0x264] sm:$0xf]
    %v5399 = vld [vmem:[%s137 + $0x268] sm:$0xff]
    %v5400 = vld [vmem:[%s137 + $0x270] sm:$0xff]
    %v5401 = vld [vmem:[%s137 + $0x278] sm:$0xff]
    %v5402 = vld [vmem:[%s137 + $0x280] sm:$0xf]
    %v5403 = vld [vmem:[%s137 + $0x284] sm:$0xff]
    %v5404 = vld [vmem:[%s137 + $0x28c] sm:$0xff]
    %v5405 = vld [vmem:[%s137 + $0x294] sm:$0xff]
    %v5406 = vld [vmem:[%s137 + $0x29c] sm:$0xf]
    %v5407 = vld [vmem:[%s137 + $0x2a0] sm:$0xff]
    %v5408 = vld [vmem:[%s137 + $0x2a8] sm:$0xff]
    %v5409 = vld [vmem:[%s137 + $0x2b0] sm:$0xff]
    %v5410 = vld [vmem:[%s137 + $0x2b8] sm:$0xf]
    %v5411 = vld [vmem:[%s137 + $0x2bc] sm:$0xff]
    %v5412 = vld [vmem:[%s137 + $0x2c4] sm:$0xff]
    %v5413 = vld [vmem:[%s137 + $0x2cc] sm:$0xff]
    %v5414 = vld [vmem:[%s137 + $0x2d4] sm:$0xf]
    %v5415 = vld [vmem:[%s137 + $0x2d8] sm:$0xff]
    %v5416 = vld [vmem:[%s137 + $0x2e0] sm:$0xff]
    %v5417 = vld [vmem:[%s137 + $0x2e8] sm:$0xff]
    %v5418 = vld [vmem:[%s137 + $0x2f0] sm:$0xf]
    %v5419 = vld [vmem:[%s137 + $0x2f4] sm:$0xff]
    %v5420 = vld [vmem:[%s137 + $0x2fc] sm:$0xff]
    %v5421 = vld [vmem:[%s137 + $0x304] sm:$0xff]
    %v5422 = vld [vmem:[%s137 + $0x30c] sm:$0xf]
    %v5423 = vld [vmem:[%s137 + $0x310] sm:$0xff]
    %v5424 = vld [vmem:[%s137 + $0x318] sm:$0xff]
    %v5425 = vld [vmem:[%s137 + $0x320] sm:$0xff]
    %v5426 = vld [vmem:[%s137 + $0x328] sm:$0xf]
    %v5427 = vld [vmem:[%s137 + $0x32c] sm:$0xff]
    %v5428 = vld [vmem:[%s137 + $0x334] sm:$0xff]
    %v5429 = vld [vmem:[%s137 + $0x33c] sm:$0xff]
    %v5430 = vld [vmem:[%s137 + $0x344] sm:$0xf]
    %v5431 = vld [vmem:[%s137 + $0x348] sm:$0xff]
    %v5432 = vld [vmem:[%s137 + $0x350] sm:$0xff]
    %v5433 = vld [vmem:[%s137 + $0x358] sm:$0xff]
    %v5434 = vld [vmem:[%s137 + $0x360] sm:$0xf]
    %v5435 = vld [vmem:[%s137 + $0x364] sm:$0xff]
    %v5436 = vld [vmem:[%s137 + $0x36c] sm:$0xff]
    %v5437 = vld [vmem:[%s137 + $0x374] sm:$0xff]
    %v5438 = vld [vmem:[%s137 + $0x37c] sm:$0xf]
    %v5440 = vunpack.c.l.b16 %v3516
    %v5441 = vunpack.c.h.b16 %v3516
    %v5442 = vpack.c.b16 %v5440, %v5440
    %v5443 = vpack.c.b16 %v5441, %v5441
    %v5574 = vunpack.c.l.b16 %v5311
    %v5575 = vunpack.c.h.b16 %v5311
    %v5576 = vunpack.c.l.b16 %v5312
    %v5577 = vunpack.c.h.b16 %v5312
    %v5578 = vunpack.c.l.b16 %v5313
    %v5579 = vunpack.c.h.b16 %v5313
    %v5580 = vunpack.c.l.b16 %v5314
    %v5581 = vunpack.c.l.b16 %v5315
    %v5582 = vunpack.c.h.b16 %v5315
    %v5583 = vunpack.c.l.b16 %v5316
    %v5584 = vunpack.c.h.b16 %v5316
    %v5585 = vunpack.c.l.b16 %v5317
    %v5586 = vunpack.c.h.b16 %v5317
    %v5587 = vunpack.c.l.b16 %v5318
    %v5588 = vunpack.c.l.b16 %v5319
    %v5589 = vunpack.c.h.b16 %v5319
    %v5590 = vunpack.c.l.b16 %v5320
    %v5591 = vunpack.c.h.b16 %v5320
    %v5592 = vunpack.c.l.b16 %v5321
    %v5593 = vunpack.c.h.b16 %v5321
    %v5594 = vunpack.c.l.b16 %v5322
    %v5595 = vunpack.c.l.b16 %v5323
    %v5596 = vunpack.c.h.b16 %v5323
    %v5597 = vunpack.c.l.b16 %v5324
    %v5598 = vunpack.c.h.b16 %v5324
    %v5599 = vunpack.c.l.b16 %v5325
    %v5600 = vunpack.c.h.b16 %v5325
    %v5601 = vunpack.c.l.b16 %v5326
    %v5602 = vunpack.c.l.b16 %v5327
    %v5603 = vunpack.c.h.b16 %v5327
    %v5604 = vunpack.c.l.b16 %v5328
    %v5605 = vunpack.c.h.b16 %v5328
    %v5606 = vunpack.c.l.b16 %v5329
    %v5607 = vunpack.c.h.b16 %v5329
    %v5608 = vunpack.c.l.b16 %v5330
    %v5609 = vunpack.c.l.b16 %v5331
    %v5610 = vunpack.c.h.b16 %v5331
    %v5611 = vunpack.c.l.b16 %v5332
    %v5612 = vunpack.c.h.b16 %v5332
    %v5613 = vunpack.c.l.b16 %v5333
    %v5614 = vunpack.c.h.b16 %v5333
    %v5615 = vunpack.c.l.b16 %v5334
    %v5616 = vunpack.c.l.b16 %v5335
    %v5617 = vunpack.c.h.b16 %v5335
    %v5618 = vunpack.c.l.b16 %v5336
    %v5619 = vunpack.c.h.b16 %v5336
    %v5620 = vunpack.c.l.b16 %v5337
    %v5621 = vunpack.c.h.b16 %v5337
    %v5622 = vunpack.c.l.b16 %v5338
    %v5623 = vunpack.c.l.b16 %v5339
    %v5624 = vunpack.c.h.b16 %v5339
    %v5625 = vunpack.c.l.b16 %v5340
    %v5626 = vunpack.c.h.b16 %v5340
    %v5627 = vunpack.c.l.b16 %v5341
    %v5628 = vunpack.c.h.b16 %v5341
    %v5629 = vunpack.c.l.b16 %v5342
    %v5630 = vunpack.c.l.b16 %v5343
    %v5631 = vunpack.c.h.b16 %v5343
    %v5632 = vunpack.c.l.b16 %v5344
    %v5633 = vunpack.c.h.b16 %v5344
    %v5634 = vunpack.c.l.b16 %v5345
    %v5635 = vunpack.c.h.b16 %v5345
    %v5636 = vunpack.c.l.b16 %v5346
    %v5637 = vunpack.c.l.b16 %v5347
    %v5638 = vunpack.c.h.b16 %v5347
    %v5639 = vunpack.c.l.b16 %v5348
    %v5640 = vunpack.c.h.b16 %v5348
    %v5641 = vunpack.c.l.b16 %v5349
    %v5642 = vunpack.c.h.b16 %v5349
    %v5643 = vunpack.c.l.b16 %v5350
    %v5644 = vunpack.c.l.b16 %v5351
    %v5645 = vunpack.c.h.b16 %v5351
    %v5646 = vunpack.c.l.b16 %v5352
    %v5647 = vunpack.c.h.b16 %v5352
    %v5648 = vunpack.c.l.b16 %v5353
    %v5649 = vunpack.c.h.b16 %v5353
    %v5650 = vunpack.c.l.b16 %v5354
    %v5651 = vunpack.c.l.b16 %v5355
    %v5652 = vunpack.c.h.b16 %v5355
    %v5653 = vunpack.c.l.b16 %v5356
    %v5654 = vunpack.c.h.b16 %v5356
    %v5655 = vunpack.c.l.b16 %v5357
    %v5656 = vunpack.c.h.b16 %v5357
    %v5657 = vunpack.c.l.b16 %v5358
    %v5658 = vunpack.c.l.b16 %v5359
    %v5659 = vunpack.c.h.b16 %v5359
    %v5660 = vunpack.c.l.b16 %v5360
    %v5661 = vunpack.c.h.b16 %v5360
    %v5662 = vunpack.c.l.b16 %v5361
    %v5663 = vunpack.c.h.b16 %v5361
    %v5664 = vunpack.c.l.b16 %v5362
    %v5665 = vunpack.c.l.b16 %v5363
    %v5666 = vunpack.c.h.b16 %v5363
    %v5667 = vunpack.c.l.b16 %v5364
    %v5668 = vunpack.c.h.b16 %v5364
    %v5669 = vunpack.c.l.b16 %v5365
    %v5670 = vunpack.c.h.b16 %v5365
    %v5671 = vunpack.c.l.b16 %v5366
    %v5672 = vunpack.c.l.b16 %v5367
    %v5673 = vunpack.c.h.b16 %v5367
    %v5674 = vunpack.c.l.b16 %v5368
    %v5675 = vunpack.c.h.b16 %v5368
    %v5676 = vunpack.c.l.b16 %v5369
    %v5677 = vunpack.c.h.b16 %v5369
    %v5678 = vunpack.c.l.b16 %v5370
    %v5679 = vunpack.c.l.b16 %v5371
    %v5680 = vunpack.c.h.b16 %v5371
    %v5681 = vunpack.c.l.b16 %v5372
    %v5682 = vunpack.c.h.b16 %v5372
    %v5683 = vunpack.c.l.b16 %v5373
    %v5684 = vunpack.c.h.b16 %v5373
    %v5685 = vunpack.c.l.b16 %v5374
    %v5686 = vunpack.c.l.b16 %v5375
    %v5687 = vunpack.c.h.b16 %v5375
    %v5688 = vunpack.c.l.b16 %v5376
    %v5689 = vunpack.c.h.b16 %v5376
    %v5690 = vunpack.c.l.b16 %v5377
    %v5691 = vunpack.c.h.b16 %v5377
    %v5692 = vunpack.c.l.b16 %v5378
    %v5693 = vunpack.c.l.b16 %v5379
    %v5694 = vunpack.c.h.b16 %v5379
    %v5695 = vunpack.c.l.b16 %v5380
    %v5696 = vunpack.c.h.b16 %v5380
    %v5697 = vunpack.c.l.b16 %v5381
    %v5698 = vunpack.c.h.b16 %v5381
    %v5699 = vunpack.c.l.b16 %v5382
    %v5700 = vunpack.c.l.b16 %v5383
    %v5701 = vunpack.c.h.b16 %v5383
    %v5702 = vunpack.c.l.b16 %v5384
    %v5703 = vunpack.c.h.b16 %v5384
    %v5704 = vunpack.c.l.b16 %v5385
    %v5705 = vunpack.c.h.b16 %v5385
    %v5706 = vunpack.c.l.b16 %v5386
    %v5707 = vunpack.c.l.b16 %v5387
    %v5708 = vunpack.c.h.b16 %v5387
    %v5709 = vunpack.c.l.b16 %v5388
    %v5710 = vunpack.c.h.b16 %v5388
    %v5711 = vunpack.c.l.b16 %v5389
    %v5712 = vunpack.c.h.b16 %v5389
    %v5713 = vunpack.c.l.b16 %v5390
    %v5714 = vunpack.c.l.b16 %v5391
    %v5715 = vunpack.c.h.b16 %v5391
    %v5716 = vunpack.c.l.b16 %v5392
    %v5717 = vunpack.c.h.b16 %v5392
    %v5718 = vunpack.c.l.b16 %v5393
    %v5719 = vunpack.c.h.b16 %v5393
    %v5720 = vunpack.c.l.b16 %v5394
    %v5721 = vunpack.c.l.b16 %v5395
    %v5722 = vunpack.c.h.b16 %v5395
    %v5723 = vunpack.c.l.b16 %v5396
    %v5724 = vunpack.c.h.b16 %v5396
    %v5725 = vunpack.c.l.b16 %v5397
    %v5726 = vunpack.c.h.b16 %v5397
    %v5727 = vunpack.c.l.b16 %v5398
    %v5728 = vunpack.c.l.b16 %v5399
    %v5729 = vunpack.c.h.b16 %v5399
    %v5730 = vunpack.c.l.b16 %v5400
    %v5731 = vunpack.c.h.b16 %v5400
    %v5732 = vunpack.c.l.b16 %v5401
    %v5733 = vunpack.c.h.b16 %v5401
    %v5734 = vunpack.c.l.b16 %v5402
    %v5735 = vunpack.c.l.b16 %v5403
    %v5736 = vunpack.c.h.b16 %v5403
    %v5737 = vunpack.c.l.b16 %v5404
    %v5738 = vunpack.c.h.b16 %v5404
    %v5739 = vunpack.c.l.b16 %v5405
    %v5740 = vunpack.c.h.b16 %v5405
    %v5741 = vunpack.c.l.b16 %v5406
    %v5742 = vunpack.c.l.b16 %v5407
    %v5743 = vunpack.c.h.b16 %v5407
    %v5744 = vunpack.c.l.b16 %v5408
    %v5745 = vunpack.c.h.b16 %v5408
    %v5746 = vunpack.c.l.b16 %v5409
    %v5747 = vunpack.c.h.b16 %v5409
    %v5748 = vunpack.c.l.b16 %v5410
    %v5749 = vunpack.c.l.b16 %v5411
    %v5750 = vunpack.c.h.b16 %v5411
    %v5751 = vunpack.c.l.b16 %v5412
    %v5752 = vunpack.c.h.b16 %v5412
    %v5753 = vunpack.c.l.b16 %v5413
    %v5754 = vunpack.c.h.b16 %v5413
    %v5755 = vunpack.c.l.b16 %v5414
    %v5756 = vunpack.c.l.b16 %v5415
    %v5757 = vunpack.c.h.b16 %v5415
    %v5758 = vunpack.c.l.b16 %v5416
    %v5759 = vunpack.c.h.b16 %v5416
    %v5760 = vunpack.c.l.b16 %v5417
    %v5761 = vunpack.c.h.b16 %v5417
    %v5762 = vunpack.c.l.b16 %v5418
    %v5763 = vunpack.c.l.b16 %v5419
    %v5764 = vunpack.c.h.b16 %v5419
    %v5765 = vunpack.c.l.b16 %v5420
    %v5766 = vunpack.c.h.b16 %v5420
    %v5767 = vunpack.c.l.b16 %v5421
    %v5768 = vunpack.c.h.b16 %v5421
    %v5769 = vunpack.c.l.b16 %v5422
    %v5770 = vunpack.c.l.b16 %v5423
    %v5771 = vunpack.c.h.b16 %v5423
    %v5772 = vunpack.c.l.b16 %v5424
    %v5773 = vunpack.c.h.b16 %v5424
    %v5774 = vunpack.c.l.b16 %v5425
    %v5775 = vunpack.c.h.b16 %v5425
    %v5776 = vunpack.c.l.b16 %v5426
    %v5777 = vunpack.c.l.b16 %v5427
    %v5778 = vunpack.c.h.b16 %v5427
    %v5779 = vunpack.c.l.b16 %v5428
    %v5780 = vunpack.c.h.b16 %v5428
    %v5781 = vunpack.c.l.b16 %v5429
    %v5782 = vunpack.c.h.b16 %v5429
    %v5783 = vunpack.c.l.b16 %v5430
    %v5784 = vunpack.c.l.b16 %v5431
    %v5785 = vunpack.c.h.b16 %v5431
    %v5786 = vunpack.c.l.b16 %v5432
    %v5787 = vunpack.c.h.b16 %v5432
    %v5788 = vunpack.c.l.b16 %v5433
    %v5789 = vunpack.c.h.b16 %v5433
    %v5790 = vunpack.c.l.b16 %v5434
    %v5791 = vunpack.c.l.b16 %v5435
    %v5792 = vunpack.c.h.b16 %v5435
    %v5793 = vunpack.c.l.b16 %v5436
    %v5794 = vunpack.c.h.b16 %v5436
    %v5795 = vunpack.c.l.b16 %v5437
    %v5796 = vunpack.c.h.b16 %v5437
    %v5797 = vunpack.c.l.b16 %v5438
    %v5798 = vpack.c.b16 %v5581, %v5574
    %v5799 = vpack.c.b16 %v5582, %v5575
    %v5800 = vpack.c.b16 %v5583, %v5576
    %v5801 = vpack.c.b16 %v5584, %v5577
    %v5802 = vpack.c.b16 %v5585, %v5578
    %v5803 = vpack.c.b16 %v5586, %v5579
    %v5804 = vpack.c.b16 %v5587, %v5580
    %v5805 = vpack.c.b16 %v5595, %v5588
    %v5806 = vpack.c.b16 %v5596, %v5589
    %v5807 = vpack.c.b16 %v5597, %v5590
    %v5808 = vpack.c.b16 %v5598, %v5591
    %v5809 = vpack.c.b16 %v5599, %v5592
    %v5810 = vpack.c.b16 %v5600, %v5593
    %v5811 = vpack.c.b16 %v5601, %v5594
    %v5812 = vpack.c.b16 %v5609, %v5602
    %v5813 = vpack.c.b16 %v5610, %v5603
    %v5814 = vpack.c.b16 %v5611, %v5604
    %v5815 = vpack.c.b16 %v5612, %v5605
    %v5816 = vpack.c.b16 %v5613, %v5606
    %v5817 = vpack.c.b16 %v5614, %v5607
    %v5818 = vpack.c.b16 %v5615, %v5608
    %v5819 = vpack.c.b16 %v5623, %v5616
    %v5820 = vpack.c.b16 %v5624, %v5617
    %v5821 = vpack.c.b16 %v5625, %v5618
    %v5822 = vpack.c.b16 %v5626, %v5619
    %v5823 = vpack.c.b16 %v5627, %v5620
    %v5824 = vpack.c.b16 %v5628, %v5621
    %v5825 = vpack.c.b16 %v5629, %v5622
    %v5826 = vpack.c.b16 %v5637, %v5630
    %v5827 = vpack.c.b16 %v5638, %v5631
    %v5828 = vpack.c.b16 %v5639, %v5632
    %v5829 = vpack.c.b16 %v5640, %v5633
    %v5830 = vpack.c.b16 %v5641, %v5634
    %v5831 = vpack.c.b16 %v5642, %v5635
    %v5832 = vpack.c.b16 %v5643, %v5636
    %v5833 = vpack.c.b16 %v5651, %v5644
    %v5834 = vpack.c.b16 %v5652, %v5645
    %v5835 = vpack.c.b16 %v5653, %v5646
    %v5836 = vpack.c.b16 %v5654, %v5647
    %v5837 = vpack.c.b16 %v5655, %v5648
    %v5838 = vpack.c.b16 %v5656, %v5649
    %v5839 = vpack.c.b16 %v5657, %v5650
    %v5840 = vpack.c.b16 %v5665, %v5658
    %v5841 = vpack.c.b16 %v5666, %v5659
    %v5842 = vpack.c.b16 %v5667, %v5660
    %v5843 = vpack.c.b16 %v5668, %v5661
    %v5844 = vpack.c.b16 %v5669, %v5662
    %v5845 = vpack.c.b16 %v5670, %v5663
    %v5846 = vpack.c.b16 %v5671, %v5664
    %v5847 = vpack.c.b16 %v5679, %v5672
    %v5848 = vpack.c.b16 %v5680, %v5673
    %v5849 = vpack.c.b16 %v5681, %v5674
    %v5850 = vpack.c.b16 %v5682, %v5675
    %v5851 = vpack.c.b16 %v5683, %v5676
    %v5852 = vpack.c.b16 %v5684, %v5677
    %v5853 = vpack.c.b16 %v5685, %v5678
    %v5854 = vpack.c.b16 %v5693, %v5686
    %v5855 = vpack.c.b16 %v5694, %v5687
    %v5856 = vpack.c.b16 %v5695, %v5688
    %v5857 = vpack.c.b16 %v5696, %v5689
    %v5858 = vpack.c.b16 %v5697, %v5690
    %v5859 = vpack.c.b16 %v5698, %v5691
    %v5860 = vpack.c.b16 %v5699, %v5692
    %v5861 = vpack.c.b16 %v5707, %v5700
    %v5862 = vpack.c.b16 %v5708, %v5701
    %v5863 = vpack.c.b16 %v5709, %v5702
    %v5864 = vpack.c.b16 %v5710, %v5703
    %v5865 = vpack.c.b16 %v5711, %v5704
    %v5866 = vpack.c.b16 %v5712, %v5705
    %v5867 = vpack.c.b16 %v5713, %v5706
    %v5868 = vpack.c.b16 %v5721, %v5714
    %v5869 = vpack.c.b16 %v5722, %v5715
    %v5870 = vpack.c.b16 %v5723, %v5716
    %v5871 = vpack.c.b16 %v5724, %v5717
    %v5872 = vpack.c.b16 %v5725, %v5718
    %v5873 = vpack.c.b16 %v5726, %v5719
    %v5874 = vpack.c.b16 %v5727, %v5720
    %v5875 = vpack.c.b16 %v5735, %v5728
    %v5876 = vpack.c.b16 %v5736, %v5729
    %v5877 = vpack.c.b16 %v5737, %v5730
    %v5878 = vpack.c.b16 %v5738, %v5731
    %v5879 = vpack.c.b16 %v5739, %v5732
    %v5880 = vpack.c.b16 %v5740, %v5733
    %v5881 = vpack.c.b16 %v5741, %v5734
    %v5882 = vpack.c.b16 %v5749, %v5742
    %v5883 = vpack.c.b16 %v5750, %v5743
    %v5884 = vpack.c.b16 %v5751, %v5744
    %v5885 = vpack.c.b16 %v5752, %v5745
    %v5886 = vpack.c.b16 %v5753, %v5746
    %v5887 = vpack.c.b16 %v5754, %v5747
    %v5888 = vpack.c.b16 %v5755, %v5748
    %v5889 = vpack.c.b16 %v5763, %v5756
    %v5890 = vpack.c.b16 %v5764, %v5757
    %v5891 = vpack.c.b16 %v5765, %v5758
    %v5892 = vpack.c.b16 %v5766, %v5759
    %v5893 = vpack.c.b16 %v5767, %v5760
    %v5894 = vpack.c.b16 %v5768, %v5761
    %v5895 = vpack.c.b16 %v5769, %v5762
    %v5896 = vpack.c.b16 %v5777, %v5770
    %v5897 = vpack.c.b16 %v5778, %v5771
    %v5898 = vpack.c.b16 %v5779, %v5772
    %v5899 = vpack.c.b16 %v5780, %v5773
    %v5900 = vpack.c.b16 %v5781, %v5774
    %v5901 = vpack.c.b16 %v5782, %v5775
    %v5902 = vpack.c.b16 %v5783, %v5776
    %v5903 = vpack.c.b16 %v5791, %v5784
    %v5904 = vpack.c.b16 %v5792, %v5785
    %v5905 = vpack.c.b16 %v5793, %v5786
    %v5906 = vpack.c.b16 %v5794, %v5787
    %v5907 = vpack.c.b16 %v5795, %v5788
    %v5908 = vpack.c.b16 %v5796, %v5789
    %v5909 = vpack.c.b16 %v5797, %v5790
    %6022 = vmatpush.bf16.msra.mxu0 %v5847
    %6023 = vmatpush.bf16.msra.mxu0 %v5840
    %6024 = vmatpush.bf16.msra.mxu0 %v5833
    %6025 = vmatpush.bf16.msra.mxu0 %v5826
    %6026 = vmatpush.bf16.msra.mxu0 %v5819
    %6027 = vmatpush.bf16.msra.mxu0 %v5812
    %6028 = vmatpush.bf16.msra.mxu0 %v5805
    %6029 = vmatpush.bf16.msra.mxu0 %v5798
    %6030 = vmatmul.bf16.gmra.mxu0 %v5442
    %v6031 = vpop.f32.mrf.mxu0
    %v6032 = vadd.f32 0.0, %v6031
    %v6033 = vpop.f32.mrf.mxu0
    %6034 = vdwg.mxu0
    %6035 = vmatpush.bf16.msra.mxu0 %v5903
    %6036 = vmatpush.bf16.msra.mxu0 %v5896
    %6037 = vmatpush.bf16.msra.mxu0 %v5889
    %6038 = vmatpush.bf16.msra.mxu0 %v5882
    %6039 = vmatpush.bf16.msra.mxu0 %v5875
    %6040 = vmatpush.bf16.msra.mxu0 %v5868
    %6041 = vmatpush.bf16.msra.mxu0 %v5861
    %6042 = vmatpush.bf16.msra.mxu0 %v5854
    %6043 = vmatmul.bf16.gmra.mxu0 %v5443
    %v6044 = vpop.f32.mrf.mxu0
    %v6045 = vadd.f32 %v6032, %v6044
    %v6046 = vpop.f32.mrf.mxu0
    %6047 = vdwg.mxu0
    %6048 = vmatpush.bf16.msra.mxu0 %v5848
    %6049 = vmatpush.bf16.msra.mxu0 %v5841
    %6050 = vmatpush.bf16.msra.mxu0 %v5834
    %6051 = vmatpush.bf16.msra.mxu0 %v5827
    %6052 = vmatpush.bf16.msra.mxu0 %v5820
    %6053 = vmatpush.bf16.msra.mxu0 %v5813
    %6054 = vmatpush.bf16.msra.mxu0 %v5806
    %6055 = vmatpush.bf16.msra.mxu0 %v5799
    %6056 = vmatmul.bf16.gmra.mxu0 %v5442
    %v6057 = vpop.f32.mrf.mxu0
    %v6058 = vadd.f32 0.0, %v6057
    %v6059 = vpop.f32.mrf.mxu0
    %6060 = vdwg.mxu0
    %6061 = vmatpush.bf16.msra.mxu0 %v5904
    %6062 = vmatpush.bf16.msra.mxu0 %v5897
    %6063 = vmatpush.bf16.msra.mxu0 %v5890
    %6064 = vmatpush.bf16.msra.mxu0 %v5883
    %6065 = vmatpush.bf16.msra.mxu0 %v5876
    %6066 = vmatpush.bf16.msra.mxu0 %v5869
    %6067 = vmatpush.bf16.msra.mxu0 %v5862
    %6068 = vmatpush.bf16.msra.mxu0 %v5855
    %6069 = vmatmul.bf16.gmra.mxu0 %v5443
    %v6070 = vpop.f32.mrf.mxu0
    %v6071 = vadd.f32 %v6058, %v6070
    %v6072 = vpop.f32.mrf.mxu0
    %6073 = vdwg.mxu0
    %6074 = vmatpush.bf16.msra.mxu0 %v5849
    %6075 = vmatpush.bf16.msra.mxu0 %v5842
    %6076 = vmatpush.bf16.msra.mxu0 %v5835
    %6077 = vmatpush.bf16.msra.mxu0 %v5828
    %6078 = vmatpush.bf16.msra.mxu0 %v5821
    %6079 = vmatpush.bf16.msra.mxu0 %v5814
    %6080 = vmatpush.bf16.msra.mxu0 %v5807
    %6081 = vmatpush.bf16.msra.mxu0 %v5800
    %6082 = vmatmul.bf16.gmra.mxu0 %v5442
    %v6083 = vpop.f32.mrf.mxu0
    %v6084 = vadd.f32 0.0, %v6083
    %v6085 = vpop.f32.mrf.mxu0
    %6086 = vdwg.mxu0
    %6087 = vmatpush.bf16.msra.mxu0 %v5905
    %6088 = vmatpush.bf16.msra.mxu0 %v5898
    %6089 = vmatpush.bf16.msra.mxu0 %v5891
    %6090 = vmatpush.bf16.msra.mxu0 %v5884
    %6091 = vmatpush.bf16.msra.mxu0 %v5877
    %6092 = vmatpush.bf16.msra.mxu0 %v5870
    %6093 = vmatpush.bf16.msra.mxu0 %v5863
    %6094 = vmatpush.bf16.msra.mxu0 %v5856
    %6095 = vmatmul.bf16.gmra.mxu0 %v5443
    %v6096 = vpop.f32.mrf.mxu0
    %v6097 = vadd.f32 %v6084, %v6096
    %v6098 = vpop.f32.mrf.mxu0
    %6099 = vdwg.mxu0
    %6100 = vmatpush.bf16.msra.mxu0 %v5850
    %6101 = vmatpush.bf16.msra.mxu0 %v5843
    %6102 = vmatpush.bf16.msra.mxu0 %v5836
    %6103 = vmatpush.bf16.msra.mxu0 %v5829
    %6104 = vmatpush.bf16.msra.mxu0 %v5822
    %6105 = vmatpush.bf16.msra.mxu0 %v5815
    %6106 = vmatpush.bf16.msra.mxu0 %v5808
    %6107 = vmatpush.bf16.msra.mxu0 %v5801
    %6108 = vmatmul.bf16.gmra.mxu0 %v5442
    %v6109 = vpop.f32.mrf.mxu0
    %v6110 = vadd.f32 0.0, %v6109
    %v6111 = vpop.f32.mrf.mxu0
    %6112 = vdwg.mxu0
    %6113 = vmatpush.bf16.msra.mxu0 %v5906
    %6114 = vmatpush.bf16.msra.mxu0 %v5899
    %6115 = vmatpush.bf16.msra.mxu0 %v5892
    %6116 = vmatpush.bf16.msra.mxu0 %v5885
    %6117 = vmatpush.bf16.msra.mxu0 %v5878
    %6118 = vmatpush.bf16.msra.mxu0 %v5871
    %6119 = vmatpush.bf16.msra.mxu0 %v5864
    %6120 = vmatpush.bf16.msra.mxu0 %v5857
    %6121 = vmatmul.bf16.gmra.mxu0 %v5443
    %v6122 = vpop.f32.mrf.mxu0
    %v6123 = vadd.f32 %v6110, %v6122
    %v6124 = vpop.f32.mrf.mxu0
    %6125 = vdwg.mxu0
    %6126 = vmatpush.bf16.msra.mxu0 %v5851
    %6127 = vmatpush.bf16.msra.mxu0 %v5844
    %6128 = vmatpush.bf16.msra.mxu0 %v5837
    %6129 = vmatpush.bf16.msra.mxu0 %v5830
    %6130 = vmatpush.bf16.msra.mxu0 %v5823
    %6131 = vmatpush.bf16.msra.mxu0 %v5816
    %6132 = vmatpush.bf16.msra.mxu0 %v5809
    %6133 = vmatpush.bf16.msra.mxu0 %v5802
    %6134 = vmatmul.bf16.gmra.mxu0 %v5442
    %v6135 = vpop.f32.mrf.mxu0
    %v6136 = vadd.f32 0.0, %v6135
    %v6137 = vpop.f32.mrf.mxu0
    %6138 = vdwg.mxu0
    %6139 = vmatpush.bf16.msra.mxu0 %v5907
    %6140 = vmatpush.bf16.msra.mxu0 %v5900
    %6141 = vmatpush.bf16.msra.mxu0 %v5893
    %6142 = vmatpush.bf16.msra.mxu0 %v5886
    %6143 = vmatpush.bf16.msra.mxu0 %v5879
    %6144 = vmatpush.bf16.msra.mxu0 %v5872
    %6145 = vmatpush.bf16.msra.mxu0 %v5865
    %6146 = vmatpush.bf16.msra.mxu0 %v5858
    %6147 = vmatmul.bf16.gmra.mxu0 %v5443
    %v6148 = vpop.f32.mrf.mxu0
    %v6149 = vadd.f32 %v6136, %v6148
    %v6150 = vpop.f32.mrf.mxu0
    %6151 = vdwg.mxu0
    %6152 = vmatpush.bf16.msra.mxu0 %v5852
    %6153 = vmatpush.bf16.msra.mxu0 %v5845
    %6154 = vmatpush.bf16.msra.mxu0 %v5838
    %6155 = vmatpush.bf16.msra.mxu0 %v5831
    %6156 = vmatpush.bf16.msra.mxu0 %v5824
    %6157 = vmatpush.bf16.msra.mxu0 %v5817
    %6158 = vmatpush.bf16.msra.mxu0 %v5810
    %6159 = vmatpush.bf16.msra.mxu0 %v5803
    %6160 = vmatmul.bf16.gmra.mxu0 %v5442
    %v6161 = vpop.f32.mrf.mxu0
    %v6162 = vadd.f32 0.0, %v6161
    %v6163 = vpop.f32.mrf.mxu0
    %6164 = vdwg.mxu0
    %6165 = vmatpush.bf16.msra.mxu0 %v5908
    %6166 = vmatpush.bf16.msra.mxu0 %v5901
    %6167 = vmatpush.bf16.msra.mxu0 %v5894
    %6168 = vmatpush.bf16.msra.mxu0 %v5887
    %6169 = vmatpush.bf16.msra.mxu0 %v5880
    %6170 = vmatpush.bf16.msra.mxu0 %v5873
    %6171 = vmatpush.bf16.msra.mxu0 %v5866
    %6172 = vmatpush.bf16.msra.mxu0 %v5859
    %6173 = vmatmul.bf16.gmra.mxu0 %v5443
    %v6174 = vpop.f32.mrf.mxu0
    %v6175 = vadd.f32 %v6162, %v6174
    %v6176 = vpop.f32.mrf.mxu0
    %6177 = vdwg.mxu0
    %6178 = vmatpush.bf16.msra.mxu0 %v5853
    %6179 = vmatpush.bf16.msra.mxu0 %v5846
    %6180 = vmatpush.bf16.msra.mxu0 %v5839
    %6181 = vmatpush.bf16.msra.mxu0 %v5832
    %6182 = vmatpush.bf16.msra.mxu0 %v5825
    %6183 = vmatpush.bf16.msra.mxu0 %v5818
    %6184 = vmatpush.bf16.msra.mxu0 %v5811
    %6185 = vmatpush.bf16.msra.mxu0 %v5804
    %6186 = vmatmul.bf16.gmra.mxu0 %v5442
    %v6187 = vpop.f32.mrf.mxu0
    %v6188 = vadd.f32 0.0, %v6187
    %v6189 = vpop.f32.mrf.mxu0
    %6190 = vdwg.mxu0
    %6191 = vmatpush.bf16.msra.mxu0 %v5909
    %6192 = vmatpush.bf16.msra.mxu0 %v5902
    %6193 = vmatpush.bf16.msra.mxu0 %v5895
    %6194 = vmatpush.bf16.msra.mxu0 %v5888
    %6195 = vmatpush.bf16.msra.mxu0 %v5881
    %6196 = vmatpush.bf16.msra.mxu0 %v5874
    %6197 = vmatpush.bf16.msra.mxu0 %v5867
    %6198 = vmatpush.bf16.msra.mxu0 %v5860
    %6199 = vmatmul.bf16.gmra.mxu0 %v5443
    %v6200 = vpop.f32.mrf.mxu0
    %v6201 = vadd.f32 %v6188, %v6200
    %v6202 = vpop.f32.mrf.mxu0
    %6203 = vdwg.mxu0
    %v6204 = vadd.f32 %v5150, %v6045
    %v6205 = vadd.f32 %v5176, %v6071
    %v6206 = vadd.f32 %v5202, %v6097
    %v6207 = vadd.f32 %v5228, %v6123
    %v6208 = vadd.f32 %v5254, %v6149
    %v6209 = vadd.f32 %v5280, %v6175
    %v6210 = vadd.f32 %v5306, %v6201
    %s6211 = sshll.u32 %s3518, 4
    %6212 = dma.done %s154, %s6211
    %v6213 = vld [vmem:[%s153] sm:$0xff]
    %v6214 = vld [vmem:[%s153 + $0x8] sm:$0xff]
    %v6215 = vld [vmem:[%s153 + $0x10] sm:$0xff]
    %v6216 = vld [vmem:[%s153 + $0x18] sm:$0xf]
    %v6217 = vld [vmem:[%s153 + $0x1c] sm:$0xff]
    %v6218 = vld [vmem:[%s153 + $0x24] sm:$0xff]
    %v6219 = vld [vmem:[%s153 + $0x2c] sm:$0xff]
    %v6220 = vld [vmem:[%s153 + $0x34] sm:$0xf]
    %v6221 = vld [vmem:[%s153 + $0x38] sm:$0xff]
    %v6222 = vld [vmem:[%s153 + $0x40] sm:$0xff]
    %v6223 = vld [vmem:[%s153 + $0x48] sm:$0xff]
    %v6224 = vld [vmem:[%s153 + $0x50] sm:$0xf]
    %v6225 = vld [vmem:[%s153 + $0x54] sm:$0xff]
    %v6226 = vld [vmem:[%s153 + $0x5c] sm:$0xff]
    %v6227 = vld [vmem:[%s153 + $0x64] sm:$0xff]
    %v6228 = vld [vmem:[%s153 + $0x6c] sm:$0xf]
    %v6229 = vld [vmem:[%s153 + $0x70] sm:$0xff]
    %v6230 = vld [vmem:[%s153 + $0x78] sm:$0xff]
    %v6231 = vld [vmem:[%s153 + $0x80] sm:$0xff]
    %v6232 = vld [vmem:[%s153 + $0x88] sm:$0xf]
    %v6233 = vld [vmem:[%s153 + $0x8c] sm:$0xff]
    %v6234 = vld [vmem:[%s153 + $0x94] sm:$0xff]
    %v6235 = vld [vmem:[%s153 + $0x9c] sm:$0xff]
    %v6236 = vld [vmem:[%s153 + $0xa4] sm:$0xf]
    %v6237 = vld [vmem:[%s153 + $0xa8] sm:$0xff]
    %v6238 = vld [vmem:[%s153 + $0xb0] sm:$0xff]
    %v6239 = vld [vmem:[%s153 + $0xb8] sm:$0xff]
    %v6240 = vld [vmem:[%s153 + $0xc0] sm:$0xf]
    %v6241 = vld [vmem:[%s153 + $0xc4] sm:$0xff]
    %v6242 = vld [vmem:[%s153 + $0xcc] sm:$0xff]
    %v6243 = vld [vmem:[%s153 + $0xd4] sm:$0xff]
    %v6244 = vld [vmem:[%s153 + $0xdc] sm:$0xf]
    %v6245 = vld [vmem:[%s153 + $0xe0] sm:$0xff]
    %v6246 = vld [vmem:[%s153 + $0xe8] sm:$0xff]
    %v6247 = vld [vmem:[%s153 + $0xf0] sm:$0xff]
    %v6248 = vld [vmem:[%s153 + $0xf8] sm:$0xf]
    %v6249 = vld [vmem:[%s153 + $0xfc] sm:$0xff]
    %v6250 = vld [vmem:[%s153 + $0x104] sm:$0xff]
    %v6251 = vld [vmem:[%s153 + $0x10c] sm:$0xff]
    %v6252 = vld [vmem:[%s153 + $0x114] sm:$0xf]
    %v6253 = vld [vmem:[%s153 + $0x118] sm:$0xff]
    %v6254 = vld [vmem:[%s153 + $0x120] sm:$0xff]
    %v6255 = vld [vmem:[%s153 + $0x128] sm:$0xff]
    %v6256 = vld [vmem:[%s153 + $0x130] sm:$0xf]
    %v6257 = vld [vmem:[%s153 + $0x134] sm:$0xff]
    %v6258 = vld [vmem:[%s153 + $0x13c] sm:$0xff]
    %v6259 = vld [vmem:[%s153 + $0x144] sm:$0xff]
    %v6260 = vld [vmem:[%s153 + $0x14c] sm:$0xf]
    %v6261 = vld [vmem:[%s153 + $0x150] sm:$0xff]
    %v6262 = vld [vmem:[%s153 + $0x158] sm:$0xff]
    %v6263 = vld [vmem:[%s153 + $0x160] sm:$0xff]
    %v6264 = vld [vmem:[%s153 + $0x168] sm:$0xf]
    %v6265 = vld [vmem:[%s153 + $0x16c] sm:$0xff]
    %v6266 = vld [vmem:[%s153 + $0x174] sm:$0xff]
    %v6267 = vld [vmem:[%s153 + $0x17c] sm:$0xff]
    %v6268 = vld [vmem:[%s153 + $0x184] sm:$0xf]
    %v6269 = vld [vmem:[%s153 + $0x188] sm:$0xff]
    %v6270 = vld [vmem:[%s153 + $0x190] sm:$0xff]
    %v6271 = vld [vmem:[%s153 + $0x198] sm:$0xff]
    %v6272 = vld [vmem:[%s153 + $0x1a0] sm:$0xf]
    %v6273 = vld [vmem:[%s153 + $0x1a4] sm:$0xff]
    %v6274 = vld [vmem:[%s153 + $0x1ac] sm:$0xff]
    %v6275 = vld [vmem:[%s153 + $0x1b4] sm:$0xff]
    %v6276 = vld [vmem:[%s153 + $0x1bc] sm:$0xf]
    %v6277 = vld [vmem:[%s153 + $0x1c0] sm:$0xff]
    %v6278 = vld [vmem:[%s153 + $0x1c8] sm:$0xff]
    %v6279 = vld [vmem:[%s153 + $0x1d0] sm:$0xff]
    %v6280 = vld [vmem:[%s153 + $0x1d8] sm:$0xf]
    %v6281 = vld [vmem:[%s153 + $0x1dc] sm:$0xff]
    %v6282 = vld [vmem:[%s153 + $0x1e4] sm:$0xff]
    %v6283 = vld [vmem:[%s153 + $0x1ec] sm:$0xff]
    %v6284 = vld [vmem:[%s153 + $0x1f4] sm:$0xf]
    %v6285 = vld [vmem:[%s153 + $0x1f8] sm:$0xff]
    %v6286 = vld [vmem:[%s153 + $0x200] sm:$0xff]
    %v6287 = vld [vmem:[%s153 + $0x208] sm:$0xff]
    %v6288 = vld [vmem:[%s153 + $0x210] sm:$0xf]
    %v6289 = vld [vmem:[%s153 + $0x214] sm:$0xff]
    %v6290 = vld [vmem:[%s153 + $0x21c] sm:$0xff]
    %v6291 = vld [vmem:[%s153 + $0x224] sm:$0xff]
    %v6292 = vld [vmem:[%s153 + $0x22c] sm:$0xf]
    %v6293 = vld [vmem:[%s153 + $0x230] sm:$0xff]
    %v6294 = vld [vmem:[%s153 + $0x238] sm:$0xff]
    %v6295 = vld [vmem:[%s153 + $0x240] sm:$0xff]
    %v6296 = vld [vmem:[%s153 + $0x248] sm:$0xf]
    %v6297 = vld [vmem:[%s153 + $0x24c] sm:$0xff]
    %v6298 = vld [vmem:[%s153 + $0x254] sm:$0xff]
    %v6299 = vld [vmem:[%s153 + $0x25c] sm:$0xff]
    %v6300 = vld [vmem:[%s153 + $0x264] sm:$0xf]
    %v6301 = vld [vmem:[%s153 + $0x268] sm:$0xff]
    %v6302 = vld [vmem:[%s153 + $0x270] sm:$0xff]
    %v6303 = vld [vmem:[%s153 + $0x278] sm:$0xff]
    %v6304 = vld [vmem:[%s153 + $0x280] sm:$0xf]
    %v6305 = vld [vmem:[%s153 + $0x284] sm:$0xff]
    %v6306 = vld [vmem:[%s153 + $0x28c] sm:$0xff]
    %v6307 = vld [vmem:[%s153 + $0x294] sm:$0xff]
    %v6308 = vld [vmem:[%s153 + $0x29c] sm:$0xf]
    %v6309 = vld [vmem:[%s153 + $0x2a0] sm:$0xff]
    %v6310 = vld [vmem:[%s153 + $0x2a8] sm:$0xff]
    %v6311 = vld [vmem:[%s153 + $0x2b0] sm:$0xff]
    %v6312 = vld [vmem:[%s153 + $0x2b8] sm:$0xf]
    %v6313 = vld [vmem:[%s153 + $0x2bc] sm:$0xff]
    %v6314 = vld [vmem:[%s153 + $0x2c4] sm:$0xff]
    %v6315 = vld [vmem:[%s153 + $0x2cc] sm:$0xff]
    %v6316 = vld [vmem:[%s153 + $0x2d4] sm:$0xf]
    %v6317 = vld [vmem:[%s153 + $0x2d8] sm:$0xff]
    %v6318 = vld [vmem:[%s153 + $0x2e0] sm:$0xff]
    %v6319 = vld [vmem:[%s153 + $0x2e8] sm:$0xff]
    %v6320 = vld [vmem:[%s153 + $0x2f0] sm:$0xf]
    %v6321 = vld [vmem:[%s153 + $0x2f4] sm:$0xff]
    %v6322 = vld [vmem:[%s153 + $0x2fc] sm:$0xff]
    %v6323 = vld [vmem:[%s153 + $0x304] sm:$0xff]
    %v6324 = vld [vmem:[%s153 + $0x30c] sm:$0xf]
    %v6325 = vld [vmem:[%s153 + $0x310] sm:$0xff]
    %v6326 = vld [vmem:[%s153 + $0x318] sm:$0xff]
    %v6327 = vld [vmem:[%s153 + $0x320] sm:$0xff]
    %v6328 = vld [vmem:[%s153 + $0x328] sm:$0xf]
    %v6329 = vld [vmem:[%s153 + $0x32c] sm:$0xff]
    %v6330 = vld [vmem:[%s153 + $0x334] sm:$0xff]
    %v6331 = vld [vmem:[%s153 + $0x33c] sm:$0xff]
    %v6332 = vld [vmem:[%s153 + $0x344] sm:$0xf]
    %v6333 = vld [vmem:[%s153 + $0x348] sm:$0xff]
    %v6334 = vld [vmem:[%s153 + $0x350] sm:$0xff]
    %v6335 = vld [vmem:[%s153 + $0x358] sm:$0xff]
    %v6336 = vld [vmem:[%s153 + $0x360] sm:$0xf]
    %v6337 = vld [vmem:[%s153 + $0x364] sm:$0xff]
    %v6338 = vld [vmem:[%s153 + $0x36c] sm:$0xff]
    %v6339 = vld [vmem:[%s153 + $0x374] sm:$0xff]
    %v6340 = vld [vmem:[%s153 + $0x37c] sm:$0xf]
    %v6342 = vunpack.c.l.b16 %v3517
    %v6343 = vunpack.c.h.b16 %v3517
    %v6344 = vpack.c.b16 %v6342, %v6342
    %v6345 = vpack.c.b16 %v6343, %v6343
    %v6476 = vunpack.c.l.b16 %v6213
    %v6477 = vunpack.c.h.b16 %v6213
    %v6478 = vunpack.c.l.b16 %v6214
    %v6479 = vunpack.c.h.b16 %v6214
    %v6480 = vunpack.c.l.b16 %v6215
    %v6481 = vunpack.c.h.b16 %v6215
    %v6482 = vunpack.c.l.b16 %v6216
    %v6483 = vunpack.c.l.b16 %v6217
    %v6484 = vunpack.c.h.b16 %v6217
    %v6485 = vunpack.c.l.b16 %v6218
    %v6486 = vunpack.c.h.b16 %v6218
    %v6487 = vunpack.c.l.b16 %v6219
    %v6488 = vunpack.c.h.b16 %v6219
    %v6489 = vunpack.c.l.b16 %v6220
    %v6490 = vunpack.c.l.b16 %v6221
    %v6491 = vunpack.c.h.b16 %v6221
    %v6492 = vunpack.c.l.b16 %v6222
    %v6493 = vunpack.c.h.b16 %v6222
    %v6494 = vunpack.c.l.b16 %v6223
    %v6495 = vunpack.c.h.b16 %v6223
    %v6496 = vunpack.c.l.b16 %v6224
    %v6497 = vunpack.c.l.b16 %v6225
    %v6498 = vunpack.c.h.b16 %v6225
    %v6499 = vunpack.c.l.b16 %v6226
    %v6500 = vunpack.c.h.b16 %v6226
    %v6501 = vunpack.c.l.b16 %v6227
    %v6502 = vunpack.c.h.b16 %v6227
    %v6503 = vunpack.c.l.b16 %v6228
    %v6504 = vunpack.c.l.b16 %v6229
    %v6505 = vunpack.c.h.b16 %v6229
    %v6506 = vunpack.c.l.b16 %v6230
    %v6507 = vunpack.c.h.b16 %v6230
    %v6508 = vunpack.c.l.b16 %v6231
    %v6509 = vunpack.c.h.b16 %v6231
    %v6510 = vunpack.c.l.b16 %v6232
    %v6511 = vunpack.c.l.b16 %v6233
    %v6512 = vunpack.c.h.b16 %v6233
    %v6513 = vunpack.c.l.b16 %v6234
    %v6514 = vunpack.c.h.b16 %v6234
    %v6515 = vunpack.c.l.b16 %v6235
    %v6516 = vunpack.c.h.b16 %v6235
    %v6517 = vunpack.c.l.b16 %v6236
    %v6518 = vunpack.c.l.b16 %v6237
    %v6519 = vunpack.c.h.b16 %v6237
    %v6520 = vunpack.c.l.b16 %v6238
    %v6521 = vunpack.c.h.b16 %v6238
    %v6522 = vunpack.c.l.b16 %v6239
    %v6523 = vunpack.c.h.b16 %v6239
    %v6524 = vunpack.c.l.b16 %v6240
    %v6525 = vunpack.c.l.b16 %v6241
    %v6526 = vunpack.c.h.b16 %v6241
    %v6527 = vunpack.c.l.b16 %v6242
    %v6528 = vunpack.c.h.b16 %v6242
    %v6529 = vunpack.c.l.b16 %v6243
    %v6530 = vunpack.c.h.b16 %v6243
    %v6531 = vunpack.c.l.b16 %v6244
    %v6532 = vunpack.c.l.b16 %v6245
    %v6533 = vunpack.c.h.b16 %v6245
    %v6534 = vunpack.c.l.b16 %v6246
    %v6535 = vunpack.c.h.b16 %v6246
    %v6536 = vunpack.c.l.b16 %v6247
    %v6537 = vunpack.c.h.b16 %v6247
    %v6538 = vunpack.c.l.b16 %v6248
    %v6539 = vunpack.c.l.b16 %v6249
    %v6540 = vunpack.c.h.b16 %v6249
    %v6541 = vunpack.c.l.b16 %v6250
    %v6542 = vunpack.c.h.b16 %v6250
    %v6543 = vunpack.c.l.b16 %v6251
    %v6544 = vunpack.c.h.b16 %v6251
    %v6545 = vunpack.c.l.b16 %v6252
    %v6546 = vunpack.c.l.b16 %v6253
    %v6547 = vunpack.c.h.b16 %v6253
    %v6548 = vunpack.c.l.b16 %v6254
    %v6549 = vunpack.c.h.b16 %v6254
    %v6550 = vunpack.c.l.b16 %v6255
    %v6551 = vunpack.c.h.b16 %v6255
    %v6552 = vunpack.c.l.b16 %v6256
    %v6553 = vunpack.c.l.b16 %v6257
    %v6554 = vunpack.c.h.b16 %v6257
    %v6555 = vunpack.c.l.b16 %v6258
    %v6556 = vunpack.c.h.b16 %v6258
    %v6557 = vunpack.c.l.b16 %v6259
    %v6558 = vunpack.c.h.b16 %v6259
    %v6559 = vunpack.c.l.b16 %v6260
    %v6560 = vunpack.c.l.b16 %v6261
    %v6561 = vunpack.c.h.b16 %v6261
    %v6562 = vunpack.c.l.b16 %v6262
    %v6563 = vunpack.c.h.b16 %v6262
    %v6564 = vunpack.c.l.b16 %v6263
    %v6565 = vunpack.c.h.b16 %v6263
    %v6566 = vunpack.c.l.b16 %v6264
    %v6567 = vunpack.c.l.b16 %v6265
    %v6568 = vunpack.c.h.b16 %v6265
    %v6569 = vunpack.c.l.b16 %v6266
    %v6570 = vunpack.c.h.b16 %v6266
    %v6571 = vunpack.c.l.b16 %v6267
    %v6572 = vunpack.c.h.b16 %v6267
    %v6573 = vunpack.c.l.b16 %v6268
    %v6574 = vunpack.c.l.b16 %v6269
    %v6575 = vunpack.c.h.b16 %v6269
    %v6576 = vunpack.c.l.b16 %v6270
    %v6577 = vunpack.c.h.b16 %v6270
    %v6578 = vunpack.c.l.b16 %v6271
    %v6579 = vunpack.c.h.b16 %v6271
    %v6580 = vunpack.c.l.b16 %v6272
    %v6581 = vunpack.c.l.b16 %v6273
    %v6582 = vunpack.c.h.b16 %v6273
    %v6583 = vunpack.c.l.b16 %v6274
    %v6584 = vunpack.c.h.b16 %v6274
    %v6585 = vunpack.c.l.b16 %v6275
    %v6586 = vunpack.c.h.b16 %v6275
    %v6587 = vunpack.c.l.b16 %v6276
    %v6588 = vunpack.c.l.b16 %v6277
    %v6589 = vunpack.c.h.b16 %v6277
    %v6590 = vunpack.c.l.b16 %v6278
    %v6591 = vunpack.c.h.b16 %v6278
    %v6592 = vunpack.c.l.b16 %v6279
    %v6593 = vunpack.c.h.b16 %v6279
    %v6594 = vunpack.c.l.b16 %v6280
    %v6595 = vunpack.c.l.b16 %v6281
    %v6596 = vunpack.c.h.b16 %v6281
    %v6597 = vunpack.c.l.b16 %v6282
    %v6598 = vunpack.c.h.b16 %v6282
    %v6599 = vunpack.c.l.b16 %v6283
    %v6600 = vunpack.c.h.b16 %v6283
    %v6601 = vunpack.c.l.b16 %v6284
    %v6602 = vunpack.c.l.b16 %v6285
    %v6603 = vunpack.c.h.b16 %v6285
    %v6604 = vunpack.c.l.b16 %v6286
    %v6605 = vunpack.c.h.b16 %v6286
    %v6606 = vunpack.c.l.b16 %v6287
    %v6607 = vunpack.c.h.b16 %v6287
    %v6608 = vunpack.c.l.b16 %v6288
    %v6609 = vunpack.c.l.b16 %v6289
    %v6610 = vunpack.c.h.b16 %v6289
    %v6611 = vunpack.c.l.b16 %v6290
    %v6612 = vunpack.c.h.b16 %v6290
    %v6613 = vunpack.c.l.b16 %v6291
    %v6614 = vunpack.c.h.b16 %v6291
    %v6615 = vunpack.c.l.b16 %v6292
    %v6616 = vunpack.c.l.b16 %v6293
    %v6617 = vunpack.c.h.b16 %v6293
    %v6618 = vunpack.c.l.b16 %v6294
    %v6619 = vunpack.c.h.b16 %v6294
    %v6620 = vunpack.c.l.b16 %v6295
    %v6621 = vunpack.c.h.b16 %v6295
    %v6622 = vunpack.c.l.b16 %v6296
    %v6623 = vunpack.c.l.b16 %v6297
    %v6624 = vunpack.c.h.b16 %v6297
    %v6625 = vunpack.c.l.b16 %v6298
    %v6626 = vunpack.c.h.b16 %v6298
    %v6627 = vunpack.c.l.b16 %v6299
    %v6628 = vunpack.c.h.b16 %v6299
    %v6629 = vunpack.c.l.b16 %v6300
    %v6630 = vunpack.c.l.b16 %v6301
    %v6631 = vunpack.c.h.b16 %v6301
    %v6632 = vunpack.c.l.b16 %v6302
    %v6633 = vunpack.c.h.b16 %v6302
    %v6634 = vunpack.c.l.b16 %v6303
    %v6635 = vunpack.c.h.b16 %v6303
    %v6636 = vunpack.c.l.b16 %v6304
    %v6637 = vunpack.c.l.b16 %v6305
    %v6638 = vunpack.c.h.b16 %v6305
    %v6639 = vunpack.c.l.b16 %v6306
    %v6640 = vunpack.c.h.b16 %v6306
    %v6641 = vunpack.c.l.b16 %v6307
    %v6642 = vunpack.c.h.b16 %v6307
    %v6643 = vunpack.c.l.b16 %v6308
    %v6644 = vunpack.c.l.b16 %v6309
    %v6645 = vunpack.c.h.b16 %v6309
    %v6646 = vunpack.c.l.b16 %v6310
    %v6647 = vunpack.c.h.b16 %v6310
    %v6648 = vunpack.c.l.b16 %v6311
    %v6649 = vunpack.c.h.b16 %v6311
    %v6650 = vunpack.c.l.b16 %v6312
    %v6651 = vunpack.c.l.b16 %v6313
    %v6652 = vunpack.c.h.b16 %v6313
    %v6653 = vunpack.c.l.b16 %v6314
    %v6654 = vunpack.c.h.b16 %v6314
    %v6655 = vunpack.c.l.b16 %v6315
    %v6656 = vunpack.c.h.b16 %v6315
    %v6657 = vunpack.c.l.b16 %v6316
    %v6658 = vunpack.c.l.b16 %v6317
    %v6659 = vunpack.c.h.b16 %v6317
    %v6660 = vunpack.c.l.b16 %v6318
    %v6661 = vunpack.c.h.b16 %v6318
    %v6662 = vunpack.c.l.b16 %v6319
    %v6663 = vunpack.c.h.b16 %v6319
    %v6664 = vunpack.c.l.b16 %v6320
    %v6665 = vunpack.c.l.b16 %v6321
    %v6666 = vunpack.c.h.b16 %v6321
    %v6667 = vunpack.c.l.b16 %v6322
    %v6668 = vunpack.c.h.b16 %v6322
    %v6669 = vunpack.c.l.b16 %v6323
    %v6670 = vunpack.c.h.b16 %v6323
    %v6671 = vunpack.c.l.b16 %v6324
    %v6672 = vunpack.c.l.b16 %v6325
    %v6673 = vunpack.c.h.b16 %v6325
    %v6674 = vunpack.c.l.b16 %v6326
    %v6675 = vunpack.c.h.b16 %v6326
    %v6676 = vunpack.c.l.b16 %v6327
    %v6677 = vunpack.c.h.b16 %v6327
    %v6678 = vunpack.c.l.b16 %v6328
    %v6679 = vunpack.c.l.b16 %v6329
    %v6680 = vunpack.c.h.b16 %v6329
    %v6681 = vunpack.c.l.b16 %v6330
    %v6682 = vunpack.c.h.b16 %v6330
    %v6683 = vunpack.c.l.b16 %v6331
    %v6684 = vunpack.c.h.b16 %v6331
    %v6685 = vunpack.c.l.b16 %v6332
    %v6686 = vunpack.c.l.b16 %v6333
    %v6687 = vunpack.c.h.b16 %v6333
    %v6688 = vunpack.c.l.b16 %v6334
    %v6689 = vunpack.c.h.b16 %v6334
    %v6690 = vunpack.c.l.b16 %v6335
    %v6691 = vunpack.c.h.b16 %v6335
    %v6692 = vunpack.c.l.b16 %v6336
    %v6693 = vunpack.c.l.b16 %v6337
    %v6694 = vunpack.c.h.b16 %v6337
    %v6695 = vunpack.c.l.b16 %v6338
    %v6696 = vunpack.c.h.b16 %v6338
    %v6697 = vunpack.c.l.b16 %v6339
    %v6698 = vunpack.c.h.b16 %v6339
    %v6699 = vunpack.c.l.b16 %v6340
    %v6700 = vpack.c.b16 %v6483, %v6476
    %v6701 = vpack.c.b16 %v6484, %v6477
    %v6702 = vpack.c.b16 %v6485, %v6478
    %v6703 = vpack.c.b16 %v6486, %v6479
    %v6704 = vpack.c.b16 %v6487, %v6480
    %v6705 = vpack.c.b16 %v6488, %v6481
    %v6706 = vpack.c.b16 %v6489, %v6482
    %v6707 = vpack.c.b16 %v6497, %v6490
    %v6708 = vpack.c.b16 %v6498, %v6491
    %v6709 = vpack.c.b16 %v6499, %v6492
    %v6710 = vpack.c.b16 %v6500, %v6493
    %v6711 = vpack.c.b16 %v6501, %v6494
    %v6712 = vpack.c.b16 %v6502, %v6495
    %v6713 = vpack.c.b16 %v6503, %v6496
    %v6714 = vpack.c.b16 %v6511, %v6504
    %v6715 = vpack.c.b16 %v6512, %v6505
    %v6716 = vpack.c.b16 %v6513, %v6506
    %v6717 = vpack.c.b16 %v6514, %v6507
    %v6718 = vpack.c.b16 %v6515, %v6508
    %v6719 = vpack.c.b16 %v6516, %v6509
    %v6720 = vpack.c.b16 %v6517, %v6510
    %v6721 = vpack.c.b16 %v6525, %v6518
    %v6722 = vpack.c.b16 %v6526, %v6519
    %v6723 = vpack.c.b16 %v6527, %v6520
    %v6724 = vpack.c.b16 %v6528, %v6521
    %v6725 = vpack.c.b16 %v6529, %v6522
    %v6726 = vpack.c.b16 %v6530, %v6523
    %v6727 = vpack.c.b16 %v6531, %v6524
    %v6728 = vpack.c.b16 %v6539, %v6532
    %v6729 = vpack.c.b16 %v6540, %v6533
    %v6730 = vpack.c.b16 %v6541, %v6534
    %v6731 = vpack.c.b16 %v6542, %v6535
    %v6732 = vpack.c.b16 %v6543, %v6536
    %v6733 = vpack.c.b16 %v6544, %v6537
    %v6734 = vpack.c.b16 %v6545, %v6538
    %v6735 = vpack.c.b16 %v6553, %v6546
    %v6736 = vpack.c.b16 %v6554, %v6547
    %v6737 = vpack.c.b16 %v6555, %v6548
    %v6738 = vpack.c.b16 %v6556, %v6549
    %v6739 = vpack.c.b16 %v6557, %v6550
    %v6740 = vpack.c.b16 %v6558, %v6551
    %v6741 = vpack.c.b16 %v6559, %v6552
    %v6742 = vpack.c.b16 %v6567, %v6560
    %v6743 = vpack.c.b16 %v6568, %v6561
    %v6744 = vpack.c.b16 %v6569, %v6562
    %v6745 = vpack.c.b16 %v6570, %v6563
    %v6746 = vpack.c.b16 %v6571, %v6564
    %v6747 = vpack.c.b16 %v6572, %v6565
    %v6748 = vpack.c.b16 %v6573, %v6566
    %v6749 = vpack.c.b16 %v6581, %v6574
    %v6750 = vpack.c.b16 %v6582, %v6575
    %v6751 = vpack.c.b16 %v6583, %v6576
    %v6752 = vpack.c.b16 %v6584, %v6577
    %v6753 = vpack.c.b16 %v6585, %v6578
    %v6754 = vpack.c.b16 %v6586, %v6579
    %v6755 = vpack.c.b16 %v6587, %v6580
    %v6756 = vpack.c.b16 %v6595, %v6588
    %v6757 = vpack.c.b16 %v6596, %v6589
    %v6758 = vpack.c.b16 %v6597, %v6590
    %v6759 = vpack.c.b16 %v6598, %v6591
    %v6760 = vpack.c.b16 %v6599, %v6592
    %v6761 = vpack.c.b16 %v6600, %v6593
    %v6762 = vpack.c.b16 %v6601, %v6594
    %v6763 = vpack.c.b16 %v6609, %v6602
    %v6764 = vpack.c.b16 %v6610, %v6603
    %v6765 = vpack.c.b16 %v6611, %v6604
    %v6766 = vpack.c.b16 %v6612, %v6605
    %v6767 = vpack.c.b16 %v6613, %v6606
    %v6768 = vpack.c.b16 %v6614, %v6607
    %v6769 = vpack.c.b16 %v6615, %v6608
    %v6770 = vpack.c.b16 %v6623, %v6616
    %v6771 = vpack.c.b16 %v6624, %v6617
    %v6772 = vpack.c.b16 %v6625, %v6618
    %v6773 = vpack.c.b16 %v6626, %v6619
    %v6774 = vpack.c.b16 %v6627, %v6620
    %v6775 = vpack.c.b16 %v6628, %v6621
    %v6776 = vpack.c.b16 %v6629, %v6622
    %v6777 = vpack.c.b16 %v6637, %v6630
    %v6778 = vpack.c.b16 %v6638, %v6631
    %v6779 = vpack.c.b16 %v6639, %v6632
    %v6780 = vpack.c.b16 %v6640, %v6633
    %v6781 = vpack.c.b16 %v6641, %v6634
    %v6782 = vpack.c.b16 %v6642, %v6635
    %v6783 = vpack.c.b16 %v6643, %v6636
    %v6784 = vpack.c.b16 %v6651, %v6644
    %v6785 = vpack.c.b16 %v6652, %v6645
    %v6786 = vpack.c.b16 %v6653, %v6646
    %v6787 = vpack.c.b16 %v6654, %v6647
    %v6788 = vpack.c.b16 %v6655, %v6648
    %v6789 = vpack.c.b16 %v6656, %v6649
    %v6790 = vpack.c.b16 %v6657, %v6650
    %v6791 = vpack.c.b16 %v6665, %v6658
    %v6792 = vpack.c.b16 %v6666, %v6659
    %v6793 = vpack.c.b16 %v6667, %v6660
    %v6794 = vpack.c.b16 %v6668, %v6661
    %v6795 = vpack.c.b16 %v6669, %v6662
    %v6796 = vpack.c.b16 %v6670, %v6663
    %v6797 = vpack.c.b16 %v6671, %v6664
    %v6798 = vpack.c.b16 %v6679, %v6672
    %v6799 = vpack.c.b16 %v6680, %v6673
    %v6800 = vpack.c.b16 %v6681, %v6674
    %v6801 = vpack.c.b16 %v6682, %v6675
    %v6802 = vpack.c.b16 %v6683, %v6676
    %v6803 = vpack.c.b16 %v6684, %v6677
    %v6804 = vpack.c.b16 %v6685, %v6678
    %v6805 = vpack.c.b16 %v6693, %v6686
    %v6806 = vpack.c.b16 %v6694, %v6687
    %v6807 = vpack.c.b16 %v6695, %v6688
    %v6808 = vpack.c.b16 %v6696, %v6689
    %v6809 = vpack.c.b16 %v6697, %v6690
    %v6810 = vpack.c.b16 %v6698, %v6691
    %v6811 = vpack.c.b16 %v6699, %v6692
    %6924 = vmatpush.bf16.msra.mxu0 %v6749
    %6925 = vmatpush.bf16.msra.mxu0 %v6742
    %6926 = vmatpush.bf16.msra.mxu0 %v6735
    %6927 = vmatpush.bf16.msra.mxu0 %v6728
    %6928 = vmatpush.bf16.msra.mxu0 %v6721
    %6929 = vmatpush.bf16.msra.mxu0 %v6714
    %6930 = vmatpush.bf16.msra.mxu0 %v6707
    %6931 = vmatpush.bf16.msra.mxu0 %v6700
    %6932 = vmatmul.bf16.gmra.mxu0 %v6344
    %v6933 = vpop.f32.mrf.mxu0
    %v6934 = vadd.f32 0.0, %v6933
    %v6935 = vpop.f32.mrf.mxu0
    %6936 = vdwg.mxu0
    %6937 = vmatpush.bf16.msra.mxu0 %v6805
    %6938 = vmatpush.bf16.msra.mxu0 %v6798
    %6939 = vmatpush.bf16.msra.mxu0 %v6791
    %6940 = vmatpush.bf16.msra.mxu0 %v6784
    %6941 = vmatpush.bf16.msra.mxu0 %v6777
    %6942 = vmatpush.bf16.msra.mxu0 %v6770
    %6943 = vmatpush.bf16.msra.mxu0 %v6763
    %6944 = vmatpush.bf16.msra.mxu0 %v6756
    %6945 = vmatmul.bf16.gmra.mxu0 %v6345
    %v6946 = vpop.f32.mrf.mxu0
    %v6947 = vadd.f32 %v6934, %v6946
    %v6948 = vpop.f32.mrf.mxu0
    %6949 = vdwg.mxu0
    %6950 = vmatpush.bf16.msra.mxu0 %v6750
    %6951 = vmatpush.bf16.msra.mxu0 %v6743
    %6952 = vmatpush.bf16.msra.mxu0 %v6736
    %6953 = vmatpush.bf16.msra.mxu0 %v6729
    %6954 = vmatpush.bf16.msra.mxu0 %v6722
    %6955 = vmatpush.bf16.msra.mxu0 %v6715
    %6956 = vmatpush.bf16.msra.mxu0 %v6708
    %6957 = vmatpush.bf16.msra.mxu0 %v6701
    %6958 = vmatmul.bf16.gmra.mxu0 %v6344
    %v6959 = vpop.f32.mrf.mxu0
    %v6960 = vadd.f32 0.0, %v6959
    %v6961 = vpop.f32.mrf.mxu0
    %6962 = vdwg.mxu0
    %6963 = vmatpush.bf16.msra.mxu0 %v6806
    %6964 = vmatpush.bf16.msra.mxu0 %v6799
    %6965 = vmatpush.bf16.msra.mxu0 %v6792
    %6966 = vmatpush.bf16.msra.mxu0 %v6785
    %6967 = vmatpush.bf16.msra.mxu0 %v6778
    %6968 = vmatpush.bf16.msra.mxu0 %v6771
    %6969 = vmatpush.bf16.msra.mxu0 %v6764
    %6970 = vmatpush.bf16.msra.mxu0 %v6757
    %6971 = vmatmul.bf16.gmra.mxu0 %v6345
    %v6972 = vpop.f32.mrf.mxu0
    %v6973 = vadd.f32 %v6960, %v6972
    %v6974 = vpop.f32.mrf.mxu0
    %6975 = vdwg.mxu0
    %6976 = vmatpush.bf16.msra.mxu0 %v6751
    %6977 = vmatpush.bf16.msra.mxu0 %v6744
    %6978 = vmatpush.bf16.msra.mxu0 %v6737
    %6979 = vmatpush.bf16.msra.mxu0 %v6730
    %6980 = vmatpush.bf16.msra.mxu0 %v6723
    %6981 = vmatpush.bf16.msra.mxu0 %v6716
    %6982 = vmatpush.bf16.msra.mxu0 %v6709
    %6983 = vmatpush.bf16.msra.mxu0 %v6702
    %6984 = vmatmul.bf16.gmra.mxu0 %v6344
    %v6985 = vpop.f32.mrf.mxu0
    %v6986 = vadd.f32 0.0, %v6985
    %v6987 = vpop.f32.mrf.mxu0
    %6988 = vdwg.mxu0
    %6989 = vmatpush.bf16.msra.mxu0 %v6807
    %6990 = vmatpush.bf16.msra.mxu0 %v6800
    %6991 = vmatpush.bf16.msra.mxu0 %v6793
    %6992 = vmatpush.bf16.msra.mxu0 %v6786
    %6993 = vmatpush.bf16.msra.mxu0 %v6779
    %6994 = vmatpush.bf16.msra.mxu0 %v6772
    %6995 = vmatpush.bf16.msra.mxu0 %v6765
    %6996 = vmatpush.bf16.msra.mxu0 %v6758
    %6997 = vmatmul.bf16.gmra.mxu0 %v6345
    %v6998 = vpop.f32.mrf.mxu0
    %v6999 = vadd.f32 %v6986, %v6998
    %v7000 = vpop.f32.mrf.mxu0
    %7001 = vdwg.mxu0
    %7002 = vmatpush.bf16.msra.mxu0 %v6752
    %7003 = vmatpush.bf16.msra.mxu0 %v6745
    %7004 = vmatpush.bf16.msra.mxu0 %v6738
    %7005 = vmatpush.bf16.msra.mxu0 %v6731
    %7006 = vmatpush.bf16.msra.mxu0 %v6724
    %7007 = vmatpush.bf16.msra.mxu0 %v6717
    %7008 = vmatpush.bf16.msra.mxu0 %v6710
    %7009 = vmatpush.bf16.msra.mxu0 %v6703
    %7010 = vmatmul.bf16.gmra.mxu0 %v6344
    %v7011 = vpop.f32.mrf.mxu0
    %v7012 = vadd.f32 0.0, %v7011
    %v7013 = vpop.f32.mrf.mxu0
    %7014 = vdwg.mxu0
    %7015 = vmatpush.bf16.msra.mxu0 %v6808
    %7016 = vmatpush.bf16.msra.mxu0 %v6801
    %7017 = vmatpush.bf16.msra.mxu0 %v6794
    %7018 = vmatpush.bf16.msra.mxu0 %v6787
    %7019 = vmatpush.bf16.msra.mxu0 %v6780
    %7020 = vmatpush.bf16.msra.mxu0 %v6773
    %7021 = vmatpush.bf16.msra.mxu0 %v6766
    %7022 = vmatpush.bf16.msra.mxu0 %v6759
    %7023 = vmatmul.bf16.gmra.mxu0 %v6345
    %v7024 = vpop.f32.mrf.mxu0
    %v7025 = vadd.f32 %v7012, %v7024
    %v7026 = vpop.f32.mrf.mxu0
    %7027 = vdwg.mxu0
    %7028 = vmatpush.bf16.msra.mxu0 %v6753
    %7029 = vmatpush.bf16.msra.mxu0 %v6746
    %7030 = vmatpush.bf16.msra.mxu0 %v6739
    %7031 = vmatpush.bf16.msra.mxu0 %v6732
    %7032 = vmatpush.bf16.msra.mxu0 %v6725
    %7033 = vmatpush.bf16.msra.mxu0 %v6718
    %7034 = vmatpush.bf16.msra.mxu0 %v6711
    %7035 = vmatpush.bf16.msra.mxu0 %v6704
    %7036 = vmatmul.bf16.gmra.mxu0 %v6344
    %v7037 = vpop.f32.mrf.mxu0
    %v7038 = vadd.f32 0.0, %v7037
    %v7039 = vpop.f32.mrf.mxu0
    %7040 = vdwg.mxu0
    %7041 = vmatpush.bf16.msra.mxu0 %v6809
    %7042 = vmatpush.bf16.msra.mxu0 %v6802
    %7043 = vmatpush.bf16.msra.mxu0 %v6795
    %7044 = vmatpush.bf16.msra.mxu0 %v6788
    %7045 = vmatpush.bf16.msra.mxu0 %v6781
    %7046 = vmatpush.bf16.msra.mxu0 %v6774
    %7047 = vmatpush.bf16.msra.mxu0 %v6767
    %7048 = vmatpush.bf16.msra.mxu0 %v6760
    %7049 = vmatmul.bf16.gmra.mxu0 %v6345
    %v7050 = vpop.f32.mrf.mxu0
    %v7051 = vadd.f32 %v7038, %v7050
    %v7052 = vpop.f32.mrf.mxu0
    %7053 = vdwg.mxu0
    %7054 = vmatpush.bf16.msra.mxu0 %v6754
    %7055 = vmatpush.bf16.msra.mxu0 %v6747
    %7056 = vmatpush.bf16.msra.mxu0 %v6740
    %7057 = vmatpush.bf16.msra.mxu0 %v6733
    %7058 = vmatpush.bf16.msra.mxu0 %v6726
    %7059 = vmatpush.bf16.msra.mxu0 %v6719
    %7060 = vmatpush.bf16.msra.mxu0 %v6712
    %7061 = vmatpush.bf16.msra.mxu0 %v6705
    %7062 = vmatmul.bf16.gmra.mxu0 %v6344
    %v7063 = vpop.f32.mrf.mxu0
    %v7064 = vadd.f32 0.0, %v7063
    %v7065 = vpop.f32.mrf.mxu0
    %7066 = vdwg.mxu0
    %7067 = vmatpush.bf16.msra.mxu0 %v6810
    %7068 = vmatpush.bf16.msra.mxu0 %v6803
    %7069 = vmatpush.bf16.msra.mxu0 %v6796
    %7070 = vmatpush.bf16.msra.mxu0 %v6789
    %7071 = vmatpush.bf16.msra.mxu0 %v6782
    %7072 = vmatpush.bf16.msra.mxu0 %v6775
    %7073 = vmatpush.bf16.msra.mxu0 %v6768
    %7074 = vmatpush.bf16.msra.mxu0 %v6761
    %7075 = vmatmul.bf16.gmra.mxu0 %v6345
    %v7076 = vpop.f32.mrf.mxu0
    %v7077 = vadd.f32 %v7064, %v7076
    %v7078 = vpop.f32.mrf.mxu0
    %7079 = vdwg.mxu0
    %7080 = vmatpush.bf16.msra.mxu0 %v6755
    %7081 = vmatpush.bf16.msra.mxu0 %v6748
    %7082 = vmatpush.bf16.msra.mxu0 %v6741
    %7083 = vmatpush.bf16.msra.mxu0 %v6734
    %7084 = vmatpush.bf16.msra.mxu0 %v6727
    %7085 = vmatpush.bf16.msra.mxu0 %v6720
    %7086 = vmatpush.bf16.msra.mxu0 %v6713
    %7087 = vmatpush.bf16.msra.mxu0 %v6706
    %7088 = vmatmul.bf16.gmra.mxu0 %v6344
    %v7089 = vpop.f32.mrf.mxu0
    %v7090 = vadd.f32 0.0, %v7089
    %v7091 = vpop.f32.mrf.mxu0
    %7092 = vdwg.mxu0
    %7093 = vmatpush.bf16.msra.mxu0 %v6811
    %7094 = vmatpush.bf16.msra.mxu0 %v6804
    %7095 = vmatpush.bf16.msra.mxu0 %v6797
    %7096 = vmatpush.bf16.msra.mxu0 %v6790
    %7097 = vmatpush.bf16.msra.mxu0 %v6783
    %7098 = vmatpush.bf16.msra.mxu0 %v6776
    %7099 = vmatpush.bf16.msra.mxu0 %v6769
    %7100 = vmatpush.bf16.msra.mxu0 %v6762
    %7101 = vmatmul.bf16.gmra.mxu0 %v6345
    %v7102 = vpop.f32.mrf.mxu0
    %v7103 = vadd.f32 %v7090, %v7102
    %v7104 = vpop.f32.mrf.mxu0
    %7105 = vdwg.mxu0
    %v7106 = vadd.f32 %v6204, %v6947
    %v7107 = vadd.f32 %v6205, %v6973
    %v7108 = vadd.f32 %v6206, %v6999
    %v7109 = vadd.f32 %v6207, %v7025
    %v7110 = vadd.f32 %v6208, %v7051
    %v7111 = vadd.f32 %v6209, %v7077
    %v7112 = vadd.f32 %v6210, %v7103
    %v7114 = vperm.slane %v188, 0
    %v7115 = vperm.slane %v188, 1
    %v7116 = vperm.slane %v188, 2
    %v7117 = vperm.slane %v188, 3
    %v7118 = vperm.slane %v188, 4
    %v7119 = vperm.slane %v188, 5
    %v7120 = vperm.slane %v188, 6
    %v7128 = vadd.f32 %v7106, %v7114
    %v7129 = vadd.f32 %v7107, %v7115
    %v7130 = vadd.f32 %v7108, %v7116
    %v7131 = vadd.f32 %v7109, %v7117
    %v7132 = vadd.f32 %v7110, %v7118
    %v7133 = vadd.f32 %v7111, %v7119
    %v7134 = vadd.f32 %v7112, %v7120
    %v7135 = vtanh.pop %v7128
    %v7136 = vtanh.pop %v7129
    %v7137 = vtanh.pop %v7130
    %v7138 = vtanh.pop %v7131
    %v7139 = vtanh.pop %v7132
    %v7140 = vtanh.pop %v7133
    %v7141 = vtanh.pop %v7134
    %7142 = vst [vmem:[#allocation12] sm:$0xff] %v7135
    %7143 = vst [vmem:[#allocation12 + $0x8] sm:$0xff] %v7136
    %7144 = vst [vmem:[#allocation12 + $0x10] sm:$0xff] %v7137
    %7145 = vst [vmem:[#allocation12 + $0x18] sm:$0xff] %v7138
    %7146 = vst [vmem:[#allocation12 + $0x20] sm:$0xff] %v7139
    %7147 = vst [vmem:[#allocation12 + $0x28] sm:$0xff] %v7140
    %vm7148 = vcmask 130048
    %7149 = vst.msk [vmem:[#allocation12 + $0x30] sm:$0xff] %vm7148, %v7141
    // Predicated region
    $region54: #{generator_forward.1} parent=1 // pred_check
      _
    $region55: #{generator_forward.1} parent=1 // pred_check_branch
      %7151 = sbr.rel (0) target = $region57
    $region56: #{generator_forward.1} parent=1 // pred_region
      %7153 = vsyncadd [#allocation9], 0
      %s7155 = sshll.u32 [#allocation12], 4
      %s7156 = int_to_ptr.vmem [resolvable:$true] %s7155
      %s7157 = sshll.u32 %s7, 4
      %s7158 = int_to_ptr.hbm [resolvable:$true] %s7157
      %7160 = dma.vmem_to_hbm [thread:$0]  %s7156, 896, %s7158, [#allocation9]
    $region57: #{generator_forward.1} parent=1 // pred_fallthru
      _
    // Predicated region
    $region58: #{generator_forward.1} parent=1 // pred_check
      _
    $region59: #{generator_forward.1} parent=1 // pred_check_branch
      %7162 = sbr.rel (0) target = $region61
    $region60: #{generator_forward.1} parent=1 // pred_region
      %7164 = dma.done [#allocation9], 896
    $region61: #{generator_forward.1} parent=1 // pred_fallthru
      _
    %7165 = vsyncpa [#allocation8], 1
    %7166 = vsyncpa [#allocation11], 1
    %7167 = vsyncpa [#allocation9], 1
  %7168 = vsyncmov [#allocation6]
  %s7169 = vpop.sfrf %7168
  %p7170 = scmp.eq.s32.totalorder %s7169, 0
  %p7171 = pneg %p7170
  %7173 = shalt.err (%p7171)
  %s7174 = scalar_lea.sflag [#allocation6], 1
  %7175 = vsyncmov %s7174
  %s7176 = vpop.sfrf %7175
  %p7177 = scmp.eq.s32.totalorder %s7176, 0
  %p7178 = pneg %p7177
  %7180 = shalt.err (%p7178)
  %s7181 = scalar_lea.sflag [#allocation6], 2
  %7182 = vsyncmov %s7181
  %s7183 = vpop.sfrf %7182
  %p7184 = scmp.eq.s32.totalorder %s7183, 0
  %p7185 = pneg %p7184
  %7187 = shalt.err (%p7185)
  %s7188 = scalar_lea.sflag [#allocation6], 3
  %7189 = vsyncmov %s7188
  %s7190 = vpop.sfrf %7189
  %p7191 = scmp.eq.s32.totalorder %s7190, 0
  %p7192 = pneg %p7191
  %7194 = shalt.err (%p7192)
  %s7195 = scalar_lea.sflag [#allocation6], 4
  %7196 = vsyncmov %s7195
  %s7197 = vpop.sfrf %7196
  %p7198 = scmp.eq.s32.totalorder %s7197, 0
  %p7199 = pneg %p7198
  %7201 = shalt.err (%p7199)
  %s7202 = scalar_lea.sflag [#allocation6], 5
  %7203 = vsyncmov %s7202
  %s7204 = vpop.sfrf %7203
  %p7205 = scmp.eq.s32.totalorder %s7204, 0
  %p7206 = pneg %p7205
  %7208 = shalt.err (%p7206)
  %s7209 = scalar_lea.sflag [#allocation6], 6
  %7210 = vsyncmov %s7209
  %s7211 = vpop.sfrf %7210
  %p7212 = scmp.eq.s32.totalorder %s7211, 0
  %p7213 = pneg %p7212
  %7215 = shalt.err (%p7213)
  %s7216 = scalar_lea.sflag [#allocation6], 7
  %7217 = vsyncmov %s7216
  %s7218 = vpop.sfrf %7217
  %p7219 = scmp.eq.s32.totalorder %s7218, 0
  %p7220 = pneg %p7219
  %7222 = shalt.err (%p7220)

</llo_original>
